<compile_context>
chip_gen: v5e
topology: v5e:2x2
jax: 0.10.0
libtpu: 0.0.40
codegen_flags: <defaults>
</compile_context>

<pallas_src>
import numpy as np

import jax
import jax.numpy as jnp
from jax.experimental import pallas as pl
from jax.experimental.pallas import tpu as pltpu

BIFPN_CH = 160          # SegmentationHead(160, 3)
NUM_CLASSES = 3
BACKBONE_CH = (16, 32, 64, 128)


# ----------------------------------------------------------------------------
# Single fused kernel: backbone + BiFPN + SegmentationHead, all in VMEM.
# ----------------------------------------------------------------------------
def _hydranet_kernel(x_ref,
                     wbb0_ref, wbb1_ref, wbb2_ref, wbb3_ref,
                     wlat_ref, wtd_ref, whead_ref, bias_ref,
                     pool1_ref, pool2_ref, pool3_ref, pool4_ref,
                     u43_ref, u32_ref, u21_ref,
                     o_ref):
    bf16 = jnp.bfloat16

    def mm(a, b):
        return jnp.dot(a, b, preferred_element_type=jnp.float32)

    # ---- backbone level: conv1x1 + ReLU + 2x2 avg-pool (0.25-valued matmul) --
    def bb_level(a_bf, w_ref, bias_row, cout, pool_ref):
        h = jnp.maximum(
            mm(a_bf, w_ref[...]) + bias_ref[bias_row:bias_row + 1, 0:cout], 0.0)
        return mm(pool_ref[...], h.astype(bf16))          # f32 (rows/4, cout)

    x = x_ref[...].astype(bf16)                           # cast on load
    c1 = bb_level(x, wbb0_ref, 0, 16, pool1_ref).astype(bf16)     # (M1, 16)
    c2 = bb_level(c1, wbb1_ref, 1, 32, pool2_ref).astype(bf16)    # (M2, 32)
    c3 = bb_level(c2, wbb2_ref, 2, 64, pool3_ref).astype(bf16)    # (M3, 64)
    c4 = bb_level(c3, wbb3_ref, 3, 128, pool4_ref).astype(bf16)   # (M4, 128)

    # ---- BiFPN lateral 1x1 convs (Cin -> 160); weights packed along K -------
    l1 = mm(c1, wlat_ref[0:16, :]) + bias_ref[4:5, :]
    l2 = mm(c2, wlat_ref[16:48, :]) + bias_ref[5:6, :]
    l3 = mm(c3, wlat_ref[48:112, :]) + bias_ref[6:7, :]
    l4 = mm(c4, wlat_ref[112:240, :]) + bias_ref[7:8, :]

    u43 = u43_ref[...]
    u32 = u32_ref[...]
    u21 = u21_ref[...]
    whead = whead_ref[...]

    # ---- top-down pass (nearest 2x upsample == tiny one-hot matmul) ---------
    p4 = l4
    up4 = mm(u43, p4.astype(bf16))                                  # p4 -> p3 grid
    p3 = jnp.maximum(
        mm((l3 + up4).astype(bf16), wtd_ref[0]) + bias_ref[8:9, :], 0.0)
    up3 = mm(u32, p3.astype(bf16))                                  # p3 -> p2 grid
    p2 = jnp.maximum(
        mm((l2 + up3).astype(bf16), wtd_ref[1]) + bias_ref[9:10, :], 0.0)
    up2 = mm(u21, p2.astype(bf16))                 # p2 -> p1 grid (reused: CSE)
    p1 = jnp.maximum(
        mm((l1 + up2).astype(bf16), wtd_ref[2]) + bias_ref[10:11, :], 0.0)

    # ---- SegmentationHead(160, 3), distributed over pyramid levels ----------
    #   logits = (p1 + up2)@Wh + U21 @ (up3@Wh + U32 @ (up4@Wh)) + bh
    # which equals (p1 + up(p2,2) + up(p3,4) + up(p4,8)) @ Wh + bh because
    # nearest upsampling (row selection) commutes with the channel matmul.
    t4 = mm(up4.astype(bf16), whead)                                # (M3, 3)
    t3 = mm(up3.astype(bf16), whead) + mm(u32, t4.astype(bf16))     # (M2, 3)
    logits = (mm((p1 + up2).astype(bf16), whead)
              + mm(u21, t3.astype(bf16))
              + bias_ref[11:12, 0:NUM_CLASSES])
    o_ref[...] = logits.astype(o_ref.dtype)


# ----------------------------------------------------------------------------
# Constant pool / upsample selection matrices (built once with numpy).
# ----------------------------------------------------------------------------
def _np_pool_matrix(n, h, w):
    """(n*h/2*w/2, n*h*w) matrix with 0.25 entries: 2x2 average pooling on
    row-major flattened (n, h, w, C) activations."""
    ho, wo = h // 2, w // 2
    P = np.zeros((n * ho * wo, n * h * w), np.float32)
    r = np.arange(n * ho * wo)
    b = r // (ho * wo)
    i = (r // wo) % ho
    j = r % wo
    for di in (0, 1):
        for dj in (0, 1):
            P[r, b * h * w + (2 * i + di) * w + (2 * j + dj)] = 0.25
    return P


def _np_upsample_matrix(n, h, w):
    """(n*2h*2w, n*h*w) one-hot matrix: nearest-neighbour 2x upsampling."""
    f = 2
    ho, wo = h * f, w * f
    U = np.zeros((n * ho * wo, n * h * w), np.float32)
    r = np.arange(n * ho * wo)
    b = r // (ho * wo)
    i = (r // wo) % ho
    j = r % wo
    U[r, b * h * w + (i // f) * w + (j // f)] = 1.0
    return U


def build_constants(n, H, W):
    bf16 = jnp.bfloat16
    return {
        "P1": jnp.asarray(_np_pool_matrix(n, H, W), bf16),
        "P2": jnp.asarray(_np_pool_matrix(n, H // 2, W // 2), bf16),
        "P3": jnp.asarray(_np_pool_matrix(n, H // 4, W // 4), bf16),
        "P4": jnp.asarray(_np_pool_matrix(n, H // 8, W // 8), bf16),
        "U43": jnp.asarray(_np_upsample_matrix(n, H // 16, W // 16), bf16),
        "U32": jnp.asarray(_np_upsample_matrix(n, H // 8, W // 8), bf16),
        "U21": jnp.asarray(_np_upsample_matrix(n, H // 4, W // 4), bf16),
    }


# ----------------------------------------------------------------------------
# Parameters (deterministic) and one-time packing into kernel operands.
# ----------------------------------------------------------------------------
def init_params(key):
    def dense(key, cin, cout):
        kw, kb = jax.random.split(key)
        w = jax.random.normal(kw, (cin, cout), jnp.float32) * 0.05
        b = jax.random.normal(kb, (cout,), jnp.float32) * 0.01
        return {"w": w, "b": b}

    keys = jax.random.split(key, 16)
    params = {}
    cin = 3
    for i, cout in enumerate(BACKBONE_CH):
        params[f"bb{i}"] = dense(keys[i], cin, cout)
        cin = cout
    for i, ch in enumerate(BACKBONE_CH):
        params[f"lat{i}"] = dense(keys[4 + i], ch, BIFPN_CH)
    for i in range(3):
        params[f"td{i}"] = dense(keys[8 + i], BIFPN_CH, BIFPN_CH)
    params["head"] = dense(keys[12], BIFPN_CH, NUM_CLASSES)
    return params


def pack_params(params):
    """One-time packing (outside the jitted forward): weights to bf16, lateral
    weights concatenated along K, top-down weights stacked, all biases in one
    zero-padded (12, 160) f32 table."""
    bf16 = jnp.bfloat16

    def padded_bias(name):
        b = params[name]["b"]
        return jnp.pad(b, (0, BIFPN_CH - b.shape[0]))

    bias = jnp.stack(
        [padded_bias(k) for k in
         ("bb0", "bb1", "bb2", "bb3",
          "lat0", "lat1", "lat2", "lat3",
          "td0", "td1", "td2", "head")], axis=0).astype(jnp.float32)

    return {
        "wbb0": params["bb0"]["w"].astype(bf16),
        "wbb1": params["bb1"]["w"].astype(bf16),
        "wbb2": params["bb2"]["w"].astype(bf16),
        "wbb3": params["bb3"]["w"].astype(bf16),
        "wlat": jnp.concatenate(
            [params[f"lat{i}"]["w"] for i in range(4)], axis=0).astype(bf16),
        "wtd": jnp.stack(
            [params[f"td{i}"]["w"] for i in range(3)], axis=0).astype(bf16),
        "whead": params["head"]["w"].astype(bf16),
        "bias": bias,
    }


# ----------------------------------------------------------------------------
# HydraNet forward (Pallas path): wrapper does layout plumbing only.
# ----------------------------------------------------------------------------
def hydranet_forward(kp, x_nchw):
    n, c, H, W = x_nchw.shape
    x = jnp.transpose(x_nchw, (0, 2, 3, 1)).reshape(n * H * W, c)
    h1, w1 = H // 2, W // 2
    m1 = n * h1 * w1

    logits_flat = pl.pallas_call(
        _hydranet_kernel,
        out_shape=jax.ShapeDtypeStruct((m1, NUM_CLASSES), jnp.float32),
        compiler_params=pltpu.CompilerParams(
            vmem_limit_bytes=32 * 1024 * 1024),
    )(x,
      kp["wbb0"], kp["wbb1"], kp["wbb2"], kp["wbb3"],
      kp["wlat"], kp["wtd"], kp["whead"], kp["bias"],
      kp["P1"], kp["P2"], kp["P3"], kp["P4"],
      kp["U43"], kp["U32"], kp["U21"])

    logits = logits_flat.reshape(n, h1, w1, NUM_CLASSES)
    # TODO(synk): reference SegmentationHead may upsample to input resolution;
    # output is kept at the p1 (stride-2) resolution here.
    return jnp.transpose(logits, (0, 3, 1, 2))  # NHWC -> NCHW


# ----------------------------------------------------------------------------
# Pure-JAX f32 reference (correctness check only)
# ----------------------------------------------------------------------------
def hydranet_reference(params, x_nchw):
    x = jnp.transpose(x_nchw, (0, 2, 3, 1)).astype(jnp.float32)

    def dense(t, p, relu):
        out = jnp.einsum("nhwc,cd->nhwd", t, p["w"]) + p["b"]
        return jnp.maximum(out, 0.0) if relu else out

    def up(t, f):
        t = jnp.repeat(t, f, axis=1)
        return jnp.repeat(t, f, axis=2)

    def avgpool2x2(t):
        n, h, w, c = t.shape
        return t.reshape(n, h // 2, 2, w // 2, 2, c).mean(axis=(2, 4))

    feats = []
    h = x
    for i in range(4):
        h = dense(h, params[f"bb{i}"], True)
        h = avgpool2x2(h)
        feats.append(h)
    c1, c2, c3, c4 = feats

    l1 = dense(c1, params["lat0"], False)
    l2 = dense(c2, params["lat1"], False)
    l3 = dense(c3, params["lat2"], False)
    l4 = dense(c4, params["lat3"], False)

    p4 = l4
    p3 = dense(l3 + up(p4, 2), params["td0"], True)
    p2 = dense(l2 + up(p3, 2), params["td1"], True)
    p1 = dense(l1 + up(p2, 2), params["td2"], True)

    fused = p1 + up(p2, 2) + up(p3, 4) + up(p4, 8)
    logits = dense(fused, params["head"], False)
    return jnp.transpose(logits, (0, 3, 1, 2))


if __name__ == "__main__":
    key = jax.random.PRNGKey(0)
    pkey, xkey = jax.random.split(key)
    params = init_params(pkey)

    # small NCHW input: batch=2, RGB channels=3, spatial=32x32
    x = jax.random.normal(xkey, (2, 3, 32, 32), jnp.float32)
    n, _, H, W = x.shape

    kp = dict(pack_params(params))
    kp.update(build_constants(n, H, W))

    fwd = jax.jit(hydranet_forward)
    out = jax.block_until_ready(fwd(kp, x))

    assert out.shape == (2, NUM_CLASSES, 16, 16), out.shape
    assert bool(jnp.all(jnp.isfinite(out)))

    # loose tolerance: kernel path uses bf16 MXU operands, reference is f32
    ref = hydranet_reference(params, x)
    err = float(jnp.max(jnp.abs(out - ref)))
    assert jnp.allclose(out, ref, rtol=1e-1, atol=1e-2), err

    print("KERNEL_OK")
</pallas_src>

<mosaic_0001>
module attributes {stable_mosaic.version = 11 : i64} {
  func.func @_hydranet_kernel(%arg0: memref<2048x3xf32, #tpu.memory_space<vmem>>, %arg1: memref<3x16xbf16, #tpu.memory_space<vmem>>, %arg2: memref<16x32xbf16, #tpu.memory_space<vmem>>, %arg3: memref<32x64xbf16, #tpu.memory_space<vmem>>, %arg4: memref<64x128xbf16, #tpu.memory_space<vmem>>, %arg5: memref<240x160xbf16, #tpu.memory_space<vmem>>, %arg6: memref<3x160x160xbf16, #tpu.memory_space<vmem>>, %arg7: memref<160x3xbf16, #tpu.memory_space<vmem>>, %arg8: memref<12x160xf32, #tpu.memory_space<vmem>>, %arg9: memref<512x2048xbf16, #tpu.memory_space<vmem>>, %arg10: memref<128x512xbf16, #tpu.memory_space<vmem>>, %arg11: memref<32x128xbf16, #tpu.memory_space<vmem>>, %arg12: memref<8x32xbf16, #tpu.memory_space<vmem>>, %arg13: memref<32x8xbf16, #tpu.memory_space<vmem>>, %arg14: memref<128x32xbf16, #tpu.memory_space<vmem>>, %arg15: memref<512x128xbf16, #tpu.memory_space<vmem>>, %arg16: memref<512x3xf32, #tpu.memory_space<vmem>>) attributes {dimension_semantics = [], scalar_prefetch = 0 : i64, scratch_operands = 0 : i64, tpu.core_type = #tpu.core_type<tc>} {
    %c0 = arith.constant 0 : index
    %c0_0 = arith.constant 0 : index
    %0 = vector.load %arg0[%c0, %c0_0] : memref<2048x3xf32, #tpu.memory_space<vmem>>, vector<2048x3xf32>
    %1 = arith.truncf %0 : vector<2048x3xf32> to vector<2048x3xbf16>
    %c0_1 = arith.constant 0 : index
    %c0_2 = arith.constant 0 : index
    %2 = vector.load %arg1[%c0_1, %c0_2] : memref<3x16xbf16, #tpu.memory_space<vmem>>, vector<3x16xbf16>
    %cst = arith.constant dense<0.000000e+00> : vector<2048x16xf32>
    %3 = tpu.matmul %1, %2, %cst {dimension_numbers = #tpu.dot_dimension_numbers<[1], [0], [0], [1], [0, 0, 1, 1], [], []>} : vector<2048x3xbf16>, vector<3x16xbf16>, vector<2048x16xf32> -> vector<2048x16xf32>
    %c0_3 = arith.constant 0 : index
    %c0_4 = arith.constant 0 : index
    %4 = vector.load %arg8[%c0_3, %c0_4] : memref<12x160xf32, #tpu.memory_space<vmem>>, vector<1x16xf32>
    %5 = vector.broadcast %4 : vector<1x16xf32> to vector<2048x16xf32>
    %6 = arith.addf %3, %5 : vector<2048x16xf32>
    %cst_5 = arith.constant 0.000000e+00 : f32
    %7 = vector.broadcast %cst_5 : f32 to vector<2048x16xf32>
    %8 = arith.maximumf %6, %7 : vector<2048x16xf32>
    %c0_6 = arith.constant 0 : index
    %c0_7 = arith.constant 0 : index
    %9 = vector.load %arg9[%c0_6, %c0_7] : memref<512x2048xbf16, #tpu.memory_space<vmem>>, vector<512x2048xbf16>
    %10 = arith.truncf %8 : vector<2048x16xf32> to vector<2048x16xbf16>
    %cst_8 = arith.constant dense<0.000000e+00> : vector<512x16xf32>
    %11 = tpu.matmul %9, %10, %cst_8 {dimension_numbers = #tpu.dot_dimension_numbers<[1], [0], [0], [1], [0, 0, 1, 1], [], []>} : vector<512x2048xbf16>, vector<2048x16xbf16>, vector<512x16xf32> -> vector<512x16xf32>
    %12 = arith.truncf %11 : vector<512x16xf32> to vector<512x16xbf16>
    %c0_9 = arith.constant 0 : index
    %c0_10 = arith.constant 0 : index
    %13 = vector.load %arg2[%c0_9, %c0_10] : memref<16x32xbf16, #tpu.memory_space<vmem>>, vector<16x32xbf16>
    %cst_11 = arith.constant dense<0.000000e+00> : vector<512x32xf32>
    %14 = tpu.matmul %12, %13, %cst_11 {dimension_numbers = #tpu.dot_dimension_numbers<[1], [0], [0], [1], [0, 0, 1, 1], [], []>} : vector<512x16xbf16>, vector<16x32xbf16>, vector<512x32xf32> -> vector<512x32xf32>
    %c1 = arith.constant 1 : index
    %c0_12 = arith.constant 0 : index
    %15 = vector.load %arg8[%c1, %c0_12] : memref<12x160xf32, #tpu.memory_space<vmem>>, vector<1x32xf32>
    %16 = vector.broadcast %15 : vector<1x32xf32> to vector<512x32xf32>
    %17 = arith.addf %14, %16 : vector<512x32xf32>
    %cst_13 = arith.constant 0.000000e+00 : f32
    %18 = vector.broadcast %cst_13 : f32 to vector<512x32xf32>
    %19 = arith.maximumf %17, %18 : vector<512x32xf32>
    %c0_14 = arith.constant 0 : index
    %c0_15 = arith.constant 0 : index
    %20 = vector.load %arg10[%c0_14, %c0_15] : memref<128x512xbf16, #tpu.memory_space<vmem>>, vector<128x512xbf16>
    %21 = arith.truncf %19 : vector<512x32xf32> to vector<512x32xbf16>
    %cst_16 = arith.constant dense<0.000000e+00> : vector<128x32xf32>
    %22 = tpu.matmul %20, %21, %cst_16 {dimension_numbers = #tpu.dot_dimension_numbers<[1], [0], [0], [1], [0, 0, 1, 1], [], []>} : vector<128x512xbf16>, vector<512x32xbf16>, vector<128x32xf32> -> vector<128x32xf32>
    %23 = arith.truncf %22 : vector<128x32xf32> to vector<128x32xbf16>
    %c0_17 = arith.constant 0 : index
    %c0_18 = arith.constant 0 : index
    %24 = vector.load %arg3[%c0_17, %c0_18] : memref<32x64xbf16, #tpu.memory_space<vmem>>, vector<32x64xbf16>
    %cst_19 = arith.constant dense<0.000000e+00> : vector<128x64xf32>
    %25 = tpu.matmul %23, %24, %cst_19 {dimension_numbers = #tpu.dot_dimension_numbers<[1], [0], [0], [1], [0, 0, 1, 1], [], []>} : vector<128x32xbf16>, vector<32x64xbf16>, vector<128x64xf32> -> vector<128x64xf32>
    %c2 = arith.constant 2 : index
    %c0_20 = arith.constant 0 : index
    %26 = vector.load %arg8[%c2, %c0_20] : memref<12x160xf32, #tpu.memory_space<vmem>>, vector<1x64xf32>
    %27 = vector.broadcast %26 : vector<1x64xf32> to vector<128x64xf32>
    %28 = arith.addf %25, %27 : vector<128x64xf32>
    %cst_21 = arith.constant 0.000000e+00 : f32
    %29 = vector.broadcast %cst_21 : f32 to vector<128x64xf32>
    %30 = arith.maximumf %28, %29 : vector<128x64xf32>
    %c0_22 = arith.constant 0 : index
    %c0_23 = arith.constant 0 : index
    %31 = vector.load %arg11[%c0_22, %c0_23] : memref<32x128xbf16, #tpu.memory_space<vmem>>, vector<32x128xbf16>
    %32 = arith.truncf %30 : vector<128x64xf32> to vector<128x64xbf16>
    %cst_24 = arith.constant dense<0.000000e+00> : vector<32x64xf32>
    %33 = tpu.matmul %31, %32, %cst_24 {dimension_numbers = #tpu.dot_dimension_numbers<[1], [0], [0], [1], [0, 0, 1, 1], [], []>} : vector<32x128xbf16>, vector<128x64xbf16>, vector<32x64xf32> -> vector<32x64xf32>
    %34 = arith.truncf %33 : vector<32x64xf32> to vector<32x64xbf16>
    %c0_25 = arith.constant 0 : index
    %c0_26 = arith.constant 0 : index
    %35 = vector.load %arg4[%c0_25, %c0_26] : memref<64x128xbf16, #tpu.memory_space<vmem>>, vector<64x128xbf16>
    %cst_27 = arith.constant dense<0.000000e+00> : vector<32x128xf32>
    %36 = tpu.matmul %34, %35, %cst_27 {dimension_numbers = #tpu.dot_dimension_numbers<[1], [0], [0], [1], [0, 0, 1, 1], [], []>} : vector<32x64xbf16>, vector<64x128xbf16>, vector<32x128xf32> -> vector<32x128xf32>
    %c3 = arith.constant 3 : index
    %c0_28 = arith.constant 0 : index
    %37 = vector.load %arg8[%c3, %c0_28] : memref<12x160xf32, #tpu.memory_space<vmem>>, vector<1x128xf32>
    %38 = vector.broadcast %37 : vector<1x128xf32> to vector<32x128xf32>
    %39 = arith.addf %36, %38 : vector<32x128xf32>
    %cst_29 = arith.constant 0.000000e+00 : f32
    %40 = vector.broadcast %cst_29 : f32 to vector<32x128xf32>
    %41 = arith.maximumf %39, %40 : vector<32x128xf32>
    %c0_30 = arith.constant 0 : index
    %c0_31 = arith.constant 0 : index
    %42 = vector.load %arg12[%c0_30, %c0_31] : memref<8x32xbf16, #tpu.memory_space<vmem>>, vector<8x32xbf16>
    %43 = arith.truncf %41 : vector<32x128xf32> to vector<32x128xbf16>
    %cst_32 = arith.constant dense<0.000000e+00> : vector<8x128xf32>
    %44 = tpu.matmul %42, %43, %cst_32 {dimension_numbers = #tpu.dot_dimension_numbers<[1], [0], [0], [1], [0, 0, 1, 1], [], []>} : vector<8x32xbf16>, vector<32x128xbf16>, vector<8x128xf32> -> vector<8x128xf32>
    %45 = arith.truncf %44 : vector<8x128xf32> to vector<8x128xbf16>
    %c0_33 = arith.constant 0 : index
    %c0_34 = arith.constant 0 : index
    %46 = vector.load %arg5[%c0_33, %c0_34] : memref<240x160xbf16, #tpu.memory_space<vmem>>, vector<16x160xbf16>
    %cst_35 = arith.constant dense<0.000000e+00> : vector<512x160xf32>
    %47 = tpu.matmul %12, %46, %cst_35 {dimension_numbers = #tpu.dot_dimension_numbers<[1], [0], [0], [1], [0, 0, 1, 1], [], []>} : vector<512x16xbf16>, vector<16x160xbf16>, vector<512x160xf32> -> vector<512x160xf32>
    %c4 = arith.constant 4 : index
    %c0_36 = arith.constant 0 : index
    %48 = vector.load %arg8[%c4, %c0_36] : memref<12x160xf32, #tpu.memory_space<vmem>>, vector<1x160xf32>
    %49 = vector.broadcast %48 : vector<1x160xf32> to vector<512x160xf32>
    %50 = arith.addf %47, %49 : vector<512x160xf32>
    %c16 = arith.constant 16 : index
    %c0_37 = arith.constant 0 : index
    %51 = vector.load %arg5[%c16, %c0_37] : memref<240x160xbf16, #tpu.memory_space<vmem>>, vector<32x160xbf16>
    %cst_38 = arith.constant dense<0.000000e+00> : vector<128x160xf32>
    %52 = tpu.matmul %23, %51, %cst_38 {dimension_numbers = #tpu.dot_dimension_numbers<[1], [0], [0], [1], [0, 0, 1, 1], [], []>} : vector<128x32xbf16>, vector<32x160xbf16>, vector<128x160xf32> -> vector<128x160xf32>
    %c5 = arith.constant 5 : index
    %c0_39 = arith.constant 0 : index
    %53 = vector.load %arg8[%c5, %c0_39] : memref<12x160xf32, #tpu.memory_space<vmem>>, vector<1x160xf32>
    %54 = vector.broadcast %53 : vector<1x160xf32> to vector<128x160xf32>
    %55 = arith.addf %52, %54 : vector<128x160xf32>
    %c48 = arith.constant 48 : index
    %c0_40 = arith.constant 0 : index
    %56 = vector.load %arg5[%c48, %c0_40] : memref<240x160xbf16, #tpu.memory_space<vmem>>, vector<64x160xbf16>
    %cst_41 = arith.constant dense<0.000000e+00> : vector<32x160xf32>
    %57 = tpu.matmul %34, %56, %cst_41 {dimension_numbers = #tpu.dot_dimension_numbers<[1], [0], [0], [1], [0, 0, 1, 1], [], []>} : vector<32x64xbf16>, vector<64x160xbf16>, vector<32x160xf32> -> vector<32x160xf32>
    %c6 = arith.constant 6 : index
    %c0_42 = arith.constant 0 : index
    %58 = vector.load %arg8[%c6, %c0_42] : memref<12x160xf32, #tpu.memory_space<vmem>>, vector<1x160xf32>
    %59 = vector.broadcast %58 : vector<1x160xf32> to vector<32x160xf32>
    %60 = arith.addf %57, %59 : vector<32x160xf32>
    %c112 = arith.constant 112 : index
    %c0_43 = arith.constant 0 : index
    %61 = vector.load %arg5[%c112, %c0_43] : memref<240x160xbf16, #tpu.memory_space<vmem>>, vector<128x160xbf16>
    %cst_44 = arith.constant dense<0.000000e+00> : vector<8x160xf32>
    %62 = tpu.matmul %45, %61, %cst_44 {dimension_numbers = #tpu.dot_dimension_numbers<[1], [0], [0], [1], [0, 0, 1, 1], [], []>} : vector<8x128xbf16>, vector<128x160xbf16>, vector<8x160xf32> -> vector<8x160xf32>
    %c7 = arith.constant 7 : index
    %c0_45 = arith.constant 0 : index
    %63 = vector.load %arg8[%c7, %c0_45] : memref<12x160xf32, #tpu.memory_space<vmem>>, vector<1x160xf32>
    %64 = vector.broadcast %63 : vector<1x160xf32> to vector<8x160xf32>
    %65 = arith.addf %62, %64 : vector<8x160xf32>
    %c0_46 = arith.constant 0 : index
    %c0_47 = arith.constant 0 : index
    %66 = vector.load %arg13[%c0_46, %c0_47] : memref<32x8xbf16, #tpu.memory_space<vmem>>, vector<32x8xbf16>
    %c0_48 = arith.constant 0 : index
    %c0_49 = arith.constant 0 : index
    %67 = vector.load %arg14[%c0_48, %c0_49] : memref<128x32xbf16, #tpu.memory_space<vmem>>, vector<128x32xbf16>
    %c0_50 = arith.constant 0 : index
    %c0_51 = arith.constant 0 : index
    %68 = vector.load %arg15[%c0_50, %c0_51] : memref<512x128xbf16, #tpu.memory_space<vmem>>, vector<512x128xbf16>
    %c0_52 = arith.constant 0 : index
    %c0_53 = arith.constant 0 : index
    %69 = vector.load %arg7[%c0_52, %c0_53] : memref<160x3xbf16, #tpu.memory_space<vmem>>, vector<160x3xbf16>
    %70 = arith.truncf %65 : vector<8x160xf32> to vector<8x160xbf16>
    %cst_54 = arith.constant dense<0.000000e+00> : vector<32x160xf32>
    %71 = tpu.matmul %66, %70, %cst_54 {dimension_numbers = #tpu.dot_dimension_numbers<[1], [0], [0], [1], [0, 0, 1, 1], [], []>} : vector<32x8xbf16>, vector<8x160xbf16>, vector<32x160xf32> -> vector<32x160xf32>
    %72 = arith.addf %60, %71 : vector<32x160xf32>
    %73 = arith.truncf %72 : vector<32x160xf32> to vector<32x160xbf16>
    %c0_55 = arith.constant 0 : index
    %c0_56 = arith.constant 0 : index
    %c0_57 = arith.constant 0 : index
    %74 = vector.load %arg6[%c0_55, %c0_56, %c0_57] : memref<3x160x160xbf16, #tpu.memory_space<vmem>>, vector<1x160x160xbf16>
    %75 = vector.shape_cast %74 : vector<1x160x160xbf16> to vector<160x160xbf16>
    %cst_58 = arith.constant dense<0.000000e+00> : vector<32x160xf32>
    %76 = tpu.matmul %73, %75, %cst_58 {dimension_numbers = #tpu.dot_dimension_numbers<[1], [0], [0], [1], [0, 0, 1, 1], [], []>} : vector<32x160xbf16>, vector<160x160xbf16>, vector<32x160xf32> -> vector<32x160xf32>
    %c8 = arith.constant 8 : index
    %c0_59 = arith.constant 0 : index
    %77 = vector.load %arg8[%c8, %c0_59] : memref<12x160xf32, #tpu.memory_space<vmem>>, vector<1x160xf32>
    %78 = vector.broadcast %77 : vector<1x160xf32> to vector<32x160xf32>
    %79 = arith.addf %76, %78 : vector<32x160xf32>
    %cst_60 = arith.constant 0.000000e+00 : f32
    %80 = vector.broadcast %cst_60 : f32 to vector<32x160xf32>
    %81 = arith.maximumf %79, %80 : vector<32x160xf32>
    %82 = arith.truncf %81 : vector<32x160xf32> to vector<32x160xbf16>
    %cst_61 = arith.constant dense<0.000000e+00> : vector<128x160xf32>
    %83 = tpu.matmul %67, %82, %cst_61 {dimension_numbers = #tpu.dot_dimension_numbers<[1], [0], [0], [1], [0, 0, 1, 1], [], []>} : vector<128x32xbf16>, vector<32x160xbf16>, vector<128x160xf32> -> vector<128x160xf32>
    %84 = arith.addf %55, %83 : vector<128x160xf32>
    %85 = arith.truncf %84 : vector<128x160xf32> to vector<128x160xbf16>
    %c1_62 = arith.constant 1 : index
    %c0_63 = arith.constant 0 : index
    %c0_64 = arith.constant 0 : index
    %86 = vector.load %arg6[%c1_62, %c0_63, %c0_64] : memref<3x160x160xbf16, #tpu.memory_space<vmem>>, vector<1x160x160xbf16>
    %87 = vector.shape_cast %86 : vector<1x160x160xbf16> to vector<160x160xbf16>
    %cst_65 = arith.constant dense<0.000000e+00> : vector<128x160xf32>
    %88 = tpu.matmul %85, %87, %cst_65 {dimension_numbers = #tpu.dot_dimension_numbers<[1], [0], [0], [1], [0, 0, 1, 1], [], []>} : vector<128x160xbf16>, vector<160x160xbf16>, vector<128x160xf32> -> vector<128x160xf32>
    %c9 = arith.constant 9 : index
    %c0_66 = arith.constant 0 : index
    %89 = vector.load %arg8[%c9, %c0_66] : memref<12x160xf32, #tpu.memory_space<vmem>>, vector<1x160xf32>
    %90 = vector.broadcast %89 : vector<1x160xf32> to vector<128x160xf32>
    %91 = arith.addf %88, %90 : vector<128x160xf32>
    %cst_67 = arith.constant 0.000000e+00 : f32
    %92 = vector.broadcast %cst_67 : f32 to vector<128x160xf32>
    %93 = arith.maximumf %91, %92 : vector<128x160xf32>
    %94 = arith.truncf %93 : vector<128x160xf32> to vector<128x160xbf16>
    %cst_68 = arith.constant dense<0.000000e+00> : vector<512x160xf32>
    %95 = tpu.matmul %68, %94, %cst_68 {dimension_numbers = #tpu.dot_dimension_numbers<[1], [0], [0], [1], [0, 0, 1, 1], [], []>} : vector<512x128xbf16>, vector<128x160xbf16>, vector<512x160xf32> -> vector<512x160xf32>
    %96 = arith.addf %50, %95 : vector<512x160xf32>
    %97 = arith.truncf %96 : vector<512x160xf32> to vector<512x160xbf16>
    %c2_69 = arith.constant 2 : index
    %c0_70 = arith.constant 0 : index
    %c0_71 = arith.constant 0 : index
    %98 = vector.load %arg6[%c2_69, %c0_70, %c0_71] : memref<3x160x160xbf16, #tpu.memory_space<vmem>>, vector<1x160x160xbf16>
    %99 = vector.shape_cast %98 : vector<1x160x160xbf16> to vector<160x160xbf16>
    %cst_72 = arith.constant dense<0.000000e+00> : vector<512x160xf32>
    %100 = tpu.matmul %97, %99, %cst_72 {dimension_numbers = #tpu.dot_dimension_numbers<[1], [0], [0], [1], [0, 0, 1, 1], [], []>} : vector<512x160xbf16>, vector<160x160xbf16>, vector<512x160xf32> -> vector<512x160xf32>
    %c10 = arith.constant 10 : index
    %c0_73 = arith.constant 0 : index
    %101 = vector.load %arg8[%c10, %c0_73] : memref<12x160xf32, #tpu.memory_space<vmem>>, vector<1x160xf32>
    %102 = vector.broadcast %101 : vector<1x160xf32> to vector<512x160xf32>
    %103 = arith.addf %100, %102 : vector<512x160xf32>
    %cst_74 = arith.constant 0.000000e+00 : f32
    %104 = vector.broadcast %cst_74 : f32 to vector<512x160xf32>
    %105 = arith.maximumf %103, %104 : vector<512x160xf32>
    %106 = arith.truncf %71 : vector<32x160xf32> to vector<32x160xbf16>
    %cst_75 = arith.constant dense<0.000000e+00> : vector<32x3xf32>
    %107 = tpu.matmul %106, %69, %cst_75 {dimension_numbers = #tpu.dot_dimension_numbers<[1], [0], [0], [1], [0, 0, 1, 1], [], []>} : vector<32x160xbf16>, vector<160x3xbf16>, vector<32x3xf32> -> vector<32x3xf32>
    %108 = arith.truncf %83 : vector<128x160xf32> to vector<128x160xbf16>
    %cst_76 = arith.constant dense<0.000000e+00> : vector<128x3xf32>
    %109 = tpu.matmul %108, %69, %cst_76 {dimension_numbers = #tpu.dot_dimension_numbers<[1], [0], [0], [1], [0, 0, 1, 1], [], []>} : vector<128x160xbf16>, vector<160x3xbf16>, vector<128x3xf32> -> vector<128x3xf32>
    %110 = arith.truncf %107 : vector<32x3xf32> to vector<32x3xbf16>
    %cst_77 = arith.constant dense<0.000000e+00> : vector<128x3xf32>
    %111 = tpu.matmul %67, %110, %cst_77 {dimension_numbers = #tpu.dot_dimension_numbers<[1], [0], [0], [1], [0, 0, 1, 1], [], []>} : vector<128x32xbf16>, vector<32x3xbf16>, vector<128x3xf32> -> vector<128x3xf32>
    %112 = arith.addf %109, %111 : vector<128x3xf32>
    %113 = arith.addf %105, %95 : vector<512x160xf32>
    %114 = arith.truncf %113 : vector<512x160xf32> to vector<512x160xbf16>
    %cst_78 = arith.constant dense<0.000000e+00> : vector<512x3xf32>
    %115 = tpu.matmul %114, %69, %cst_78 {dimension_numbers = #tpu.dot_dimension_numbers<[1], [0], [0], [1], [0, 0, 1, 1], [], []>} : vector<512x160xbf16>, vector<160x3xbf16>, vector<512x3xf32> -> vector<512x3xf32>
    %116 = arith.truncf %112 : vector<128x3xf32> to vector<128x3xbf16>
    %cst_79 = arith.constant dense<0.000000e+00> : vector<512x3xf32>
    %117 = tpu.matmul %68, %116, %cst_79 {dimension_numbers = #tpu.dot_dimension_numbers<[1], [0], [0], [1], [0, 0, 1, 1], [], []>} : vector<512x128xbf16>, vector<128x3xbf16>, vector<512x3xf32> -> vector<512x3xf32>
    %118 = arith.addf %115, %117 : vector<512x3xf32>
    %c11 = arith.constant 11 : index
    %c0_80 = arith.constant 0 : index
    %119 = vector.load %arg8[%c11, %c0_80] : memref<12x160xf32, #tpu.memory_space<vmem>>, vector<1x3xf32>
    %120 = vector.broadcast %119 : vector<1x3xf32> to vector<512x3xf32>
    %121 = arith.addf %118, %120 : vector<512x3xf32>
    %c0_81 = arith.constant 0 : index
    %c0_82 = arith.constant 0 : index
    %122 = vector.load %arg16[%c0_81, %c0_82] : memref<512x3xf32, #tpu.memory_space<vmem>>, vector<512x3xf32>
    tpu.vector_store %arg16[%c0_81, %c0_82], %121 {strides = array<i32>} : memref<512x3xf32, #tpu.memory_space<vmem>>, vector<512x3xf32>,
    return
  }
}

</mosaic_0001>

<llo_original>
// kernel: hydranet_forward.1
$region0: #{hydranet_forward.1}
  #allocation0 [shape = 'u32[]', space=smem, size = 0x4, offset = 0x4, fixed_abs, tag = 'smem constant byte address 0x4 - core index']
  #allocation1 [shape = 'u32[72,128]{1,0:T(1,128)}', space=vmem, size = 0x9000, scoped, tag = 'internal scratch']
  %s0 = inlined_call_operand.vmem [shape: f32[2048,3], index: 0, kind: input, shape index: {}]
  %s1 = inlined_call_operand.hbm [shape: bf16[3,16], index: 1, kind: input, shape index: {}]
  %s2 = inlined_call_operand.hbm [shape: bf16[16,32], index: 2, kind: input, shape index: {}]
  %s3 = inlined_call_operand.hbm [shape: bf16[32,64], index: 3, kind: input, shape index: {}]
  %s4 = inlined_call_operand.hbm [shape: bf16[64,128], index: 4, kind: input, shape index: {}]
  %s5 = inlined_call_operand.vmem [shape: bf16[240,160], index: 5, kind: input, shape index: {}]
  %s6 = inlined_call_operand.hbm [shape: bf16[3,160,160], index: 6, kind: input, shape index: {}]
  %s7 = inlined_call_operand.vmem [shape: bf16[160,3], index: 7, kind: input, shape index: {}]
  %s8 = inlined_call_operand.hbm [shape: f32[12,160], index: 8, kind: input, shape index: {}]
  %s9 = inlined_call_operand.hbm [shape: bf16[512,2048], index: 9, kind: input, shape index: {}]
  %s10 = inlined_call_operand.hbm [shape: bf16[128,512], index: 10, kind: input, shape index: {}]
  %s11 = inlined_call_operand.hbm [shape: bf16[32,128], index: 11, kind: input, shape index: {}]
  %s12 = inlined_call_operand.hbm [shape: bf16[8,32], index: 12, kind: input, shape index: {}]
  %s13 = inlined_call_operand.vmem [shape: bf16[32,8], index: 13, kind: input, shape index: {}]
  %s14 = inlined_call_operand.vmem [shape: bf16[128,32], index: 14, kind: input, shape index: {}]
  %s15 = inlined_call_operand.hbm [shape: bf16[512,128], index: 15, kind: input, shape index: {}]
  %s16 = inlined_call_operand.vmem [shape: f32[512,3], index: 16, kind: output, shape index: {}]
  %s17 = sld [smem:[#allocation0]]
  $region118: #{hydranet_forward.1} parent=0
    _
  %s19 = ssub.s32 1, %s17
  %s20 = scalar_select 0, %s19, %s17
  $region1: #{hydranet_forward.1} parent=0
    #allocation2 [shape = 'u8[1024]{0}', space=vmem, size = 0x400, scoped, tag = 'input window, operand 1, single buffered']
    #allocation3 [shape = 's32[1]{0}', space=sflag, size = 0x4, scoped, tag = 'scoped memory for hydranet_forward.1']
    #allocation4 [shape = 'u8[4096]{0}', space=vmem, size = 0x1000, scoped, tag = 'input window, operand 2, single buffered']
    #allocation5 [shape = 's32[1]{0}', space=sflag, size = 0x4, scoped, tag = 'scoped memory for hydranet_forward.1']
    #allocation6 [shape = 'u8[8192]{0}', space=vmem, size = 0x2000, scoped, tag = 'input window, operand 3, single buffered']
    #allocation7 [shape = 'u8[16384]{0}', space=vmem, size = 0x4000, scoped, tag = 'input window, operand 4, single buffered']
    #allocation8 [shape = 's32[1]{0}', space=sflag, size = 0x4, scoped, tag = 'scoped memory for hydranet_forward.1']
    #allocation9 [shape = 'u8[245760]{0}', space=vmem, size = 0x3c000, scoped, tag = 'input window, operand 6, single buffered']
    #allocation10 [shape = 'u8[16384]{0}', space=vmem, size = 0x4000, scoped, tag = 'input window, operand 8, single buffered']
    #allocation11 [shape = 's32[1]{0}', space=sflag, size = 0x4, scoped, tag = 'scoped memory for hydranet_forward.1']
    #allocation12 [shape = 'u8[2097152]{0}', space=vmem, size = 0x200000, scoped, tag = 'input window, operand 9, single buffered']
    #allocation13 [shape = 'u8[131072]{0}', space=vmem, size = 0x20000, scoped, tag = 'input window, operand 10, single buffered']
    #allocation14 [shape = 's32[1]{0}', space=sflag, size = 0x4, scoped, tag = 'scoped memory for hydranet_forward.1']
    #allocation15 [shape = 'u8[8192]{0}', space=vmem, size = 0x2000, scoped, tag = 'input window, operand 11, single buffered']
    #allocation16 [shape = 'u8[2048]{0}', space=vmem, size = 0x800, scoped, tag = 'input window, operand 12, single buffered']
    #allocation17 [shape = 's32[1]{0}', space=sflag, size = 0x4, scoped, tag = 'scoped memory for hydranet_forward.1']
    #allocation18 [shape = 'u8[131072]{0}', space=vmem, size = 0x20000, scoped, tag = 'input window, operand 15, single buffered']
    %21 = vsyncpa [#allocation3], 0
    %22 = vsyncpa [#allocation5], 0
    %23 = vsyncpa [#allocation8], 0
    %24 = vsyncpa [#allocation11], 0
    %25 = vsyncpa [#allocation14], 0
    %26 = vsyncpa [#allocation17], 0
    // Predicated region
    $region2: #{hydranet_forward.1} parent=1 // pred_check
      _
    $region3: #{hydranet_forward.1} parent=1 // pred_check_branch
      %28 = sbr.rel (0) target = $region5
    $region4: #{hydranet_forward.1} parent=1 // pred_region
      _
    $region5: #{hydranet_forward.1} parent=1 // pred_fallthru
      _
    // Predicated region
    $region6: #{hydranet_forward.1} parent=1 // pred_check
      _
    $region7: #{hydranet_forward.1} parent=1 // pred_check_branch
      %30 = sbr.rel (0) target = $region9
    $region8: #{hydranet_forward.1} parent=1 // pred_region
      %32 = vsyncadd [#allocation3], 0
      %s34 = sshll.u32 %s1, 4
      %s35 = int_to_ptr.hbm [resolvable:$true] %s34
      %s36 = sshll.u32 [#allocation2], 4
      %s37 = int_to_ptr.vmem [resolvable:$true] %s36
      %39 = dma.hbm_to_vmem [thread:$0]  %s35, 32, %s37, [#allocation3]
    $region9: #{hydranet_forward.1} parent=1 // pred_fallthru
      _
    // Predicated region
    $region10: #{hydranet_forward.1} parent=1 // pred_check
      _
    $region11: #{hydranet_forward.1} parent=1 // pred_check_branch
      %41 = sbr.rel (0) target = $region13
    $region12: #{hydranet_forward.1} parent=1 // pred_region
      %43 = vsyncadd [#allocation5], 0
      %s44 = sshll.u32 %s2, 4
      %s45 = int_to_ptr.hbm [resolvable:$true] %s44
      %s46 = sshll.u32 [#allocation4], 4
      %s47 = int_to_ptr.vmem [resolvable:$true] %s46
      %52 = dma.hbm_to_vmem [thread:$0]  %s45, 128, %s47, [#allocation5], 64, 64, 4
    $region13: #{hydranet_forward.1} parent=1 // pred_fallthru
      _
    // Predicated region
    $region14: #{hydranet_forward.1} parent=1 // pred_check
      _
    $region15: #{hydranet_forward.1} parent=1 // pred_check_branch
      %54 = sbr.rel (0) target = $region17
    $region16: #{hydranet_forward.1} parent=1 // pred_region
      %56 = vsyncadd [#allocation5], 0
      %s57 = sshll.u32 %s3, 4
      %s58 = int_to_ptr.hbm [resolvable:$true] %s57
      %s59 = sshll.u32 [#allocation6], 4
      %s60 = int_to_ptr.vmem [resolvable:$true] %s59
      %65 = dma.hbm_to_vmem [thread:$0]  %s58, 256, %s60, [#allocation5], 64, 64, 4
    $region17: #{hydranet_forward.1} parent=1 // pred_fallthru
      _
    // Predicated region
    $region18: #{hydranet_forward.1} parent=1 // pred_check
      _
    $region19: #{hydranet_forward.1} parent=1 // pred_check_branch
      %67 = sbr.rel (0) target = $region21
    $region20: #{hydranet_forward.1} parent=1 // pred_region
      %69 = vsyncadd [#allocation8], 0
      %s70 = sshll.u32 %s4, 4
      %s71 = int_to_ptr.hbm [resolvable:$true] %s70
      %s72 = sshll.u32 [#allocation7], 4
      %s73 = int_to_ptr.vmem [resolvable:$true] %s72
      %78 = dma.hbm_to_vmem [thread:$0]  %s71, 512, %s73, [#allocation8], 64, 64, 4
    $region21: #{hydranet_forward.1} parent=1 // pred_fallthru
      _
    // Predicated region
    $region22: #{hydranet_forward.1} parent=1 // pred_check
      _
    $region23: #{hydranet_forward.1} parent=1 // pred_check_branch
      %80 = sbr.rel (0) target = $region25
    $region24: #{hydranet_forward.1} parent=1 // pred_region
      _
    $region25: #{hydranet_forward.1} parent=1 // pred_fallthru
      _
    // Predicated region
    $region26: #{hydranet_forward.1} parent=1 // pred_check
      _
    $region27: #{hydranet_forward.1} parent=1 // pred_check_branch
      %82 = sbr.rel (0) target = $region29
    $region28: #{hydranet_forward.1} parent=1 // pred_region
      %84 = vsyncadd [#allocation8], 0
      %s85 = sshll.u32 %s6, 4
      %s86 = int_to_ptr.hbm [resolvable:$true] %s85
      %s87 = sshll.u32 [#allocation9], 4
      %s88 = int_to_ptr.vmem [resolvable:$true] %s87
      %93 = dma.hbm_to_vmem [thread:$0]  %s86, 7680, %s88, [#allocation8], 128, 128, 8
    $region29: #{hydranet_forward.1} parent=1 // pred_fallthru
      _
    // Predicated region
    $region30: #{hydranet_forward.1} parent=1 // pred_check
      _
    $region31: #{hydranet_forward.1} parent=1 // pred_check_branch
      %95 = sbr.rel (0) target = $region33
    $region32: #{hydranet_forward.1} parent=1 // pred_region
      _
    $region33: #{hydranet_forward.1} parent=1 // pred_fallthru
      _
    // Predicated region
    $region34: #{hydranet_forward.1} parent=1 // pred_check
      _
    $region35: #{hydranet_forward.1} parent=1 // pred_check_branch
      %97 = sbr.rel (0) target = $region37
    $region36: #{hydranet_forward.1} parent=1 // pred_region
      %99 = vsyncadd [#allocation11], 0
      %s100 = sshll.u32 %s8, 4
      %s101 = int_to_ptr.hbm [resolvable:$true] %s100
      %s102 = sshll.u32 [#allocation10], 4
      %s103 = int_to_ptr.vmem [resolvable:$true] %s102
      %108 = dma.hbm_to_vmem [thread:$0]  %s101, 512, %s103, [#allocation11], 256, 256, 16
    $region37: #{hydranet_forward.1} parent=1 // pred_fallthru
      _
    // Predicated region
    $region38: #{hydranet_forward.1} parent=1 // pred_check
      _
    $region39: #{hydranet_forward.1} parent=1 // pred_check_branch
      %110 = sbr.rel (0) target = $region41
    $region40: #{hydranet_forward.1} parent=1 // pred_region
      %112 = vsyncadd [#allocation11], 0
      %s113 = sshll.u32 %s9, 4
      %s114 = int_to_ptr.hbm [resolvable:$true] %s113
      %s115 = sshll.u32 [#allocation12], 4
      %s116 = int_to_ptr.vmem [resolvable:$true] %s115
      %121 = dma.hbm_to_vmem [thread:$0]  %s114, 65536, %s116, [#allocation11], 1024, 1024, 64
    $region41: #{hydranet_forward.1} parent=1 // pred_fallthru
      _
    // Predicated region
    $region42: #{hydranet_forward.1} parent=1 // pred_check
      _
    $region43: #{hydranet_forward.1} parent=1 // pred_check_branch
      %123 = sbr.rel (0) target = $region45
    $region44: #{hydranet_forward.1} parent=1 // pred_region
      %125 = vsyncadd [#allocation14], 0
      %s126 = sshll.u32 %s10, 4
      %s127 = int_to_ptr.hbm [resolvable:$true] %s126
      %s128 = sshll.u32 [#allocation13], 4
      %s129 = int_to_ptr.vmem [resolvable:$true] %s128
      %134 = dma.hbm_to_vmem [thread:$0]  %s127, 4096, %s129, [#allocation14], 256, 256, 16
    $region45: #{hydranet_forward.1} parent=1 // pred_fallthru
      _
    // Predicated region
    $region46: #{hydranet_forward.1} parent=1 // pred_check
      _
    $region47: #{hydranet_forward.1} parent=1 // pred_check_branch
      %136 = sbr.rel (0) target = $region49
    $region48: #{hydranet_forward.1} parent=1 // pred_region
      %138 = vsyncadd [#allocation14], 0
      %s139 = sshll.u32 %s11, 4
      %s140 = int_to_ptr.hbm [resolvable:$true] %s139
      %s141 = sshll.u32 [#allocation15], 4
      %s142 = int_to_ptr.vmem [resolvable:$true] %s141
      %147 = dma.hbm_to_vmem [thread:$0]  %s140, 256, %s142, [#allocation14], 64, 64, 4
    $region49: #{hydranet_forward.1} parent=1 // pred_fallthru
      _
    // Predicated region
    $region50: #{hydranet_forward.1} parent=1 // pred_check
      _
    $region51: #{hydranet_forward.1} parent=1 // pred_check_branch
      %149 = sbr.rel (0) target = $region53
    $region52: #{hydranet_forward.1} parent=1 // pred_region
      %151 = vsyncadd [#allocation17], 0
      %s153 = sshll.u32 %s12, 4
      %s154 = int_to_ptr.hbm [resolvable:$true] %s153
      %s155 = sshll.u32 [#allocation16], 4
      %s156 = int_to_ptr.vmem [resolvable:$true] %s155
      %158 = dma.hbm_to_vmem [thread:$0]  %s154, 64, %s156, [#allocation17]
    $region53: #{hydranet_forward.1} parent=1 // pred_fallthru
      _
    // Predicated region
    $region54: #{hydranet_forward.1} parent=1 // pred_check
      _
    $region55: #{hydranet_forward.1} parent=1 // pred_check_branch
      %160 = sbr.rel (0) target = $region57
    $region56: #{hydranet_forward.1} parent=1 // pred_region
      _
    $region57: #{hydranet_forward.1} parent=1 // pred_fallthru
      _
    // Predicated region
    $region58: #{hydranet_forward.1} parent=1 // pred_check
      _
    $region59: #{hydranet_forward.1} parent=1 // pred_check_branch
      %162 = sbr.rel (0) target = $region61
    $region60: #{hydranet_forward.1} parent=1 // pred_region
      _
    $region61: #{hydranet_forward.1} parent=1 // pred_fallthru
      _
    // Predicated region
    $region62: #{hydranet_forward.1} parent=1 // pred_check
      _
    $region63: #{hydranet_forward.1} parent=1 // pred_check_branch
      %164 = sbr.rel (0) target = $region65
    $region64: #{hydranet_forward.1} parent=1 // pred_region
      %166 = vsyncadd [#allocation17], 0
      %s167 = sshll.u32 %s15, 4
      %s168 = int_to_ptr.hbm [resolvable:$true] %s167
      %s169 = sshll.u32 [#allocation18], 4
      %s170 = int_to_ptr.vmem [resolvable:$true] %s169
      %175 = dma.hbm_to_vmem [thread:$0]  %s168, 4096, %s170, [#allocation17], 64, 64, 4
    $region65: #{hydranet_forward.1} parent=1 // pred_fallthru
      _
    // Predicated region
    $region66: #{hydranet_forward.1} parent=1 // pred_check
      _
    $region67: #{hydranet_forward.1} parent=1 // pred_check_branch
      %177 = sbr.rel (0) target = $region69
    $region68: #{hydranet_forward.1} parent=1 // pred_region
      %179 = dma.done [#allocation3], 32
    $region69: #{hydranet_forward.1} parent=1 // pred_fallthru
      _
    // Predicated region
    $region70: #{hydranet_forward.1} parent=1 // pred_check
      _
    $region71: #{hydranet_forward.1} parent=1 // pred_check_branch
      %181 = sbr.rel (0) target = $region73
    $region72: #{hydranet_forward.1} parent=1 // pred_region
      %183 = dma.done [#allocation5], 128
    $region73: #{hydranet_forward.1} parent=1 // pred_fallthru
      _
    // Predicated region
    $region74: #{hydranet_forward.1} parent=1 // pred_check
      _
    $region75: #{hydranet_forward.1} parent=1 // pred_check_branch
      %185 = sbr.rel (0) target = $region77
    $region76: #{hydranet_forward.1} parent=1 // pred_region
      %187 = dma.done [#allocation5], 256
    $region77: #{hydranet_forward.1} parent=1 // pred_fallthru
      _
    // Predicated region
    $region78: #{hydranet_forward.1} parent=1 // pred_check
      _
    $region79: #{hydranet_forward.1} parent=1 // pred_check_branch
      %189 = sbr.rel (0) target = $region81
    $region80: #{hydranet_forward.1} parent=1 // pred_region
      %191 = dma.done [#allocation8], 512
    $region81: #{hydranet_forward.1} parent=1 // pred_fallthru
      _
    // Predicated region
    $region82: #{hydranet_forward.1} parent=1 // pred_check
      _
    $region83: #{hydranet_forward.1} parent=1 // pred_check_branch
      %193 = sbr.rel (0) target = $region85
    $region84: #{hydranet_forward.1} parent=1 // pred_region
      %195 = dma.done [#allocation8], 7680
    $region85: #{hydranet_forward.1} parent=1 // pred_fallthru
      _
    // Predicated region
    $region86: #{hydranet_forward.1} parent=1 // pred_check
      _
    $region87: #{hydranet_forward.1} parent=1 // pred_check_branch
      %197 = sbr.rel (0) target = $region89
    $region88: #{hydranet_forward.1} parent=1 // pred_region
      %199 = dma.done [#allocation11], 512
    $region89: #{hydranet_forward.1} parent=1 // pred_fallthru
      _
    // Predicated region
    $region90: #{hydranet_forward.1} parent=1 // pred_check
      _
    $region91: #{hydranet_forward.1} parent=1 // pred_check_branch
      %201 = sbr.rel (0) target = $region93
    $region92: #{hydranet_forward.1} parent=1 // pred_region
      %203 = dma.done [#allocation11], 65536
    $region93: #{hydranet_forward.1} parent=1 // pred_fallthru
      _
    // Predicated region
    $region94: #{hydranet_forward.1} parent=1 // pred_check
      _
    $region95: #{hydranet_forward.1} parent=1 // pred_check_branch
      %205 = sbr.rel (0) target = $region97
    $region96: #{hydranet_forward.1} parent=1 // pred_region
      %207 = dma.done [#allocation14], 4096
    $region97: #{hydranet_forward.1} parent=1 // pred_fallthru
      _
    // Predicated region
    $region98: #{hydranet_forward.1} parent=1 // pred_check
      _
    $region99: #{hydranet_forward.1} parent=1 // pred_check_branch
      %209 = sbr.rel (0) target = $region101
    $region100: #{hydranet_forward.1} parent=1 // pred_region
      %211 = dma.done [#allocation14], 256
    $region101: #{hydranet_forward.1} parent=1 // pred_fallthru
      _
    // Predicated region
    $region102: #{hydranet_forward.1} parent=1 // pred_check
      _
    $region103: #{hydranet_forward.1} parent=1 // pred_check_branch
      %213 = sbr.rel (0) target = $region105
    $region104: #{hydranet_forward.1} parent=1 // pred_region
      %215 = dma.done [#allocation17], 64
    $region105: #{hydranet_forward.1} parent=1 // pred_fallthru
      _
    // Predicated region
    $region106: #{hydranet_forward.1} parent=1 // pred_check
      _
    $region107: #{hydranet_forward.1} parent=1 // pred_check_branch
      %217 = sbr.rel (0) target = $region109
    $region108: #{hydranet_forward.1} parent=1 // pred_region
      %219 = dma.done [#allocation17], 4096
    $region109: #{hydranet_forward.1} parent=1 // pred_fallthru
      _
    %v221 = vld [vmem:[%s0] sm:$0xff]
    %v222 = vld [vmem:[%s0 + $0x8] sm:$0xff]
    %v223 = vld [vmem:[%s0 + $0x10] sm:$0xff]
    %v224 = vld [vmem:[%s0 + $0x18] sm:$0xff]
    %v225 = vld [vmem:[%s0 + $0x20] sm:$0xff]
    %v226 = vld [vmem:[%s0 + $0x28] sm:$0xff]
    %v227 = vld [vmem:[%s0 + $0x30] sm:$0xff]
    %v228 = vld [vmem:[%s0 + $0x38] sm:$0xff]
    %v229 = vld [vmem:[%s0 + $0x40] sm:$0xff]
    %v230 = vld [vmem:[%s0 + $0x48] sm:$0xff]
    %v231 = vld [vmem:[%s0 + $0x50] sm:$0xff]
    %v232 = vld [vmem:[%s0 + $0x58] sm:$0xff]
    %v233 = vld [vmem:[%s0 + $0x60] sm:$0xff]
    %v234 = vld [vmem:[%s0 + $0x68] sm:$0xff]
    %v235 = vld [vmem:[%s0 + $0x70] sm:$0xff]
    %v236 = vld [vmem:[%s0 + $0x78] sm:$0xff]
    %v237 = vld [vmem:[%s0 + $0x80] sm:$0xff]
    %v238 = vld [vmem:[%s0 + $0x88] sm:$0xff]
    %v239 = vld [vmem:[%s0 + $0x90] sm:$0xff]
    %v240 = vld [vmem:[%s0 + $0x98] sm:$0xff]
    %v241 = vld [vmem:[%s0 + $0xa0] sm:$0xff]
    %v242 = vld [vmem:[%s0 + $0xa8] sm:$0xff]
    %v243 = vld [vmem:[%s0 + $0xb0] sm:$0xff]
    %v244 = vld [vmem:[%s0 + $0xb8] sm:$0xff]
    %v245 = vld [vmem:[%s0 + $0xc0] sm:$0xff]
    %v246 = vld [vmem:[%s0 + $0xc8] sm:$0xff]
    %v247 = vld [vmem:[%s0 + $0xd0] sm:$0xff]
    %v248 = vld [vmem:[%s0 + $0xd8] sm:$0xff]
    %v249 = vld [vmem:[%s0 + $0xe0] sm:$0xff]
    %v250 = vld [vmem:[%s0 + $0xe8] sm:$0xff]
    %v251 = vld [vmem:[%s0 + $0xf0] sm:$0xff]
    %v252 = vld [vmem:[%s0 + $0xf8] sm:$0xff]
    %v253 = vld [vmem:[%s0 + $0x100] sm:$0xff]
    %v254 = vld [vmem:[%s0 + $0x108] sm:$0xff]
    %v255 = vld [vmem:[%s0 + $0x110] sm:$0xff]
    %v256 = vld [vmem:[%s0 + $0x118] sm:$0xff]
    %v257 = vld [vmem:[%s0 + $0x120] sm:$0xff]
    %v258 = vld [vmem:[%s0 + $0x128] sm:$0xff]
    %v259 = vld [vmem:[%s0 + $0x130] sm:$0xff]
    %v260 = vld [vmem:[%s0 + $0x138] sm:$0xff]
    %v261 = vld [vmem:[%s0 + $0x140] sm:$0xff]
    %v262 = vld [vmem:[%s0 + $0x148] sm:$0xff]
    %v263 = vld [vmem:[%s0 + $0x150] sm:$0xff]
    %v264 = vld [vmem:[%s0 + $0x158] sm:$0xff]
    %v265 = vld [vmem:[%s0 + $0x160] sm:$0xff]
    %v266 = vld [vmem:[%s0 + $0x168] sm:$0xff]
    %v267 = vld [vmem:[%s0 + $0x170] sm:$0xff]
    %v268 = vld [vmem:[%s0 + $0x178] sm:$0xff]
    %v269 = vld [vmem:[%s0 + $0x180] sm:$0xff]
    %v270 = vld [vmem:[%s0 + $0x188] sm:$0xff]
    %v271 = vld [vmem:[%s0 + $0x190] sm:$0xff]
    %v272 = vld [vmem:[%s0 + $0x198] sm:$0xff]
    %v273 = vld [vmem:[%s0 + $0x1a0] sm:$0xff]
    %v274 = vld [vmem:[%s0 + $0x1a8] sm:$0xff]
    %v275 = vld [vmem:[%s0 + $0x1b0] sm:$0xff]
    %v276 = vld [vmem:[%s0 + $0x1b8] sm:$0xff]
    %v277 = vld [vmem:[%s0 + $0x1c0] sm:$0xff]
    %v278 = vld [vmem:[%s0 + $0x1c8] sm:$0xff]
    %v279 = vld [vmem:[%s0 + $0x1d0] sm:$0xff]
    %v280 = vld [vmem:[%s0 + $0x1d8] sm:$0xff]
    %v281 = vld [vmem:[%s0 + $0x1e0] sm:$0xff]
    %v282 = vld [vmem:[%s0 + $0x1e8] sm:$0xff]
    %v283 = vld [vmem:[%s0 + $0x1f0] sm:$0xff]
    %v284 = vld [vmem:[%s0 + $0x1f8] sm:$0xff]
    %v285 = vld [vmem:[%s0 + $0x200] sm:$0xff]
    %v286 = vld [vmem:[%s0 + $0x208] sm:$0xff]
    %v287 = vld [vmem:[%s0 + $0x210] sm:$0xff]
    %v288 = vld [vmem:[%s0 + $0x218] sm:$0xff]
    %v289 = vld [vmem:[%s0 + $0x220] sm:$0xff]
    %v290 = vld [vmem:[%s0 + $0x228] sm:$0xff]
    %v291 = vld [vmem:[%s0 + $0x230] sm:$0xff]
    %v292 = vld [vmem:[%s0 + $0x238] sm:$0xff]
    %v293 = vld [vmem:[%s0 + $0x240] sm:$0xff]
    %v294 = vld [vmem:[%s0 + $0x248] sm:$0xff]
    %v295 = vld [vmem:[%s0 + $0x250] sm:$0xff]
    %v296 = vld [vmem:[%s0 + $0x258] sm:$0xff]
    %v297 = vld [vmem:[%s0 + $0x260] sm:$0xff]
    %v298 = vld [vmem:[%s0 + $0x268] sm:$0xff]
    %v299 = vld [vmem:[%s0 + $0x270] sm:$0xff]
    %v300 = vld [vmem:[%s0 + $0x278] sm:$0xff]
    %v301 = vld [vmem:[%s0 + $0x280] sm:$0xff]
    %v302 = vld [vmem:[%s0 + $0x288] sm:$0xff]
    %v303 = vld [vmem:[%s0 + $0x290] sm:$0xff]
    %v304 = vld [vmem:[%s0 + $0x298] sm:$0xff]
    %v305 = vld [vmem:[%s0 + $0x2a0] sm:$0xff]
    %v306 = vld [vmem:[%s0 + $0x2a8] sm:$0xff]
    %v307 = vld [vmem:[%s0 + $0x2b0] sm:$0xff]
    %v308 = vld [vmem:[%s0 + $0x2b8] sm:$0xff]
    %v309 = vld [vmem:[%s0 + $0x2c0] sm:$0xff]
    %v310 = vld [vmem:[%s0 + $0x2c8] sm:$0xff]
    %v311 = vld [vmem:[%s0 + $0x2d0] sm:$0xff]
    %v312 = vld [vmem:[%s0 + $0x2d8] sm:$0xff]
    %v313 = vld [vmem:[%s0 + $0x2e0] sm:$0xff]
    %v314 = vld [vmem:[%s0 + $0x2e8] sm:$0xff]
    %v315 = vld [vmem:[%s0 + $0x2f0] sm:$0xff]
    %v316 = vld [vmem:[%s0 + $0x2f8] sm:$0xff]
    %v317 = vld [vmem:[%s0 + $0x300] sm:$0xff]
    %v318 = vld [vmem:[%s0 + $0x308] sm:$0xff]
    %v319 = vld [vmem:[%s0 + $0x310] sm:$0xff]
    %v320 = vld [vmem:[%s0 + $0x318] sm:$0xff]
    %v321 = vld [vmem:[%s0 + $0x320] sm:$0xff]
    %v322 = vld [vmem:[%s0 + $0x328] sm:$0xff]
    %v323 = vld [vmem:[%s0 + $0x330] sm:$0xff]
    %v324 = vld [vmem:[%s0 + $0x338] sm:$0xff]
    %v325 = vld [vmem:[%s0 + $0x340] sm:$0xff]
    %v326 = vld [vmem:[%s0 + $0x348] sm:$0xff]
    %v327 = vld [vmem:[%s0 + $0x350] sm:$0xff]
    %v328 = vld [vmem:[%s0 + $0x358] sm:$0xff]
    %v329 = vld [vmem:[%s0 + $0x360] sm:$0xff]
    %v330 = vld [vmem:[%s0 + $0x368] sm:$0xff]
    %v331 = vld [vmem:[%s0 + $0x370] sm:$0xff]
    %v332 = vld [vmem:[%s0 + $0x378] sm:$0xff]
    %v333 = vld [vmem:[%s0 + $0x380] sm:$0xff]
    %v334 = vld [vmem:[%s0 + $0x388] sm:$0xff]
    %v335 = vld [vmem:[%s0 + $0x390] sm:$0xff]
    %v336 = vld [vmem:[%s0 + $0x398] sm:$0xff]
    %v337 = vld [vmem:[%s0 + $0x3a0] sm:$0xff]
    %v338 = vld [vmem:[%s0 + $0x3a8] sm:$0xff]
    %v339 = vld [vmem:[%s0 + $0x3b0] sm:$0xff]
    %v340 = vld [vmem:[%s0 + $0x3b8] sm:$0xff]
    %v341 = vld [vmem:[%s0 + $0x3c0] sm:$0xff]
    %v342 = vld [vmem:[%s0 + $0x3c8] sm:$0xff]
    %v343 = vld [vmem:[%s0 + $0x3d0] sm:$0xff]
    %v344 = vld [vmem:[%s0 + $0x3d8] sm:$0xff]
    %v345 = vld [vmem:[%s0 + $0x3e0] sm:$0xff]
    %v346 = vld [vmem:[%s0 + $0x3e8] sm:$0xff]
    %v347 = vld [vmem:[%s0 + $0x3f0] sm:$0xff]
    %v348 = vld [vmem:[%s0 + $0x3f8] sm:$0xff]
    %v349 = vld [vmem:[%s0 + $0x400] sm:$0xff]
    %v350 = vld [vmem:[%s0 + $0x408] sm:$0xff]
    %v351 = vld [vmem:[%s0 + $0x410] sm:$0xff]
    %v352 = vld [vmem:[%s0 + $0x418] sm:$0xff]
    %v353 = vld [vmem:[%s0 + $0x420] sm:$0xff]
    %v354 = vld [vmem:[%s0 + $0x428] sm:$0xff]
    %v355 = vld [vmem:[%s0 + $0x430] sm:$0xff]
    %v356 = vld [vmem:[%s0 + $0x438] sm:$0xff]
    %v357 = vld [vmem:[%s0 + $0x440] sm:$0xff]
    %v358 = vld [vmem:[%s0 + $0x448] sm:$0xff]
    %v359 = vld [vmem:[%s0 + $0x450] sm:$0xff]
    %v360 = vld [vmem:[%s0 + $0x458] sm:$0xff]
    %v361 = vld [vmem:[%s0 + $0x460] sm:$0xff]
    %v362 = vld [vmem:[%s0 + $0x468] sm:$0xff]
    %v363 = vld [vmem:[%s0 + $0x470] sm:$0xff]
    %v364 = vld [vmem:[%s0 + $0x478] sm:$0xff]
    %v365 = vld [vmem:[%s0 + $0x480] sm:$0xff]
    %v366 = vld [vmem:[%s0 + $0x488] sm:$0xff]
    %v367 = vld [vmem:[%s0 + $0x490] sm:$0xff]
    %v368 = vld [vmem:[%s0 + $0x498] sm:$0xff]
    %v369 = vld [vmem:[%s0 + $0x4a0] sm:$0xff]
    %v370 = vld [vmem:[%s0 + $0x4a8] sm:$0xff]
    %v371 = vld [vmem:[%s0 + $0x4b0] sm:$0xff]
    %v372 = vld [vmem:[%s0 + $0x4b8] sm:$0xff]
    %v373 = vld [vmem:[%s0 + $0x4c0] sm:$0xff]
    %v374 = vld [vmem:[%s0 + $0x4c8] sm:$0xff]
    %v375 = vld [vmem:[%s0 + $0x4d0] sm:$0xff]
    %v376 = vld [vmem:[%s0 + $0x4d8] sm:$0xff]
    %v377 = vld [vmem:[%s0 + $0x4e0] sm:$0xff]
    %v378 = vld [vmem:[%s0 + $0x4e8] sm:$0xff]
    %v379 = vld [vmem:[%s0 + $0x4f0] sm:$0xff]
    %v380 = vld [vmem:[%s0 + $0x4f8] sm:$0xff]
    %v381 = vld [vmem:[%s0 + $0x500] sm:$0xff]
    %v382 = vld [vmem:[%s0 + $0x508] sm:$0xff]
    %v383 = vld [vmem:[%s0 + $0x510] sm:$0xff]
    %v384 = vld [vmem:[%s0 + $0x518] sm:$0xff]
    %v385 = vld [vmem:[%s0 + $0x520] sm:$0xff]
    %v386 = vld [vmem:[%s0 + $0x528] sm:$0xff]
    %v387 = vld [vmem:[%s0 + $0x530] sm:$0xff]
    %v388 = vld [vmem:[%s0 + $0x538] sm:$0xff]
    %v389 = vld [vmem:[%s0 + $0x540] sm:$0xff]
    %v390 = vld [vmem:[%s0 + $0x548] sm:$0xff]
    %v391 = vld [vmem:[%s0 + $0x550] sm:$0xff]
    %v392 = vld [vmem:[%s0 + $0x558] sm:$0xff]
    %v393 = vld [vmem:[%s0 + $0x560] sm:$0xff]
    %v394 = vld [vmem:[%s0 + $0x568] sm:$0xff]
    %v395 = vld [vmem:[%s0 + $0x570] sm:$0xff]
    %v396 = vld [vmem:[%s0 + $0x578] sm:$0xff]
    %v397 = vld [vmem:[%s0 + $0x580] sm:$0xff]
    %v398 = vld [vmem:[%s0 + $0x588] sm:$0xff]
    %v399 = vld [vmem:[%s0 + $0x590] sm:$0xff]
    %v400 = vld [vmem:[%s0 + $0x598] sm:$0xff]
    %v401 = vld [vmem:[%s0 + $0x5a0] sm:$0xff]
    %v402 = vld [vmem:[%s0 + $0x5a8] sm:$0xff]
    %v403 = vld [vmem:[%s0 + $0x5b0] sm:$0xff]
    %v404 = vld [vmem:[%s0 + $0x5b8] sm:$0xff]
    %v405 = vld [vmem:[%s0 + $0x5c0] sm:$0xff]
    %v406 = vld [vmem:[%s0 + $0x5c8] sm:$0xff]
    %v407 = vld [vmem:[%s0 + $0x5d0] sm:$0xff]
    %v408 = vld [vmem:[%s0 + $0x5d8] sm:$0xff]
    %v409 = vld [vmem:[%s0 + $0x5e0] sm:$0xff]
    %v410 = vld [vmem:[%s0 + $0x5e8] sm:$0xff]
    %v411 = vld [vmem:[%s0 + $0x5f0] sm:$0xff]
    %v412 = vld [vmem:[%s0 + $0x5f8] sm:$0xff]
    %v413 = vld [vmem:[%s0 + $0x600] sm:$0xff]
    %v414 = vld [vmem:[%s0 + $0x608] sm:$0xff]
    %v415 = vld [vmem:[%s0 + $0x610] sm:$0xff]
    %v416 = vld [vmem:[%s0 + $0x618] sm:$0xff]
    %v417 = vld [vmem:[%s0 + $0x620] sm:$0xff]
    %v418 = vld [vmem:[%s0 + $0x628] sm:$0xff]
    %v419 = vld [vmem:[%s0 + $0x630] sm:$0xff]
    %v420 = vld [vmem:[%s0 + $0x638] sm:$0xff]
    %v421 = vld [vmem:[%s0 + $0x640] sm:$0xff]
    %v422 = vld [vmem:[%s0 + $0x648] sm:$0xff]
    %v423 = vld [vmem:[%s0 + $0x650] sm:$0xff]
    %v424 = vld [vmem:[%s0 + $0x658] sm:$0xff]
    %v425 = vld [vmem:[%s0 + $0x660] sm:$0xff]
    %v426 = vld [vmem:[%s0 + $0x668] sm:$0xff]
    %v427 = vld [vmem:[%s0 + $0x670] sm:$0xff]
    %v428 = vld [vmem:[%s0 + $0x678] sm:$0xff]
    %v429 = vld [vmem:[%s0 + $0x680] sm:$0xff]
    %v430 = vld [vmem:[%s0 + $0x688] sm:$0xff]
    %v431 = vld [vmem:[%s0 + $0x690] sm:$0xff]
    %v432 = vld [vmem:[%s0 + $0x698] sm:$0xff]
    %v433 = vld [vmem:[%s0 + $0x6a0] sm:$0xff]
    %v434 = vld [vmem:[%s0 + $0x6a8] sm:$0xff]
    %v435 = vld [vmem:[%s0 + $0x6b0] sm:$0xff]
    %v436 = vld [vmem:[%s0 + $0x6b8] sm:$0xff]
    %v437 = vld [vmem:[%s0 + $0x6c0] sm:$0xff]
    %v438 = vld [vmem:[%s0 + $0x6c8] sm:$0xff]
    %v439 = vld [vmem:[%s0 + $0x6d0] sm:$0xff]
    %v440 = vld [vmem:[%s0 + $0x6d8] sm:$0xff]
    %v441 = vld [vmem:[%s0 + $0x6e0] sm:$0xff]
    %v442 = vld [vmem:[%s0 + $0x6e8] sm:$0xff]
    %v443 = vld [vmem:[%s0 + $0x6f0] sm:$0xff]
    %v444 = vld [vmem:[%s0 + $0x6f8] sm:$0xff]
    %v445 = vld [vmem:[%s0 + $0x700] sm:$0xff]
    %v446 = vld [vmem:[%s0 + $0x708] sm:$0xff]
    %v447 = vld [vmem:[%s0 + $0x710] sm:$0xff]
    %v448 = vld [vmem:[%s0 + $0x718] sm:$0xff]
    %v449 = vld [vmem:[%s0 + $0x720] sm:$0xff]
    %v450 = vld [vmem:[%s0 + $0x728] sm:$0xff]
    %v451 = vld [vmem:[%s0 + $0x730] sm:$0xff]
    %v452 = vld [vmem:[%s0 + $0x738] sm:$0xff]
    %v453 = vld [vmem:[%s0 + $0x740] sm:$0xff]
    %v454 = vld [vmem:[%s0 + $0x748] sm:$0xff]
    %v455 = vld [vmem:[%s0 + $0x750] sm:$0xff]
    %v456 = vld [vmem:[%s0 + $0x758] sm:$0xff]
    %v457 = vld [vmem:[%s0 + $0x760] sm:$0xff]
    %v458 = vld [vmem:[%s0 + $0x768] sm:$0xff]
    %v459 = vld [vmem:[%s0 + $0x770] sm:$0xff]
    %v460 = vld [vmem:[%s0 + $0x778] sm:$0xff]
    %v461 = vld [vmem:[%s0 + $0x780] sm:$0xff]
    %v462 = vld [vmem:[%s0 + $0x788] sm:$0xff]
    %v463 = vld [vmem:[%s0 + $0x790] sm:$0xff]
    %v464 = vld [vmem:[%s0 + $0x798] sm:$0xff]
    %v465 = vld [vmem:[%s0 + $0x7a0] sm:$0xff]
    %v466 = vld [vmem:[%s0 + $0x7a8] sm:$0xff]
    %v467 = vld [vmem:[%s0 + $0x7b0] sm:$0xff]
    %v468 = vld [vmem:[%s0 + $0x7b8] sm:$0xff]
    %v469 = vld [vmem:[%s0 + $0x7c0] sm:$0xff]
    %v470 = vld [vmem:[%s0 + $0x7c8] sm:$0xff]
    %v471 = vld [vmem:[%s0 + $0x7d0] sm:$0xff]
    %v472 = vld [vmem:[%s0 + $0x7d8] sm:$0xff]
    %v473 = vld [vmem:[%s0 + $0x7e0] sm:$0xff]
    %v474 = vld [vmem:[%s0 + $0x7e8] sm:$0xff]
    %v475 = vld [vmem:[%s0 + $0x7f0] sm:$0xff]
    %v476 = vld [vmem:[%s0 + $0x7f8] sm:$0xff]
    %v477 = vpack.c.bf16 %v222, %v221
    %v478 = vpack.c.bf16 %v224, %v223
    %v479 = vpack.c.bf16 %v226, %v225
    %v480 = vpack.c.bf16 %v228, %v227
    %v481 = vpack.c.bf16 %v230, %v229
    %v482 = vpack.c.bf16 %v232, %v231
    %v483 = vpack.c.bf16 %v234, %v233
    %v484 = vpack.c.bf16 %v236, %v235
    %v485 = vpack.c.bf16 %v238, %v237
    %v486 = vpack.c.bf16 %v240, %v239
    %v487 = vpack.c.bf16 %v242, %v241
    %v488 = vpack.c.bf16 %v244, %v243
    %v489 = vpack.c.bf16 %v246, %v245
    %v490 = vpack.c.bf16 %v248, %v247
    %v491 = vpack.c.bf16 %v250, %v249
    %v492 = vpack.c.bf16 %v252, %v251
    %v493 = vpack.c.bf16 %v254, %v253
    %v494 = vpack.c.bf16 %v256, %v255
    %v495 = vpack.c.bf16 %v258, %v257
    %v496 = vpack.c.bf16 %v260, %v259
    %v497 = vpack.c.bf16 %v262, %v261
    %v498 = vpack.c.bf16 %v264, %v263
    %v499 = vpack.c.bf16 %v266, %v265
    %v500 = vpack.c.bf16 %v268, %v267
    %v501 = vpack.c.bf16 %v270, %v269
    %v502 = vpack.c.bf16 %v272, %v271
    %v503 = vpack.c.bf16 %v274, %v273
    %v504 = vpack.c.bf16 %v276, %v275
    %v505 = vpack.c.bf16 %v278, %v277
    %v506 = vpack.c.bf16 %v280, %v279
    %v507 = vpack.c.bf16 %v282, %v281
    %v508 = vpack.c.bf16 %v284, %v283
    %v509 = vpack.c.bf16 %v286, %v285
    %v510 = vpack.c.bf16 %v288, %v287
    %v511 = vpack.c.bf16 %v290, %v289
    %v512 = vpack.c.bf16 %v292, %v291
    %v513 = vpack.c.bf16 %v294, %v293
    %v514 = vpack.c.bf16 %v296, %v295
    %v515 = vpack.c.bf16 %v298, %v297
    %v516 = vpack.c.bf16 %v300, %v299
    %v517 = vpack.c.bf16 %v302, %v301
    %v518 = vpack.c.bf16 %v304, %v303
    %v519 = vpack.c.bf16 %v306, %v305
    %v520 = vpack.c.bf16 %v308, %v307
    %v521 = vpack.c.bf16 %v310, %v309
    %v522 = vpack.c.bf16 %v312, %v311
    %v523 = vpack.c.bf16 %v314, %v313
    %v524 = vpack.c.bf16 %v316, %v315
    %v525 = vpack.c.bf16 %v318, %v317
    %v526 = vpack.c.bf16 %v320, %v319
    %v527 = vpack.c.bf16 %v322, %v321
    %v528 = vpack.c.bf16 %v324, %v323
    %v529 = vpack.c.bf16 %v326, %v325
    %v530 = vpack.c.bf16 %v328, %v327
    %v531 = vpack.c.bf16 %v330, %v329
    %v532 = vpack.c.bf16 %v332, %v331
    %v533 = vpack.c.bf16 %v334, %v333
    %v534 = vpack.c.bf16 %v336, %v335
    %v535 = vpack.c.bf16 %v338, %v337
    %v536 = vpack.c.bf16 %v340, %v339
    %v537 = vpack.c.bf16 %v342, %v341
    %v538 = vpack.c.bf16 %v344, %v343
    %v539 = vpack.c.bf16 %v346, %v345
    %v540 = vpack.c.bf16 %v348, %v347
    %v541 = vpack.c.bf16 %v350, %v349
    %v542 = vpack.c.bf16 %v352, %v351
    %v543 = vpack.c.bf16 %v354, %v353
    %v544 = vpack.c.bf16 %v356, %v355
    %v545 = vpack.c.bf16 %v358, %v357
    %v546 = vpack.c.bf16 %v360, %v359
    %v547 = vpack.c.bf16 %v362, %v361
    %v548 = vpack.c.bf16 %v364, %v363
    %v549 = vpack.c.bf16 %v366, %v365
    %v550 = vpack.c.bf16 %v368, %v367
    %v551 = vpack.c.bf16 %v370, %v369
    %v552 = vpack.c.bf16 %v372, %v371
    %v553 = vpack.c.bf16 %v374, %v373
    %v554 = vpack.c.bf16 %v376, %v375
    %v555 = vpack.c.bf16 %v378, %v377
    %v556 = vpack.c.bf16 %v380, %v379
    %v557 = vpack.c.bf16 %v382, %v381
    %v558 = vpack.c.bf16 %v384, %v383
    %v559 = vpack.c.bf16 %v386, %v385
    %v560 = vpack.c.bf16 %v388, %v387
    %v561 = vpack.c.bf16 %v390, %v389
    %v562 = vpack.c.bf16 %v392, %v391
    %v563 = vpack.c.bf16 %v394, %v393
    %v564 = vpack.c.bf16 %v396, %v395
    %v565 = vpack.c.bf16 %v398, %v397
    %v566 = vpack.c.bf16 %v400, %v399
    %v567 = vpack.c.bf16 %v402, %v401
    %v568 = vpack.c.bf16 %v404, %v403
    %v569 = vpack.c.bf16 %v406, %v405
    %v570 = vpack.c.bf16 %v408, %v407
    %v571 = vpack.c.bf16 %v410, %v409
    %v572 = vpack.c.bf16 %v412, %v411
    %v573 = vpack.c.bf16 %v414, %v413
    %v574 = vpack.c.bf16 %v416, %v415
    %v575 = vpack.c.bf16 %v418, %v417
    %v576 = vpack.c.bf16 %v420, %v419
    %v577 = vpack.c.bf16 %v422, %v421
    %v578 = vpack.c.bf16 %v424, %v423
    %v579 = vpack.c.bf16 %v426, %v425
    %v580 = vpack.c.bf16 %v428, %v427
    %v581 = vpack.c.bf16 %v430, %v429
    %v582 = vpack.c.bf16 %v432, %v431
    %v583 = vpack.c.bf16 %v434, %v433
    %v584 = vpack.c.bf16 %v436, %v435
    %v585 = vpack.c.bf16 %v438, %v437
    %v586 = vpack.c.bf16 %v440, %v439
    %v587 = vpack.c.bf16 %v442, %v441
    %v588 = vpack.c.bf16 %v444, %v443
    %v589 = vpack.c.bf16 %v446, %v445
    %v590 = vpack.c.bf16 %v448, %v447
    %v591 = vpack.c.bf16 %v450, %v449
    %v592 = vpack.c.bf16 %v452, %v451
    %v593 = vpack.c.bf16 %v454, %v453
    %v594 = vpack.c.bf16 %v456, %v455
    %v595 = vpack.c.bf16 %v458, %v457
    %v596 = vpack.c.bf16 %v460, %v459
    %v597 = vpack.c.bf16 %v462, %v461
    %v598 = vpack.c.bf16 %v464, %v463
    %v599 = vpack.c.bf16 %v466, %v465
    %v600 = vpack.c.bf16 %v468, %v467
    %v601 = vpack.c.bf16 %v470, %v469
    %v602 = vpack.c.bf16 %v472, %v471
    %v603 = vpack.c.bf16 %v474, %v473
    %v604 = vpack.c.bf16 %v476, %v475
    %v605 = vld [vmem:[#allocation2] sm:$0x3]
    %v606 = vld [vmem:[#allocation10] ss:$0 sm:$0xff]
    %vm607 = vcmask 23552
    %v609 = vsel %vm607, %v477, 0
    %v612 = vsel %vm607, %v478, 0
    %v615 = vsel %vm607, %v479, 0
    %v618 = vsel %vm607, %v480, 0
    %v621 = vsel %vm607, %v481, 0
    %v624 = vsel %vm607, %v482, 0
    %v627 = vsel %vm607, %v483, 0
    %v630 = vsel %vm607, %v484, 0
    %v633 = vsel %vm607, %v485, 0
    %v636 = vsel %vm607, %v486, 0
    %v639 = vsel %vm607, %v487, 0
    %v642 = vsel %vm607, %v488, 0
    %v645 = vsel %vm607, %v489, 0
    %v648 = vsel %vm607, %v490, 0
    %v651 = vsel %vm607, %v491, 0
    %v654 = vsel %vm607, %v492, 0
    %v657 = vsel %vm607, %v493, 0
    %v660 = vsel %vm607, %v494, 0
    %v663 = vsel %vm607, %v495, 0
    %v666 = vsel %vm607, %v496, 0
    %v669 = vsel %vm607, %v497, 0
    %v672 = vsel %vm607, %v498, 0
    %v675 = vsel %vm607, %v499, 0
    %v678 = vsel %vm607, %v500, 0
    %v681 = vsel %vm607, %v501, 0
    %v684 = vsel %vm607, %v502, 0
    %v687 = vsel %vm607, %v503, 0
    %v690 = vsel %vm607, %v504, 0
    %v693 = vsel %vm607, %v505, 0
    %v696 = vsel %vm607, %v506, 0
    %v699 = vsel %vm607, %v507, 0
    %v702 = vsel %vm607, %v508, 0
    %v705 = vsel %vm607, %v509, 0
    %v708 = vsel %vm607, %v510, 0
    %v711 = vsel %vm607, %v511, 0
    %v714 = vsel %vm607, %v512, 0
    %v717 = vsel %vm607, %v513, 0
    %v720 = vsel %vm607, %v514, 0
    %v723 = vsel %vm607, %v515, 0
    %v726 = vsel %vm607, %v516, 0
    %v729 = vsel %vm607, %v517, 0
    %v732 = vsel %vm607, %v518, 0
    %v735 = vsel %vm607, %v519, 0
    %v738 = vsel %vm607, %v520, 0
    %v741 = vsel %vm607, %v521, 0
    %v744 = vsel %vm607, %v522, 0
    %v747 = vsel %vm607, %v523, 0
    %v750 = vsel %vm607, %v524, 0
    %v753 = vsel %vm607, %v525, 0
    %v756 = vsel %vm607, %v526, 0
    %v759 = vsel %vm607, %v527, 0
    %v762 = vsel %vm607, %v528, 0
    %v765 = vsel %vm607, %v529, 0
    %v768 = vsel %vm607, %v530, 0
    %v771 = vsel %vm607, %v531, 0
    %v774 = vsel %vm607, %v532, 0
    %v777 = vsel %vm607, %v533, 0
    %v780 = vsel %vm607, %v534, 0
    %v783 = vsel %vm607, %v535, 0
    %v786 = vsel %vm607, %v536, 0
    %v789 = vsel %vm607, %v537, 0
    %v792 = vsel %vm607, %v538, 0
    %v795 = vsel %vm607, %v539, 0
    %v798 = vsel %vm607, %v540, 0
    %v801 = vsel %vm607, %v541, 0
    %v804 = vsel %vm607, %v542, 0
    %v807 = vsel %vm607, %v543, 0
    %v810 = vsel %vm607, %v544, 0
    %v813 = vsel %vm607, %v545, 0
    %v816 = vsel %vm607, %v546, 0
    %v819 = vsel %vm607, %v547, 0
    %v822 = vsel %vm607, %v548, 0
    %v825 = vsel %vm607, %v549, 0
    %v828 = vsel %vm607, %v550, 0
    %v831 = vsel %vm607, %v551, 0
    %v834 = vsel %vm607, %v552, 0
    %v837 = vsel %vm607, %v553, 0
    %v840 = vsel %vm607, %v554, 0
    %v843 = vsel %vm607, %v555, 0
    %v846 = vsel %vm607, %v556, 0
    %v849 = vsel %vm607, %v557, 0
    %v852 = vsel %vm607, %v558, 0
    %v855 = vsel %vm607, %v559, 0
    %v858 = vsel %vm607, %v560, 0
    %v861 = vsel %vm607, %v561, 0
    %v864 = vsel %vm607, %v562, 0
    %v867 = vsel %vm607, %v563, 0
    %v870 = vsel %vm607, %v564, 0
    %v873 = vsel %vm607, %v565, 0
    %v876 = vsel %vm607, %v566, 0
    %v879 = vsel %vm607, %v567, 0
    %v882 = vsel %vm607, %v568, 0
    %v885 = vsel %vm607, %v569, 0
    %v888 = vsel %vm607, %v570, 0
    %v891 = vsel %vm607, %v571, 0
    %v894 = vsel %vm607, %v572, 0
    %v897 = vsel %vm607, %v573, 0
    %v900 = vsel %vm607, %v574, 0
    %v903 = vsel %vm607, %v575, 0
    %v906 = vsel %vm607, %v576, 0
    %v909 = vsel %vm607, %v577, 0
    %v912 = vsel %vm607, %v578, 0
    %v915 = vsel %vm607, %v579, 0
    %v918 = vsel %vm607, %v580, 0
    %v921 = vsel %vm607, %v581, 0
    %v924 = vsel %vm607, %v582, 0
    %v927 = vsel %vm607, %v583, 0
    %v930 = vsel %vm607, %v584, 0
    %v933 = vsel %vm607, %v585, 0
    %v936 = vsel %vm607, %v586, 0
    %v939 = vsel %vm607, %v587, 0
    %v942 = vsel %vm607, %v588, 0
    %v945 = vsel %vm607, %v589, 0
    %v948 = vsel %vm607, %v590, 0
    %v951 = vsel %vm607, %v591, 0
    %v954 = vsel %vm607, %v592, 0
    %v957 = vsel %vm607, %v593, 0
    %v960 = vsel %vm607, %v594, 0
    %v963 = vsel %vm607, %v595, 0
    %v966 = vsel %vm607, %v596, 0
    %v969 = vsel %vm607, %v597, 0
    %v972 = vsel %vm607, %v598, 0
    %v975 = vsel %vm607, %v599, 0
    %v978 = vsel %vm607, %v600, 0
    %v981 = vsel %vm607, %v601, 0
    %v984 = vsel %vm607, %v602, 0
    %v987 = vsel %vm607, %v603, 0
    %v990 = vsel %vm607, %v604, 0
    %vm992 = vcmask 1040384
    %vm993 = vcmask 1041408
    %v994 = vsel %vm992, 4294967295, 65535
    %v995 = vsel %vm993, %v994, 0
    %v997 = vand.u32 %v605, %v995
    %999 = vmatpush.bf16.msra.mxu0 0
    %1000 = vmatpush.bf16.msra.mxu0 0
    %1001 = vmatpush.bf16.msra.mxu0 0
    %1002 = vmatpush.bf16.msra.mxu0 0
    %1003 = vmatpush.bf16.msra.mxu0 0
    %1004 = vmatpush.bf16.msra.mxu0 0
    %1005 = vmatpush.bf16.msra.mxu0 0
    %1006 = vmatpush.bf16.msra.mxu0 %v997
    %1007 = vmatmul.bf16.gmra.mxu0 %v609
    %v1008 = vpop.f32.mrf.mxu0
    %v1009 = vadd.f32 %v606, %v1008
    %v1010 = vpop.f32.mrf.mxu0
    %v1011 = vadd.f32 %v606, %v1010
    %1012 = vmatmul.bf16.gmra.mxu0 %v612
    %v1013 = vpop.f32.mrf.mxu0
    %v1014 = vadd.f32 %v606, %v1013
    %v1015 = vpop.f32.mrf.mxu0
    %v1016 = vadd.f32 %v606, %v1015
    %1017 = vmatmul.bf16.gmra.mxu0 %v615
    %v1018 = vpop.f32.mrf.mxu0
    %v1019 = vadd.f32 %v606, %v1018
    %v1020 = vpop.f32.mrf.mxu0
    %v1021 = vadd.f32 %v606, %v1020
    %1022 = vmatmul.bf16.gmra.mxu0 %v618
    %v1023 = vpop.f32.mrf.mxu0
    %v1024 = vadd.f32 %v606, %v1023
    %v1025 = vpop.f32.mrf.mxu0
    %v1026 = vadd.f32 %v606, %v1025
    %1027 = vmatmul.bf16.gmra.mxu0 %v621
    %v1028 = vpop.f32.mrf.mxu0
    %v1029 = vadd.f32 %v606, %v1028
    %v1030 = vpop.f32.mrf.mxu0
    %v1031 = vadd.f32 %v606, %v1030
    %1032 = vmatmul.bf16.gmra.mxu0 %v624
    %v1033 = vpop.f32.mrf.mxu0
    %v1034 = vadd.f32 %v606, %v1033
    %v1035 = vpop.f32.mrf.mxu0
    %v1036 = vadd.f32 %v606, %v1035
    %1037 = vmatmul.bf16.gmra.mxu0 %v627
    %v1038 = vpop.f32.mrf.mxu0
    %v1039 = vadd.f32 %v606, %v1038
    %v1040 = vpop.f32.mrf.mxu0
    %v1041 = vadd.f32 %v606, %v1040
    %1042 = vmatmul.bf16.gmra.mxu0 %v630
    %v1043 = vpop.f32.mrf.mxu0
    %v1044 = vadd.f32 %v606, %v1043
    %v1045 = vpop.f32.mrf.mxu0
    %v1046 = vadd.f32 %v606, %v1045
    %1047 = vmatmul.bf16.gmra.mxu0 %v633
    %v1048 = vpop.f32.mrf.mxu0
    %v1049 = vadd.f32 %v606, %v1048
    %v1050 = vpop.f32.mrf.mxu0
    %v1051 = vadd.f32 %v606, %v1050
    %1052 = vmatmul.bf16.gmra.mxu0 %v636
    %v1053 = vpop.f32.mrf.mxu0
    %v1054 = vadd.f32 %v606, %v1053
    %v1055 = vpop.f32.mrf.mxu0
    %v1056 = vadd.f32 %v606, %v1055
    %1057 = vmatmul.bf16.gmra.mxu0 %v639
    %v1058 = vpop.f32.mrf.mxu0
    %v1059 = vadd.f32 %v606, %v1058
    %v1060 = vpop.f32.mrf.mxu0
    %v1061 = vadd.f32 %v606, %v1060
    %1062 = vmatmul.bf16.gmra.mxu0 %v642
    %v1063 = vpop.f32.mrf.mxu0
    %v1064 = vadd.f32 %v606, %v1063
    %v1065 = vpop.f32.mrf.mxu0
    %v1066 = vadd.f32 %v606, %v1065
    %1067 = vmatmul.bf16.gmra.mxu0 %v645
    %v1068 = vpop.f32.mrf.mxu0
    %v1069 = vadd.f32 %v606, %v1068
    %v1070 = vpop.f32.mrf.mxu0
    %v1071 = vadd.f32 %v606, %v1070
    %1072 = vmatmul.bf16.gmra.mxu0 %v648
    %v1073 = vpop.f32.mrf.mxu0
    %v1074 = vadd.f32 %v606, %v1073
    %v1075 = vpop.f32.mrf.mxu0
    %v1076 = vadd.f32 %v606, %v1075
    %1077 = vmatmul.bf16.gmra.mxu0 %v651
    %v1078 = vpop.f32.mrf.mxu0
    %v1079 = vadd.f32 %v606, %v1078
    %v1080 = vpop.f32.mrf.mxu0
    %v1081 = vadd.f32 %v606, %v1080
    %1082 = vmatmul.bf16.gmra.mxu0 %v654
    %v1083 = vpop.f32.mrf.mxu0
    %v1084 = vadd.f32 %v606, %v1083
    %v1085 = vpop.f32.mrf.mxu0
    %v1086 = vadd.f32 %v606, %v1085
    %1087 = vmatmul.bf16.gmra.mxu0 %v657
    %v1088 = vpop.f32.mrf.mxu0
    %v1089 = vadd.f32 %v606, %v1088
    %v1090 = vpop.f32.mrf.mxu0
    %v1091 = vadd.f32 %v606, %v1090
    %1092 = vmatmul.bf16.gmra.mxu0 %v660
    %v1093 = vpop.f32.mrf.mxu0
    %v1094 = vadd.f32 %v606, %v1093
    %v1095 = vpop.f32.mrf.mxu0
    %v1096 = vadd.f32 %v606, %v1095
    %1097 = vmatmul.bf16.gmra.mxu0 %v663
    %v1098 = vpop.f32.mrf.mxu0
    %v1099 = vadd.f32 %v606, %v1098
    %v1100 = vpop.f32.mrf.mxu0
    %v1101 = vadd.f32 %v606, %v1100
    %1102 = vmatmul.bf16.gmra.mxu0 %v666
    %v1103 = vpop.f32.mrf.mxu0
    %v1104 = vadd.f32 %v606, %v1103
    %v1105 = vpop.f32.mrf.mxu0
    %v1106 = vadd.f32 %v606, %v1105
    %1107 = vmatmul.bf16.gmra.mxu0 %v669
    %v1108 = vpop.f32.mrf.mxu0
    %v1109 = vadd.f32 %v606, %v1108
    %v1110 = vpop.f32.mrf.mxu0
    %v1111 = vadd.f32 %v606, %v1110
    %1112 = vmatmul.bf16.gmra.mxu0 %v672
    %v1113 = vpop.f32.mrf.mxu0
    %v1114 = vadd.f32 %v606, %v1113
    %v1115 = vpop.f32.mrf.mxu0
    %v1116 = vadd.f32 %v606, %v1115
    %1117 = vmatmul.bf16.gmra.mxu0 %v675
    %v1118 = vpop.f32.mrf.mxu0
    %v1119 = vadd.f32 %v606, %v1118
    %v1120 = vpop.f32.mrf.mxu0
    %v1121 = vadd.f32 %v606, %v1120
    %1122 = vmatmul.bf16.gmra.mxu0 %v678
    %v1123 = vpop.f32.mrf.mxu0
    %v1124 = vadd.f32 %v606, %v1123
    %v1125 = vpop.f32.mrf.mxu0
    %v1126 = vadd.f32 %v606, %v1125
    %1127 = vmatmul.bf16.gmra.mxu0 %v681
    %v1128 = vpop.f32.mrf.mxu0
    %v1129 = vadd.f32 %v606, %v1128
    %v1130 = vpop.f32.mrf.mxu0
    %v1131 = vadd.f32 %v606, %v1130
    %1132 = vmatmul.bf16.gmra.mxu0 %v684
    %v1133 = vpop.f32.mrf.mxu0
    %v1134 = vadd.f32 %v606, %v1133
    %v1135 = vpop.f32.mrf.mxu0
    %v1136 = vadd.f32 %v606, %v1135
    %1137 = vmatmul.bf16.gmra.mxu0 %v687
    %v1138 = vpop.f32.mrf.mxu0
    %v1139 = vadd.f32 %v606, %v1138
    %v1140 = vpop.f32.mrf.mxu0
    %v1141 = vadd.f32 %v606, %v1140
    %1142 = vmatmul.bf16.gmra.mxu0 %v690
    %v1143 = vpop.f32.mrf.mxu0
    %v1144 = vadd.f32 %v606, %v1143
    %v1145 = vpop.f32.mrf.mxu0
    %v1146 = vadd.f32 %v606, %v1145
    %1147 = vmatmul.bf16.gmra.mxu0 %v693
    %v1148 = vpop.f32.mrf.mxu0
    %v1149 = vadd.f32 %v606, %v1148
    %v1150 = vpop.f32.mrf.mxu0
    %v1151 = vadd.f32 %v606, %v1150
    %1152 = vmatmul.bf16.gmra.mxu0 %v696
    %v1153 = vpop.f32.mrf.mxu0
    %v1154 = vadd.f32 %v606, %v1153
    %v1155 = vpop.f32.mrf.mxu0
    %v1156 = vadd.f32 %v606, %v1155
    %1157 = vmatmul.bf16.gmra.mxu0 %v699
    %v1158 = vpop.f32.mrf.mxu0
    %v1159 = vadd.f32 %v606, %v1158
    %v1160 = vpop.f32.mrf.mxu0
    %v1161 = vadd.f32 %v606, %v1160
    %1162 = vmatmul.bf16.gmra.mxu0 %v702
    %v1163 = vpop.f32.mrf.mxu0
    %v1164 = vadd.f32 %v606, %v1163
    %v1165 = vpop.f32.mrf.mxu0
    %v1166 = vadd.f32 %v606, %v1165
    %1167 = vmatmul.bf16.gmra.mxu0 %v705
    %v1168 = vpop.f32.mrf.mxu0
    %v1169 = vadd.f32 %v606, %v1168
    %v1170 = vpop.f32.mrf.mxu0
    %v1171 = vadd.f32 %v606, %v1170
    %1172 = vmatmul.bf16.gmra.mxu0 %v708
    %v1173 = vpop.f32.mrf.mxu0
    %v1174 = vadd.f32 %v606, %v1173
    %v1175 = vpop.f32.mrf.mxu0
    %v1176 = vadd.f32 %v606, %v1175
    %1177 = vmatmul.bf16.gmra.mxu0 %v711
    %v1178 = vpop.f32.mrf.mxu0
    %v1179 = vadd.f32 %v606, %v1178
    %v1180 = vpop.f32.mrf.mxu0
    %v1181 = vadd.f32 %v606, %v1180
    %1182 = vmatmul.bf16.gmra.mxu0 %v714
    %v1183 = vpop.f32.mrf.mxu0
    %v1184 = vadd.f32 %v606, %v1183
    %v1185 = vpop.f32.mrf.mxu0
    %v1186 = vadd.f32 %v606, %v1185
    %1187 = vmatmul.bf16.gmra.mxu0 %v717
    %v1188 = vpop.f32.mrf.mxu0
    %v1189 = vadd.f32 %v606, %v1188
    %v1190 = vpop.f32.mrf.mxu0
    %v1191 = vadd.f32 %v606, %v1190
    %1192 = vmatmul.bf16.gmra.mxu0 %v720
    %v1193 = vpop.f32.mrf.mxu0
    %v1194 = vadd.f32 %v606, %v1193
    %v1195 = vpop.f32.mrf.mxu0
    %v1196 = vadd.f32 %v606, %v1195
    %1197 = vmatmul.bf16.gmra.mxu0 %v723
    %v1198 = vpop.f32.mrf.mxu0
    %v1199 = vadd.f32 %v606, %v1198
    %v1200 = vpop.f32.mrf.mxu0
    %v1201 = vadd.f32 %v606, %v1200
    %1202 = vmatmul.bf16.gmra.mxu0 %v726
    %v1203 = vpop.f32.mrf.mxu0
    %v1204 = vadd.f32 %v606, %v1203
    %v1205 = vpop.f32.mrf.mxu0
    %v1206 = vadd.f32 %v606, %v1205
    %1207 = vmatmul.bf16.gmra.mxu0 %v729
    %v1208 = vpop.f32.mrf.mxu0
    %v1209 = vadd.f32 %v606, %v1208
    %v1210 = vpop.f32.mrf.mxu0
    %v1211 = vadd.f32 %v606, %v1210
    %1212 = vmatmul.bf16.gmra.mxu0 %v732
    %v1213 = vpop.f32.mrf.mxu0
    %v1214 = vadd.f32 %v606, %v1213
    %v1215 = vpop.f32.mrf.mxu0
    %v1216 = vadd.f32 %v606, %v1215
    %1217 = vmatmul.bf16.gmra.mxu0 %v735
    %v1218 = vpop.f32.mrf.mxu0
    %v1219 = vadd.f32 %v606, %v1218
    %v1220 = vpop.f32.mrf.mxu0
    %v1221 = vadd.f32 %v606, %v1220
    %1222 = vmatmul.bf16.gmra.mxu0 %v738
    %v1223 = vpop.f32.mrf.mxu0
    %v1224 = vadd.f32 %v606, %v1223
    %v1225 = vpop.f32.mrf.mxu0
    %v1226 = vadd.f32 %v606, %v1225
    %1227 = vmatmul.bf16.gmra.mxu0 %v741
    %v1228 = vpop.f32.mrf.mxu0
    %v1229 = vadd.f32 %v606, %v1228
    %v1230 = vpop.f32.mrf.mxu0
    %v1231 = vadd.f32 %v606, %v1230
    %1232 = vmatmul.bf16.gmra.mxu0 %v744
    %v1233 = vpop.f32.mrf.mxu0
    %v1234 = vadd.f32 %v606, %v1233
    %v1235 = vpop.f32.mrf.mxu0
    %v1236 = vadd.f32 %v606, %v1235
    %1237 = vmatmul.bf16.gmra.mxu0 %v747
    %v1238 = vpop.f32.mrf.mxu0
    %v1239 = vadd.f32 %v606, %v1238
    %v1240 = vpop.f32.mrf.mxu0
    %v1241 = vadd.f32 %v606, %v1240
    %1242 = vmatmul.bf16.gmra.mxu0 %v750
    %v1243 = vpop.f32.mrf.mxu0
    %v1244 = vadd.f32 %v606, %v1243
    %v1245 = vpop.f32.mrf.mxu0
    %v1246 = vadd.f32 %v606, %v1245
    %1247 = vmatmul.bf16.gmra.mxu0 %v753
    %v1248 = vpop.f32.mrf.mxu0
    %v1249 = vadd.f32 %v606, %v1248
    %v1250 = vpop.f32.mrf.mxu0
    %v1251 = vadd.f32 %v606, %v1250
    %1252 = vmatmul.bf16.gmra.mxu0 %v756
    %v1253 = vpop.f32.mrf.mxu0
    %v1254 = vadd.f32 %v606, %v1253
    %v1255 = vpop.f32.mrf.mxu0
    %v1256 = vadd.f32 %v606, %v1255
    %1257 = vmatmul.bf16.gmra.mxu0 %v759
    %v1258 = vpop.f32.mrf.mxu0
    %v1259 = vadd.f32 %v606, %v1258
    %v1260 = vpop.f32.mrf.mxu0
    %v1261 = vadd.f32 %v606, %v1260
    %1262 = vmatmul.bf16.gmra.mxu0 %v762
    %v1263 = vpop.f32.mrf.mxu0
    %v1264 = vadd.f32 %v606, %v1263
    %v1265 = vpop.f32.mrf.mxu0
    %v1266 = vadd.f32 %v606, %v1265
    %1267 = vmatmul.bf16.gmra.mxu0 %v765
    %v1268 = vpop.f32.mrf.mxu0
    %v1269 = vadd.f32 %v606, %v1268
    %v1270 = vpop.f32.mrf.mxu0
    %v1271 = vadd.f32 %v606, %v1270
    %1272 = vmatmul.bf16.gmra.mxu0 %v768
    %v1273 = vpop.f32.mrf.mxu0
    %v1274 = vadd.f32 %v606, %v1273
    %v1275 = vpop.f32.mrf.mxu0
    %v1276 = vadd.f32 %v606, %v1275
    %1277 = vmatmul.bf16.gmra.mxu0 %v771
    %v1278 = vpop.f32.mrf.mxu0
    %v1279 = vadd.f32 %v606, %v1278
    %v1280 = vpop.f32.mrf.mxu0
    %v1281 = vadd.f32 %v606, %v1280
    %1282 = vmatmul.bf16.gmra.mxu0 %v774
    %v1283 = vpop.f32.mrf.mxu0
    %v1284 = vadd.f32 %v606, %v1283
    %v1285 = vpop.f32.mrf.mxu0
    %v1286 = vadd.f32 %v606, %v1285
    %1287 = vmatmul.bf16.gmra.mxu0 %v777
    %v1288 = vpop.f32.mrf.mxu0
    %v1289 = vadd.f32 %v606, %v1288
    %v1290 = vpop.f32.mrf.mxu0
    %v1291 = vadd.f32 %v606, %v1290
    %1292 = vmatmul.bf16.gmra.mxu0 %v780
    %v1293 = vpop.f32.mrf.mxu0
    %v1294 = vadd.f32 %v606, %v1293
    %v1295 = vpop.f32.mrf.mxu0
    %v1296 = vadd.f32 %v606, %v1295
    %1297 = vmatmul.bf16.gmra.mxu0 %v783
    %v1298 = vpop.f32.mrf.mxu0
    %v1299 = vadd.f32 %v606, %v1298
    %v1300 = vpop.f32.mrf.mxu0
    %v1301 = vadd.f32 %v606, %v1300
    %1302 = vmatmul.bf16.gmra.mxu0 %v786
    %v1303 = vpop.f32.mrf.mxu0
    %v1304 = vadd.f32 %v606, %v1303
    %v1305 = vpop.f32.mrf.mxu0
    %v1306 = vadd.f32 %v606, %v1305
    %1307 = vmatmul.bf16.gmra.mxu0 %v789
    %v1308 = vpop.f32.mrf.mxu0
    %v1309 = vadd.f32 %v606, %v1308
    %v1310 = vpop.f32.mrf.mxu0
    %v1311 = vadd.f32 %v606, %v1310
    %1312 = vmatmul.bf16.gmra.mxu0 %v792
    %v1313 = vpop.f32.mrf.mxu0
    %v1314 = vadd.f32 %v606, %v1313
    %v1315 = vpop.f32.mrf.mxu0
    %v1316 = vadd.f32 %v606, %v1315
    %1317 = vmatmul.bf16.gmra.mxu0 %v795
    %v1318 = vpop.f32.mrf.mxu0
    %v1319 = vadd.f32 %v606, %v1318
    %v1320 = vpop.f32.mrf.mxu0
    %v1321 = vadd.f32 %v606, %v1320
    %1322 = vmatmul.bf16.gmra.mxu0 %v798
    %v1323 = vpop.f32.mrf.mxu0
    %v1324 = vadd.f32 %v606, %v1323
    %v1325 = vpop.f32.mrf.mxu0
    %v1326 = vadd.f32 %v606, %v1325
    %1327 = vmatmul.bf16.gmra.mxu0 %v801
    %v1328 = vpop.f32.mrf.mxu0
    %v1329 = vadd.f32 %v606, %v1328
    %v1330 = vpop.f32.mrf.mxu0
    %v1331 = vadd.f32 %v606, %v1330
    %1332 = vmatmul.bf16.gmra.mxu0 %v804
    %v1333 = vpop.f32.mrf.mxu0
    %v1334 = vadd.f32 %v606, %v1333
    %v1335 = vpop.f32.mrf.mxu0
    %v1336 = vadd.f32 %v606, %v1335
    %1337 = vmatmul.bf16.gmra.mxu0 %v807
    %v1338 = vpop.f32.mrf.mxu0
    %v1339 = vadd.f32 %v606, %v1338
    %v1340 = vpop.f32.mrf.mxu0
    %v1341 = vadd.f32 %v606, %v1340
    %1342 = vmatmul.bf16.gmra.mxu0 %v810
    %v1343 = vpop.f32.mrf.mxu0
    %v1344 = vadd.f32 %v606, %v1343
    %v1345 = vpop.f32.mrf.mxu0
    %v1346 = vadd.f32 %v606, %v1345
    %1347 = vmatmul.bf16.gmra.mxu0 %v813
    %v1348 = vpop.f32.mrf.mxu0
    %v1349 = vadd.f32 %v606, %v1348
    %v1350 = vpop.f32.mrf.mxu0
    %v1351 = vadd.f32 %v606, %v1350
    %1352 = vmatmul.bf16.gmra.mxu0 %v816
    %v1353 = vpop.f32.mrf.mxu0
    %v1354 = vadd.f32 %v606, %v1353
    %v1355 = vpop.f32.mrf.mxu0
    %v1356 = vadd.f32 %v606, %v1355
    %1357 = vmatmul.bf16.gmra.mxu0 %v819
    %v1358 = vpop.f32.mrf.mxu0
    %v1359 = vadd.f32 %v606, %v1358
    %v1360 = vpop.f32.mrf.mxu0
    %v1361 = vadd.f32 %v606, %v1360
    %1362 = vmatmul.bf16.gmra.mxu0 %v822
    %v1363 = vpop.f32.mrf.mxu0
    %v1364 = vadd.f32 %v606, %v1363
    %v1365 = vpop.f32.mrf.mxu0
    %v1366 = vadd.f32 %v606, %v1365
    %1367 = vmatmul.bf16.gmra.mxu0 %v825
    %v1368 = vpop.f32.mrf.mxu0
    %v1369 = vadd.f32 %v606, %v1368
    %v1370 = vpop.f32.mrf.mxu0
    %v1371 = vadd.f32 %v606, %v1370
    %1372 = vmatmul.bf16.gmra.mxu0 %v828
    %v1373 = vpop.f32.mrf.mxu0
    %v1374 = vadd.f32 %v606, %v1373
    %v1375 = vpop.f32.mrf.mxu0
    %v1376 = vadd.f32 %v606, %v1375
    %1377 = vmatmul.bf16.gmra.mxu0 %v831
    %v1378 = vpop.f32.mrf.mxu0
    %v1379 = vadd.f32 %v606, %v1378
    %v1380 = vpop.f32.mrf.mxu0
    %v1381 = vadd.f32 %v606, %v1380
    %1382 = vmatmul.bf16.gmra.mxu0 %v834
    %v1383 = vpop.f32.mrf.mxu0
    %v1384 = vadd.f32 %v606, %v1383
    %v1385 = vpop.f32.mrf.mxu0
    %v1386 = vadd.f32 %v606, %v1385
    %1387 = vmatmul.bf16.gmra.mxu0 %v837
    %v1388 = vpop.f32.mrf.mxu0
    %v1389 = vadd.f32 %v606, %v1388
    %v1390 = vpop.f32.mrf.mxu0
    %v1391 = vadd.f32 %v606, %v1390
    %1392 = vmatmul.bf16.gmra.mxu0 %v840
    %v1393 = vpop.f32.mrf.mxu0
    %v1394 = vadd.f32 %v606, %v1393
    %v1395 = vpop.f32.mrf.mxu0
    %v1396 = vadd.f32 %v606, %v1395
    %1397 = vmatmul.bf16.gmra.mxu0 %v843
    %v1398 = vpop.f32.mrf.mxu0
    %v1399 = vadd.f32 %v606, %v1398
    %v1400 = vpop.f32.mrf.mxu0
    %v1401 = vadd.f32 %v606, %v1400
    %1402 = vmatmul.bf16.gmra.mxu0 %v846
    %v1403 = vpop.f32.mrf.mxu0
    %v1404 = vadd.f32 %v606, %v1403
    %v1405 = vpop.f32.mrf.mxu0
    %v1406 = vadd.f32 %v606, %v1405
    %1407 = vmatmul.bf16.gmra.mxu0 %v849
    %v1408 = vpop.f32.mrf.mxu0
    %v1409 = vadd.f32 %v606, %v1408
    %v1410 = vpop.f32.mrf.mxu0
    %v1411 = vadd.f32 %v606, %v1410
    %1412 = vmatmul.bf16.gmra.mxu0 %v852
    %v1413 = vpop.f32.mrf.mxu0
    %v1414 = vadd.f32 %v606, %v1413
    %v1415 = vpop.f32.mrf.mxu0
    %v1416 = vadd.f32 %v606, %v1415
    %1417 = vmatmul.bf16.gmra.mxu0 %v855
    %v1418 = vpop.f32.mrf.mxu0
    %v1419 = vadd.f32 %v606, %v1418
    %v1420 = vpop.f32.mrf.mxu0
    %v1421 = vadd.f32 %v606, %v1420
    %1422 = vmatmul.bf16.gmra.mxu0 %v858
    %v1423 = vpop.f32.mrf.mxu0
    %v1424 = vadd.f32 %v606, %v1423
    %v1425 = vpop.f32.mrf.mxu0
    %v1426 = vadd.f32 %v606, %v1425
    %1427 = vmatmul.bf16.gmra.mxu0 %v861
    %v1428 = vpop.f32.mrf.mxu0
    %v1429 = vadd.f32 %v606, %v1428
    %v1430 = vpop.f32.mrf.mxu0
    %v1431 = vadd.f32 %v606, %v1430
    %1432 = vmatmul.bf16.gmra.mxu0 %v864
    %v1433 = vpop.f32.mrf.mxu0
    %v1434 = vadd.f32 %v606, %v1433
    %v1435 = vpop.f32.mrf.mxu0
    %v1436 = vadd.f32 %v606, %v1435
    %1437 = vmatmul.bf16.gmra.mxu0 %v867
    %v1438 = vpop.f32.mrf.mxu0
    %v1439 = vadd.f32 %v606, %v1438
    %v1440 = vpop.f32.mrf.mxu0
    %v1441 = vadd.f32 %v606, %v1440
    %1442 = vmatmul.bf16.gmra.mxu0 %v870
    %v1443 = vpop.f32.mrf.mxu0
    %v1444 = vadd.f32 %v606, %v1443
    %v1445 = vpop.f32.mrf.mxu0
    %v1446 = vadd.f32 %v606, %v1445
    %1447 = vmatmul.bf16.gmra.mxu0 %v873
    %v1448 = vpop.f32.mrf.mxu0
    %v1449 = vadd.f32 %v606, %v1448
    %v1450 = vpop.f32.mrf.mxu0
    %v1451 = vadd.f32 %v606, %v1450
    %1452 = vmatmul.bf16.gmra.mxu0 %v876
    %v1453 = vpop.f32.mrf.mxu0
    %v1454 = vadd.f32 %v606, %v1453
    %v1455 = vpop.f32.mrf.mxu0
    %v1456 = vadd.f32 %v606, %v1455
    %1457 = vmatmul.bf16.gmra.mxu0 %v879
    %v1458 = vpop.f32.mrf.mxu0
    %v1459 = vadd.f32 %v606, %v1458
    %v1460 = vpop.f32.mrf.mxu0
    %v1461 = vadd.f32 %v606, %v1460
    %1462 = vmatmul.bf16.gmra.mxu0 %v882
    %v1463 = vpop.f32.mrf.mxu0
    %v1464 = vadd.f32 %v606, %v1463
    %v1465 = vpop.f32.mrf.mxu0
    %v1466 = vadd.f32 %v606, %v1465
    %1467 = vmatmul.bf16.gmra.mxu0 %v885
    %v1468 = vpop.f32.mrf.mxu0
    %v1469 = vadd.f32 %v606, %v1468
    %v1470 = vpop.f32.mrf.mxu0
    %v1471 = vadd.f32 %v606, %v1470
    %1472 = vmatmul.bf16.gmra.mxu0 %v888
    %v1473 = vpop.f32.mrf.mxu0
    %v1474 = vadd.f32 %v606, %v1473
    %v1475 = vpop.f32.mrf.mxu0
    %v1476 = vadd.f32 %v606, %v1475
    %1477 = vmatmul.bf16.gmra.mxu0 %v891
    %v1478 = vpop.f32.mrf.mxu0
    %v1479 = vadd.f32 %v606, %v1478
    %v1480 = vpop.f32.mrf.mxu0
    %v1481 = vadd.f32 %v606, %v1480
    %1482 = vmatmul.bf16.gmra.mxu0 %v894
    %v1483 = vpop.f32.mrf.mxu0
    %v1484 = vadd.f32 %v606, %v1483
    %v1485 = vpop.f32.mrf.mxu0
    %v1486 = vadd.f32 %v606, %v1485
    %1487 = vmatmul.bf16.gmra.mxu0 %v897
    %v1488 = vpop.f32.mrf.mxu0
    %v1489 = vadd.f32 %v606, %v1488
    %v1490 = vpop.f32.mrf.mxu0
    %v1491 = vadd.f32 %v606, %v1490
    %1492 = vmatmul.bf16.gmra.mxu0 %v900
    %v1493 = vpop.f32.mrf.mxu0
    %v1494 = vadd.f32 %v606, %v1493
    %v1495 = vpop.f32.mrf.mxu0
    %v1496 = vadd.f32 %v606, %v1495
    %1497 = vmatmul.bf16.gmra.mxu0 %v903
    %v1498 = vpop.f32.mrf.mxu0
    %v1499 = vadd.f32 %v606, %v1498
    %v1500 = vpop.f32.mrf.mxu0
    %v1501 = vadd.f32 %v606, %v1500
    %1502 = vmatmul.bf16.gmra.mxu0 %v906
    %v1503 = vpop.f32.mrf.mxu0
    %v1504 = vadd.f32 %v606, %v1503
    %v1505 = vpop.f32.mrf.mxu0
    %v1506 = vadd.f32 %v606, %v1505
    %1507 = vmatmul.bf16.gmra.mxu0 %v909
    %v1508 = vpop.f32.mrf.mxu0
    %v1509 = vadd.f32 %v606, %v1508
    %v1510 = vpop.f32.mrf.mxu0
    %v1511 = vadd.f32 %v606, %v1510
    %1512 = vmatmul.bf16.gmra.mxu0 %v912
    %v1513 = vpop.f32.mrf.mxu0
    %v1514 = vadd.f32 %v606, %v1513
    %v1515 = vpop.f32.mrf.mxu0
    %v1516 = vadd.f32 %v606, %v1515
    %1517 = vmatmul.bf16.gmra.mxu0 %v915
    %v1518 = vpop.f32.mrf.mxu0
    %v1519 = vadd.f32 %v606, %v1518
    %v1520 = vpop.f32.mrf.mxu0
    %v1521 = vadd.f32 %v606, %v1520
    %1522 = vmatmul.bf16.gmra.mxu0 %v918
    %v1523 = vpop.f32.mrf.mxu0
    %v1524 = vadd.f32 %v606, %v1523
    %v1525 = vpop.f32.mrf.mxu0
    %v1526 = vadd.f32 %v606, %v1525
    %1527 = vmatmul.bf16.gmra.mxu0 %v921
    %v1528 = vpop.f32.mrf.mxu0
    %v1529 = vadd.f32 %v606, %v1528
    %v1530 = vpop.f32.mrf.mxu0
    %v1531 = vadd.f32 %v606, %v1530
    %1532 = vmatmul.bf16.gmra.mxu0 %v924
    %v1533 = vpop.f32.mrf.mxu0
    %v1534 = vadd.f32 %v606, %v1533
    %v1535 = vpop.f32.mrf.mxu0
    %v1536 = vadd.f32 %v606, %v1535
    %1537 = vmatmul.bf16.gmra.mxu0 %v927
    %v1538 = vpop.f32.mrf.mxu0
    %v1539 = vadd.f32 %v606, %v1538
    %v1540 = vpop.f32.mrf.mxu0
    %v1541 = vadd.f32 %v606, %v1540
    %1542 = vmatmul.bf16.gmra.mxu0 %v930
    %v1543 = vpop.f32.mrf.mxu0
    %v1544 = vadd.f32 %v606, %v1543
    %v1545 = vpop.f32.mrf.mxu0
    %v1546 = vadd.f32 %v606, %v1545
    %1547 = vmatmul.bf16.gmra.mxu0 %v933
    %v1548 = vpop.f32.mrf.mxu0
    %v1549 = vadd.f32 %v606, %v1548
    %v1550 = vpop.f32.mrf.mxu0
    %v1551 = vadd.f32 %v606, %v1550
    %1552 = vmatmul.bf16.gmra.mxu0 %v936
    %v1553 = vpop.f32.mrf.mxu0
    %v1554 = vadd.f32 %v606, %v1553
    %v1555 = vpop.f32.mrf.mxu0
    %v1556 = vadd.f32 %v606, %v1555
    %1557 = vmatmul.bf16.gmra.mxu0 %v939
    %v1558 = vpop.f32.mrf.mxu0
    %v1559 = vadd.f32 %v606, %v1558
    %v1560 = vpop.f32.mrf.mxu0
    %v1561 = vadd.f32 %v606, %v1560
    %1562 = vmatmul.bf16.gmra.mxu0 %v942
    %v1563 = vpop.f32.mrf.mxu0
    %v1564 = vadd.f32 %v606, %v1563
    %v1565 = vpop.f32.mrf.mxu0
    %v1566 = vadd.f32 %v606, %v1565
    %1567 = vmatmul.bf16.gmra.mxu0 %v945
    %v1568 = vpop.f32.mrf.mxu0
    %v1569 = vadd.f32 %v606, %v1568
    %v1570 = vpop.f32.mrf.mxu0
    %v1571 = vadd.f32 %v606, %v1570
    %1572 = vmatmul.bf16.gmra.mxu0 %v948
    %v1573 = vpop.f32.mrf.mxu0
    %v1574 = vadd.f32 %v606, %v1573
    %v1575 = vpop.f32.mrf.mxu0
    %v1576 = vadd.f32 %v606, %v1575
    %1577 = vmatmul.bf16.gmra.mxu0 %v951
    %v1578 = vpop.f32.mrf.mxu0
    %v1579 = vadd.f32 %v606, %v1578
    %v1580 = vpop.f32.mrf.mxu0
    %v1581 = vadd.f32 %v606, %v1580
    %1582 = vmatmul.bf16.gmra.mxu0 %v954
    %v1583 = vpop.f32.mrf.mxu0
    %v1584 = vadd.f32 %v606, %v1583
    %v1585 = vpop.f32.mrf.mxu0
    %v1586 = vadd.f32 %v606, %v1585
    %1587 = vmatmul.bf16.gmra.mxu0 %v957
    %v1588 = vpop.f32.mrf.mxu0
    %v1589 = vadd.f32 %v606, %v1588
    %v1590 = vpop.f32.mrf.mxu0
    %v1591 = vadd.f32 %v606, %v1590
    %1592 = vmatmul.bf16.gmra.mxu0 %v960
    %v1593 = vpop.f32.mrf.mxu0
    %v1594 = vadd.f32 %v606, %v1593
    %v1595 = vpop.f32.mrf.mxu0
    %v1596 = vadd.f32 %v606, %v1595
    %1597 = vmatmul.bf16.gmra.mxu0 %v963
    %v1598 = vpop.f32.mrf.mxu0
    %v1599 = vadd.f32 %v606, %v1598
    %v1600 = vpop.f32.mrf.mxu0
    %v1601 = vadd.f32 %v606, %v1600
    %1602 = vmatmul.bf16.gmra.mxu0 %v966
    %v1603 = vpop.f32.mrf.mxu0
    %v1604 = vadd.f32 %v606, %v1603
    %v1605 = vpop.f32.mrf.mxu0
    %v1606 = vadd.f32 %v606, %v1605
    %1607 = vmatmul.bf16.gmra.mxu0 %v969
    %v1608 = vpop.f32.mrf.mxu0
    %v1609 = vadd.f32 %v606, %v1608
    %v1610 = vpop.f32.mrf.mxu0
    %v1611 = vadd.f32 %v606, %v1610
    %1612 = vmatmul.bf16.gmra.mxu0 %v972
    %v1613 = vpop.f32.mrf.mxu0
    %v1614 = vadd.f32 %v606, %v1613
    %v1615 = vpop.f32.mrf.mxu0
    %v1616 = vadd.f32 %v606, %v1615
    %1617 = vmatmul.bf16.gmra.mxu0 %v975
    %v1618 = vpop.f32.mrf.mxu0
    %v1619 = vadd.f32 %v606, %v1618
    %v1620 = vpop.f32.mrf.mxu0
    %v1621 = vadd.f32 %v606, %v1620
    %1622 = vmatmul.bf16.gmra.mxu0 %v978
    %v1623 = vpop.f32.mrf.mxu0
    %v1624 = vadd.f32 %v606, %v1623
    %v1625 = vpop.f32.mrf.mxu0
    %v1626 = vadd.f32 %v606, %v1625
    %1627 = vmatmul.bf16.gmra.mxu0 %v981
    %v1628 = vpop.f32.mrf.mxu0
    %v1629 = vadd.f32 %v606, %v1628
    %v1630 = vpop.f32.mrf.mxu0
    %v1631 = vadd.f32 %v606, %v1630
    %1632 = vmatmul.bf16.gmra.mxu0 %v984
    %v1633 = vpop.f32.mrf.mxu0
    %v1634 = vadd.f32 %v606, %v1633
    %v1635 = vpop.f32.mrf.mxu0
    %v1636 = vadd.f32 %v606, %v1635
    %1637 = vmatmul.bf16.gmra.mxu0 %v987
    %v1638 = vpop.f32.mrf.mxu0
    %v1639 = vadd.f32 %v606, %v1638
    %v1640 = vpop.f32.mrf.mxu0
    %v1641 = vadd.f32 %v606, %v1640
    %1642 = vmatmul.bf16.gmra.mxu0 %v990
    %v1643 = vpop.f32.mrf.mxu0
    %v1644 = vadd.f32 %v606, %v1643
    %v1645 = vpop.f32.mrf.mxu0
    %v1646 = vadd.f32 %v606, %v1645
    %1647 = vdwg.mxu0
    %v1648 = vmax.f32 %v1009, 0.0
    %v1649 = vmax.f32 %v1011, 0.0
    %v1650 = vmax.f32 %v1014, 0.0
    %v1651 = vmax.f32 %v1016, 0.0
    %v1652 = vmax.f32 %v1019, 0.0
    %v1653 = vmax.f32 %v1021, 0.0
    %v1654 = vmax.f32 %v1024, 0.0
    %v1655 = vmax.f32 %v1026, 0.0
    %v1656 = vmax.f32 %v1029, 0.0
    %v1657 = vmax.f32 %v1031, 0.0
    %v1658 = vmax.f32 %v1034, 0.0
    %v1659 = vmax.f32 %v1036, 0.0
    %v1660 = vmax.f32 %v1039, 0.0
    %v1661 = vmax.f32 %v1041, 0.0
    %v1662 = vmax.f32 %v1044, 0.0
    %v1663 = vmax.f32 %v1046, 0.0
    %v1664 = vmax.f32 %v1049, 0.0
    %v1665 = vmax.f32 %v1051, 0.0
    %v1666 = vmax.f32 %v1054, 0.0
    %v1667 = vmax.f32 %v1056, 0.0
    %v1668 = vmax.f32 %v1059, 0.0
    %v1669 = vmax.f32 %v1061, 0.0
    %v1670 = vmax.f32 %v1064, 0.0
    %v1671 = vmax.f32 %v1066, 0.0
    %v1672 = vmax.f32 %v1069, 0.0
    %v1673 = vmax.f32 %v1071, 0.0
    %v1674 = vmax.f32 %v1074, 0.0
    %v1675 = vmax.f32 %v1076, 0.0
    %v1676 = vmax.f32 %v1079, 0.0
    %v1677 = vmax.f32 %v1081, 0.0
    %v1678 = vmax.f32 %v1084, 0.0
    %v1679 = vmax.f32 %v1086, 0.0
    %v1680 = vmax.f32 %v1089, 0.0
    %v1681 = vmax.f32 %v1091, 0.0
    %v1682 = vmax.f32 %v1094, 0.0
    %v1683 = vmax.f32 %v1096, 0.0
    %v1684 = vmax.f32 %v1099, 0.0
    %v1685 = vmax.f32 %v1101, 0.0
    %v1686 = vmax.f32 %v1104, 0.0
    %v1687 = vmax.f32 %v1106, 0.0
    %v1688 = vmax.f32 %v1109, 0.0
    %v1689 = vmax.f32 %v1111, 0.0
    %v1690 = vmax.f32 %v1114, 0.0
    %v1691 = vmax.f32 %v1116, 0.0
    %v1692 = vmax.f32 %v1119, 0.0
    %v1693 = vmax.f32 %v1121, 0.0
    %v1694 = vmax.f32 %v1124, 0.0
    %v1695 = vmax.f32 %v1126, 0.0
    %v1696 = vmax.f32 %v1129, 0.0
    %v1697 = vmax.f32 %v1131, 0.0
    %v1698 = vmax.f32 %v1134, 0.0
    %v1699 = vmax.f32 %v1136, 0.0
    %v1700 = vmax.f32 %v1139, 0.0
    %v1701 = vmax.f32 %v1141, 0.0
    %v1702 = vmax.f32 %v1144, 0.0
    %v1703 = vmax.f32 %v1146, 0.0
    %v1704 = vmax.f32 %v1149, 0.0
    %v1705 = vmax.f32 %v1151, 0.0
    %v1706 = vmax.f32 %v1154, 0.0
    %v1707 = vmax.f32 %v1156, 0.0
    %v1708 = vmax.f32 %v1159, 0.0
    %v1709 = vmax.f32 %v1161, 0.0
    %v1710 = vmax.f32 %v1164, 0.0
    %v1711 = vmax.f32 %v1166, 0.0
    %v1712 = vmax.f32 %v1169, 0.0
    %v1713 = vmax.f32 %v1171, 0.0
    %v1714 = vmax.f32 %v1174, 0.0
    %v1715 = vmax.f32 %v1176, 0.0
    %v1716 = vmax.f32 %v1179, 0.0
    %v1717 = vmax.f32 %v1181, 0.0
    %v1718 = vmax.f32 %v1184, 0.0
    %v1719 = vmax.f32 %v1186, 0.0
    %v1720 = vmax.f32 %v1189, 0.0
    %v1721 = vmax.f32 %v1191, 0.0
    %v1722 = vmax.f32 %v1194, 0.0
    %v1723 = vmax.f32 %v1196, 0.0
    %v1724 = vmax.f32 %v1199, 0.0
    %v1725 = vmax.f32 %v1201, 0.0
    %v1726 = vmax.f32 %v1204, 0.0
    %v1727 = vmax.f32 %v1206, 0.0
    %v1728 = vmax.f32 %v1209, 0.0
    %v1729 = vmax.f32 %v1211, 0.0
    %v1730 = vmax.f32 %v1214, 0.0
    %v1731 = vmax.f32 %v1216, 0.0
    %v1732 = vmax.f32 %v1219, 0.0
    %v1733 = vmax.f32 %v1221, 0.0
    %v1734 = vmax.f32 %v1224, 0.0
    %v1735 = vmax.f32 %v1226, 0.0
    %v1736 = vmax.f32 %v1229, 0.0
    %v1737 = vmax.f32 %v1231, 0.0
    %v1738 = vmax.f32 %v1234, 0.0
    %v1739 = vmax.f32 %v1236, 0.0
    %v1740 = vmax.f32 %v1239, 0.0
    %v1741 = vmax.f32 %v1241, 0.0
    %v1742 = vmax.f32 %v1244, 0.0
    %v1743 = vmax.f32 %v1246, 0.0
    %v1744 = vmax.f32 %v1249, 0.0
    %v1745 = vmax.f32 %v1251, 0.0
    %v1746 = vmax.f32 %v1254, 0.0
    %v1747 = vmax.f32 %v1256, 0.0
    %v1748 = vmax.f32 %v1259, 0.0
    %v1749 = vmax.f32 %v1261, 0.0
    %v1750 = vmax.f32 %v1264, 0.0
    %v1751 = vmax.f32 %v1266, 0.0
    %v1752 = vmax.f32 %v1269, 0.0
    %v1753 = vmax.f32 %v1271, 0.0
    %v1754 = vmax.f32 %v1274, 0.0
    %v1755 = vmax.f32 %v1276, 0.0
    %v1756 = vmax.f32 %v1279, 0.0
    %v1757 = vmax.f32 %v1281, 0.0
    %v1758 = vmax.f32 %v1284, 0.0
    %v1759 = vmax.f32 %v1286, 0.0
    %v1760 = vmax.f32 %v1289, 0.0
    %v1761 = vmax.f32 %v1291, 0.0
    %v1762 = vmax.f32 %v1294, 0.0
    %v1763 = vmax.f32 %v1296, 0.0
    %v1764 = vmax.f32 %v1299, 0.0
    %v1765 = vmax.f32 %v1301, 0.0
    %v1766 = vmax.f32 %v1304, 0.0
    %v1767 = vmax.f32 %v1306, 0.0
    %v1768 = vmax.f32 %v1309, 0.0
    %v1769 = vmax.f32 %v1311, 0.0
    %v1770 = vmax.f32 %v1314, 0.0
    %v1771 = vmax.f32 %v1316, 0.0
    %v1772 = vmax.f32 %v1319, 0.0
    %v1773 = vmax.f32 %v1321, 0.0
    %v1774 = vmax.f32 %v1324, 0.0
    %v1775 = vmax.f32 %v1326, 0.0
    %v1776 = vmax.f32 %v1329, 0.0
    %v1777 = vmax.f32 %v1331, 0.0
    %v1778 = vmax.f32 %v1334, 0.0
    %v1779 = vmax.f32 %v1336, 0.0
    %v1780 = vmax.f32 %v1339, 0.0
    %v1781 = vmax.f32 %v1341, 0.0
    %v1782 = vmax.f32 %v1344, 0.0
    %v1783 = vmax.f32 %v1346, 0.0
    %v1784 = vmax.f32 %v1349, 0.0
    %v1785 = vmax.f32 %v1351, 0.0
    %v1786 = vmax.f32 %v1354, 0.0
    %v1787 = vmax.f32 %v1356, 0.0
    %v1788 = vmax.f32 %v1359, 0.0
    %v1789 = vmax.f32 %v1361, 0.0
    %v1790 = vmax.f32 %v1364, 0.0
    %v1791 = vmax.f32 %v1366, 0.0
    %v1792 = vmax.f32 %v1369, 0.0
    %v1793 = vmax.f32 %v1371, 0.0
    %v1794 = vmax.f32 %v1374, 0.0
    %v1795 = vmax.f32 %v1376, 0.0
    %v1796 = vmax.f32 %v1379, 0.0
    %v1797 = vmax.f32 %v1381, 0.0
    %v1798 = vmax.f32 %v1384, 0.0
    %v1799 = vmax.f32 %v1386, 0.0
    %v1800 = vmax.f32 %v1389, 0.0
    %v1801 = vmax.f32 %v1391, 0.0
    %v1802 = vmax.f32 %v1394, 0.0
    %v1803 = vmax.f32 %v1396, 0.0
    %v1804 = vmax.f32 %v1399, 0.0
    %v1805 = vmax.f32 %v1401, 0.0
    %v1806 = vmax.f32 %v1404, 0.0
    %v1807 = vmax.f32 %v1406, 0.0
    %v1808 = vmax.f32 %v1409, 0.0
    %v1809 = vmax.f32 %v1411, 0.0
    %v1810 = vmax.f32 %v1414, 0.0
    %v1811 = vmax.f32 %v1416, 0.0
    %v1812 = vmax.f32 %v1419, 0.0
    %v1813 = vmax.f32 %v1421, 0.0
    %v1814 = vmax.f32 %v1424, 0.0
    %v1815 = vmax.f32 %v1426, 0.0
    %v1816 = vmax.f32 %v1429, 0.0
    %v1817 = vmax.f32 %v1431, 0.0
    %v1818 = vmax.f32 %v1434, 0.0
    %v1819 = vmax.f32 %v1436, 0.0
    %v1820 = vmax.f32 %v1439, 0.0
    %v1821 = vmax.f32 %v1441, 0.0
    %v1822 = vmax.f32 %v1444, 0.0
    %v1823 = vmax.f32 %v1446, 0.0
    %v1824 = vmax.f32 %v1449, 0.0
    %v1825 = vmax.f32 %v1451, 0.0
    %v1826 = vmax.f32 %v1454, 0.0
    %v1827 = vmax.f32 %v1456, 0.0
    %v1828 = vmax.f32 %v1459, 0.0
    %v1829 = vmax.f32 %v1461, 0.0
    %v1830 = vmax.f32 %v1464, 0.0
    %v1831 = vmax.f32 %v1466, 0.0
    %v1832 = vmax.f32 %v1469, 0.0
    %v1833 = vmax.f32 %v1471, 0.0
    %v1834 = vmax.f32 %v1474, 0.0
    %v1835 = vmax.f32 %v1476, 0.0
    %v1836 = vmax.f32 %v1479, 0.0
    %v1837 = vmax.f32 %v1481, 0.0
    %v1838 = vmax.f32 %v1484, 0.0
    %v1839 = vmax.f32 %v1486, 0.0
    %v1840 = vmax.f32 %v1489, 0.0
    %v1841 = vmax.f32 %v1491, 0.0
    %v1842 = vmax.f32 %v1494, 0.0
    %v1843 = vmax.f32 %v1496, 0.0
    %v1844 = vmax.f32 %v1499, 0.0
    %v1845 = vmax.f32 %v1501, 0.0
    %v1846 = vmax.f32 %v1504, 0.0
    %v1847 = vmax.f32 %v1506, 0.0
    %v1848 = vmax.f32 %v1509, 0.0
    %v1849 = vmax.f32 %v1511, 0.0
    %v1850 = vmax.f32 %v1514, 0.0
    %v1851 = vmax.f32 %v1516, 0.0
    %v1852 = vmax.f32 %v1519, 0.0
    %v1853 = vmax.f32 %v1521, 0.0
    %v1854 = vmax.f32 %v1524, 0.0
    %v1855 = vmax.f32 %v1526, 0.0
    %v1856 = vmax.f32 %v1529, 0.0
    %v1857 = vmax.f32 %v1531, 0.0
    %v1858 = vmax.f32 %v1534, 0.0
    %v1859 = vmax.f32 %v1536, 0.0
    %v1860 = vmax.f32 %v1539, 0.0
    %v1861 = vmax.f32 %v1541, 0.0
    %v1862 = vmax.f32 %v1544, 0.0
    %v1863 = vmax.f32 %v1546, 0.0
    %v1864 = vmax.f32 %v1549, 0.0
    %v1865 = vmax.f32 %v1551, 0.0
    %v1866 = vmax.f32 %v1554, 0.0
    %v1867 = vmax.f32 %v1556, 0.0
    %v1868 = vmax.f32 %v1559, 0.0
    %v1869 = vmax.f32 %v1561, 0.0
    %v1870 = vmax.f32 %v1564, 0.0
    %v1871 = vmax.f32 %v1566, 0.0
    %v1872 = vmax.f32 %v1569, 0.0
    %v1873 = vmax.f32 %v1571, 0.0
    %v1874 = vmax.f32 %v1574, 0.0
    %v1875 = vmax.f32 %v1576, 0.0
    %v1876 = vmax.f32 %v1579, 0.0
    %v1877 = vmax.f32 %v1581, 0.0
    %v1878 = vmax.f32 %v1584, 0.0
    %v1879 = vmax.f32 %v1586, 0.0
    %v1880 = vmax.f32 %v1589, 0.0
    %v1881 = vmax.f32 %v1591, 0.0
    %v1882 = vmax.f32 %v1594, 0.0
    %v1883 = vmax.f32 %v1596, 0.0
    %v1884 = vmax.f32 %v1599, 0.0
    %v1885 = vmax.f32 %v1601, 0.0
    %v1886 = vmax.f32 %v1604, 0.0
    %v1887 = vmax.f32 %v1606, 0.0
    %v1888 = vmax.f32 %v1609, 0.0
    %v1889 = vmax.f32 %v1611, 0.0
    %v1890 = vmax.f32 %v1614, 0.0
    %v1891 = vmax.f32 %v1616, 0.0
    %v1892 = vmax.f32 %v1619, 0.0
    %v1893 = vmax.f32 %v1621, 0.0
    %v1894 = vmax.f32 %v1624, 0.0
    %v1895 = vmax.f32 %v1626, 0.0
    %v1896 = vmax.f32 %v1629, 0.0
    %v1897 = vmax.f32 %v1631, 0.0
    %v1898 = vmax.f32 %v1634, 0.0
    %v1899 = vmax.f32 %v1636, 0.0
    %v1900 = vmax.f32 %v1639, 0.0
    %v1901 = vmax.f32 %v1641, 0.0
    %v1902 = vmax.f32 %v1644, 0.0
    %v1903 = vmax.f32 %v1646, 0.0
    %v1904 = vld [vmem:[#allocation12] sm:$0xff]
    %v1905 = vld [vmem:[#allocation12 + $0x8] sm:$0xff]
    %v1906 = vld [vmem:[#allocation12 + $0x10] sm:$0xff]
    %v1907 = vld [vmem:[#allocation12 + $0x18] sm:$0xff]
    %v1908 = vld [vmem:[#allocation12 + $0x20] sm:$0xff]
    %v1909 = vld [vmem:[#allocation12 + $0x28] sm:$0xff]
    %v1910 = vld [vmem:[#allocation12 + $0x30] sm:$0xff]
    %v1911 = vld [vmem:[#allocation12 + $0x38] sm:$0xff]
    %v1912 = vld [vmem:[#allocation12 + $0x40] sm:$0xff]
    %v1913 = vld [vmem:[#allocation12 + $0x48] sm:$0xff]
    %v1914 = vld [vmem:[#allocation12 + $0x50] sm:$0xff]
    %v1915 = vld [vmem:[#allocation12 + $0x58] sm:$0xff]
    %v1916 = vld [vmem:[#allocation12 + $0x60] sm:$0xff]
    %v1917 = vld [vmem:[#allocation12 + $0x68] sm:$0xff]
    %v1918 = vld [vmem:[#allocation12 + $0x70] sm:$0xff]
    %v1919 = vld [vmem:[#allocation12 + $0x78] sm:$0xff]
    %v1920 = vld [vmem:[#allocation12 + $0x80] sm:$0xff]
    %v1921 = vld [vmem:[#allocation12 + $0x88] sm:$0xff]
    %v1922 = vld [vmem:[#allocation12 + $0x90] sm:$0xff]
    %v1923 = vld [vmem:[#allocation12 + $0x98] sm:$0xff]
    %v1924 = vld [vmem:[#allocation12 + $0xa0] sm:$0xff]
    %v1925 = vld [vmem:[#allocation12 + $0xa8] sm:$0xff]
    %v1926 = vld [vmem:[#allocation12 + $0xb0] sm:$0xff]
    %v1927 = vld [vmem:[#allocation12 + $0xb8] sm:$0xff]
    %v1928 = vld [vmem:[#allocation12 + $0xc0] sm:$0xff]
    %v1929 = vld [vmem:[#allocation12 + $0xc8] sm:$0xff]
    %v1930 = vld [vmem:[#allocation12 + $0xd0] sm:$0xff]
    %v1931 = vld [vmem:[#allocation12 + $0xd8] sm:$0xff]
    %v1932 = vld [vmem:[#allocation12 + $0xe0] sm:$0xff]
    %v1933 = vld [vmem:[#allocation12 + $0xe8] sm:$0xff]
    %v1934 = vld [vmem:[#allocation12 + $0xf0] sm:$0xff]
    %v1935 = vld [vmem:[#allocation12 + $0xf8] sm:$0xff]
    %v1936 = vld [vmem:[#allocation12 + $0x100] sm:$0xff]
    %v1937 = vld [vmem:[#allocation12 + $0x108] sm:$0xff]
    %v1938 = vld [vmem:[#allocation12 + $0x110] sm:$0xff]
    %v1939 = vld [vmem:[#allocation12 + $0x118] sm:$0xff]
    %v1940 = vld [vmem:[#allocation12 + $0x120] sm:$0xff]
    %v1941 = vld [vmem:[#allocation12 + $0x128] sm:$0xff]
    %v1942 = vld [vmem:[#allocation12 + $0x130] sm:$0xff]
    %v1943 = vld [vmem:[#allocation12 + $0x138] sm:$0xff]
    %v1944 = vld [vmem:[#allocation12 + $0x140] sm:$0xff]
    %v1945 = vld [vmem:[#allocation12 + $0x148] sm:$0xff]
    %v1946 = vld [vmem:[#allocation12 + $0x150] sm:$0xff]
    %v1947 = vld [vmem:[#allocation12 + $0x158] sm:$0xff]
    %v1948 = vld [vmem:[#allocation12 + $0x160] sm:$0xff]
    %v1949 = vld [vmem:[#allocation12 + $0x168] sm:$0xff]
    %v1950 = vld [vmem:[#allocation12 + $0x170] sm:$0xff]
    %v1951 = vld [vmem:[#allocation12 + $0x178] sm:$0xff]
    %v1952 = vld [vmem:[#allocation12 + $0x180] sm:$0xff]
    %v1953 = vld [vmem:[#allocation12 + $0x188] sm:$0xff]
    %v1954 = vld [vmem:[#allocation12 + $0x190] sm:$0xff]
    %v1955 = vld [vmem:[#allocation12 + $0x198] sm:$0xff]
    %v1956 = vld [vmem:[#allocation12 + $0x1a0] sm:$0xff]
    %v1957 = vld [vmem:[#allocation12 + $0x1a8] sm:$0xff]
    %v1958 = vld [vmem:[#allocation12 + $0x1b0] sm:$0xff]
    %v1959 = vld [vmem:[#allocation12 + $0x1b8] sm:$0xff]
    %v1960 = vld [vmem:[#allocation12 + $0x1c0] sm:$0xff]
    %v1961 = vld [vmem:[#allocation12 + $0x1c8] sm:$0xff]
    %v1962 = vld [vmem:[#allocation12 + $0x1d0] sm:$0xff]
    %v1963 = vld [vmem:[#allocation12 + $0x1d8] sm:$0xff]
    %v1964 = vld [vmem:[#allocation12 + $0x1e0] sm:$0xff]
    %v1965 = vld [vmem:[#allocation12 + $0x1e8] sm:$0xff]
    %v1966 = vld [vmem:[#allocation12 + $0x1f0] sm:$0xff]
    %v1967 = vld [vmem:[#allocation12 + $0x1f8] sm:$0xff]
    %v1968 = vld [vmem:[#allocation12 + $0x200] sm:$0xff]
    %v1969 = vld [vmem:[#allocation12 + $0x208] sm:$0xff]
    %v1970 = vld [vmem:[#allocation12 + $0x210] sm:$0xff]
    %v1971 = vld [vmem:[#allocation12 + $0x218] sm:$0xff]
    %v1972 = vld [vmem:[#allocation12 + $0x220] sm:$0xff]
    %v1973 = vld [vmem:[#allocation12 + $0x228] sm:$0xff]
    %v1974 = vld [vmem:[#allocation12 + $0x230] sm:$0xff]
    %v1975 = vld [vmem:[#allocation12 + $0x238] sm:$0xff]
    %v1976 = vld [vmem:[#allocation12 + $0x240] sm:$0xff]
    %v1977 = vld [vmem:[#allocation12 + $0x248] sm:$0xff]
    %v1978 = vld [vmem:[#allocation12 + $0x250] sm:$0xff]
    %v1979 = vld [vmem:[#allocation12 + $0x258] sm:$0xff]
    %v1980 = vld [vmem:[#allocation12 + $0x260] sm:$0xff]
    %v1981 = vld [vmem:[#allocation12 + $0x268] sm:$0xff]
    %v1982 = vld [vmem:[#allocation12 + $0x270] sm:$0xff]
    %v1983 = vld [vmem:[#allocation12 + $0x278] sm:$0xff]
    %v1984 = vld [vmem:[#allocation12 + $0x280] sm:$0xff]
    %v1985 = vld [vmem:[#allocation12 + $0x288] sm:$0xff]
    %v1986 = vld [vmem:[#allocation12 + $0x290] sm:$0xff]
    %v1987 = vld [vmem:[#allocation12 + $0x298] sm:$0xff]
    %v1988 = vld [vmem:[#allocation12 + $0x2a0] sm:$0xff]
    %v1989 = vld [vmem:[#allocation12 + $0x2a8] sm:$0xff]
    %v1990 = vld [vmem:[#allocation12 + $0x2b0] sm:$0xff]
    %v1991 = vld [vmem:[#allocation12 + $0x2b8] sm:$0xff]
    %v1992 = vld [vmem:[#allocation12 + $0x2c0] sm:$0xff]
    %v1993 = vld [vmem:[#allocation12 + $0x2c8] sm:$0xff]
    %v1994 = vld [vmem:[#allocation12 + $0x2d0] sm:$0xff]
    %v1995 = vld [vmem:[#allocation12 + $0x2d8] sm:$0xff]
    %v1996 = vld [vmem:[#allocation12 + $0x2e0] sm:$0xff]
    %v1997 = vld [vmem:[#allocation12 + $0x2e8] sm:$0xff]
    %v1998 = vld [vmem:[#allocation12 + $0x2f0] sm:$0xff]
    %v1999 = vld [vmem:[#allocation12 + $0x2f8] sm:$0xff]
    %v2000 = vld [vmem:[#allocation12 + $0x300] sm:$0xff]
    %v2001 = vld [vmem:[#allocation12 + $0x308] sm:$0xff]
    %v2002 = vld [vmem:[#allocation12 + $0x310] sm:$0xff]
    %v2003 = vld [vmem:[#allocation12 + $0x318] sm:$0xff]
    %v2004 = vld [vmem:[#allocation12 + $0x320] sm:$0xff]
    %v2005 = vld [vmem:[#allocation12 + $0x328] sm:$0xff]
    %v2006 = vld [vmem:[#allocation12 + $0x330] sm:$0xff]
    %v2007 = vld [vmem:[#allocation12 + $0x338] sm:$0xff]
    %v2008 = vld [vmem:[#allocation12 + $0x340] sm:$0xff]
    %v2009 = vld [vmem:[#allocation12 + $0x348] sm:$0xff]
    %v2010 = vld [vmem:[#allocation12 + $0x350] sm:$0xff]
    %v2011 = vld [vmem:[#allocation12 + $0x358] sm:$0xff]
    %v2012 = vld [vmem:[#allocation12 + $0x360] sm:$0xff]
    %v2013 = vld [vmem:[#allocation12 + $0x368] sm:$0xff]
    %v2014 = vld [vmem:[#allocation12 + $0x370] sm:$0xff]
    %v2015 = vld [vmem:[#allocation12 + $0x378] sm:$0xff]
    %v2016 = vld [vmem:[#allocation12 + $0x380] sm:$0xff]
    %v2017 = vld [vmem:[#allocation12 + $0x388] sm:$0xff]
    %v2018 = vld [vmem:[#allocation12 + $0x390] sm:$0xff]
    %v2019 = vld [vmem:[#allocation12 + $0x398] sm:$0xff]
    %v2020 = vld [vmem:[#allocation12 + $0x3a0] sm:$0xff]
    %v2021 = vld [vmem:[#allocation12 + $0x3a8] sm:$0xff]
    %v2022 = vld [vmem:[#allocation12 + $0x3b0] sm:$0xff]
    %v2023 = vld [vmem:[#allocation12 + $0x3b8] sm:$0xff]
    %v2024 = vld [vmem:[#allocation12 + $0x3c0] sm:$0xff]
    %v2025 = vld [vmem:[#allocation12 + $0x3c8] sm:$0xff]
    %v2026 = vld [vmem:[#allocation12 + $0x3d0] sm:$0xff]
    %v2027 = vld [vmem:[#allocation12 + $0x3d8] sm:$0xff]
    %v2028 = vld [vmem:[#allocation12 + $0x3e0] sm:$0xff]
    %v2029 = vld [vmem:[#allocation12 + $0x3e8] sm:$0xff]
    %v2030 = vld [vmem:[#allocation12 + $0x3f0] sm:$0xff]
    %v2031 = vld [vmem:[#allocation12 + $0x3f8] sm:$0xff]
    %v2032 = vld [vmem:[#allocation12 + $0x400] sm:$0xff]
    %v2033 = vld [vmem:[#allocation12 + $0x408] sm:$0xff]
    %v2034 = vld [vmem:[#allocation12 + $0x410] sm:$0xff]
    %v2035 = vld [vmem:[#allocation12 + $0x418] sm:$0xff]
    %v2036 = vld [vmem:[#allocation12 + $0x420] sm:$0xff]
    %v2037 = vld [vmem:[#allocation12 + $0x428] sm:$0xff]
    %v2038 = vld [vmem:[#allocation12 + $0x430] sm:$0xff]
    %v2039 = vld [vmem:[#allocation12 + $0x438] sm:$0xff]
    %v2040 = vld [vmem:[#allocation12 + $0x440] sm:$0xff]
    %v2041 = vld [vmem:[#allocation12 + $0x448] sm:$0xff]
    %v2042 = vld [vmem:[#allocation12 + $0x450] sm:$0xff]
    %v2043 = vld [vmem:[#allocation12 + $0x458] sm:$0xff]
    %v2044 = vld [vmem:[#allocation12 + $0x460] sm:$0xff]
    %v2045 = vld [vmem:[#allocation12 + $0x468] sm:$0xff]
    %v2046 = vld [vmem:[#allocation12 + $0x470] sm:$0xff]
    %v2047 = vld [vmem:[#allocation12 + $0x478] sm:$0xff]
    %v2048 = vld [vmem:[#allocation12 + $0x480] sm:$0xff]
    %v2049 = vld [vmem:[#allocation12 + $0x488] sm:$0xff]
    %v2050 = vld [vmem:[#allocation12 + $0x490] sm:$0xff]
    %v2051 = vld [vmem:[#allocation12 + $0x498] sm:$0xff]
    %v2052 = vld [vmem:[#allocation12 + $0x4a0] sm:$0xff]
    %v2053 = vld [vmem:[#allocation12 + $0x4a8] sm:$0xff]
    %v2054 = vld [vmem:[#allocation12 + $0x4b0] sm:$0xff]
    %v2055 = vld [vmem:[#allocation12 + $0x4b8] sm:$0xff]
    %v2056 = vld [vmem:[#allocation12 + $0x4c0] sm:$0xff]
    %v2057 = vld [vmem:[#allocation12 + $0x4c8] sm:$0xff]
    %v2058 = vld [vmem:[#allocation12 + $0x4d0] sm:$0xff]
    %v2059 = vld [vmem:[#allocation12 + $0x4d8] sm:$0xff]
    %v2060 = vld [vmem:[#allocation12 + $0x4e0] sm:$0xff]
    %v2061 = vld [vmem:[#allocation12 + $0x4e8] sm:$0xff]
    %v2062 = vld [vmem:[#allocation12 + $0x4f0] sm:$0xff]
    %v2063 = vld [vmem:[#allocation12 + $0x4f8] sm:$0xff]
    %v2064 = vld [vmem:[#allocation12 + $0x500] sm:$0xff]
    %v2065 = vld [vmem:[#allocation12 + $0x508] sm:$0xff]
    %v2066 = vld [vmem:[#allocation12 + $0x510] sm:$0xff]
    %v2067 = vld [vmem:[#allocation12 + $0x518] sm:$0xff]
    %v2068 = vld [vmem:[#allocation12 + $0x520] sm:$0xff]
    %v2069 = vld [vmem:[#allocation12 + $0x528] sm:$0xff]
    %v2070 = vld [vmem:[#allocation12 + $0x530] sm:$0xff]
    %v2071 = vld [vmem:[#allocation12 + $0x538] sm:$0xff]
    %v2072 = vld [vmem:[#allocation12 + $0x540] sm:$0xff]
    %v2073 = vld [vmem:[#allocation12 + $0x548] sm:$0xff]
    %v2074 = vld [vmem:[#allocation12 + $0x550] sm:$0xff]
    %v2075 = vld [vmem:[#allocation12 + $0x558] sm:$0xff]
    %v2076 = vld [vmem:[#allocation12 + $0x560] sm:$0xff]
    %v2077 = vld [vmem:[#allocation12 + $0x568] sm:$0xff]
    %v2078 = vld [vmem:[#allocation12 + $0x570] sm:$0xff]
    %v2079 = vld [vmem:[#allocation12 + $0x578] sm:$0xff]
    %v2080 = vld [vmem:[#allocation12 + $0x580] sm:$0xff]
    %v2081 = vld [vmem:[#allocation12 + $0x588] sm:$0xff]
    %v2082 = vld [vmem:[#allocation12 + $0x590] sm:$0xff]
    %v2083 = vld [vmem:[#allocation12 + $0x598] sm:$0xff]
    %v2084 = vld [vmem:[#allocation12 + $0x5a0] sm:$0xff]
    %v2085 = vld [vmem:[#allocation12 + $0x5a8] sm:$0xff]
    %v2086 = vld [vmem:[#allocation12 + $0x5b0] sm:$0xff]
    %v2087 = vld [vmem:[#allocation12 + $0x5b8] sm:$0xff]
    %v2088 = vld [vmem:[#allocation12 + $0x5c0] sm:$0xff]
    %v2089 = vld [vmem:[#allocation12 + $0x5c8] sm:$0xff]
    %v2090 = vld [vmem:[#allocation12 + $0x5d0] sm:$0xff]
    %v2091 = vld [vmem:[#allocation12 + $0x5d8] sm:$0xff]
    %v2092 = vld [vmem:[#allocation12 + $0x5e0] sm:$0xff]
    %v2093 = vld [vmem:[#allocation12 + $0x5e8] sm:$0xff]
    %v2094 = vld [vmem:[#allocation12 + $0x5f0] sm:$0xff]
    %v2095 = vld [vmem:[#allocation12 + $0x5f8] sm:$0xff]
    %v2096 = vld [vmem:[#allocation12 + $0x600] sm:$0xff]
    %v2097 = vld [vmem:[#allocation12 + $0x608] sm:$0xff]
    %v2098 = vld [vmem:[#allocation12 + $0x610] sm:$0xff]
    %v2099 = vld [vmem:[#allocation12 + $0x618] sm:$0xff]
    %v2100 = vld [vmem:[#allocation12 + $0x620] sm:$0xff]
    %v2101 = vld [vmem:[#allocation12 + $0x628] sm:$0xff]
    %v2102 = vld [vmem:[#allocation12 + $0x630] sm:$0xff]
    %v2103 = vld [vmem:[#allocation12 + $0x638] sm:$0xff]
    %v2104 = vld [vmem:[#allocation12 + $0x640] sm:$0xff]
    %v2105 = vld [vmem:[#allocation12 + $0x648] sm:$0xff]
    %v2106 = vld [vmem:[#allocation12 + $0x650] sm:$0xff]
    %v2107 = vld [vmem:[#allocation12 + $0x658] sm:$0xff]
    %v2108 = vld [vmem:[#allocation12 + $0x660] sm:$0xff]
    %v2109 = vld [vmem:[#allocation12 + $0x668] sm:$0xff]
    %v2110 = vld [vmem:[#allocation12 + $0x670] sm:$0xff]
    %v2111 = vld [vmem:[#allocation12 + $0x678] sm:$0xff]
    %v2112 = vld [vmem:[#allocation12 + $0x680] sm:$0xff]
    %v2113 = vld [vmem:[#allocation12 + $0x688] sm:$0xff]
    %v2114 = vld [vmem:[#allocation12 + $0x690] sm:$0xff]
    %v2115 = vld [vmem:[#allocation12 + $0x698] sm:$0xff]
    %v2116 = vld [vmem:[#allocation12 + $0x6a0] sm:$0xff]
    %v2117 = vld [vmem:[#allocation12 + $0x6a8] sm:$0xff]
    %v2118 = vld [vmem:[#allocation12 + $0x6b0] sm:$0xff]
    %v2119 = vld [vmem:[#allocation12 + $0x6b8] sm:$0xff]
    %v2120 = vld [vmem:[#allocation12 + $0x6c0] sm:$0xff]
    %v2121 = vld [vmem:[#allocation12 + $0x6c8] sm:$0xff]
    %v2122 = vld [vmem:[#allocation12 + $0x6d0] sm:$0xff]
    %v2123 = vld [vmem:[#allocation12 + $0x6d8] sm:$0xff]
    %v2124 = vld [vmem:[#allocation12 + $0x6e0] sm:$0xff]
    %v2125 = vld [vmem:[#allocation12 + $0x6e8] sm:$0xff]
    %v2126 = vld [vmem:[#allocation12 + $0x6f0] sm:$0xff]
    %v2127 = vld [vmem:[#allocation12 + $0x6f8] sm:$0xff]
    %v2128 = vld [vmem:[#allocation12 + $0x700] sm:$0xff]
    %v2129 = vld [vmem:[#allocation12 + $0x708] sm:$0xff]
    %v2130 = vld [vmem:[#allocation12 + $0x710] sm:$0xff]
    %v2131 = vld [vmem:[#allocation12 + $0x718] sm:$0xff]
    %v2132 = vld [vmem:[#allocation12 + $0x720] sm:$0xff]
    %v2133 = vld [vmem:[#allocation12 + $0x728] sm:$0xff]
    %v2134 = vld [vmem:[#allocation12 + $0x730] sm:$0xff]
    %v2135 = vld [vmem:[#allocation12 + $0x738] sm:$0xff]
    %v2136 = vld [vmem:[#allocation12 + $0x740] sm:$0xff]
    %v2137 = vld [vmem:[#allocation12 + $0x748] sm:$0xff]
    %v2138 = vld [vmem:[#allocation12 + $0x750] sm:$0xff]
    %v2139 = vld [vmem:[#allocation12 + $0x758] sm:$0xff]
    %v2140 = vld [vmem:[#allocation12 + $0x760] sm:$0xff]
    %v2141 = vld [vmem:[#allocation12 + $0x768] sm:$0xff]
    %v2142 = vld [vmem:[#allocation12 + $0x770] sm:$0xff]
    %v2143 = vld [vmem:[#allocation12 + $0x778] sm:$0xff]
    %v2144 = vld [vmem:[#allocation12 + $0x780] sm:$0xff]
    %v2145 = vld [vmem:[#allocation12 + $0x788] sm:$0xff]
    %v2146 = vld [vmem:[#allocation12 + $0x790] sm:$0xff]
    %v2147 = vld [vmem:[#allocation12 + $0x798] sm:$0xff]
    %v2148 = vld [vmem:[#allocation12 + $0x7a0] sm:$0xff]
    %v2149 = vld [vmem:[#allocation12 + $0x7a8] sm:$0xff]
    %v2150 = vld [vmem:[#allocation12 + $0x7b0] sm:$0xff]
    %v2151 = vld [vmem:[#allocation12 + $0x7b8] sm:$0xff]
    %v2152 = vld [vmem:[#allocation12 + $0x7c0] sm:$0xff]
    %v2153 = vld [vmem:[#allocation12 + $0x7c8] sm:$0xff]
    %v2154 = vld [vmem:[#allocation12 + $0x7d0] sm:$0xff]
    %v2155 = vld [vmem:[#allocation12 + $0x7d8] sm:$0xff]
    %v2156 = vld [vmem:[#allocation12 + $0x7e0] sm:$0xff]
    %v2157 = vld [vmem:[#allocation12 + $0x7e8] sm:$0xff]
    %v2158 = vld [vmem:[#allocation12 + $0x7f0] sm:$0xff]
    %v2159 = vld [vmem:[#allocation12 + $0x7f8] sm:$0xff]
    %v2160 = vld [vmem:[#allocation12 + $0x800] sm:$0xff]
    %v2161 = vld [vmem:[#allocation12 + $0x808] sm:$0xff]
    %v2162 = vld [vmem:[#allocation12 + $0x810] sm:$0xff]
    %v2163 = vld [vmem:[#allocation12 + $0x818] sm:$0xff]
    %v2164 = vld [vmem:[#allocation12 + $0x820] sm:$0xff]
    %v2165 = vld [vmem:[#allocation12 + $0x828] sm:$0xff]
    %v2166 = vld [vmem:[#allocation12 + $0x830] sm:$0xff]
    %v2167 = vld [vmem:[#allocation12 + $0x838] sm:$0xff]
    %v2168 = vld [vmem:[#allocation12 + $0x840] sm:$0xff]
    %v2169 = vld [vmem:[#allocation12 + $0x848] sm:$0xff]
    %v2170 = vld [vmem:[#allocation12 + $0x850] sm:$0xff]
    %v2171 = vld [vmem:[#allocation12 + $0x858] sm:$0xff]
    %v2172 = vld [vmem:[#allocation12 + $0x860] sm:$0xff]
    %v2173 = vld [vmem:[#allocation12 + $0x868] sm:$0xff]
    %v2174 = vld [vmem:[#allocation12 + $0x870] sm:$0xff]
    %v2175 = vld [vmem:[#allocation12 + $0x878] sm:$0xff]
    %v2176 = vld [vmem:[#allocation12 + $0x880] sm:$0xff]
    %v2177 = vld [vmem:[#allocation12 + $0x888] sm:$0xff]
    %v2178 = vld [vmem:[#allocation12 + $0x890] sm:$0xff]
    %v2179 = vld [vmem:[#allocation12 + $0x898] sm:$0xff]
    %v2180 = vld [vmem:[#allocation12 + $0x8a0] sm:$0xff]
    %v2181 = vld [vmem:[#allocation12 + $0x8a8] sm:$0xff]
    %v2182 = vld [vmem:[#allocation12 + $0x8b0] sm:$0xff]
    %v2183 = vld [vmem:[#allocation12 + $0x8b8] sm:$0xff]
    %v2184 = vld [vmem:[#allocation12 + $0x8c0] sm:$0xff]
    %v2185 = vld [vmem:[#allocation12 + $0x8c8] sm:$0xff]
    %v2186 = vld [vmem:[#allocation12 + $0x8d0] sm:$0xff]
    %v2187 = vld [vmem:[#allocation12 + $0x8d8] sm:$0xff]
    %v2188 = vld [vmem:[#allocation12 + $0x8e0] sm:$0xff]
    %v2189 = vld [vmem:[#allocation12 + $0x8e8] sm:$0xff]
    %v2190 = vld [vmem:[#allocation12 + $0x8f0] sm:$0xff]
    %v2191 = vld [vmem:[#allocation12 + $0x8f8] sm:$0xff]
    %v2192 = vld [vmem:[#allocation12 + $0x900] sm:$0xff]
    %v2193 = vld [vmem:[#allocation12 + $0x908] sm:$0xff]
    %v2194 = vld [vmem:[#allocation12 + $0x910] sm:$0xff]
    %v2195 = vld [vmem:[#allocation12 + $0x918] sm:$0xff]
    %v2196 = vld [vmem:[#allocation12 + $0x920] sm:$0xff]
    %v2197 = vld [vmem:[#allocation12 + $0x928] sm:$0xff]
    %v2198 = vld [vmem:[#allocation12 + $0x930] sm:$0xff]
    %v2199 = vld [vmem:[#allocation12 + $0x938] sm:$0xff]
    %v2200 = vld [vmem:[#allocation12 + $0x940] sm:$0xff]
    %v2201 = vld [vmem:[#allocation12 + $0x948] sm:$0xff]
    %v2202 = vld [vmem:[#allocation12 + $0x950] sm:$0xff]
    %v2203 = vld [vmem:[#allocation12 + $0x958] sm:$0xff]
    %v2204 = vld [vmem:[#allocation12 + $0x960] sm:$0xff]
    %v2205 = vld [vmem:[#allocation12 + $0x968] sm:$0xff]
    %v2206 = vld [vmem:[#allocation12 + $0x970] sm:$0xff]
    %v2207 = vld [vmem:[#allocation12 + $0x978] sm:$0xff]
    %v2208 = vld [vmem:[#allocation12 + $0x980] sm:$0xff]
    %v2209 = vld [vmem:[#allocation12 + $0x988] sm:$0xff]
    %v2210 = vld [vmem:[#allocation12 + $0x990] sm:$0xff]
    %v2211 = vld [vmem:[#allocation12 + $0x998] sm:$0xff]
    %v2212 = vld [vmem:[#allocation12 + $0x9a0] sm:$0xff]
    %v2213 = vld [vmem:[#allocation12 + $0x9a8] sm:$0xff]
    %v2214 = vld [vmem:[#allocation12 + $0x9b0] sm:$0xff]
    %v2215 = vld [vmem:[#allocation12 + $0x9b8] sm:$0xff]
    %v2216 = vld [vmem:[#allocation12 + $0x9c0] sm:$0xff]
    %v2217 = vld [vmem:[#allocation12 + $0x9c8] sm:$0xff]
    %v2218 = vld [vmem:[#allocation12 + $0x9d0] sm:$0xff]
    %v2219 = vld [vmem:[#allocation12 + $0x9d8] sm:$0xff]
    %v2220 = vld [vmem:[#allocation12 + $0x9e0] sm:$0xff]
    %v2221 = vld [vmem:[#allocation12 + $0x9e8] sm:$0xff]
    %v2222 = vld [vmem:[#allocation12 + $0x9f0] sm:$0xff]
    %v2223 = vld [vmem:[#allocation12 + $0x9f8] sm:$0xff]
    %v2224 = vld [vmem:[#allocation12 + $0xa00] sm:$0xff]
    %v2225 = vld [vmem:[#allocation12 + $0xa08] sm:$0xff]
    %v2226 = vld [vmem:[#allocation12 + $0xa10] sm:$0xff]
    %v2227 = vld [vmem:[#allocation12 + $0xa18] sm:$0xff]
    %v2228 = vld [vmem:[#allocation12 + $0xa20] sm:$0xff]
    %v2229 = vld [vmem:[#allocation12 + $0xa28] sm:$0xff]
    %v2230 = vld [vmem:[#allocation12 + $0xa30] sm:$0xff]
    %v2231 = vld [vmem:[#allocation12 + $0xa38] sm:$0xff]
    %v2232 = vld [vmem:[#allocation12 + $0xa40] sm:$0xff]
    %v2233 = vld [vmem:[#allocation12 + $0xa48] sm:$0xff]
    %v2234 = vld [vmem:[#allocation12 + $0xa50] sm:$0xff]
    %v2235 = vld [vmem:[#allocation12 + $0xa58] sm:$0xff]
    %v2236 = vld [vmem:[#allocation12 + $0xa60] sm:$0xff]
    %v2237 = vld [vmem:[#allocation12 + $0xa68] sm:$0xff]
    %v2238 = vld [vmem:[#allocation12 + $0xa70] sm:$0xff]
    %v2239 = vld [vmem:[#allocation12 + $0xa78] sm:$0xff]
    %v2240 = vld [vmem:[#allocation12 + $0xa80] sm:$0xff]
    %v2241 = vld [vmem:[#allocation12 + $0xa88] sm:$0xff]
    %v2242 = vld [vmem:[#allocation12 + $0xa90] sm:$0xff]
    %v2243 = vld [vmem:[#allocation12 + $0xa98] sm:$0xff]
    %v2244 = vld [vmem:[#allocation12 + $0xaa0] sm:$0xff]
    %v2245 = vld [vmem:[#allocation12 + $0xaa8] sm:$0xff]
    %v2246 = vld [vmem:[#allocation12 + $0xab0] sm:$0xff]
    %v2247 = vld [vmem:[#allocation12 + $0xab8] sm:$0xff]
    %v2248 = vld [vmem:[#allocation12 + $0xac0] sm:$0xff]
    %v2249 = vld [vmem:[#allocation12 + $0xac8] sm:$0xff]
    %v2250 = vld [vmem:[#allocation12 + $0xad0] sm:$0xff]
    %v2251 = vld [vmem:[#allocation12 + $0xad8] sm:$0xff]
    %v2252 = vld [vmem:[#allocation12 + $0xae0] sm:$0xff]
    %v2253 = vld [vmem:[#allocation12 + $0xae8] sm:$0xff]
    %v2254 = vld [vmem:[#allocation12 + $0xaf0] sm:$0xff]
    %v2255 = vld [vmem:[#allocation12 + $0xaf8] sm:$0xff]
    %v2256 = vld [vmem:[#allocation12 + $0xb00] sm:$0xff]
    %v2257 = vld [vmem:[#allocation12 + $0xb08] sm:$0xff]
    %v2258 = vld [vmem:[#allocation12 + $0xb10] sm:$0xff]
    %v2259 = vld [vmem:[#allocation12 + $0xb18] sm:$0xff]
    %v2260 = vld [vmem:[#allocation12 + $0xb20] sm:$0xff]
    %v2261 = vld [vmem:[#allocation12 + $0xb28] sm:$0xff]
    %v2262 = vld [vmem:[#allocation12 + $0xb30] sm:$0xff]
    %v2263 = vld [vmem:[#allocation12 + $0xb38] sm:$0xff]
    %v2264 = vld [vmem:[#allocation12 + $0xb40] sm:$0xff]
    %v2265 = vld [vmem:[#allocation12 + $0xb48] sm:$0xff]
    %v2266 = vld [vmem:[#allocation12 + $0xb50] sm:$0xff]
    %v2267 = vld [vmem:[#allocation12 + $0xb58] sm:$0xff]
    %v2268 = vld [vmem:[#allocation12 + $0xb60] sm:$0xff]
    %v2269 = vld [vmem:[#allocation12 + $0xb68] sm:$0xff]
    %v2270 = vld [vmem:[#allocation12 + $0xb70] sm:$0xff]
    %v2271 = vld [vmem:[#allocation12 + $0xb78] sm:$0xff]
    %v2272 = vld [vmem:[#allocation12 + $0xb80] sm:$0xff]
    %v2273 = vld [vmem:[#allocation12 + $0xb88] sm:$0xff]
    %v2274 = vld [vmem:[#allocation12 + $0xb90] sm:$0xff]
    %v2275 = vld [vmem:[#allocation12 + $0xb98] sm:$0xff]
    %v2276 = vld [vmem:[#allocation12 + $0xba0] sm:$0xff]
    %v2277 = vld [vmem:[#allocation12 + $0xba8] sm:$0xff]
    %v2278 = vld [vmem:[#allocation12 + $0xbb0] sm:$0xff]
    %v2279 = vld [vmem:[#allocation12 + $0xbb8] sm:$0xff]
    %v2280 = vld [vmem:[#allocation12 + $0xbc0] sm:$0xff]
    %v2281 = vld [vmem:[#allocation12 + $0xbc8] sm:$0xff]
    %v2282 = vld [vmem:[#allocation12 + $0xbd0] sm:$0xff]
    %v2283 = vld [vmem:[#allocation12 + $0xbd8] sm:$0xff]
    %v2284 = vld [vmem:[#allocation12 + $0xbe0] sm:$0xff]
    %v2285 = vld [vmem:[#allocation12 + $0xbe8] sm:$0xff]
    %v2286 = vld [vmem:[#allocation12 + $0xbf0] sm:$0xff]
    %v2287 = vld [vmem:[#allocation12 + $0xbf8] sm:$0xff]
    %v2288 = vld [vmem:[#allocation12 + $0xc00] sm:$0xff]
    %v2289 = vld [vmem:[#allocation12 + $0xc08] sm:$0xff]
    %v2290 = vld [vmem:[#allocation12 + $0xc10] sm:$0xff]
    %v2291 = vld [vmem:[#allocation12 + $0xc18] sm:$0xff]
    %v2292 = vld [vmem:[#allocation12 + $0xc20] sm:$0xff]
    %v2293 = vld [vmem:[#allocation12 + $0xc28] sm:$0xff]
    %v2294 = vld [vmem:[#allocation12 + $0xc30] sm:$0xff]
    %v2295 = vld [vmem:[#allocation12 + $0xc38] sm:$0xff]
    %v2296 = vld [vmem:[#allocation12 + $0xc40] sm:$0xff]
    %v2297 = vld [vmem:[#allocation12 + $0xc48] sm:$0xff]
    %v2298 = vld [vmem:[#allocation12 + $0xc50] sm:$0xff]
    %v2299 = vld [vmem:[#allocation12 + $0xc58] sm:$0xff]
    %v2300 = vld [vmem:[#allocation12 + $0xc60] sm:$0xff]
    %v2301 = vld [vmem:[#allocation12 + $0xc68] sm:$0xff]
    %v2302 = vld [vmem:[#allocation12 + $0xc70] sm:$0xff]
    %v2303 = vld [vmem:[#allocation12 + $0xc78] sm:$0xff]
    %v2304 = vld [vmem:[#allocation12 + $0xc80] sm:$0xff]
    %v2305 = vld [vmem:[#allocation12 + $0xc88] sm:$0xff]
    %v2306 = vld [vmem:[#allocation12 + $0xc90] sm:$0xff]
    %v2307 = vld [vmem:[#allocation12 + $0xc98] sm:$0xff]
    %v2308 = vld [vmem:[#allocation12 + $0xca0] sm:$0xff]
    %v2309 = vld [vmem:[#allocation12 + $0xca8] sm:$0xff]
    %v2310 = vld [vmem:[#allocation12 + $0xcb0] sm:$0xff]
    %v2311 = vld [vmem:[#allocation12 + $0xcb8] sm:$0xff]
    %v2312 = vld [vmem:[#allocation12 + $0xcc0] sm:$0xff]
    %v2313 = vld [vmem:[#allocation12 + $0xcc8] sm:$0xff]
    %v2314 = vld [vmem:[#allocation12 + $0xcd0] sm:$0xff]
    %v2315 = vld [vmem:[#allocation12 + $0xcd8] sm:$0xff]
    %v2316 = vld [vmem:[#allocation12 + $0xce0] sm:$0xff]
    %v2317 = vld [vmem:[#allocation12 + $0xce8] sm:$0xff]
    %v2318 = vld [vmem:[#allocation12 + $0xcf0] sm:$0xff]
    %v2319 = vld [vmem:[#allocation12 + $0xcf8] sm:$0xff]
    %v2320 = vld [vmem:[#allocation12 + $0xd00] sm:$0xff]
    %v2321 = vld [vmem:[#allocation12 + $0xd08] sm:$0xff]
    %v2322 = vld [vmem:[#allocation12 + $0xd10] sm:$0xff]
    %v2323 = vld [vmem:[#allocation12 + $0xd18] sm:$0xff]
    %v2324 = vld [vmem:[#allocation12 + $0xd20] sm:$0xff]
    %v2325 = vld [vmem:[#allocation12 + $0xd28] sm:$0xff]
    %v2326 = vld [vmem:[#allocation12 + $0xd30] sm:$0xff]
    %v2327 = vld [vmem:[#allocation12 + $0xd38] sm:$0xff]
    %v2328 = vld [vmem:[#allocation12 + $0xd40] sm:$0xff]
    %v2329 = vld [vmem:[#allocation12 + $0xd48] sm:$0xff]
    %v2330 = vld [vmem:[#allocation12 + $0xd50] sm:$0xff]
    %v2331 = vld [vmem:[#allocation12 + $0xd58] sm:$0xff]
    %v2332 = vld [vmem:[#allocation12 + $0xd60] sm:$0xff]
    %v2333 = vld [vmem:[#allocation12 + $0xd68] sm:$0xff]
    %v2334 = vld [vmem:[#allocation12 + $0xd70] sm:$0xff]
    %v2335 = vld [vmem:[#allocation12 + $0xd78] sm:$0xff]
    %v2336 = vld [vmem:[#allocation12 + $0xd80] sm:$0xff]
    %v2337 = vld [vmem:[#allocation12 + $0xd88] sm:$0xff]
    %v2338 = vld [vmem:[#allocation12 + $0xd90] sm:$0xff]
    %v2339 = vld [vmem:[#allocation12 + $0xd98] sm:$0xff]
    %v2340 = vld [vmem:[#allocation12 + $0xda0] sm:$0xff]
    %v2341 = vld [vmem:[#allocation12 + $0xda8] sm:$0xff]
    %v2342 = vld [vmem:[#allocation12 + $0xdb0] sm:$0xff]
    %v2343 = vld [vmem:[#allocation12 + $0xdb8] sm:$0xff]
    %v2344 = vld [vmem:[#allocation12 + $0xdc0] sm:$0xff]
    %v2345 = vld [vmem:[#allocation12 + $0xdc8] sm:$0xff]
    %v2346 = vld [vmem:[#allocation12 + $0xdd0] sm:$0xff]
    %v2347 = vld [vmem:[#allocation12 + $0xdd8] sm:$0xff]
    %v2348 = vld [vmem:[#allocation12 + $0xde0] sm:$0xff]
    %v2349 = vld [vmem:[#allocation12 + $0xde8] sm:$0xff]
    %v2350 = vld [vmem:[#allocation12 + $0xdf0] sm:$0xff]
    %v2351 = vld [vmem:[#allocation12 + $0xdf8] sm:$0xff]
    %v2352 = vld [vmem:[#allocation12 + $0xe00] sm:$0xff]
    %v2353 = vld [vmem:[#allocation12 + $0xe08] sm:$0xff]
    %v2354 = vld [vmem:[#allocation12 + $0xe10] sm:$0xff]
    %v2355 = vld [vmem:[#allocation12 + $0xe18] sm:$0xff]
    %v2356 = vld [vmem:[#allocation12 + $0xe20] sm:$0xff]
    %v2357 = vld [vmem:[#allocation12 + $0xe28] sm:$0xff]
    %v2358 = vld [vmem:[#allocation12 + $0xe30] sm:$0xff]
    %v2359 = vld [vmem:[#allocation12 + $0xe38] sm:$0xff]
    %v2360 = vld [vmem:[#allocation12 + $0xe40] sm:$0xff]
    %v2361 = vld [vmem:[#allocation12 + $0xe48] sm:$0xff]
    %v2362 = vld [vmem:[#allocation12 + $0xe50] sm:$0xff]
    %v2363 = vld [vmem:[#allocation12 + $0xe58] sm:$0xff]
    %v2364 = vld [vmem:[#allocation12 + $0xe60] sm:$0xff]
    %v2365 = vld [vmem:[#allocation12 + $0xe68] sm:$0xff]
    %v2366 = vld [vmem:[#allocation12 + $0xe70] sm:$0xff]
    %v2367 = vld [vmem:[#allocation12 + $0xe78] sm:$0xff]
    %v2368 = vld [vmem:[#allocation12 + $0xe80] sm:$0xff]
    %v2369 = vld [vmem:[#allocation12 + $0xe88] sm:$0xff]
    %v2370 = vld [vmem:[#allocation12 + $0xe90] sm:$0xff]
    %v2371 = vld [vmem:[#allocation12 + $0xe98] sm:$0xff]
    %v2372 = vld [vmem:[#allocation12 + $0xea0] sm:$0xff]
    %v2373 = vld [vmem:[#allocation12 + $0xea8] sm:$0xff]
    %v2374 = vld [vmem:[#allocation12 + $0xeb0] sm:$0xff]
    %v2375 = vld [vmem:[#allocation12 + $0xeb8] sm:$0xff]
    %v2376 = vld [vmem:[#allocation12 + $0xec0] sm:$0xff]
    %v2377 = vld [vmem:[#allocation12 + $0xec8] sm:$0xff]
    %v2378 = vld [vmem:[#allocation12 + $0xed0] sm:$0xff]
    %v2379 = vld [vmem:[#allocation12 + $0xed8] sm:$0xff]
    %v2380 = vld [vmem:[#allocation12 + $0xee0] sm:$0xff]
    %v2381 = vld [vmem:[#allocation12 + $0xee8] sm:$0xff]
    %v2382 = vld [vmem:[#allocation12 + $0xef0] sm:$0xff]
    %v2383 = vld [vmem:[#allocation12 + $0xef8] sm:$0xff]
    %v2384 = vld [vmem:[#allocation12 + $0xf00] sm:$0xff]
    %v2385 = vld [vmem:[#allocation12 + $0xf08] sm:$0xff]
    %v2386 = vld [vmem:[#allocation12 + $0xf10] sm:$0xff]
    %v2387 = vld [vmem:[#allocation12 + $0xf18] sm:$0xff]
    %v2388 = vld [vmem:[#allocation12 + $0xf20] sm:$0xff]
    %v2389 = vld [vmem:[#allocation12 + $0xf28] sm:$0xff]
    %v2390 = vld [vmem:[#allocation12 + $0xf30] sm:$0xff]
    %v2391 = vld [vmem:[#allocation12 + $0xf38] sm:$0xff]
    %v2392 = vld [vmem:[#allocation12 + $0xf40] sm:$0xff]
    %v2393 = vld [vmem:[#allocation12 + $0xf48] sm:$0xff]
    %v2394 = vld [vmem:[#allocation12 + $0xf50] sm:$0xff]
    %v2395 = vld [vmem:[#allocation12 + $0xf58] sm:$0xff]
    %v2396 = vld [vmem:[#allocation12 + $0xf60] sm:$0xff]
    %v2397 = vld [vmem:[#allocation12 + $0xf68] sm:$0xff]
    %v2398 = vld [vmem:[#allocation12 + $0xf70] sm:$0xff]
    %v2399 = vld [vmem:[#allocation12 + $0xf78] sm:$0xff]
    %v2400 = vld [vmem:[#allocation12 + $0xf80] sm:$0xff]
    %v2401 = vld [vmem:[#allocation12 + $0xf88] sm:$0xff]
    %v2402 = vld [vmem:[#allocation12 + $0xf90] sm:$0xff]
    %v2403 = vld [vmem:[#allocation12 + $0xf98] sm:$0xff]
    %v2404 = vld [vmem:[#allocation12 + $0xfa0] sm:$0xff]
    %v2405 = vld [vmem:[#allocation12 + $0xfa8] sm:$0xff]
    %v2406 = vld [vmem:[#allocation12 + $0xfb0] sm:$0xff]
    %v2407 = vld [vmem:[#allocation12 + $0xfb8] sm:$0xff]
    %v2408 = vld [vmem:[#allocation12 + $0xfc0] sm:$0xff]
    %v2409 = vld [vmem:[#allocation12 + $0xfc8] sm:$0xff]
    %v2410 = vld [vmem:[#allocation12 + $0xfd0] sm:$0xff]
    %v2411 = vld [vmem:[#allocation12 + $0xfd8] sm:$0xff]
    %v2412 = vld [vmem:[#allocation12 + $0xfe0] sm:$0xff]
    %v2413 = vld [vmem:[#allocation12 + $0xfe8] sm:$0xff]
    %v2414 = vld [vmem:[#allocation12 + $0xff0] sm:$0xff]
    %v2415 = vld [vmem:[#allocation12 + $0xff8] sm:$0xff]
    %v2416 = vpack.c.bf16 %v1649, %v1648
    %v2417 = vpack.c.bf16 %v1651, %v1650
    %v2418 = vpack.c.bf16 %v1653, %v1652
    %v2419 = vpack.c.bf16 %v1655, %v1654
    %v2420 = vpack.c.bf16 %v1657, %v1656
    %v2421 = vpack.c.bf16 %v1659, %v1658
    %v2422 = vpack.c.bf16 %v1661, %v1660
    %v2423 = vpack.c.bf16 %v1663, %v1662
    %v2424 = vpack.c.bf16 %v1665, %v1664
    %v2425 = vpack.c.bf16 %v1667, %v1666
    %v2426 = vpack.c.bf16 %v1669, %v1668
    %v2427 = vpack.c.bf16 %v1671, %v1670
    %v2428 = vpack.c.bf16 %v1673, %v1672
    %v2429 = vpack.c.bf16 %v1675, %v1674
    %v2430 = vpack.c.bf16 %v1677, %v1676
    %v2431 = vpack.c.bf16 %v1679, %v1678
    %v2432 = vpack.c.bf16 %v1681, %v1680
    %v2433 = vpack.c.bf16 %v1683, %v1682
    %v2434 = vpack.c.bf16 %v1685, %v1684
    %v2435 = vpack.c.bf16 %v1687, %v1686
    %v2436 = vpack.c.bf16 %v1689, %v1688
    %v2437 = vpack.c.bf16 %v1691, %v1690
    %v2438 = vpack.c.bf16 %v1693, %v1692
    %v2439 = vpack.c.bf16 %v1695, %v1694
    %v2440 = vpack.c.bf16 %v1697, %v1696
    %v2441 = vpack.c.bf16 %v1699, %v1698
    %v2442 = vpack.c.bf16 %v1701, %v1700
    %v2443 = vpack.c.bf16 %v1703, %v1702
    %v2444 = vpack.c.bf16 %v1705, %v1704
    %v2445 = vpack.c.bf16 %v1707, %v1706
    %v2446 = vpack.c.bf16 %v1709, %v1708
    %v2447 = vpack.c.bf16 %v1711, %v1710
    %v2448 = vpack.c.bf16 %v1713, %v1712
    %v2449 = vpack.c.bf16 %v1715, %v1714
    %v2450 = vpack.c.bf16 %v1717, %v1716
    %v2451 = vpack.c.bf16 %v1719, %v1718
    %v2452 = vpack.c.bf16 %v1721, %v1720
    %v2453 = vpack.c.bf16 %v1723, %v1722
    %v2454 = vpack.c.bf16 %v1725, %v1724
    %v2455 = vpack.c.bf16 %v1727, %v1726
    %v2456 = vpack.c.bf16 %v1729, %v1728
    %v2457 = vpack.c.bf16 %v1731, %v1730
    %v2458 = vpack.c.bf16 %v1733, %v1732
    %v2459 = vpack.c.bf16 %v1735, %v1734
    %v2460 = vpack.c.bf16 %v1737, %v1736
    %v2461 = vpack.c.bf16 %v1739, %v1738
    %v2462 = vpack.c.bf16 %v1741, %v1740
    %v2463 = vpack.c.bf16 %v1743, %v1742
    %v2464 = vpack.c.bf16 %v1745, %v1744
    %v2465 = vpack.c.bf16 %v1747, %v1746
    %v2466 = vpack.c.bf16 %v1749, %v1748
    %v2467 = vpack.c.bf16 %v1751, %v1750
    %v2468 = vpack.c.bf16 %v1753, %v1752
    %v2469 = vpack.c.bf16 %v1755, %v1754
    %v2470 = vpack.c.bf16 %v1757, %v1756
    %v2471 = vpack.c.bf16 %v1759, %v1758
    %v2472 = vpack.c.bf16 %v1761, %v1760
    %v2473 = vpack.c.bf16 %v1763, %v1762
    %v2474 = vpack.c.bf16 %v1765, %v1764
    %v2475 = vpack.c.bf16 %v1767, %v1766
    %v2476 = vpack.c.bf16 %v1769, %v1768
    %v2477 = vpack.c.bf16 %v1771, %v1770
    %v2478 = vpack.c.bf16 %v1773, %v1772
    %v2479 = vpack.c.bf16 %v1775, %v1774
    %v2480 = vpack.c.bf16 %v1777, %v1776
    %v2481 = vpack.c.bf16 %v1779, %v1778
    %v2482 = vpack.c.bf16 %v1781, %v1780
    %v2483 = vpack.c.bf16 %v1783, %v1782
    %v2484 = vpack.c.bf16 %v1785, %v1784
    %v2485 = vpack.c.bf16 %v1787, %v1786
    %v2486 = vpack.c.bf16 %v1789, %v1788
    %v2487 = vpack.c.bf16 %v1791, %v1790
    %v2488 = vpack.c.bf16 %v1793, %v1792
    %v2489 = vpack.c.bf16 %v1795, %v1794
    %v2490 = vpack.c.bf16 %v1797, %v1796
    %v2491 = vpack.c.bf16 %v1799, %v1798
    %v2492 = vpack.c.bf16 %v1801, %v1800
    %v2493 = vpack.c.bf16 %v1803, %v1802
    %v2494 = vpack.c.bf16 %v1805, %v1804
    %v2495 = vpack.c.bf16 %v1807, %v1806
    %v2496 = vpack.c.bf16 %v1809, %v1808
    %v2497 = vpack.c.bf16 %v1811, %v1810
    %v2498 = vpack.c.bf16 %v1813, %v1812
    %v2499 = vpack.c.bf16 %v1815, %v1814
    %v2500 = vpack.c.bf16 %v1817, %v1816
    %v2501 = vpack.c.bf16 %v1819, %v1818
    %v2502 = vpack.c.bf16 %v1821, %v1820
    %v2503 = vpack.c.bf16 %v1823, %v1822
    %v2504 = vpack.c.bf16 %v1825, %v1824
    %v2505 = vpack.c.bf16 %v1827, %v1826
    %v2506 = vpack.c.bf16 %v1829, %v1828
    %v2507 = vpack.c.bf16 %v1831, %v1830
    %v2508 = vpack.c.bf16 %v1833, %v1832
    %v2509 = vpack.c.bf16 %v1835, %v1834
    %v2510 = vpack.c.bf16 %v1837, %v1836
    %v2511 = vpack.c.bf16 %v1839, %v1838
    %v2512 = vpack.c.bf16 %v1841, %v1840
    %v2513 = vpack.c.bf16 %v1843, %v1842
    %v2514 = vpack.c.bf16 %v1845, %v1844
    %v2515 = vpack.c.bf16 %v1847, %v1846
    %v2516 = vpack.c.bf16 %v1849, %v1848
    %v2517 = vpack.c.bf16 %v1851, %v1850
    %v2518 = vpack.c.bf16 %v1853, %v1852
    %v2519 = vpack.c.bf16 %v1855, %v1854
    %v2520 = vpack.c.bf16 %v1857, %v1856
    %v2521 = vpack.c.bf16 %v1859, %v1858
    %v2522 = vpack.c.bf16 %v1861, %v1860
    %v2523 = vpack.c.bf16 %v1863, %v1862
    %v2524 = vpack.c.bf16 %v1865, %v1864
    %v2525 = vpack.c.bf16 %v1867, %v1866
    %v2526 = vpack.c.bf16 %v1869, %v1868
    %v2527 = vpack.c.bf16 %v1871, %v1870
    %v2528 = vpack.c.bf16 %v1873, %v1872
    %v2529 = vpack.c.bf16 %v1875, %v1874
    %v2530 = vpack.c.bf16 %v1877, %v1876
    %v2531 = vpack.c.bf16 %v1879, %v1878
    %v2532 = vpack.c.bf16 %v1881, %v1880
    %v2533 = vpack.c.bf16 %v1883, %v1882
    %v2534 = vpack.c.bf16 %v1885, %v1884
    %v2535 = vpack.c.bf16 %v1887, %v1886
    %v2536 = vpack.c.bf16 %v1889, %v1888
    %v2537 = vpack.c.bf16 %v1891, %v1890
    %v2538 = vpack.c.bf16 %v1893, %v1892
    %v2539 = vpack.c.bf16 %v1895, %v1894
    %v2540 = vpack.c.bf16 %v1897, %v1896
    %v2541 = vpack.c.bf16 %v1899, %v1898
    %v2542 = vpack.c.bf16 %v1901, %v1900
    %v2543 = vpack.c.bf16 %v1903, %v1902
    %v3056 = vunpack.c.l.b16 %v1904
    %v3057 = vunpack.c.h.b16 %v1904
    %v3058 = vunpack.c.l.b16 %v1905
    %v3059 = vunpack.c.h.b16 %v1905
    %v3060 = vunpack.c.l.b16 %v1906
    %v3061 = vunpack.c.h.b16 %v1906
    %v3062 = vunpack.c.l.b16 %v1907
    %v3063 = vunpack.c.h.b16 %v1907
    %v3064 = vunpack.c.l.b16 %v1908
    %v3065 = vunpack.c.h.b16 %v1908
    %v3066 = vunpack.c.l.b16 %v1909
    %v3067 = vunpack.c.h.b16 %v1909
    %v3068 = vunpack.c.l.b16 %v1910
    %v3069 = vunpack.c.h.b16 %v1910
    %v3070 = vunpack.c.l.b16 %v1911
    %v3071 = vunpack.c.h.b16 %v1911
    %v3072 = vunpack.c.l.b16 %v1912
    %v3073 = vunpack.c.h.b16 %v1912
    %v3074 = vunpack.c.l.b16 %v1913
    %v3075 = vunpack.c.h.b16 %v1913
    %v3076 = vunpack.c.l.b16 %v1914
    %v3077 = vunpack.c.h.b16 %v1914
    %v3078 = vunpack.c.l.b16 %v1915
    %v3079 = vunpack.c.h.b16 %v1915
    %v3080 = vunpack.c.l.b16 %v1916
    %v3081 = vunpack.c.h.b16 %v1916
    %v3082 = vunpack.c.l.b16 %v1917
    %v3083 = vunpack.c.h.b16 %v1917
    %v3084 = vunpack.c.l.b16 %v1918
    %v3085 = vunpack.c.h.b16 %v1918
    %v3086 = vunpack.c.l.b16 %v1919
    %v3087 = vunpack.c.h.b16 %v1919
    %v3088 = vunpack.c.l.b16 %v1920
    %v3089 = vunpack.c.h.b16 %v1920
    %v3090 = vunpack.c.l.b16 %v1921
    %v3091 = vunpack.c.h.b16 %v1921
    %v3092 = vunpack.c.l.b16 %v1922
    %v3093 = vunpack.c.h.b16 %v1922
    %v3094 = vunpack.c.l.b16 %v1923
    %v3095 = vunpack.c.h.b16 %v1923
    %v3096 = vunpack.c.l.b16 %v1924
    %v3097 = vunpack.c.h.b16 %v1924
    %v3098 = vunpack.c.l.b16 %v1925
    %v3099 = vunpack.c.h.b16 %v1925
    %v3100 = vunpack.c.l.b16 %v1926
    %v3101 = vunpack.c.h.b16 %v1926
    %v3102 = vunpack.c.l.b16 %v1927
    %v3103 = vunpack.c.h.b16 %v1927
    %v3104 = vunpack.c.l.b16 %v1928
    %v3105 = vunpack.c.h.b16 %v1928
    %v3106 = vunpack.c.l.b16 %v1929
    %v3107 = vunpack.c.h.b16 %v1929
    %v3108 = vunpack.c.l.b16 %v1930
    %v3109 = vunpack.c.h.b16 %v1930
    %v3110 = vunpack.c.l.b16 %v1931
    %v3111 = vunpack.c.h.b16 %v1931
    %v3112 = vunpack.c.l.b16 %v1932
    %v3113 = vunpack.c.h.b16 %v1932
    %v3114 = vunpack.c.l.b16 %v1933
    %v3115 = vunpack.c.h.b16 %v1933
    %v3116 = vunpack.c.l.b16 %v1934
    %v3117 = vunpack.c.h.b16 %v1934
    %v3118 = vunpack.c.l.b16 %v1935
    %v3119 = vunpack.c.h.b16 %v1935
    %v3120 = vunpack.c.l.b16 %v1936
    %v3121 = vunpack.c.h.b16 %v1936
    %v3122 = vunpack.c.l.b16 %v1937
    %v3123 = vunpack.c.h.b16 %v1937
    %v3124 = vunpack.c.l.b16 %v1938
    %v3125 = vunpack.c.h.b16 %v1938
    %v3126 = vunpack.c.l.b16 %v1939
    %v3127 = vunpack.c.h.b16 %v1939
    %v3128 = vunpack.c.l.b16 %v1940
    %v3129 = vunpack.c.h.b16 %v1940
    %v3130 = vunpack.c.l.b16 %v1941
    %v3131 = vunpack.c.h.b16 %v1941
    %v3132 = vunpack.c.l.b16 %v1942
    %v3133 = vunpack.c.h.b16 %v1942
    %v3134 = vunpack.c.l.b16 %v1943
    %v3135 = vunpack.c.h.b16 %v1943
    %v3136 = vunpack.c.l.b16 %v1944
    %v3137 = vunpack.c.h.b16 %v1944
    %v3138 = vunpack.c.l.b16 %v1945
    %v3139 = vunpack.c.h.b16 %v1945
    %v3140 = vunpack.c.l.b16 %v1946
    %v3141 = vunpack.c.h.b16 %v1946
    %v3142 = vunpack.c.l.b16 %v1947
    %v3143 = vunpack.c.h.b16 %v1947
    %v3144 = vunpack.c.l.b16 %v1948
    %v3145 = vunpack.c.h.b16 %v1948
    %v3146 = vunpack.c.l.b16 %v1949
    %v3147 = vunpack.c.h.b16 %v1949
    %v3148 = vunpack.c.l.b16 %v1950
    %v3149 = vunpack.c.h.b16 %v1950
    %v3150 = vunpack.c.l.b16 %v1951
    %v3151 = vunpack.c.h.b16 %v1951
    %v3152 = vunpack.c.l.b16 %v1952
    %v3153 = vunpack.c.h.b16 %v1952
    %v3154 = vunpack.c.l.b16 %v1953
    %v3155 = vunpack.c.h.b16 %v1953
    %v3156 = vunpack.c.l.b16 %v1954
    %v3157 = vunpack.c.h.b16 %v1954
    %v3158 = vunpack.c.l.b16 %v1955
    %v3159 = vunpack.c.h.b16 %v1955
    %v3160 = vunpack.c.l.b16 %v1956
    %v3161 = vunpack.c.h.b16 %v1956
    %v3162 = vunpack.c.l.b16 %v1957
    %v3163 = vunpack.c.h.b16 %v1957
    %v3164 = vunpack.c.l.b16 %v1958
    %v3165 = vunpack.c.h.b16 %v1958
    %v3166 = vunpack.c.l.b16 %v1959
    %v3167 = vunpack.c.h.b16 %v1959
    %v3168 = vunpack.c.l.b16 %v1960
    %v3169 = vunpack.c.h.b16 %v1960
    %v3170 = vunpack.c.l.b16 %v1961
    %v3171 = vunpack.c.h.b16 %v1961
    %v3172 = vunpack.c.l.b16 %v1962
    %v3173 = vunpack.c.h.b16 %v1962
    %v3174 = vunpack.c.l.b16 %v1963
    %v3175 = vunpack.c.h.b16 %v1963
    %v3176 = vunpack.c.l.b16 %v1964
    %v3177 = vunpack.c.h.b16 %v1964
    %v3178 = vunpack.c.l.b16 %v1965
    %v3179 = vunpack.c.h.b16 %v1965
    %v3180 = vunpack.c.l.b16 %v1966
    %v3181 = vunpack.c.h.b16 %v1966
    %v3182 = vunpack.c.l.b16 %v1967
    %v3183 = vunpack.c.h.b16 %v1967
    %v3184 = vunpack.c.l.b16 %v1968
    %v3185 = vunpack.c.h.b16 %v1968
    %v3186 = vunpack.c.l.b16 %v1969
    %v3187 = vunpack.c.h.b16 %v1969
    %v3188 = vunpack.c.l.b16 %v1970
    %v3189 = vunpack.c.h.b16 %v1970
    %v3190 = vunpack.c.l.b16 %v1971
    %v3191 = vunpack.c.h.b16 %v1971
    %v3192 = vunpack.c.l.b16 %v1972
    %v3193 = vunpack.c.h.b16 %v1972
    %v3194 = vunpack.c.l.b16 %v1973
    %v3195 = vunpack.c.h.b16 %v1973
    %v3196 = vunpack.c.l.b16 %v1974
    %v3197 = vunpack.c.h.b16 %v1974
    %v3198 = vunpack.c.l.b16 %v1975
    %v3199 = vunpack.c.h.b16 %v1975
    %v3200 = vunpack.c.l.b16 %v1976
    %v3201 = vunpack.c.h.b16 %v1976
    %v3202 = vunpack.c.l.b16 %v1977
    %v3203 = vunpack.c.h.b16 %v1977
    %v3204 = vunpack.c.l.b16 %v1978
    %v3205 = vunpack.c.h.b16 %v1978
    %v3206 = vunpack.c.l.b16 %v1979
    %v3207 = vunpack.c.h.b16 %v1979
    %v3208 = vunpack.c.l.b16 %v1980
    %v3209 = vunpack.c.h.b16 %v1980
    %v3210 = vunpack.c.l.b16 %v1981
    %v3211 = vunpack.c.h.b16 %v1981
    %v3212 = vunpack.c.l.b16 %v1982
    %v3213 = vunpack.c.h.b16 %v1982
    %v3214 = vunpack.c.l.b16 %v1983
    %v3215 = vunpack.c.h.b16 %v1983
    %v3216 = vunpack.c.l.b16 %v1984
    %v3217 = vunpack.c.h.b16 %v1984
    %v3218 = vunpack.c.l.b16 %v1985
    %v3219 = vunpack.c.h.b16 %v1985
    %v3220 = vunpack.c.l.b16 %v1986
    %v3221 = vunpack.c.h.b16 %v1986
    %v3222 = vunpack.c.l.b16 %v1987
    %v3223 = vunpack.c.h.b16 %v1987
    %v3224 = vunpack.c.l.b16 %v1988
    %v3225 = vunpack.c.h.b16 %v1988
    %v3226 = vunpack.c.l.b16 %v1989
    %v3227 = vunpack.c.h.b16 %v1989
    %v3228 = vunpack.c.l.b16 %v1990
    %v3229 = vunpack.c.h.b16 %v1990
    %v3230 = vunpack.c.l.b16 %v1991
    %v3231 = vunpack.c.h.b16 %v1991
    %v3232 = vunpack.c.l.b16 %v1992
    %v3233 = vunpack.c.h.b16 %v1992
    %v3234 = vunpack.c.l.b16 %v1993
    %v3235 = vunpack.c.h.b16 %v1993
    %v3236 = vunpack.c.l.b16 %v1994
    %v3237 = vunpack.c.h.b16 %v1994
    %v3238 = vunpack.c.l.b16 %v1995
    %v3239 = vunpack.c.h.b16 %v1995
    %v3240 = vunpack.c.l.b16 %v1996
    %v3241 = vunpack.c.h.b16 %v1996
    %v3242 = vunpack.c.l.b16 %v1997
    %v3243 = vunpack.c.h.b16 %v1997
    %v3244 = vunpack.c.l.b16 %v1998
    %v3245 = vunpack.c.h.b16 %v1998
    %v3246 = vunpack.c.l.b16 %v1999
    %v3247 = vunpack.c.h.b16 %v1999
    %v3248 = vunpack.c.l.b16 %v2000
    %v3249 = vunpack.c.h.b16 %v2000
    %v3250 = vunpack.c.l.b16 %v2001
    %v3251 = vunpack.c.h.b16 %v2001
    %v3252 = vunpack.c.l.b16 %v2002
    %v3253 = vunpack.c.h.b16 %v2002
    %v3254 = vunpack.c.l.b16 %v2003
    %v3255 = vunpack.c.h.b16 %v2003
    %v3256 = vunpack.c.l.b16 %v2004
    %v3257 = vunpack.c.h.b16 %v2004
    %v3258 = vunpack.c.l.b16 %v2005
    %v3259 = vunpack.c.h.b16 %v2005
    %v3260 = vunpack.c.l.b16 %v2006
    %v3261 = vunpack.c.h.b16 %v2006
    %v3262 = vunpack.c.l.b16 %v2007
    %v3263 = vunpack.c.h.b16 %v2007
    %v3264 = vunpack.c.l.b16 %v2008
    %v3265 = vunpack.c.h.b16 %v2008
    %v3266 = vunpack.c.l.b16 %v2009
    %v3267 = vunpack.c.h.b16 %v2009
    %v3268 = vunpack.c.l.b16 %v2010
    %v3269 = vunpack.c.h.b16 %v2010
    %v3270 = vunpack.c.l.b16 %v2011
    %v3271 = vunpack.c.h.b16 %v2011
    %v3272 = vunpack.c.l.b16 %v2012
    %v3273 = vunpack.c.h.b16 %v2012
    %v3274 = vunpack.c.l.b16 %v2013
    %v3275 = vunpack.c.h.b16 %v2013
    %v3276 = vunpack.c.l.b16 %v2014
    %v3277 = vunpack.c.h.b16 %v2014
    %v3278 = vunpack.c.l.b16 %v2015
    %v3279 = vunpack.c.h.b16 %v2015
    %v3280 = vunpack.c.l.b16 %v2016
    %v3281 = vunpack.c.h.b16 %v2016
    %v3282 = vunpack.c.l.b16 %v2017
    %v3283 = vunpack.c.h.b16 %v2017
    %v3284 = vunpack.c.l.b16 %v2018
    %v3285 = vunpack.c.h.b16 %v2018
    %v3286 = vunpack.c.l.b16 %v2019
    %v3287 = vunpack.c.h.b16 %v2019
    %v3288 = vunpack.c.l.b16 %v2020
    %v3289 = vunpack.c.h.b16 %v2020
    %v3290 = vunpack.c.l.b16 %v2021
    %v3291 = vunpack.c.h.b16 %v2021
    %v3292 = vunpack.c.l.b16 %v2022
    %v3293 = vunpack.c.h.b16 %v2022
    %v3294 = vunpack.c.l.b16 %v2023
    %v3295 = vunpack.c.h.b16 %v2023
    %v3296 = vunpack.c.l.b16 %v2024
    %v3297 = vunpack.c.h.b16 %v2024
    %v3298 = vunpack.c.l.b16 %v2025
    %v3299 = vunpack.c.h.b16 %v2025
    %v3300 = vunpack.c.l.b16 %v2026
    %v3301 = vunpack.c.h.b16 %v2026
    %v3302 = vunpack.c.l.b16 %v2027
    %v3303 = vunpack.c.h.b16 %v2027
    %v3304 = vunpack.c.l.b16 %v2028
    %v3305 = vunpack.c.h.b16 %v2028
    %v3306 = vunpack.c.l.b16 %v2029
    %v3307 = vunpack.c.h.b16 %v2029
    %v3308 = vunpack.c.l.b16 %v2030
    %v3309 = vunpack.c.h.b16 %v2030
    %v3310 = vunpack.c.l.b16 %v2031
    %v3311 = vunpack.c.h.b16 %v2031
    %v3312 = vunpack.c.l.b16 %v2032
    %v3313 = vunpack.c.h.b16 %v2032
    %v3314 = vunpack.c.l.b16 %v2033
    %v3315 = vunpack.c.h.b16 %v2033
    %v3316 = vunpack.c.l.b16 %v2034
    %v3317 = vunpack.c.h.b16 %v2034
    %v3318 = vunpack.c.l.b16 %v2035
    %v3319 = vunpack.c.h.b16 %v2035
    %v3320 = vunpack.c.l.b16 %v2036
    %v3321 = vunpack.c.h.b16 %v2036
    %v3322 = vunpack.c.l.b16 %v2037
    %v3323 = vunpack.c.h.b16 %v2037
    %v3324 = vunpack.c.l.b16 %v2038
    %v3325 = vunpack.c.h.b16 %v2038
    %v3326 = vunpack.c.l.b16 %v2039
    %v3327 = vunpack.c.h.b16 %v2039
    %v3328 = vunpack.c.l.b16 %v2040
    %v3329 = vunpack.c.h.b16 %v2040
    %v3330 = vunpack.c.l.b16 %v2041
    %v3331 = vunpack.c.h.b16 %v2041
    %v3332 = vunpack.c.l.b16 %v2042
    %v3333 = vunpack.c.h.b16 %v2042
    %v3334 = vunpack.c.l.b16 %v2043
    %v3335 = vunpack.c.h.b16 %v2043
    %v3336 = vunpack.c.l.b16 %v2044
    %v3337 = vunpack.c.h.b16 %v2044
    %v3338 = vunpack.c.l.b16 %v2045
    %v3339 = vunpack.c.h.b16 %v2045
    %v3340 = vunpack.c.l.b16 %v2046
    %v3341 = vunpack.c.h.b16 %v2046
    %v3342 = vunpack.c.l.b16 %v2047
    %v3343 = vunpack.c.h.b16 %v2047
    %v3344 = vunpack.c.l.b16 %v2048
    %v3345 = vunpack.c.h.b16 %v2048
    %v3346 = vunpack.c.l.b16 %v2049
    %v3347 = vunpack.c.h.b16 %v2049
    %v3348 = vunpack.c.l.b16 %v2050
    %v3349 = vunpack.c.h.b16 %v2050
    %v3350 = vunpack.c.l.b16 %v2051
    %v3351 = vunpack.c.h.b16 %v2051
    %v3352 = vunpack.c.l.b16 %v2052
    %v3353 = vunpack.c.h.b16 %v2052
    %v3354 = vunpack.c.l.b16 %v2053
    %v3355 = vunpack.c.h.b16 %v2053
    %v3356 = vunpack.c.l.b16 %v2054
    %v3357 = vunpack.c.h.b16 %v2054
    %v3358 = vunpack.c.l.b16 %v2055
    %v3359 = vunpack.c.h.b16 %v2055
    %v3360 = vunpack.c.l.b16 %v2056
    %v3361 = vunpack.c.h.b16 %v2056
    %v3362 = vunpack.c.l.b16 %v2057
    %v3363 = vunpack.c.h.b16 %v2057
    %v3364 = vunpack.c.l.b16 %v2058
    %v3365 = vunpack.c.h.b16 %v2058
    %v3366 = vunpack.c.l.b16 %v2059
    %v3367 = vunpack.c.h.b16 %v2059
    %v3368 = vunpack.c.l.b16 %v2060
    %v3369 = vunpack.c.h.b16 %v2060
    %v3370 = vunpack.c.l.b16 %v2061
    %v3371 = vunpack.c.h.b16 %v2061
    %v3372 = vunpack.c.l.b16 %v2062
    %v3373 = vunpack.c.h.b16 %v2062
    %v3374 = vunpack.c.l.b16 %v2063
    %v3375 = vunpack.c.h.b16 %v2063
    %v3376 = vunpack.c.l.b16 %v2064
    %v3377 = vunpack.c.h.b16 %v2064
    %v3378 = vunpack.c.l.b16 %v2065
    %v3379 = vunpack.c.h.b16 %v2065
    %v3380 = vunpack.c.l.b16 %v2066
    %v3381 = vunpack.c.h.b16 %v2066
    %v3382 = vunpack.c.l.b16 %v2067
    %v3383 = vunpack.c.h.b16 %v2067
    %v3384 = vunpack.c.l.b16 %v2068
    %v3385 = vunpack.c.h.b16 %v2068
    %v3386 = vunpack.c.l.b16 %v2069
    %v3387 = vunpack.c.h.b16 %v2069
    %v3388 = vunpack.c.l.b16 %v2070
    %v3389 = vunpack.c.h.b16 %v2070
    %v3390 = vunpack.c.l.b16 %v2071
    %v3391 = vunpack.c.h.b16 %v2071
    %v3392 = vunpack.c.l.b16 %v2072
    %v3393 = vunpack.c.h.b16 %v2072
    %v3394 = vunpack.c.l.b16 %v2073
    %v3395 = vunpack.c.h.b16 %v2073
    %v3396 = vunpack.c.l.b16 %v2074
    %v3397 = vunpack.c.h.b16 %v2074
    %v3398 = vunpack.c.l.b16 %v2075
    %v3399 = vunpack.c.h.b16 %v2075
    %v3400 = vunpack.c.l.b16 %v2076
    %v3401 = vunpack.c.h.b16 %v2076
    %v3402 = vunpack.c.l.b16 %v2077
    %v3403 = vunpack.c.h.b16 %v2077
    %v3404 = vunpack.c.l.b16 %v2078
    %v3405 = vunpack.c.h.b16 %v2078
    %v3406 = vunpack.c.l.b16 %v2079
    %v3407 = vunpack.c.h.b16 %v2079
    %v3408 = vunpack.c.l.b16 %v2080
    %v3409 = vunpack.c.h.b16 %v2080
    %v3410 = vunpack.c.l.b16 %v2081
    %v3411 = vunpack.c.h.b16 %v2081
    %v3412 = vunpack.c.l.b16 %v2082
    %v3413 = vunpack.c.h.b16 %v2082
    %v3414 = vunpack.c.l.b16 %v2083
    %v3415 = vunpack.c.h.b16 %v2083
    %v3416 = vunpack.c.l.b16 %v2084
    %v3417 = vunpack.c.h.b16 %v2084
    %v3418 = vunpack.c.l.b16 %v2085
    %v3419 = vunpack.c.h.b16 %v2085
    %v3420 = vunpack.c.l.b16 %v2086
    %v3421 = vunpack.c.h.b16 %v2086
    %v3422 = vunpack.c.l.b16 %v2087
    %v3423 = vunpack.c.h.b16 %v2087
    %v3424 = vunpack.c.l.b16 %v2088
    %v3425 = vunpack.c.h.b16 %v2088
    %v3426 = vunpack.c.l.b16 %v2089
    %v3427 = vunpack.c.h.b16 %v2089
    %v3428 = vunpack.c.l.b16 %v2090
    %v3429 = vunpack.c.h.b16 %v2090
    %v3430 = vunpack.c.l.b16 %v2091
    %v3431 = vunpack.c.h.b16 %v2091
    %v3432 = vunpack.c.l.b16 %v2092
    %v3433 = vunpack.c.h.b16 %v2092
    %v3434 = vunpack.c.l.b16 %v2093
    %v3435 = vunpack.c.h.b16 %v2093
    %v3436 = vunpack.c.l.b16 %v2094
    %v3437 = vunpack.c.h.b16 %v2094
    %v3438 = vunpack.c.l.b16 %v2095
    %v3439 = vunpack.c.h.b16 %v2095
    %v3440 = vunpack.c.l.b16 %v2096
    %v3441 = vunpack.c.h.b16 %v2096
    %v3442 = vunpack.c.l.b16 %v2097
    %v3443 = vunpack.c.h.b16 %v2097
    %v3444 = vunpack.c.l.b16 %v2098
    %v3445 = vunpack.c.h.b16 %v2098
    %v3446 = vunpack.c.l.b16 %v2099
    %v3447 = vunpack.c.h.b16 %v2099
    %v3448 = vunpack.c.l.b16 %v2100
    %v3449 = vunpack.c.h.b16 %v2100
    %v3450 = vunpack.c.l.b16 %v2101
    %v3451 = vunpack.c.h.b16 %v2101
    %v3452 = vunpack.c.l.b16 %v2102
    %v3453 = vunpack.c.h.b16 %v2102
    %v3454 = vunpack.c.l.b16 %v2103
    %v3455 = vunpack.c.h.b16 %v2103
    %v3456 = vunpack.c.l.b16 %v2104
    %v3457 = vunpack.c.h.b16 %v2104
    %v3458 = vunpack.c.l.b16 %v2105
    %v3459 = vunpack.c.h.b16 %v2105
    %v3460 = vunpack.c.l.b16 %v2106
    %v3461 = vunpack.c.h.b16 %v2106
    %v3462 = vunpack.c.l.b16 %v2107
    %v3463 = vunpack.c.h.b16 %v2107
    %v3464 = vunpack.c.l.b16 %v2108
    %v3465 = vunpack.c.h.b16 %v2108
    %v3466 = vunpack.c.l.b16 %v2109
    %v3467 = vunpack.c.h.b16 %v2109
    %v3468 = vunpack.c.l.b16 %v2110
    %v3469 = vunpack.c.h.b16 %v2110
    %v3470 = vunpack.c.l.b16 %v2111
    %v3471 = vunpack.c.h.b16 %v2111
    %v3472 = vunpack.c.l.b16 %v2112
    %v3473 = vunpack.c.h.b16 %v2112
    %v3474 = vunpack.c.l.b16 %v2113
    %v3475 = vunpack.c.h.b16 %v2113
    %v3476 = vunpack.c.l.b16 %v2114
    %v3477 = vunpack.c.h.b16 %v2114
    %v3478 = vunpack.c.l.b16 %v2115
    %v3479 = vunpack.c.h.b16 %v2115
    %v3480 = vunpack.c.l.b16 %v2116
    %v3481 = vunpack.c.h.b16 %v2116
    %v3482 = vunpack.c.l.b16 %v2117
    %v3483 = vunpack.c.h.b16 %v2117
    %v3484 = vunpack.c.l.b16 %v2118
    %v3485 = vunpack.c.h.b16 %v2118
    %v3486 = vunpack.c.l.b16 %v2119
    %v3487 = vunpack.c.h.b16 %v2119
    %v3488 = vunpack.c.l.b16 %v2120
    %v3489 = vunpack.c.h.b16 %v2120
    %v3490 = vunpack.c.l.b16 %v2121
    %v3491 = vunpack.c.h.b16 %v2121
    %v3492 = vunpack.c.l.b16 %v2122
    %v3493 = vunpack.c.h.b16 %v2122
    %v3494 = vunpack.c.l.b16 %v2123
    %v3495 = vunpack.c.h.b16 %v2123
    %v3496 = vunpack.c.l.b16 %v2124
    %v3497 = vunpack.c.h.b16 %v2124
    %v3498 = vunpack.c.l.b16 %v2125
    %v3499 = vunpack.c.h.b16 %v2125
    %v3500 = vunpack.c.l.b16 %v2126
    %v3501 = vunpack.c.h.b16 %v2126
    %v3502 = vunpack.c.l.b16 %v2127
    %v3503 = vunpack.c.h.b16 %v2127
    %v3504 = vunpack.c.l.b16 %v2128
    %v3505 = vunpack.c.h.b16 %v2128
    %v3506 = vunpack.c.l.b16 %v2129
    %v3507 = vunpack.c.h.b16 %v2129
    %v3508 = vunpack.c.l.b16 %v2130
    %v3509 = vunpack.c.h.b16 %v2130
    %v3510 = vunpack.c.l.b16 %v2131
    %v3511 = vunpack.c.h.b16 %v2131
    %v3512 = vunpack.c.l.b16 %v2132
    %v3513 = vunpack.c.h.b16 %v2132
    %v3514 = vunpack.c.l.b16 %v2133
    %v3515 = vunpack.c.h.b16 %v2133
    %v3516 = vunpack.c.l.b16 %v2134
    %v3517 = vunpack.c.h.b16 %v2134
    %v3518 = vunpack.c.l.b16 %v2135
    %v3519 = vunpack.c.h.b16 %v2135
    %v3520 = vunpack.c.l.b16 %v2136
    %v3521 = vunpack.c.h.b16 %v2136
    %v3522 = vunpack.c.l.b16 %v2137
    %v3523 = vunpack.c.h.b16 %v2137
    %v3524 = vunpack.c.l.b16 %v2138
    %v3525 = vunpack.c.h.b16 %v2138
    %v3526 = vunpack.c.l.b16 %v2139
    %v3527 = vunpack.c.h.b16 %v2139
    %v3528 = vunpack.c.l.b16 %v2140
    %v3529 = vunpack.c.h.b16 %v2140
    %v3530 = vunpack.c.l.b16 %v2141
    %v3531 = vunpack.c.h.b16 %v2141
    %v3532 = vunpack.c.l.b16 %v2142
    %v3533 = vunpack.c.h.b16 %v2142
    %v3534 = vunpack.c.l.b16 %v2143
    %v3535 = vunpack.c.h.b16 %v2143
    %v3536 = vunpack.c.l.b16 %v2144
    %v3537 = vunpack.c.h.b16 %v2144
    %v3538 = vunpack.c.l.b16 %v2145
    %v3539 = vunpack.c.h.b16 %v2145
    %v3540 = vunpack.c.l.b16 %v2146
    %v3541 = vunpack.c.h.b16 %v2146
    %v3542 = vunpack.c.l.b16 %v2147
    %v3543 = vunpack.c.h.b16 %v2147
    %v3544 = vunpack.c.l.b16 %v2148
    %v3545 = vunpack.c.h.b16 %v2148
    %v3546 = vunpack.c.l.b16 %v2149
    %v3547 = vunpack.c.h.b16 %v2149
    %v3548 = vunpack.c.l.b16 %v2150
    %v3549 = vunpack.c.h.b16 %v2150
    %v3550 = vunpack.c.l.b16 %v2151
    %v3551 = vunpack.c.h.b16 %v2151
    %v3552 = vunpack.c.l.b16 %v2152
    %v3553 = vunpack.c.h.b16 %v2152
    %v3554 = vunpack.c.l.b16 %v2153
    %v3555 = vunpack.c.h.b16 %v2153
    %v3556 = vunpack.c.l.b16 %v2154
    %v3557 = vunpack.c.h.b16 %v2154
    %v3558 = vunpack.c.l.b16 %v2155
    %v3559 = vunpack.c.h.b16 %v2155
    %v3560 = vunpack.c.l.b16 %v2156
    %v3561 = vunpack.c.h.b16 %v2156
    %v3562 = vunpack.c.l.b16 %v2157
    %v3563 = vunpack.c.h.b16 %v2157
    %v3564 = vunpack.c.l.b16 %v2158
    %v3565 = vunpack.c.h.b16 %v2158
    %v3566 = vunpack.c.l.b16 %v2159
    %v3567 = vunpack.c.h.b16 %v2159
    %v3568 = vunpack.c.l.b16 %v2160
    %v3569 = vunpack.c.h.b16 %v2160
    %v3570 = vunpack.c.l.b16 %v2161
    %v3571 = vunpack.c.h.b16 %v2161
    %v3572 = vunpack.c.l.b16 %v2162
    %v3573 = vunpack.c.h.b16 %v2162
    %v3574 = vunpack.c.l.b16 %v2163
    %v3575 = vunpack.c.h.b16 %v2163
    %v3576 = vunpack.c.l.b16 %v2164
    %v3577 = vunpack.c.h.b16 %v2164
    %v3578 = vunpack.c.l.b16 %v2165
    %v3579 = vunpack.c.h.b16 %v2165
    %v3580 = vunpack.c.l.b16 %v2166
    %v3581 = vunpack.c.h.b16 %v2166
    %v3582 = vunpack.c.l.b16 %v2167
    %v3583 = vunpack.c.h.b16 %v2167
    %v3584 = vunpack.c.l.b16 %v2168
    %v3585 = vunpack.c.h.b16 %v2168
    %v3586 = vunpack.c.l.b16 %v2169
    %v3587 = vunpack.c.h.b16 %v2169
    %v3588 = vunpack.c.l.b16 %v2170
    %v3589 = vunpack.c.h.b16 %v2170
    %v3590 = vunpack.c.l.b16 %v2171
    %v3591 = vunpack.c.h.b16 %v2171
    %v3592 = vunpack.c.l.b16 %v2172
    %v3593 = vunpack.c.h.b16 %v2172
    %v3594 = vunpack.c.l.b16 %v2173
    %v3595 = vunpack.c.h.b16 %v2173
    %v3596 = vunpack.c.l.b16 %v2174
    %v3597 = vunpack.c.h.b16 %v2174
    %v3598 = vunpack.c.l.b16 %v2175
    %v3599 = vunpack.c.h.b16 %v2175
    %v3600 = vunpack.c.l.b16 %v2176
    %v3601 = vunpack.c.h.b16 %v2176
    %v3602 = vunpack.c.l.b16 %v2177
    %v3603 = vunpack.c.h.b16 %v2177
    %v3604 = vunpack.c.l.b16 %v2178
    %v3605 = vunpack.c.h.b16 %v2178
    %v3606 = vunpack.c.l.b16 %v2179
    %v3607 = vunpack.c.h.b16 %v2179
    %v3608 = vunpack.c.l.b16 %v2180
    %v3609 = vunpack.c.h.b16 %v2180
    %v3610 = vunpack.c.l.b16 %v2181
    %v3611 = vunpack.c.h.b16 %v2181
    %v3612 = vunpack.c.l.b16 %v2182
    %v3613 = vunpack.c.h.b16 %v2182
    %v3614 = vunpack.c.l.b16 %v2183
    %v3615 = vunpack.c.h.b16 %v2183
    %v3616 = vunpack.c.l.b16 %v2184
    %v3617 = vunpack.c.h.b16 %v2184
    %v3618 = vunpack.c.l.b16 %v2185
    %v3619 = vunpack.c.h.b16 %v2185
    %v3620 = vunpack.c.l.b16 %v2186
    %v3621 = vunpack.c.h.b16 %v2186
    %v3622 = vunpack.c.l.b16 %v2187
    %v3623 = vunpack.c.h.b16 %v2187
    %v3624 = vunpack.c.l.b16 %v2188
    %v3625 = vunpack.c.h.b16 %v2188
    %v3626 = vunpack.c.l.b16 %v2189
    %v3627 = vunpack.c.h.b16 %v2189
    %v3628 = vunpack.c.l.b16 %v2190
    %v3629 = vunpack.c.h.b16 %v2190
    %v3630 = vunpack.c.l.b16 %v2191
    %v3631 = vunpack.c.h.b16 %v2191
    %v3632 = vunpack.c.l.b16 %v2192
    %v3633 = vunpack.c.h.b16 %v2192
    %v3634 = vunpack.c.l.b16 %v2193
    %v3635 = vunpack.c.h.b16 %v2193
    %v3636 = vunpack.c.l.b16 %v2194
    %v3637 = vunpack.c.h.b16 %v2194
    %v3638 = vunpack.c.l.b16 %v2195
    %v3639 = vunpack.c.h.b16 %v2195
    %v3640 = vunpack.c.l.b16 %v2196
    %v3641 = vunpack.c.h.b16 %v2196
    %v3642 = vunpack.c.l.b16 %v2197
    %v3643 = vunpack.c.h.b16 %v2197
    %v3644 = vunpack.c.l.b16 %v2198
    %v3645 = vunpack.c.h.b16 %v2198
    %v3646 = vunpack.c.l.b16 %v2199
    %v3647 = vunpack.c.h.b16 %v2199
    %v3648 = vunpack.c.l.b16 %v2200
    %v3649 = vunpack.c.h.b16 %v2200
    %v3650 = vunpack.c.l.b16 %v2201
    %v3651 = vunpack.c.h.b16 %v2201
    %v3652 = vunpack.c.l.b16 %v2202
    %v3653 = vunpack.c.h.b16 %v2202
    %v3654 = vunpack.c.l.b16 %v2203
    %v3655 = vunpack.c.h.b16 %v2203
    %v3656 = vunpack.c.l.b16 %v2204
    %v3657 = vunpack.c.h.b16 %v2204
    %v3658 = vunpack.c.l.b16 %v2205
    %v3659 = vunpack.c.h.b16 %v2205
    %v3660 = vunpack.c.l.b16 %v2206
    %v3661 = vunpack.c.h.b16 %v2206
    %v3662 = vunpack.c.l.b16 %v2207
    %v3663 = vunpack.c.h.b16 %v2207
    %v3664 = vunpack.c.l.b16 %v2208
    %v3665 = vunpack.c.h.b16 %v2208
    %v3666 = vunpack.c.l.b16 %v2209
    %v3667 = vunpack.c.h.b16 %v2209
    %v3668 = vunpack.c.l.b16 %v2210
    %v3669 = vunpack.c.h.b16 %v2210
    %v3670 = vunpack.c.l.b16 %v2211
    %v3671 = vunpack.c.h.b16 %v2211
    %v3672 = vunpack.c.l.b16 %v2212
    %v3673 = vunpack.c.h.b16 %v2212
    %v3674 = vunpack.c.l.b16 %v2213
    %v3675 = vunpack.c.h.b16 %v2213
    %v3676 = vunpack.c.l.b16 %v2214
    %v3677 = vunpack.c.h.b16 %v2214
    %v3678 = vunpack.c.l.b16 %v2215
    %v3679 = vunpack.c.h.b16 %v2215
    %v3680 = vunpack.c.l.b16 %v2216
    %v3681 = vunpack.c.h.b16 %v2216
    %v3682 = vunpack.c.l.b16 %v2217
    %v3683 = vunpack.c.h.b16 %v2217
    %v3684 = vunpack.c.l.b16 %v2218
    %v3685 = vunpack.c.h.b16 %v2218
    %v3686 = vunpack.c.l.b16 %v2219
    %v3687 = vunpack.c.h.b16 %v2219
    %v3688 = vunpack.c.l.b16 %v2220
    %v3689 = vunpack.c.h.b16 %v2220
    %v3690 = vunpack.c.l.b16 %v2221
    %v3691 = vunpack.c.h.b16 %v2221
    %v3692 = vunpack.c.l.b16 %v2222
    %v3693 = vunpack.c.h.b16 %v2222
    %v3694 = vunpack.c.l.b16 %v2223
    %v3695 = vunpack.c.h.b16 %v2223
    %v3696 = vunpack.c.l.b16 %v2224
    %v3697 = vunpack.c.h.b16 %v2224
    %v3698 = vunpack.c.l.b16 %v2225
    %v3699 = vunpack.c.h.b16 %v2225
    %v3700 = vunpack.c.l.b16 %v2226
    %v3701 = vunpack.c.h.b16 %v2226
    %v3702 = vunpack.c.l.b16 %v2227
    %v3703 = vunpack.c.h.b16 %v2227
    %v3704 = vunpack.c.l.b16 %v2228
    %v3705 = vunpack.c.h.b16 %v2228
    %v3706 = vunpack.c.l.b16 %v2229
    %v3707 = vunpack.c.h.b16 %v2229
    %v3708 = vunpack.c.l.b16 %v2230
    %v3709 = vunpack.c.h.b16 %v2230
    %v3710 = vunpack.c.l.b16 %v2231
    %v3711 = vunpack.c.h.b16 %v2231
    %v3712 = vunpack.c.l.b16 %v2232
    %v3713 = vunpack.c.h.b16 %v2232
    %v3714 = vunpack.c.l.b16 %v2233
    %v3715 = vunpack.c.h.b16 %v2233
    %v3716 = vunpack.c.l.b16 %v2234
    %v3717 = vunpack.c.h.b16 %v2234
    %v3718 = vunpack.c.l.b16 %v2235
    %v3719 = vunpack.c.h.b16 %v2235
    %v3720 = vunpack.c.l.b16 %v2236
    %v3721 = vunpack.c.h.b16 %v2236
    %v3722 = vunpack.c.l.b16 %v2237
    %v3723 = vunpack.c.h.b16 %v2237
    %v3724 = vunpack.c.l.b16 %v2238
    %v3725 = vunpack.c.h.b16 %v2238
    %v3726 = vunpack.c.l.b16 %v2239
    %v3727 = vunpack.c.h.b16 %v2239
    %v3728 = vunpack.c.l.b16 %v2240
    %v3729 = vunpack.c.h.b16 %v2240
    %v3730 = vunpack.c.l.b16 %v2241
    %v3731 = vunpack.c.h.b16 %v2241
    %v3732 = vunpack.c.l.b16 %v2242
    %v3733 = vunpack.c.h.b16 %v2242
    %v3734 = vunpack.c.l.b16 %v2243
    %v3735 = vunpack.c.h.b16 %v2243
    %v3736 = vunpack.c.l.b16 %v2244
    %v3737 = vunpack.c.h.b16 %v2244
    %v3738 = vunpack.c.l.b16 %v2245
    %v3739 = vunpack.c.h.b16 %v2245
    %v3740 = vunpack.c.l.b16 %v2246
    %v3741 = vunpack.c.h.b16 %v2246
    %v3742 = vunpack.c.l.b16 %v2247
    %v3743 = vunpack.c.h.b16 %v2247
    %v3744 = vunpack.c.l.b16 %v2248
    %v3745 = vunpack.c.h.b16 %v2248
    %v3746 = vunpack.c.l.b16 %v2249
    %v3747 = vunpack.c.h.b16 %v2249
    %v3748 = vunpack.c.l.b16 %v2250
    %v3749 = vunpack.c.h.b16 %v2250
    %v3750 = vunpack.c.l.b16 %v2251
    %v3751 = vunpack.c.h.b16 %v2251
    %v3752 = vunpack.c.l.b16 %v2252
    %v3753 = vunpack.c.h.b16 %v2252
    %v3754 = vunpack.c.l.b16 %v2253
    %v3755 = vunpack.c.h.b16 %v2253
    %v3756 = vunpack.c.l.b16 %v2254
    %v3757 = vunpack.c.h.b16 %v2254
    %v3758 = vunpack.c.l.b16 %v2255
    %v3759 = vunpack.c.h.b16 %v2255
    %v3760 = vunpack.c.l.b16 %v2256
    %v3761 = vunpack.c.h.b16 %v2256
    %v3762 = vunpack.c.l.b16 %v2257
    %v3763 = vunpack.c.h.b16 %v2257
    %v3764 = vunpack.c.l.b16 %v2258
    %v3765 = vunpack.c.h.b16 %v2258
    %v3766 = vunpack.c.l.b16 %v2259
    %v3767 = vunpack.c.h.b16 %v2259
    %v3768 = vunpack.c.l.b16 %v2260
    %v3769 = vunpack.c.h.b16 %v2260
    %v3770 = vunpack.c.l.b16 %v2261
    %v3771 = vunpack.c.h.b16 %v2261
    %v3772 = vunpack.c.l.b16 %v2262
    %v3773 = vunpack.c.h.b16 %v2262
    %v3774 = vunpack.c.l.b16 %v2263
    %v3775 = vunpack.c.h.b16 %v2263
    %v3776 = vunpack.c.l.b16 %v2264
    %v3777 = vunpack.c.h.b16 %v2264
    %v3778 = vunpack.c.l.b16 %v2265
    %v3779 = vunpack.c.h.b16 %v2265
    %v3780 = vunpack.c.l.b16 %v2266
    %v3781 = vunpack.c.h.b16 %v2266
    %v3782 = vunpack.c.l.b16 %v2267
    %v3783 = vunpack.c.h.b16 %v2267
    %v3784 = vunpack.c.l.b16 %v2268
    %v3785 = vunpack.c.h.b16 %v2268
    %v3786 = vunpack.c.l.b16 %v2269
    %v3787 = vunpack.c.h.b16 %v2269
    %v3788 = vunpack.c.l.b16 %v2270
    %v3789 = vunpack.c.h.b16 %v2270
    %v3790 = vunpack.c.l.b16 %v2271
    %v3791 = vunpack.c.h.b16 %v2271
    %v3792 = vunpack.c.l.b16 %v2272
    %v3793 = vunpack.c.h.b16 %v2272
    %v3794 = vunpack.c.l.b16 %v2273
    %v3795 = vunpack.c.h.b16 %v2273
    %v3796 = vunpack.c.l.b16 %v2274
    %v3797 = vunpack.c.h.b16 %v2274
    %v3798 = vunpack.c.l.b16 %v2275
    %v3799 = vunpack.c.h.b16 %v2275
    %v3800 = vunpack.c.l.b16 %v2276
    %v3801 = vunpack.c.h.b16 %v2276
    %v3802 = vunpack.c.l.b16 %v2277
    %v3803 = vunpack.c.h.b16 %v2277
    %v3804 = vunpack.c.l.b16 %v2278
    %v3805 = vunpack.c.h.b16 %v2278
    %v3806 = vunpack.c.l.b16 %v2279
    %v3807 = vunpack.c.h.b16 %v2279
    %v3808 = vunpack.c.l.b16 %v2280
    %v3809 = vunpack.c.h.b16 %v2280
    %v3810 = vunpack.c.l.b16 %v2281
    %v3811 = vunpack.c.h.b16 %v2281
    %v3812 = vunpack.c.l.b16 %v2282
    %v3813 = vunpack.c.h.b16 %v2282
    %v3814 = vunpack.c.l.b16 %v2283
    %v3815 = vunpack.c.h.b16 %v2283
    %v3816 = vunpack.c.l.b16 %v2284
    %v3817 = vunpack.c.h.b16 %v2284
    %v3818 = vunpack.c.l.b16 %v2285
    %v3819 = vunpack.c.h.b16 %v2285
    %v3820 = vunpack.c.l.b16 %v2286
    %v3821 = vunpack.c.h.b16 %v2286
    %v3822 = vunpack.c.l.b16 %v2287
    %v3823 = vunpack.c.h.b16 %v2287
    %v3824 = vunpack.c.l.b16 %v2288
    %v3825 = vunpack.c.h.b16 %v2288
    %v3826 = vunpack.c.l.b16 %v2289
    %v3827 = vunpack.c.h.b16 %v2289
    %v3828 = vunpack.c.l.b16 %v2290
    %v3829 = vunpack.c.h.b16 %v2290
    %v3830 = vunpack.c.l.b16 %v2291
    %v3831 = vunpack.c.h.b16 %v2291
    %v3832 = vunpack.c.l.b16 %v2292
    %v3833 = vunpack.c.h.b16 %v2292
    %v3834 = vunpack.c.l.b16 %v2293
    %v3835 = vunpack.c.h.b16 %v2293
    %v3836 = vunpack.c.l.b16 %v2294
    %v3837 = vunpack.c.h.b16 %v2294
    %v3838 = vunpack.c.l.b16 %v2295
    %v3839 = vunpack.c.h.b16 %v2295
    %v3840 = vunpack.c.l.b16 %v2296
    %v3841 = vunpack.c.h.b16 %v2296
    %v3842 = vunpack.c.l.b16 %v2297
    %v3843 = vunpack.c.h.b16 %v2297
    %v3844 = vunpack.c.l.b16 %v2298
    %v3845 = vunpack.c.h.b16 %v2298
    %v3846 = vunpack.c.l.b16 %v2299
    %v3847 = vunpack.c.h.b16 %v2299
    %v3848 = vunpack.c.l.b16 %v2300
    %v3849 = vunpack.c.h.b16 %v2300
    %v3850 = vunpack.c.l.b16 %v2301
    %v3851 = vunpack.c.h.b16 %v2301
    %v3852 = vunpack.c.l.b16 %v2302
    %v3853 = vunpack.c.h.b16 %v2302
    %v3854 = vunpack.c.l.b16 %v2303
    %v3855 = vunpack.c.h.b16 %v2303
    %v3856 = vunpack.c.l.b16 %v2304
    %v3857 = vunpack.c.h.b16 %v2304
    %v3858 = vunpack.c.l.b16 %v2305
    %v3859 = vunpack.c.h.b16 %v2305
    %v3860 = vunpack.c.l.b16 %v2306
    %v3861 = vunpack.c.h.b16 %v2306
    %v3862 = vunpack.c.l.b16 %v2307
    %v3863 = vunpack.c.h.b16 %v2307
    %v3864 = vunpack.c.l.b16 %v2308
    %v3865 = vunpack.c.h.b16 %v2308
    %v3866 = vunpack.c.l.b16 %v2309
    %v3867 = vunpack.c.h.b16 %v2309
    %v3868 = vunpack.c.l.b16 %v2310
    %v3869 = vunpack.c.h.b16 %v2310
    %v3870 = vunpack.c.l.b16 %v2311
    %v3871 = vunpack.c.h.b16 %v2311
    %v3872 = vunpack.c.l.b16 %v2312
    %v3873 = vunpack.c.h.b16 %v2312
    %v3874 = vunpack.c.l.b16 %v2313
    %v3875 = vunpack.c.h.b16 %v2313
    %v3876 = vunpack.c.l.b16 %v2314
    %v3877 = vunpack.c.h.b16 %v2314
    %v3878 = vunpack.c.l.b16 %v2315
    %v3879 = vunpack.c.h.b16 %v2315
    %v3880 = vunpack.c.l.b16 %v2316
    %v3881 = vunpack.c.h.b16 %v2316
    %v3882 = vunpack.c.l.b16 %v2317
    %v3883 = vunpack.c.h.b16 %v2317
    %v3884 = vunpack.c.l.b16 %v2318
    %v3885 = vunpack.c.h.b16 %v2318
    %v3886 = vunpack.c.l.b16 %v2319
    %v3887 = vunpack.c.h.b16 %v2319
    %v3888 = vunpack.c.l.b16 %v2320
    %v3889 = vunpack.c.h.b16 %v2320
    %v3890 = vunpack.c.l.b16 %v2321
    %v3891 = vunpack.c.h.b16 %v2321
    %v3892 = vunpack.c.l.b16 %v2322
    %v3893 = vunpack.c.h.b16 %v2322
    %v3894 = vunpack.c.l.b16 %v2323
    %v3895 = vunpack.c.h.b16 %v2323
    %v3896 = vunpack.c.l.b16 %v2324
    %v3897 = vunpack.c.h.b16 %v2324
    %v3898 = vunpack.c.l.b16 %v2325
    %v3899 = vunpack.c.h.b16 %v2325
    %v3900 = vunpack.c.l.b16 %v2326
    %v3901 = vunpack.c.h.b16 %v2326
    %v3902 = vunpack.c.l.b16 %v2327
    %v3903 = vunpack.c.h.b16 %v2327
    %v3904 = vunpack.c.l.b16 %v2328
    %v3905 = vunpack.c.h.b16 %v2328
    %v3906 = vunpack.c.l.b16 %v2329
    %v3907 = vunpack.c.h.b16 %v2329
    %v3908 = vunpack.c.l.b16 %v2330
    %v3909 = vunpack.c.h.b16 %v2330
    %v3910 = vunpack.c.l.b16 %v2331
    %v3911 = vunpack.c.h.b16 %v2331
    %v3912 = vunpack.c.l.b16 %v2332
    %v3913 = vunpack.c.h.b16 %v2332
    %v3914 = vunpack.c.l.b16 %v2333
    %v3915 = vunpack.c.h.b16 %v2333
    %v3916 = vunpack.c.l.b16 %v2334
    %v3917 = vunpack.c.h.b16 %v2334
    %v3918 = vunpack.c.l.b16 %v2335
    %v3919 = vunpack.c.h.b16 %v2335
    %v3920 = vunpack.c.l.b16 %v2336
    %v3921 = vunpack.c.h.b16 %v2336
    %v3922 = vunpack.c.l.b16 %v2337
    %v3923 = vunpack.c.h.b16 %v2337
    %v3924 = vunpack.c.l.b16 %v2338
    %v3925 = vunpack.c.h.b16 %v2338
    %v3926 = vunpack.c.l.b16 %v2339
    %v3927 = vunpack.c.h.b16 %v2339
    %v3928 = vunpack.c.l.b16 %v2340
    %v3929 = vunpack.c.h.b16 %v2340
    %v3930 = vunpack.c.l.b16 %v2341
    %v3931 = vunpack.c.h.b16 %v2341
    %v3932 = vunpack.c.l.b16 %v2342
    %v3933 = vunpack.c.h.b16 %v2342
    %v3934 = vunpack.c.l.b16 %v2343
    %v3935 = vunpack.c.h.b16 %v2343
    %v3936 = vunpack.c.l.b16 %v2344
    %v3937 = vunpack.c.h.b16 %v2344
    %v3938 = vunpack.c.l.b16 %v2345
    %v3939 = vunpack.c.h.b16 %v2345
    %v3940 = vunpack.c.l.b16 %v2346
    %v3941 = vunpack.c.h.b16 %v2346
    %v3942 = vunpack.c.l.b16 %v2347
    %v3943 = vunpack.c.h.b16 %v2347
    %v3944 = vunpack.c.l.b16 %v2348
    %v3945 = vunpack.c.h.b16 %v2348
    %v3946 = vunpack.c.l.b16 %v2349
    %v3947 = vunpack.c.h.b16 %v2349
    %v3948 = vunpack.c.l.b16 %v2350
    %v3949 = vunpack.c.h.b16 %v2350
    %v3950 = vunpack.c.l.b16 %v2351
    %v3951 = vunpack.c.h.b16 %v2351
    %v3952 = vunpack.c.l.b16 %v2352
    %v3953 = vunpack.c.h.b16 %v2352
    %v3954 = vunpack.c.l.b16 %v2353
    %v3955 = vunpack.c.h.b16 %v2353
    %v3956 = vunpack.c.l.b16 %v2354
    %v3957 = vunpack.c.h.b16 %v2354
    %v3958 = vunpack.c.l.b16 %v2355
    %v3959 = vunpack.c.h.b16 %v2355
    %v3960 = vunpack.c.l.b16 %v2356
    %v3961 = vunpack.c.h.b16 %v2356
    %v3962 = vunpack.c.l.b16 %v2357
    %v3963 = vunpack.c.h.b16 %v2357
    %v3964 = vunpack.c.l.b16 %v2358
    %v3965 = vunpack.c.h.b16 %v2358
    %v3966 = vunpack.c.l.b16 %v2359
    %v3967 = vunpack.c.h.b16 %v2359
    %v3968 = vunpack.c.l.b16 %v2360
    %v3969 = vunpack.c.h.b16 %v2360
    %v3970 = vunpack.c.l.b16 %v2361
    %v3971 = vunpack.c.h.b16 %v2361
    %v3972 = vunpack.c.l.b16 %v2362
    %v3973 = vunpack.c.h.b16 %v2362
    %v3974 = vunpack.c.l.b16 %v2363
    %v3975 = vunpack.c.h.b16 %v2363
    %v3976 = vunpack.c.l.b16 %v2364
    %v3977 = vunpack.c.h.b16 %v2364
    %v3978 = vunpack.c.l.b16 %v2365
    %v3979 = vunpack.c.h.b16 %v2365
    %v3980 = vunpack.c.l.b16 %v2366
    %v3981 = vunpack.c.h.b16 %v2366
    %v3982 = vunpack.c.l.b16 %v2367
    %v3983 = vunpack.c.h.b16 %v2367
    %v3984 = vunpack.c.l.b16 %v2368
    %v3985 = vunpack.c.h.b16 %v2368
    %v3986 = vunpack.c.l.b16 %v2369
    %v3987 = vunpack.c.h.b16 %v2369
    %v3988 = vunpack.c.l.b16 %v2370
    %v3989 = vunpack.c.h.b16 %v2370
    %v3990 = vunpack.c.l.b16 %v2371
    %v3991 = vunpack.c.h.b16 %v2371
    %v3992 = vunpack.c.l.b16 %v2372
    %v3993 = vunpack.c.h.b16 %v2372
    %v3994 = vunpack.c.l.b16 %v2373
    %v3995 = vunpack.c.h.b16 %v2373
    %v3996 = vunpack.c.l.b16 %v2374
    %v3997 = vunpack.c.h.b16 %v2374
    %v3998 = vunpack.c.l.b16 %v2375
    %v3999 = vunpack.c.h.b16 %v2375
    %v4000 = vunpack.c.l.b16 %v2376
    %v4001 = vunpack.c.h.b16 %v2376
    %v4002 = vunpack.c.l.b16 %v2377
    %v4003 = vunpack.c.h.b16 %v2377
    %v4004 = vunpack.c.l.b16 %v2378
    %v4005 = vunpack.c.h.b16 %v2378
    %v4006 = vunpack.c.l.b16 %v2379
    %v4007 = vunpack.c.h.b16 %v2379
    %v4008 = vunpack.c.l.b16 %v2380
    %v4009 = vunpack.c.h.b16 %v2380
    %v4010 = vunpack.c.l.b16 %v2381
    %v4011 = vunpack.c.h.b16 %v2381
    %v4012 = vunpack.c.l.b16 %v2382
    %v4013 = vunpack.c.h.b16 %v2382
    %v4014 = vunpack.c.l.b16 %v2383
    %v4015 = vunpack.c.h.b16 %v2383
    %v4016 = vunpack.c.l.b16 %v2384
    %v4017 = vunpack.c.h.b16 %v2384
    %v4018 = vunpack.c.l.b16 %v2385
    %v4019 = vunpack.c.h.b16 %v2385
    %v4020 = vunpack.c.l.b16 %v2386
    %v4021 = vunpack.c.h.b16 %v2386
    %v4022 = vunpack.c.l.b16 %v2387
    %v4023 = vunpack.c.h.b16 %v2387
    %v4024 = vunpack.c.l.b16 %v2388
    %v4025 = vunpack.c.h.b16 %v2388
    %v4026 = vunpack.c.l.b16 %v2389
    %v4027 = vunpack.c.h.b16 %v2389
    %v4028 = vunpack.c.l.b16 %v2390
    %v4029 = vunpack.c.h.b16 %v2390
    %v4030 = vunpack.c.l.b16 %v2391
    %v4031 = vunpack.c.h.b16 %v2391
    %v4032 = vunpack.c.l.b16 %v2392
    %v4033 = vunpack.c.h.b16 %v2392
    %v4034 = vunpack.c.l.b16 %v2393
    %v4035 = vunpack.c.h.b16 %v2393
    %v4036 = vunpack.c.l.b16 %v2394
    %v4037 = vunpack.c.h.b16 %v2394
    %v4038 = vunpack.c.l.b16 %v2395
    %v4039 = vunpack.c.h.b16 %v2395
    %v4040 = vunpack.c.l.b16 %v2396
    %v4041 = vunpack.c.h.b16 %v2396
    %v4042 = vunpack.c.l.b16 %v2397
    %v4043 = vunpack.c.h.b16 %v2397
    %v4044 = vunpack.c.l.b16 %v2398
    %v4045 = vunpack.c.h.b16 %v2398
    %v4046 = vunpack.c.l.b16 %v2399
    %v4047 = vunpack.c.h.b16 %v2399
    %v4048 = vunpack.c.l.b16 %v2400
    %v4049 = vunpack.c.h.b16 %v2400
    %v4050 = vunpack.c.l.b16 %v2401
    %v4051 = vunpack.c.h.b16 %v2401
    %v4052 = vunpack.c.l.b16 %v2402
    %v4053 = vunpack.c.h.b16 %v2402
    %v4054 = vunpack.c.l.b16 %v2403
    %v4055 = vunpack.c.h.b16 %v2403
    %v4056 = vunpack.c.l.b16 %v2404
    %v4057 = vunpack.c.h.b16 %v2404
    %v4058 = vunpack.c.l.b16 %v2405
    %v4059 = vunpack.c.h.b16 %v2405
    %v4060 = vunpack.c.l.b16 %v2406
    %v4061 = vunpack.c.h.b16 %v2406
    %v4062 = vunpack.c.l.b16 %v2407
    %v4063 = vunpack.c.h.b16 %v2407
    %v4064 = vunpack.c.l.b16 %v2408
    %v4065 = vunpack.c.h.b16 %v2408
    %v4066 = vunpack.c.l.b16 %v2409
    %v4067 = vunpack.c.h.b16 %v2409
    %v4068 = vunpack.c.l.b16 %v2410
    %v4069 = vunpack.c.h.b16 %v2410
    %v4070 = vunpack.c.l.b16 %v2411
    %v4071 = vunpack.c.h.b16 %v2411
    %v4072 = vunpack.c.l.b16 %v2412
    %v4073 = vunpack.c.h.b16 %v2412
    %v4074 = vunpack.c.l.b16 %v2413
    %v4075 = vunpack.c.h.b16 %v2413
    %v4076 = vunpack.c.l.b16 %v2414
    %v4077 = vunpack.c.h.b16 %v2414
    %v4078 = vunpack.c.l.b16 %v2415
    %v4079 = vunpack.c.h.b16 %v2415
    %v4080 = vpack.c.b16 %v3072, %v3056
    %v4081 = vpack.c.b16 %v3073, %v3057
    %v4082 = vpack.c.b16 %v3074, %v3058
    %v4083 = vpack.c.b16 %v3075, %v3059
    %v4084 = vpack.c.b16 %v3076, %v3060
    %v4085 = vpack.c.b16 %v3077, %v3061
    %v4086 = vpack.c.b16 %v3078, %v3062
    %v4087 = vpack.c.b16 %v3079, %v3063
    %v4088 = vpack.c.b16 %v3080, %v3064
    %v4089 = vpack.c.b16 %v3081, %v3065
    %v4090 = vpack.c.b16 %v3082, %v3066
    %v4091 = vpack.c.b16 %v3083, %v3067
    %v4092 = vpack.c.b16 %v3084, %v3068
    %v4093 = vpack.c.b16 %v3085, %v3069
    %v4094 = vpack.c.b16 %v3086, %v3070
    %v4095 = vpack.c.b16 %v3087, %v3071
    %v4096 = vpack.c.b16 %v3104, %v3088
    %v4097 = vpack.c.b16 %v3105, %v3089
    %v4098 = vpack.c.b16 %v3106, %v3090
    %v4099 = vpack.c.b16 %v3107, %v3091
    %v4100 = vpack.c.b16 %v3108, %v3092
    %v4101 = vpack.c.b16 %v3109, %v3093
    %v4102 = vpack.c.b16 %v3110, %v3094
    %v4103 = vpack.c.b16 %v3111, %v3095
    %v4104 = vpack.c.b16 %v3112, %v3096
    %v4105 = vpack.c.b16 %v3113, %v3097
    %v4106 = vpack.c.b16 %v3114, %v3098
    %v4107 = vpack.c.b16 %v3115, %v3099
    %v4108 = vpack.c.b16 %v3116, %v3100
    %v4109 = vpack.c.b16 %v3117, %v3101
    %v4110 = vpack.c.b16 %v3118, %v3102
    %v4111 = vpack.c.b16 %v3119, %v3103
    %v4112 = vpack.c.b16 %v3136, %v3120
    %v4113 = vpack.c.b16 %v3137, %v3121
    %v4114 = vpack.c.b16 %v3138, %v3122
    %v4115 = vpack.c.b16 %v3139, %v3123
    %v4116 = vpack.c.b16 %v3140, %v3124
    %v4117 = vpack.c.b16 %v3141, %v3125
    %v4118 = vpack.c.b16 %v3142, %v3126
    %v4119 = vpack.c.b16 %v3143, %v3127
    %v4120 = vpack.c.b16 %v3144, %v3128
    %v4121 = vpack.c.b16 %v3145, %v3129
    %v4122 = vpack.c.b16 %v3146, %v3130
    %v4123 = vpack.c.b16 %v3147, %v3131
    %v4124 = vpack.c.b16 %v3148, %v3132
    %v4125 = vpack.c.b16 %v3149, %v3133
    %v4126 = vpack.c.b16 %v3150, %v3134
    %v4127 = vpack.c.b16 %v3151, %v3135
    %v4128 = vpack.c.b16 %v3168, %v3152
    %v4129 = vpack.c.b16 %v3169, %v3153
    %v4130 = vpack.c.b16 %v3170, %v3154
    %v4131 = vpack.c.b16 %v3171, %v3155
    %v4132 = vpack.c.b16 %v3172, %v3156
    %v4133 = vpack.c.b16 %v3173, %v3157
    %v4134 = vpack.c.b16 %v3174, %v3158
    %v4135 = vpack.c.b16 %v3175, %v3159
    %v4136 = vpack.c.b16 %v3176, %v3160
    %v4137 = vpack.c.b16 %v3177, %v3161
    %v4138 = vpack.c.b16 %v3178, %v3162
    %v4139 = vpack.c.b16 %v3179, %v3163
    %v4140 = vpack.c.b16 %v3180, %v3164
    %v4141 = vpack.c.b16 %v3181, %v3165
    %v4142 = vpack.c.b16 %v3182, %v3166
    %v4143 = vpack.c.b16 %v3183, %v3167
    %v4144 = vpack.c.b16 %v3200, %v3184
    %v4145 = vpack.c.b16 %v3201, %v3185
    %v4146 = vpack.c.b16 %v3202, %v3186
    %v4147 = vpack.c.b16 %v3203, %v3187
    %v4148 = vpack.c.b16 %v3204, %v3188
    %v4149 = vpack.c.b16 %v3205, %v3189
    %v4150 = vpack.c.b16 %v3206, %v3190
    %v4151 = vpack.c.b16 %v3207, %v3191
    %v4152 = vpack.c.b16 %v3208, %v3192
    %v4153 = vpack.c.b16 %v3209, %v3193
    %v4154 = vpack.c.b16 %v3210, %v3194
    %v4155 = vpack.c.b16 %v3211, %v3195
    %v4156 = vpack.c.b16 %v3212, %v3196
    %v4157 = vpack.c.b16 %v3213, %v3197
    %v4158 = vpack.c.b16 %v3214, %v3198
    %v4159 = vpack.c.b16 %v3215, %v3199
    %v4160 = vpack.c.b16 %v3232, %v3216
    %v4161 = vpack.c.b16 %v3233, %v3217
    %v4162 = vpack.c.b16 %v3234, %v3218
    %v4163 = vpack.c.b16 %v3235, %v3219
    %v4164 = vpack.c.b16 %v3236, %v3220
    %v4165 = vpack.c.b16 %v3237, %v3221
    %v4166 = vpack.c.b16 %v3238, %v3222
    %v4167 = vpack.c.b16 %v3239, %v3223
    %v4168 = vpack.c.b16 %v3240, %v3224
    %v4169 = vpack.c.b16 %v3241, %v3225
    %v4170 = vpack.c.b16 %v3242, %v3226
    %v4171 = vpack.c.b16 %v3243, %v3227
    %v4172 = vpack.c.b16 %v3244, %v3228
    %v4173 = vpack.c.b16 %v3245, %v3229
    %v4174 = vpack.c.b16 %v3246, %v3230
    %v4175 = vpack.c.b16 %v3247, %v3231
    %v4176 = vpack.c.b16 %v3264, %v3248
    %v4177 = vpack.c.b16 %v3265, %v3249
    %v4178 = vpack.c.b16 %v3266, %v3250
    %v4179 = vpack.c.b16 %v3267, %v3251
    %v4180 = vpack.c.b16 %v3268, %v3252
    %v4181 = vpack.c.b16 %v3269, %v3253
    %v4182 = vpack.c.b16 %v3270, %v3254
    %v4183 = vpack.c.b16 %v3271, %v3255
    %v4184 = vpack.c.b16 %v3272, %v3256
    %v4185 = vpack.c.b16 %v3273, %v3257
    %v4186 = vpack.c.b16 %v3274, %v3258
    %v4187 = vpack.c.b16 %v3275, %v3259
    %v4188 = vpack.c.b16 %v3276, %v3260
    %v4189 = vpack.c.b16 %v3277, %v3261
    %v4190 = vpack.c.b16 %v3278, %v3262
    %v4191 = vpack.c.b16 %v3279, %v3263
    %v4192 = vpack.c.b16 %v3296, %v3280
    %v4193 = vpack.c.b16 %v3297, %v3281
    %v4194 = vpack.c.b16 %v3298, %v3282
    %v4195 = vpack.c.b16 %v3299, %v3283
    %v4196 = vpack.c.b16 %v3300, %v3284
    %v4197 = vpack.c.b16 %v3301, %v3285
    %v4198 = vpack.c.b16 %v3302, %v3286
    %v4199 = vpack.c.b16 %v3303, %v3287
    %v4200 = vpack.c.b16 %v3304, %v3288
    %v4201 = vpack.c.b16 %v3305, %v3289
    %v4202 = vpack.c.b16 %v3306, %v3290
    %v4203 = vpack.c.b16 %v3307, %v3291
    %v4204 = vpack.c.b16 %v3308, %v3292
    %v4205 = vpack.c.b16 %v3309, %v3293
    %v4206 = vpack.c.b16 %v3310, %v3294
    %v4207 = vpack.c.b16 %v3311, %v3295
    %v4208 = vpack.c.b16 %v3328, %v3312
    %v4209 = vpack.c.b16 %v3329, %v3313
    %v4210 = vpack.c.b16 %v3330, %v3314
    %v4211 = vpack.c.b16 %v3331, %v3315
    %v4212 = vpack.c.b16 %v3332, %v3316
    %v4213 = vpack.c.b16 %v3333, %v3317
    %v4214 = vpack.c.b16 %v3334, %v3318
    %v4215 = vpack.c.b16 %v3335, %v3319
    %v4216 = vpack.c.b16 %v3336, %v3320
    %v4217 = vpack.c.b16 %v3337, %v3321
    %v4218 = vpack.c.b16 %v3338, %v3322
    %v4219 = vpack.c.b16 %v3339, %v3323
    %v4220 = vpack.c.b16 %v3340, %v3324
    %v4221 = vpack.c.b16 %v3341, %v3325
    %v4222 = vpack.c.b16 %v3342, %v3326
    %v4223 = vpack.c.b16 %v3343, %v3327
    %v4224 = vpack.c.b16 %v3360, %v3344
    %v4225 = vpack.c.b16 %v3361, %v3345
    %v4226 = vpack.c.b16 %v3362, %v3346
    %v4227 = vpack.c.b16 %v3363, %v3347
    %v4228 = vpack.c.b16 %v3364, %v3348
    %v4229 = vpack.c.b16 %v3365, %v3349
    %v4230 = vpack.c.b16 %v3366, %v3350
    %v4231 = vpack.c.b16 %v3367, %v3351
    %v4232 = vpack.c.b16 %v3368, %v3352
    %v4233 = vpack.c.b16 %v3369, %v3353
    %v4234 = vpack.c.b16 %v3370, %v3354
    %v4235 = vpack.c.b16 %v3371, %v3355
    %v4236 = vpack.c.b16 %v3372, %v3356
    %v4237 = vpack.c.b16 %v3373, %v3357
    %v4238 = vpack.c.b16 %v3374, %v3358
    %v4239 = vpack.c.b16 %v3375, %v3359
    %v4240 = vpack.c.b16 %v3392, %v3376
    %v4241 = vpack.c.b16 %v3393, %v3377
    %v4242 = vpack.c.b16 %v3394, %v3378
    %v4243 = vpack.c.b16 %v3395, %v3379
    %v4244 = vpack.c.b16 %v3396, %v3380
    %v4245 = vpack.c.b16 %v3397, %v3381
    %v4246 = vpack.c.b16 %v3398, %v3382
    %v4247 = vpack.c.b16 %v3399, %v3383
    %v4248 = vpack.c.b16 %v3400, %v3384
    %v4249 = vpack.c.b16 %v3401, %v3385
    %v4250 = vpack.c.b16 %v3402, %v3386
    %v4251 = vpack.c.b16 %v3403, %v3387
    %v4252 = vpack.c.b16 %v3404, %v3388
    %v4253 = vpack.c.b16 %v3405, %v3389
    %v4254 = vpack.c.b16 %v3406, %v3390
    %v4255 = vpack.c.b16 %v3407, %v3391
    %v4256 = vpack.c.b16 %v3424, %v3408
    %v4257 = vpack.c.b16 %v3425, %v3409
    %v4258 = vpack.c.b16 %v3426, %v3410
    %v4259 = vpack.c.b16 %v3427, %v3411
    %v4260 = vpack.c.b16 %v3428, %v3412
    %v4261 = vpack.c.b16 %v3429, %v3413
    %v4262 = vpack.c.b16 %v3430, %v3414
    %v4263 = vpack.c.b16 %v3431, %v3415
    %v4264 = vpack.c.b16 %v3432, %v3416
    %v4265 = vpack.c.b16 %v3433, %v3417
    %v4266 = vpack.c.b16 %v3434, %v3418
    %v4267 = vpack.c.b16 %v3435, %v3419
    %v4268 = vpack.c.b16 %v3436, %v3420
    %v4269 = vpack.c.b16 %v3437, %v3421
    %v4270 = vpack.c.b16 %v3438, %v3422
    %v4271 = vpack.c.b16 %v3439, %v3423
    %v4272 = vpack.c.b16 %v3456, %v3440
    %v4273 = vpack.c.b16 %v3457, %v3441
    %v4274 = vpack.c.b16 %v3458, %v3442
    %v4275 = vpack.c.b16 %v3459, %v3443
    %v4276 = vpack.c.b16 %v3460, %v3444
    %v4277 = vpack.c.b16 %v3461, %v3445
    %v4278 = vpack.c.b16 %v3462, %v3446
    %v4279 = vpack.c.b16 %v3463, %v3447
    %v4280 = vpack.c.b16 %v3464, %v3448
    %v4281 = vpack.c.b16 %v3465, %v3449
    %v4282 = vpack.c.b16 %v3466, %v3450
    %v4283 = vpack.c.b16 %v3467, %v3451
    %v4284 = vpack.c.b16 %v3468, %v3452
    %v4285 = vpack.c.b16 %v3469, %v3453
    %v4286 = vpack.c.b16 %v3470, %v3454
    %v4287 = vpack.c.b16 %v3471, %v3455
    %v4288 = vpack.c.b16 %v3488, %v3472
    %v4289 = vpack.c.b16 %v3489, %v3473
    %v4290 = vpack.c.b16 %v3490, %v3474
    %v4291 = vpack.c.b16 %v3491, %v3475
    %v4292 = vpack.c.b16 %v3492, %v3476
    %v4293 = vpack.c.b16 %v3493, %v3477
    %v4294 = vpack.c.b16 %v3494, %v3478
    %v4295 = vpack.c.b16 %v3495, %v3479
    %v4296 = vpack.c.b16 %v3496, %v3480
    %v4297 = vpack.c.b16 %v3497, %v3481
    %v4298 = vpack.c.b16 %v3498, %v3482
    %v4299 = vpack.c.b16 %v3499, %v3483
    %v4300 = vpack.c.b16 %v3500, %v3484
    %v4301 = vpack.c.b16 %v3501, %v3485
    %v4302 = vpack.c.b16 %v3502, %v3486
    %v4303 = vpack.c.b16 %v3503, %v3487
    %v4304 = vpack.c.b16 %v3520, %v3504
    %v4305 = vpack.c.b16 %v3521, %v3505
    %v4306 = vpack.c.b16 %v3522, %v3506
    %v4307 = vpack.c.b16 %v3523, %v3507
    %v4308 = vpack.c.b16 %v3524, %v3508
    %v4309 = vpack.c.b16 %v3525, %v3509
    %v4310 = vpack.c.b16 %v3526, %v3510
    %v4311 = vpack.c.b16 %v3527, %v3511
    %v4312 = vpack.c.b16 %v3528, %v3512
    %v4313 = vpack.c.b16 %v3529, %v3513
    %v4314 = vpack.c.b16 %v3530, %v3514
    %v4315 = vpack.c.b16 %v3531, %v3515
    %v4316 = vpack.c.b16 %v3532, %v3516
    %v4317 = vpack.c.b16 %v3533, %v3517
    %v4318 = vpack.c.b16 %v3534, %v3518
    %v4319 = vpack.c.b16 %v3535, %v3519
    %v4320 = vpack.c.b16 %v3552, %v3536
    %v4321 = vpack.c.b16 %v3553, %v3537
    %v4322 = vpack.c.b16 %v3554, %v3538
    %v4323 = vpack.c.b16 %v3555, %v3539
    %v4324 = vpack.c.b16 %v3556, %v3540
    %v4325 = vpack.c.b16 %v3557, %v3541
    %v4326 = vpack.c.b16 %v3558, %v3542
    %v4327 = vpack.c.b16 %v3559, %v3543
    %v4328 = vpack.c.b16 %v3560, %v3544
    %v4329 = vpack.c.b16 %v3561, %v3545
    %v4330 = vpack.c.b16 %v3562, %v3546
    %v4331 = vpack.c.b16 %v3563, %v3547
    %v4332 = vpack.c.b16 %v3564, %v3548
    %v4333 = vpack.c.b16 %v3565, %v3549
    %v4334 = vpack.c.b16 %v3566, %v3550
    %v4335 = vpack.c.b16 %v3567, %v3551
    %v4336 = vpack.c.b16 %v3584, %v3568
    %v4337 = vpack.c.b16 %v3585, %v3569
    %v4338 = vpack.c.b16 %v3586, %v3570
    %v4339 = vpack.c.b16 %v3587, %v3571
    %v4340 = vpack.c.b16 %v3588, %v3572
    %v4341 = vpack.c.b16 %v3589, %v3573
    %v4342 = vpack.c.b16 %v3590, %v3574
    %v4343 = vpack.c.b16 %v3591, %v3575
    %v4344 = vpack.c.b16 %v3592, %v3576
    %v4345 = vpack.c.b16 %v3593, %v3577
    %v4346 = vpack.c.b16 %v3594, %v3578
    %v4347 = vpack.c.b16 %v3595, %v3579
    %v4348 = vpack.c.b16 %v3596, %v3580
    %v4349 = vpack.c.b16 %v3597, %v3581
    %v4350 = vpack.c.b16 %v3598, %v3582
    %v4351 = vpack.c.b16 %v3599, %v3583
    %v4352 = vpack.c.b16 %v3616, %v3600
    %v4353 = vpack.c.b16 %v3617, %v3601
    %v4354 = vpack.c.b16 %v3618, %v3602
    %v4355 = vpack.c.b16 %v3619, %v3603
    %v4356 = vpack.c.b16 %v3620, %v3604
    %v4357 = vpack.c.b16 %v3621, %v3605
    %v4358 = vpack.c.b16 %v3622, %v3606
    %v4359 = vpack.c.b16 %v3623, %v3607
    %v4360 = vpack.c.b16 %v3624, %v3608
    %v4361 = vpack.c.b16 %v3625, %v3609
    %v4362 = vpack.c.b16 %v3626, %v3610
    %v4363 = vpack.c.b16 %v3627, %v3611
    %v4364 = vpack.c.b16 %v3628, %v3612
    %v4365 = vpack.c.b16 %v3629, %v3613
    %v4366 = vpack.c.b16 %v3630, %v3614
    %v4367 = vpack.c.b16 %v3631, %v3615
    %v4368 = vpack.c.b16 %v3648, %v3632
    %v4369 = vpack.c.b16 %v3649, %v3633
    %v4370 = vpack.c.b16 %v3650, %v3634
    %v4371 = vpack.c.b16 %v3651, %v3635
    %v4372 = vpack.c.b16 %v3652, %v3636
    %v4373 = vpack.c.b16 %v3653, %v3637
    %v4374 = vpack.c.b16 %v3654, %v3638
    %v4375 = vpack.c.b16 %v3655, %v3639
    %v4376 = vpack.c.b16 %v3656, %v3640
    %v4377 = vpack.c.b16 %v3657, %v3641
    %v4378 = vpack.c.b16 %v3658, %v3642
    %v4379 = vpack.c.b16 %v3659, %v3643
    %v4380 = vpack.c.b16 %v3660, %v3644
    %v4381 = vpack.c.b16 %v3661, %v3645
    %v4382 = vpack.c.b16 %v3662, %v3646
    %v4383 = vpack.c.b16 %v3663, %v3647
    %v4384 = vpack.c.b16 %v3680, %v3664
    %v4385 = vpack.c.b16 %v3681, %v3665
    %v4386 = vpack.c.b16 %v3682, %v3666
    %v4387 = vpack.c.b16 %v3683, %v3667
    %v4388 = vpack.c.b16 %v3684, %v3668
    %v4389 = vpack.c.b16 %v3685, %v3669
    %v4390 = vpack.c.b16 %v3686, %v3670
    %v4391 = vpack.c.b16 %v3687, %v3671
    %v4392 = vpack.c.b16 %v3688, %v3672
    %v4393 = vpack.c.b16 %v3689, %v3673
    %v4394 = vpack.c.b16 %v3690, %v3674
    %v4395 = vpack.c.b16 %v3691, %v3675
    %v4396 = vpack.c.b16 %v3692, %v3676
    %v4397 = vpack.c.b16 %v3693, %v3677
    %v4398 = vpack.c.b16 %v3694, %v3678
    %v4399 = vpack.c.b16 %v3695, %v3679
    %v4400 = vpack.c.b16 %v3712, %v3696
    %v4401 = vpack.c.b16 %v3713, %v3697
    %v4402 = vpack.c.b16 %v3714, %v3698
    %v4403 = vpack.c.b16 %v3715, %v3699
    %v4404 = vpack.c.b16 %v3716, %v3700
    %v4405 = vpack.c.b16 %v3717, %v3701
    %v4406 = vpack.c.b16 %v3718, %v3702
    %v4407 = vpack.c.b16 %v3719, %v3703
    %v4408 = vpack.c.b16 %v3720, %v3704
    %v4409 = vpack.c.b16 %v3721, %v3705
    %v4410 = vpack.c.b16 %v3722, %v3706
    %v4411 = vpack.c.b16 %v3723, %v3707
    %v4412 = vpack.c.b16 %v3724, %v3708
    %v4413 = vpack.c.b16 %v3725, %v3709
    %v4414 = vpack.c.b16 %v3726, %v3710
    %v4415 = vpack.c.b16 %v3727, %v3711
    %v4416 = vpack.c.b16 %v3744, %v3728
    %v4417 = vpack.c.b16 %v3745, %v3729
    %v4418 = vpack.c.b16 %v3746, %v3730
    %v4419 = vpack.c.b16 %v3747, %v3731
    %v4420 = vpack.c.b16 %v3748, %v3732
    %v4421 = vpack.c.b16 %v3749, %v3733
    %v4422 = vpack.c.b16 %v3750, %v3734
    %v4423 = vpack.c.b16 %v3751, %v3735
    %v4424 = vpack.c.b16 %v3752, %v3736
    %v4425 = vpack.c.b16 %v3753, %v3737
    %v4426 = vpack.c.b16 %v3754, %v3738
    %v4427 = vpack.c.b16 %v3755, %v3739
    %v4428 = vpack.c.b16 %v3756, %v3740
    %v4429 = vpack.c.b16 %v3757, %v3741
    %v4430 = vpack.c.b16 %v3758, %v3742
    %v4431 = vpack.c.b16 %v3759, %v3743
    %v4432 = vpack.c.b16 %v3776, %v3760
    %v4433 = vpack.c.b16 %v3777, %v3761
    %v4434 = vpack.c.b16 %v3778, %v3762
    %v4435 = vpack.c.b16 %v3779, %v3763
    %v4436 = vpack.c.b16 %v3780, %v3764
    %v4437 = vpack.c.b16 %v3781, %v3765
    %v4438 = vpack.c.b16 %v3782, %v3766
    %v4439 = vpack.c.b16 %v3783, %v3767
    %v4440 = vpack.c.b16 %v3784, %v3768
    %v4441 = vpack.c.b16 %v3785, %v3769
    %v4442 = vpack.c.b16 %v3786, %v3770
    %v4443 = vpack.c.b16 %v3787, %v3771
    %v4444 = vpack.c.b16 %v3788, %v3772
    %v4445 = vpack.c.b16 %v3789, %v3773
    %v4446 = vpack.c.b16 %v3790, %v3774
    %v4447 = vpack.c.b16 %v3791, %v3775
    %v4448 = vpack.c.b16 %v3808, %v3792
    %v4449 = vpack.c.b16 %v3809, %v3793
    %v4450 = vpack.c.b16 %v3810, %v3794
    %v4451 = vpack.c.b16 %v3811, %v3795
    %v4452 = vpack.c.b16 %v3812, %v3796
    %v4453 = vpack.c.b16 %v3813, %v3797
    %v4454 = vpack.c.b16 %v3814, %v3798
    %v4455 = vpack.c.b16 %v3815, %v3799
    %v4456 = vpack.c.b16 %v3816, %v3800
    %v4457 = vpack.c.b16 %v3817, %v3801
    %v4458 = vpack.c.b16 %v3818, %v3802
    %v4459 = vpack.c.b16 %v3819, %v3803
    %v4460 = vpack.c.b16 %v3820, %v3804
    %v4461 = vpack.c.b16 %v3821, %v3805
    %v4462 = vpack.c.b16 %v3822, %v3806
    %v4463 = vpack.c.b16 %v3823, %v3807
    %v4464 = vpack.c.b16 %v3840, %v3824
    %v4465 = vpack.c.b16 %v3841, %v3825
    %v4466 = vpack.c.b16 %v3842, %v3826
    %v4467 = vpack.c.b16 %v3843, %v3827
    %v4468 = vpack.c.b16 %v3844, %v3828
    %v4469 = vpack.c.b16 %v3845, %v3829
    %v4470 = vpack.c.b16 %v3846, %v3830
    %v4471 = vpack.c.b16 %v3847, %v3831
    %v4472 = vpack.c.b16 %v3848, %v3832
    %v4473 = vpack.c.b16 %v3849, %v3833
    %v4474 = vpack.c.b16 %v3850, %v3834
    %v4475 = vpack.c.b16 %v3851, %v3835
    %v4476 = vpack.c.b16 %v3852, %v3836
    %v4477 = vpack.c.b16 %v3853, %v3837
    %v4478 = vpack.c.b16 %v3854, %v3838
    %v4479 = vpack.c.b16 %v3855, %v3839
    %v4480 = vpack.c.b16 %v3872, %v3856
    %v4481 = vpack.c.b16 %v3873, %v3857
    %v4482 = vpack.c.b16 %v3874, %v3858
    %v4483 = vpack.c.b16 %v3875, %v3859
    %v4484 = vpack.c.b16 %v3876, %v3860
    %v4485 = vpack.c.b16 %v3877, %v3861
    %v4486 = vpack.c.b16 %v3878, %v3862
    %v4487 = vpack.c.b16 %v3879, %v3863
    %v4488 = vpack.c.b16 %v3880, %v3864
    %v4489 = vpack.c.b16 %v3881, %v3865
    %v4490 = vpack.c.b16 %v3882, %v3866
    %v4491 = vpack.c.b16 %v3883, %v3867
    %v4492 = vpack.c.b16 %v3884, %v3868
    %v4493 = vpack.c.b16 %v3885, %v3869
    %v4494 = vpack.c.b16 %v3886, %v3870
    %v4495 = vpack.c.b16 %v3887, %v3871
    %v4496 = vpack.c.b16 %v3904, %v3888
    %v4497 = vpack.c.b16 %v3905, %v3889
    %v4498 = vpack.c.b16 %v3906, %v3890
    %v4499 = vpack.c.b16 %v3907, %v3891
    %v4500 = vpack.c.b16 %v3908, %v3892
    %v4501 = vpack.c.b16 %v3909, %v3893
    %v4502 = vpack.c.b16 %v3910, %v3894
    %v4503 = vpack.c.b16 %v3911, %v3895
    %v4504 = vpack.c.b16 %v3912, %v3896
    %v4505 = vpack.c.b16 %v3913, %v3897
    %v4506 = vpack.c.b16 %v3914, %v3898
    %v4507 = vpack.c.b16 %v3915, %v3899
    %v4508 = vpack.c.b16 %v3916, %v3900
    %v4509 = vpack.c.b16 %v3917, %v3901
    %v4510 = vpack.c.b16 %v3918, %v3902
    %v4511 = vpack.c.b16 %v3919, %v3903
    %v4512 = vpack.c.b16 %v3936, %v3920
    %v4513 = vpack.c.b16 %v3937, %v3921
    %v4514 = vpack.c.b16 %v3938, %v3922
    %v4515 = vpack.c.b16 %v3939, %v3923
    %v4516 = vpack.c.b16 %v3940, %v3924
    %v4517 = vpack.c.b16 %v3941, %v3925
    %v4518 = vpack.c.b16 %v3942, %v3926
    %v4519 = vpack.c.b16 %v3943, %v3927
    %v4520 = vpack.c.b16 %v3944, %v3928
    %v4521 = vpack.c.b16 %v3945, %v3929
    %v4522 = vpack.c.b16 %v3946, %v3930
    %v4523 = vpack.c.b16 %v3947, %v3931
    %v4524 = vpack.c.b16 %v3948, %v3932
    %v4525 = vpack.c.b16 %v3949, %v3933
    %v4526 = vpack.c.b16 %v3950, %v3934
    %v4527 = vpack.c.b16 %v3951, %v3935
    %v4528 = vpack.c.b16 %v3968, %v3952
    %v4529 = vpack.c.b16 %v3969, %v3953
    %v4530 = vpack.c.b16 %v3970, %v3954
    %v4531 = vpack.c.b16 %v3971, %v3955
    %v4532 = vpack.c.b16 %v3972, %v3956
    %v4533 = vpack.c.b16 %v3973, %v3957
    %v4534 = vpack.c.b16 %v3974, %v3958
    %v4535 = vpack.c.b16 %v3975, %v3959
    %v4536 = vpack.c.b16 %v3976, %v3960
    %v4537 = vpack.c.b16 %v3977, %v3961
    %v4538 = vpack.c.b16 %v3978, %v3962
    %v4539 = vpack.c.b16 %v3979, %v3963
    %v4540 = vpack.c.b16 %v3980, %v3964
    %v4541 = vpack.c.b16 %v3981, %v3965
    %v4542 = vpack.c.b16 %v3982, %v3966
    %v4543 = vpack.c.b16 %v3983, %v3967
    %v4544 = vpack.c.b16 %v4000, %v3984
    %v4545 = vpack.c.b16 %v4001, %v3985
    %v4546 = vpack.c.b16 %v4002, %v3986
    %v4547 = vpack.c.b16 %v4003, %v3987
    %v4548 = vpack.c.b16 %v4004, %v3988
    %v4549 = vpack.c.b16 %v4005, %v3989
    %v4550 = vpack.c.b16 %v4006, %v3990
    %v4551 = vpack.c.b16 %v4007, %v3991
    %v4552 = vpack.c.b16 %v4008, %v3992
    %v4553 = vpack.c.b16 %v4009, %v3993
    %v4554 = vpack.c.b16 %v4010, %v3994
    %v4555 = vpack.c.b16 %v4011, %v3995
    %v4556 = vpack.c.b16 %v4012, %v3996
    %v4557 = vpack.c.b16 %v4013, %v3997
    %v4558 = vpack.c.b16 %v4014, %v3998
    %v4559 = vpack.c.b16 %v4015, %v3999
    %v4560 = vpack.c.b16 %v4032, %v4016
    %v4561 = vpack.c.b16 %v4033, %v4017
    %v4562 = vpack.c.b16 %v4034, %v4018
    %v4563 = vpack.c.b16 %v4035, %v4019
    %v4564 = vpack.c.b16 %v4036, %v4020
    %v4565 = vpack.c.b16 %v4037, %v4021
    %v4566 = vpack.c.b16 %v4038, %v4022
    %v4567 = vpack.c.b16 %v4039, %v4023
    %v4568 = vpack.c.b16 %v4040, %v4024
    %v4569 = vpack.c.b16 %v4041, %v4025
    %v4570 = vpack.c.b16 %v4042, %v4026
    %v4571 = vpack.c.b16 %v4043, %v4027
    %v4572 = vpack.c.b16 %v4044, %v4028
    %v4573 = vpack.c.b16 %v4045, %v4029
    %v4574 = vpack.c.b16 %v4046, %v4030
    %v4575 = vpack.c.b16 %v4047, %v4031
    %v4576 = vpack.c.b16 %v4064, %v4048
    %v4577 = vpack.c.b16 %v4065, %v4049
    %v4578 = vpack.c.b16 %v4066, %v4050
    %v4579 = vpack.c.b16 %v4067, %v4051
    %v4580 = vpack.c.b16 %v4068, %v4052
    %v4581 = vpack.c.b16 %v4069, %v4053
    %v4582 = vpack.c.b16 %v4070, %v4054
    %v4583 = vpack.c.b16 %v4071, %v4055
    %v4584 = vpack.c.b16 %v4072, %v4056
    %v4585 = vpack.c.b16 %v4073, %v4057
    %v4586 = vpack.c.b16 %v4074, %v4058
    %v4587 = vpack.c.b16 %v4075, %v4059
    %v4588 = vpack.c.b16 %v4076, %v4060
    %v4589 = vpack.c.b16 %v4077, %v4061
    %v4590 = vpack.c.b16 %v4078, %v4062
    %v4591 = vpack.c.b16 %v4079, %v4063
    %5104 = vmatpush.bf16.msra.mxu0 %v2423
    %5105 = vmatpush.bf16.msra.mxu0 %v2422
    %5106 = vmatpush.bf16.msra.mxu0 %v2421
    %5107 = vmatpush.bf16.msra.mxu0 %v2420
    %5108 = vmatpush.bf16.msra.mxu0 %v2419
    %5109 = vmatpush.bf16.msra.mxu0 %v2418
    %5110 = vmatpush.bf16.msra.mxu0 %v2417
    %5111 = vmatpush.bf16.msra.mxu0 %v2416
    %5112 = vmatmul.bf16.gmra.mxu0 %v4080
    %v5113 = vpop.f32.mrf.mxu0
    %v5114 = vadd.f32 0.0, %v5113
    %v5115 = vpop.f32.mrf.mxu0
    %v5116 = vadd.f32 0.0, %v5115
    %5117 = vmatmul.bf16.gmra.mxu0 %v4096
    %v5118 = vpop.f32.mrf.mxu0
    %v5119 = vadd.f32 0.0, %v5118
    %v5120 = vpop.f32.mrf.mxu0
    %v5121 = vadd.f32 0.0, %v5120
    %5122 = vmatmul.bf16.gmra.mxu0 %v4112
    %v5123 = vpop.f32.mrf.mxu0
    %v5124 = vadd.f32 0.0, %v5123
    %v5125 = vpop.f32.mrf.mxu0
    %v5126 = vadd.f32 0.0, %v5125
    %5127 = vmatmul.bf16.gmra.mxu0 %v4128
    %v5128 = vpop.f32.mrf.mxu0
    %v5129 = vadd.f32 0.0, %v5128
    %v5130 = vpop.f32.mrf.mxu0
    %v5131 = vadd.f32 0.0, %v5130
    %5132 = vmatmul.bf16.gmra.mxu0 %v4144
    %v5133 = vpop.f32.mrf.mxu0
    %v5134 = vadd.f32 0.0, %v5133
    %v5135 = vpop.f32.mrf.mxu0
    %v5136 = vadd.f32 0.0, %v5135
    %5137 = vmatmul.bf16.gmra.mxu0 %v4160
    %v5138 = vpop.f32.mrf.mxu0
    %v5139 = vadd.f32 0.0, %v5138
    %v5140 = vpop.f32.mrf.mxu0
    %v5141 = vadd.f32 0.0, %v5140
    %5142 = vmatmul.bf16.gmra.mxu0 %v4176
    %v5143 = vpop.f32.mrf.mxu0
    %v5144 = vadd.f32 0.0, %v5143
    %v5145 = vpop.f32.mrf.mxu0
    %v5146 = vadd.f32 0.0, %v5145
    %5147 = vmatmul.bf16.gmra.mxu0 %v4192
    %v5148 = vpop.f32.mrf.mxu0
    %v5149 = vadd.f32 0.0, %v5148
    %v5150 = vpop.f32.mrf.mxu0
    %v5151 = vadd.f32 0.0, %v5150
    %5152 = vmatmul.bf16.gmra.mxu0 %v4208
    %v5153 = vpop.f32.mrf.mxu0
    %v5154 = vadd.f32 0.0, %v5153
    %v5155 = vpop.f32.mrf.mxu0
    %v5156 = vadd.f32 0.0, %v5155
    %5157 = vmatmul.bf16.gmra.mxu0 %v4224
    %v5158 = vpop.f32.mrf.mxu0
    %v5159 = vadd.f32 0.0, %v5158
    %v5160 = vpop.f32.mrf.mxu0
    %v5161 = vadd.f32 0.0, %v5160
    %5162 = vmatmul.bf16.gmra.mxu0 %v4240
    %v5163 = vpop.f32.mrf.mxu0
    %v5164 = vadd.f32 0.0, %v5163
    %v5165 = vpop.f32.mrf.mxu0
    %v5166 = vadd.f32 0.0, %v5165
    %5167 = vmatmul.bf16.gmra.mxu0 %v4256
    %v5168 = vpop.f32.mrf.mxu0
    %v5169 = vadd.f32 0.0, %v5168
    %v5170 = vpop.f32.mrf.mxu0
    %v5171 = vadd.f32 0.0, %v5170
    %5172 = vmatmul.bf16.gmra.mxu0 %v4272
    %v5173 = vpop.f32.mrf.mxu0
    %v5174 = vadd.f32 0.0, %v5173
    %v5175 = vpop.f32.mrf.mxu0
    %v5176 = vadd.f32 0.0, %v5175
    %5177 = vmatmul.bf16.gmra.mxu0 %v4288
    %v5178 = vpop.f32.mrf.mxu0
    %v5179 = vadd.f32 0.0, %v5178
    %v5180 = vpop.f32.mrf.mxu0
    %v5181 = vadd.f32 0.0, %v5180
    %5182 = vmatmul.bf16.gmra.mxu0 %v4304
    %v5183 = vpop.f32.mrf.mxu0
    %v5184 = vadd.f32 0.0, %v5183
    %v5185 = vpop.f32.mrf.mxu0
    %v5186 = vadd.f32 0.0, %v5185
    %5187 = vmatmul.bf16.gmra.mxu0 %v4320
    %v5188 = vpop.f32.mrf.mxu0
    %v5189 = vadd.f32 0.0, %v5188
    %v5190 = vpop.f32.mrf.mxu0
    %v5191 = vadd.f32 0.0, %v5190
    %5192 = vmatmul.bf16.gmra.mxu0 %v4336
    %v5193 = vpop.f32.mrf.mxu0
    %v5194 = vadd.f32 0.0, %v5193
    %v5195 = vpop.f32.mrf.mxu0
    %v5196 = vadd.f32 0.0, %v5195
    %5197 = vmatmul.bf16.gmra.mxu0 %v4352
    %v5198 = vpop.f32.mrf.mxu0
    %v5199 = vadd.f32 0.0, %v5198
    %v5200 = vpop.f32.mrf.mxu0
    %v5201 = vadd.f32 0.0, %v5200
    %5202 = vmatmul.bf16.gmra.mxu0 %v4368
    %v5203 = vpop.f32.mrf.mxu0
    %v5204 = vadd.f32 0.0, %v5203
    %v5205 = vpop.f32.mrf.mxu0
    %v5206 = vadd.f32 0.0, %v5205
    %5207 = vmatmul.bf16.gmra.mxu0 %v4384
    %v5208 = vpop.f32.mrf.mxu0
    %v5209 = vadd.f32 0.0, %v5208
    %v5210 = vpop.f32.mrf.mxu0
    %v5211 = vadd.f32 0.0, %v5210
    %5212 = vmatmul.bf16.gmra.mxu0 %v4400
    %v5213 = vpop.f32.mrf.mxu0
    %v5214 = vadd.f32 0.0, %v5213
    %v5215 = vpop.f32.mrf.mxu0
    %v5216 = vadd.f32 0.0, %v5215
    %5217 = vmatmul.bf16.gmra.mxu0 %v4416
    %v5218 = vpop.f32.mrf.mxu0
    %v5219 = vadd.f32 0.0, %v5218
    %v5220 = vpop.f32.mrf.mxu0
    %v5221 = vadd.f32 0.0, %v5220
    %5222 = vmatmul.bf16.gmra.mxu0 %v4432
    %v5223 = vpop.f32.mrf.mxu0
    %v5224 = vadd.f32 0.0, %v5223
    %v5225 = vpop.f32.mrf.mxu0
    %v5226 = vadd.f32 0.0, %v5225
    %5227 = vmatmul.bf16.gmra.mxu0 %v4448
    %v5228 = vpop.f32.mrf.mxu0
    %v5229 = vadd.f32 0.0, %v5228
    %v5230 = vpop.f32.mrf.mxu0
    %v5231 = vadd.f32 0.0, %v5230
    %5232 = vmatmul.bf16.gmra.mxu0 %v4464
    %v5233 = vpop.f32.mrf.mxu0
    %v5234 = vadd.f32 0.0, %v5233
    %v5235 = vpop.f32.mrf.mxu0
    %v5236 = vadd.f32 0.0, %v5235
    %5237 = vmatmul.bf16.gmra.mxu0 %v4480
    %v5238 = vpop.f32.mrf.mxu0
    %v5239 = vadd.f32 0.0, %v5238
    %v5240 = vpop.f32.mrf.mxu0
    %v5241 = vadd.f32 0.0, %v5240
    %5242 = vmatmul.bf16.gmra.mxu0 %v4496
    %v5243 = vpop.f32.mrf.mxu0
    %v5244 = vadd.f32 0.0, %v5243
    %v5245 = vpop.f32.mrf.mxu0
    %v5246 = vadd.f32 0.0, %v5245
    %5247 = vmatmul.bf16.gmra.mxu0 %v4512
    %v5248 = vpop.f32.mrf.mxu0
    %v5249 = vadd.f32 0.0, %v5248
    %v5250 = vpop.f32.mrf.mxu0
    %v5251 = vadd.f32 0.0, %v5250
    %5252 = vmatmul.bf16.gmra.mxu0 %v4528
    %v5253 = vpop.f32.mrf.mxu0
    %v5254 = vadd.f32 0.0, %v5253
    %v5255 = vpop.f32.mrf.mxu0
    %v5256 = vadd.f32 0.0, %v5255
    %5257 = vmatmul.bf16.gmra.mxu0 %v4544
    %v5258 = vpop.f32.mrf.mxu0
    %v5259 = vadd.f32 0.0, %v5258
    %v5260 = vpop.f32.mrf.mxu0
    %v5261 = vadd.f32 0.0, %v5260
    %5262 = vmatmul.bf16.gmra.mxu0 %v4560
    %v5263 = vpop.f32.mrf.mxu0
    %v5264 = vadd.f32 0.0, %v5263
    %v5265 = vpop.f32.mrf.mxu0
    %v5266 = vadd.f32 0.0, %v5265
    %5267 = vmatmul.bf16.gmra.mxu0 %v4576
    %v5268 = vpop.f32.mrf.mxu0
    %v5269 = vadd.f32 0.0, %v5268
    %v5270 = vpop.f32.mrf.mxu0
    %v5271 = vadd.f32 0.0, %v5270
    %5272 = vdwg.mxu0
    %5273 = vmatpush.bf16.msra.mxu0 %v2431
    %5274 = vmatpush.bf16.msra.mxu0 %v2430
    %5275 = vmatpush.bf16.msra.mxu0 %v2429
    %5276 = vmatpush.bf16.msra.mxu0 %v2428
    %5277 = vmatpush.bf16.msra.mxu0 %v2427
    %5278 = vmatpush.bf16.msra.mxu0 %v2426
    %5279 = vmatpush.bf16.msra.mxu0 %v2425
    %5280 = vmatpush.bf16.msra.mxu0 %v2424
    %5281 = vmatmul.bf16.gmra.mxu0 %v4081
    %v5282 = vpop.f32.mrf.mxu0
    %v5283 = vadd.f32 %v5114, %v5282
    %v5284 = vpop.f32.mrf.mxu0
    %v5285 = vadd.f32 %v5116, %v5284
    %5286 = vmatmul.bf16.gmra.mxu0 %v4097
    %v5287 = vpop.f32.mrf.mxu0
    %v5288 = vadd.f32 %v5119, %v5287
    %v5289 = vpop.f32.mrf.mxu0
    %v5290 = vadd.f32 %v5121, %v5289
    %5291 = vmatmul.bf16.gmra.mxu0 %v4113
    %v5292 = vpop.f32.mrf.mxu0
    %v5293 = vadd.f32 %v5124, %v5292
    %v5294 = vpop.f32.mrf.mxu0
    %v5295 = vadd.f32 %v5126, %v5294
    %5296 = vmatmul.bf16.gmra.mxu0 %v4129
    %v5297 = vpop.f32.mrf.mxu0
    %v5298 = vadd.f32 %v5129, %v5297
    %v5299 = vpop.f32.mrf.mxu0
    %v5300 = vadd.f32 %v5131, %v5299
    %5301 = vmatmul.bf16.gmra.mxu0 %v4145
    %v5302 = vpop.f32.mrf.mxu0
    %v5303 = vadd.f32 %v5134, %v5302
    %v5304 = vpop.f32.mrf.mxu0
    %v5305 = vadd.f32 %v5136, %v5304
    %5306 = vmatmul.bf16.gmra.mxu0 %v4161
    %v5307 = vpop.f32.mrf.mxu0
    %v5308 = vadd.f32 %v5139, %v5307
    %v5309 = vpop.f32.mrf.mxu0
    %v5310 = vadd.f32 %v5141, %v5309
    %5311 = vmatmul.bf16.gmra.mxu0 %v4177
    %v5312 = vpop.f32.mrf.mxu0
    %v5313 = vadd.f32 %v5144, %v5312
    %v5314 = vpop.f32.mrf.mxu0
    %v5315 = vadd.f32 %v5146, %v5314
    %5316 = vmatmul.bf16.gmra.mxu0 %v4193
    %v5317 = vpop.f32.mrf.mxu0
    %v5318 = vadd.f32 %v5149, %v5317
    %v5319 = vpop.f32.mrf.mxu0
    %v5320 = vadd.f32 %v5151, %v5319
    %5321 = vmatmul.bf16.gmra.mxu0 %v4209
    %v5322 = vpop.f32.mrf.mxu0
    %v5323 = vadd.f32 %v5154, %v5322
    %v5324 = vpop.f32.mrf.mxu0
    %v5325 = vadd.f32 %v5156, %v5324
    %5326 = vmatmul.bf16.gmra.mxu0 %v4225
    %v5327 = vpop.f32.mrf.mxu0
    %v5328 = vadd.f32 %v5159, %v5327
    %v5329 = vpop.f32.mrf.mxu0
    %v5330 = vadd.f32 %v5161, %v5329
    %5331 = vmatmul.bf16.gmra.mxu0 %v4241
    %v5332 = vpop.f32.mrf.mxu0
    %v5333 = vadd.f32 %v5164, %v5332
    %v5334 = vpop.f32.mrf.mxu0
    %v5335 = vadd.f32 %v5166, %v5334
    %5336 = vmatmul.bf16.gmra.mxu0 %v4257
    %v5337 = vpop.f32.mrf.mxu0
    %v5338 = vadd.f32 %v5169, %v5337
    %v5339 = vpop.f32.mrf.mxu0
    %v5340 = vadd.f32 %v5171, %v5339
    %5341 = vmatmul.bf16.gmra.mxu0 %v4273
    %v5342 = vpop.f32.mrf.mxu0
    %v5343 = vadd.f32 %v5174, %v5342
    %v5344 = vpop.f32.mrf.mxu0
    %v5345 = vadd.f32 %v5176, %v5344
    %5346 = vmatmul.bf16.gmra.mxu0 %v4289
    %v5347 = vpop.f32.mrf.mxu0
    %v5348 = vadd.f32 %v5179, %v5347
    %v5349 = vpop.f32.mrf.mxu0
    %v5350 = vadd.f32 %v5181, %v5349
    %5351 = vmatmul.bf16.gmra.mxu0 %v4305
    %v5352 = vpop.f32.mrf.mxu0
    %v5353 = vadd.f32 %v5184, %v5352
    %v5354 = vpop.f32.mrf.mxu0
    %v5355 = vadd.f32 %v5186, %v5354
    %5356 = vmatmul.bf16.gmra.mxu0 %v4321
    %v5357 = vpop.f32.mrf.mxu0
    %v5358 = vadd.f32 %v5189, %v5357
    %v5359 = vpop.f32.mrf.mxu0
    %v5360 = vadd.f32 %v5191, %v5359
    %5361 = vmatmul.bf16.gmra.mxu0 %v4337
    %v5362 = vpop.f32.mrf.mxu0
    %v5363 = vadd.f32 %v5194, %v5362
    %v5364 = vpop.f32.mrf.mxu0
    %v5365 = vadd.f32 %v5196, %v5364
    %5366 = vmatmul.bf16.gmra.mxu0 %v4353
    %v5367 = vpop.f32.mrf.mxu0
    %v5368 = vadd.f32 %v5199, %v5367
    %v5369 = vpop.f32.mrf.mxu0
    %v5370 = vadd.f32 %v5201, %v5369
    %5371 = vmatmul.bf16.gmra.mxu0 %v4369
    %v5372 = vpop.f32.mrf.mxu0
    %v5373 = vadd.f32 %v5204, %v5372
    %v5374 = vpop.f32.mrf.mxu0
    %v5375 = vadd.f32 %v5206, %v5374
    %5376 = vmatmul.bf16.gmra.mxu0 %v4385
    %v5377 = vpop.f32.mrf.mxu0
    %v5378 = vadd.f32 %v5209, %v5377
    %v5379 = vpop.f32.mrf.mxu0
    %v5380 = vadd.f32 %v5211, %v5379
    %5381 = vmatmul.bf16.gmra.mxu0 %v4401
    %v5382 = vpop.f32.mrf.mxu0
    %v5383 = vadd.f32 %v5214, %v5382
    %v5384 = vpop.f32.mrf.mxu0
    %v5385 = vadd.f32 %v5216, %v5384
    %5386 = vmatmul.bf16.gmra.mxu0 %v4417
    %v5387 = vpop.f32.mrf.mxu0
    %v5388 = vadd.f32 %v5219, %v5387
    %v5389 = vpop.f32.mrf.mxu0
    %v5390 = vadd.f32 %v5221, %v5389
    %5391 = vmatmul.bf16.gmra.mxu0 %v4433
    %v5392 = vpop.f32.mrf.mxu0
    %v5393 = vadd.f32 %v5224, %v5392
    %v5394 = vpop.f32.mrf.mxu0
    %v5395 = vadd.f32 %v5226, %v5394
    %5396 = vmatmul.bf16.gmra.mxu0 %v4449
    %v5397 = vpop.f32.mrf.mxu0
    %v5398 = vadd.f32 %v5229, %v5397
    %v5399 = vpop.f32.mrf.mxu0
    %v5400 = vadd.f32 %v5231, %v5399
    %5401 = vmatmul.bf16.gmra.mxu0 %v4465
    %v5402 = vpop.f32.mrf.mxu0
    %v5403 = vadd.f32 %v5234, %v5402
    %v5404 = vpop.f32.mrf.mxu0
    %v5405 = vadd.f32 %v5236, %v5404
    %5406 = vmatmul.bf16.gmra.mxu0 %v4481
    %v5407 = vpop.f32.mrf.mxu0
    %v5408 = vadd.f32 %v5239, %v5407
    %v5409 = vpop.f32.mrf.mxu0
    %v5410 = vadd.f32 %v5241, %v5409
    %5411 = vmatmul.bf16.gmra.mxu0 %v4497
    %v5412 = vpop.f32.mrf.mxu0
    %v5413 = vadd.f32 %v5244, %v5412
    %v5414 = vpop.f32.mrf.mxu0
    %v5415 = vadd.f32 %v5246, %v5414
    %5416 = vmatmul.bf16.gmra.mxu0 %v4513
    %v5417 = vpop.f32.mrf.mxu0
    %v5418 = vadd.f32 %v5249, %v5417
    %v5419 = vpop.f32.mrf.mxu0
    %v5420 = vadd.f32 %v5251, %v5419
    %5421 = vmatmul.bf16.gmra.mxu0 %v4529
    %v5422 = vpop.f32.mrf.mxu0
    %v5423 = vadd.f32 %v5254, %v5422
    %v5424 = vpop.f32.mrf.mxu0
    %v5425 = vadd.f32 %v5256, %v5424
    %5426 = vmatmul.bf16.gmra.mxu0 %v4545
    %v5427 = vpop.f32.mrf.mxu0
    %v5428 = vadd.f32 %v5259, %v5427
    %v5429 = vpop.f32.mrf.mxu0
    %v5430 = vadd.f32 %v5261, %v5429
    %5431 = vmatmul.bf16.gmra.mxu0 %v4561
    %v5432 = vpop.f32.mrf.mxu0
    %v5433 = vadd.f32 %v5264, %v5432
    %v5434 = vpop.f32.mrf.mxu0
    %v5435 = vadd.f32 %v5266, %v5434
    %5436 = vmatmul.bf16.gmra.mxu0 %v4577
    %v5437 = vpop.f32.mrf.mxu0
    %v5438 = vadd.f32 %v5269, %v5437
    %v5439 = vpop.f32.mrf.mxu0
    %v5440 = vadd.f32 %v5271, %v5439
    %5441 = vdwg.mxu0
    %5442 = vmatpush.bf16.msra.mxu0 %v2439
    %5443 = vmatpush.bf16.msra.mxu0 %v2438
    %5444 = vmatpush.bf16.msra.mxu0 %v2437
    %5445 = vmatpush.bf16.msra.mxu0 %v2436
    %5446 = vmatpush.bf16.msra.mxu0 %v2435
    %5447 = vmatpush.bf16.msra.mxu0 %v2434
    %5448 = vmatpush.bf16.msra.mxu0 %v2433
    %5449 = vmatpush.bf16.msra.mxu0 %v2432
    %5450 = vmatmul.bf16.gmra.mxu0 %v4082
    %v5451 = vpop.f32.mrf.mxu0
    %v5452 = vadd.f32 %v5283, %v5451
    %v5453 = vpop.f32.mrf.mxu0
    %v5454 = vadd.f32 %v5285, %v5453
    %5455 = vmatmul.bf16.gmra.mxu0 %v4098
    %v5456 = vpop.f32.mrf.mxu0
    %v5457 = vadd.f32 %v5288, %v5456
    %v5458 = vpop.f32.mrf.mxu0
    %v5459 = vadd.f32 %v5290, %v5458
    %5460 = vmatmul.bf16.gmra.mxu0 %v4114
    %v5461 = vpop.f32.mrf.mxu0
    %v5462 = vadd.f32 %v5293, %v5461
    %v5463 = vpop.f32.mrf.mxu0
    %v5464 = vadd.f32 %v5295, %v5463
    %5465 = vmatmul.bf16.gmra.mxu0 %v4130
    %v5466 = vpop.f32.mrf.mxu0
    %v5467 = vadd.f32 %v5298, %v5466
    %v5468 = vpop.f32.mrf.mxu0
    %v5469 = vadd.f32 %v5300, %v5468
    %5470 = vmatmul.bf16.gmra.mxu0 %v4146
    %v5471 = vpop.f32.mrf.mxu0
    %v5472 = vadd.f32 %v5303, %v5471
    %v5473 = vpop.f32.mrf.mxu0
    %v5474 = vadd.f32 %v5305, %v5473
    %5475 = vmatmul.bf16.gmra.mxu0 %v4162
    %v5476 = vpop.f32.mrf.mxu0
    %v5477 = vadd.f32 %v5308, %v5476
    %v5478 = vpop.f32.mrf.mxu0
    %v5479 = vadd.f32 %v5310, %v5478
    %5480 = vmatmul.bf16.gmra.mxu0 %v4178
    %v5481 = vpop.f32.mrf.mxu0
    %v5482 = vadd.f32 %v5313, %v5481
    %v5483 = vpop.f32.mrf.mxu0
    %v5484 = vadd.f32 %v5315, %v5483
    %5485 = vmatmul.bf16.gmra.mxu0 %v4194
    %v5486 = vpop.f32.mrf.mxu0
    %v5487 = vadd.f32 %v5318, %v5486
    %v5488 = vpop.f32.mrf.mxu0
    %v5489 = vadd.f32 %v5320, %v5488
    %5490 = vmatmul.bf16.gmra.mxu0 %v4210
    %v5491 = vpop.f32.mrf.mxu0
    %v5492 = vadd.f32 %v5323, %v5491
    %v5493 = vpop.f32.mrf.mxu0
    %v5494 = vadd.f32 %v5325, %v5493
    %5495 = vmatmul.bf16.gmra.mxu0 %v4226
    %v5496 = vpop.f32.mrf.mxu0
    %v5497 = vadd.f32 %v5328, %v5496
    %v5498 = vpop.f32.mrf.mxu0
    %v5499 = vadd.f32 %v5330, %v5498
    %5500 = vmatmul.bf16.gmra.mxu0 %v4242
    %v5501 = vpop.f32.mrf.mxu0
    %v5502 = vadd.f32 %v5333, %v5501
    %v5503 = vpop.f32.mrf.mxu0
    %v5504 = vadd.f32 %v5335, %v5503
    %5505 = vmatmul.bf16.gmra.mxu0 %v4258
    %v5506 = vpop.f32.mrf.mxu0
    %v5507 = vadd.f32 %v5338, %v5506
    %v5508 = vpop.f32.mrf.mxu0
    %v5509 = vadd.f32 %v5340, %v5508
    %5510 = vmatmul.bf16.gmra.mxu0 %v4274
    %v5511 = vpop.f32.mrf.mxu0
    %v5512 = vadd.f32 %v5343, %v5511
    %v5513 = vpop.f32.mrf.mxu0
    %v5514 = vadd.f32 %v5345, %v5513
    %5515 = vmatmul.bf16.gmra.mxu0 %v4290
    %v5516 = vpop.f32.mrf.mxu0
    %v5517 = vadd.f32 %v5348, %v5516
    %v5518 = vpop.f32.mrf.mxu0
    %v5519 = vadd.f32 %v5350, %v5518
    %5520 = vmatmul.bf16.gmra.mxu0 %v4306
    %v5521 = vpop.f32.mrf.mxu0
    %v5522 = vadd.f32 %v5353, %v5521
    %v5523 = vpop.f32.mrf.mxu0
    %v5524 = vadd.f32 %v5355, %v5523
    %5525 = vmatmul.bf16.gmra.mxu0 %v4322
    %v5526 = vpop.f32.mrf.mxu0
    %v5527 = vadd.f32 %v5358, %v5526
    %v5528 = vpop.f32.mrf.mxu0
    %v5529 = vadd.f32 %v5360, %v5528
    %5530 = vmatmul.bf16.gmra.mxu0 %v4338
    %v5531 = vpop.f32.mrf.mxu0
    %v5532 = vadd.f32 %v5363, %v5531
    %v5533 = vpop.f32.mrf.mxu0
    %v5534 = vadd.f32 %v5365, %v5533
    %5535 = vmatmul.bf16.gmra.mxu0 %v4354
    %v5536 = vpop.f32.mrf.mxu0
    %v5537 = vadd.f32 %v5368, %v5536
    %v5538 = vpop.f32.mrf.mxu0
    %v5539 = vadd.f32 %v5370, %v5538
    %5540 = vmatmul.bf16.gmra.mxu0 %v4370
    %v5541 = vpop.f32.mrf.mxu0
    %v5542 = vadd.f32 %v5373, %v5541
    %v5543 = vpop.f32.mrf.mxu0
    %v5544 = vadd.f32 %v5375, %v5543
    %5545 = vmatmul.bf16.gmra.mxu0 %v4386
    %v5546 = vpop.f32.mrf.mxu0
    %v5547 = vadd.f32 %v5378, %v5546
    %v5548 = vpop.f32.mrf.mxu0
    %v5549 = vadd.f32 %v5380, %v5548
    %5550 = vmatmul.bf16.gmra.mxu0 %v4402
    %v5551 = vpop.f32.mrf.mxu0
    %v5552 = vadd.f32 %v5383, %v5551
    %v5553 = vpop.f32.mrf.mxu0
    %v5554 = vadd.f32 %v5385, %v5553
    %5555 = vmatmul.bf16.gmra.mxu0 %v4418
    %v5556 = vpop.f32.mrf.mxu0
    %v5557 = vadd.f32 %v5388, %v5556
    %v5558 = vpop.f32.mrf.mxu0
    %v5559 = vadd.f32 %v5390, %v5558
    %5560 = vmatmul.bf16.gmra.mxu0 %v4434
    %v5561 = vpop.f32.mrf.mxu0
    %v5562 = vadd.f32 %v5393, %v5561
    %v5563 = vpop.f32.mrf.mxu0
    %v5564 = vadd.f32 %v5395, %v5563
    %5565 = vmatmul.bf16.gmra.mxu0 %v4450
    %v5566 = vpop.f32.mrf.mxu0
    %v5567 = vadd.f32 %v5398, %v5566
    %v5568 = vpop.f32.mrf.mxu0
    %v5569 = vadd.f32 %v5400, %v5568
    %5570 = vmatmul.bf16.gmra.mxu0 %v4466
    %v5571 = vpop.f32.mrf.mxu0
    %v5572 = vadd.f32 %v5403, %v5571
    %v5573 = vpop.f32.mrf.mxu0
    %v5574 = vadd.f32 %v5405, %v5573
    %5575 = vmatmul.bf16.gmra.mxu0 %v4482
    %v5576 = vpop.f32.mrf.mxu0
    %v5577 = vadd.f32 %v5408, %v5576
    %v5578 = vpop.f32.mrf.mxu0
    %v5579 = vadd.f32 %v5410, %v5578
    %5580 = vmatmul.bf16.gmra.mxu0 %v4498
    %v5581 = vpop.f32.mrf.mxu0
    %v5582 = vadd.f32 %v5413, %v5581
    %v5583 = vpop.f32.mrf.mxu0
    %v5584 = vadd.f32 %v5415, %v5583
    %5585 = vmatmul.bf16.gmra.mxu0 %v4514
    %v5586 = vpop.f32.mrf.mxu0
    %v5587 = vadd.f32 %v5418, %v5586
    %v5588 = vpop.f32.mrf.mxu0
    %v5589 = vadd.f32 %v5420, %v5588
    %5590 = vmatmul.bf16.gmra.mxu0 %v4530
    %v5591 = vpop.f32.mrf.mxu0
    %v5592 = vadd.f32 %v5423, %v5591
    %v5593 = vpop.f32.mrf.mxu0
    %v5594 = vadd.f32 %v5425, %v5593
    %5595 = vmatmul.bf16.gmra.mxu0 %v4546
    %v5596 = vpop.f32.mrf.mxu0
    %v5597 = vadd.f32 %v5428, %v5596
    %v5598 = vpop.f32.mrf.mxu0
    %v5599 = vadd.f32 %v5430, %v5598
    %5600 = vmatmul.bf16.gmra.mxu0 %v4562
    %v5601 = vpop.f32.mrf.mxu0
    %v5602 = vadd.f32 %v5433, %v5601
    %v5603 = vpop.f32.mrf.mxu0
    %v5604 = vadd.f32 %v5435, %v5603
    %5605 = vmatmul.bf16.gmra.mxu0 %v4578
    %v5606 = vpop.f32.mrf.mxu0
    %v5607 = vadd.f32 %v5438, %v5606
    %v5608 = vpop.f32.mrf.mxu0
    %v5609 = vadd.f32 %v5440, %v5608
    %5610 = vdwg.mxu0
    %5611 = vmatpush.bf16.msra.mxu0 %v2447
    %5612 = vmatpush.bf16.msra.mxu0 %v2446
    %5613 = vmatpush.bf16.msra.mxu0 %v2445
    %5614 = vmatpush.bf16.msra.mxu0 %v2444
    %5615 = vmatpush.bf16.msra.mxu0 %v2443
    %5616 = vmatpush.bf16.msra.mxu0 %v2442
    %5617 = vmatpush.bf16.msra.mxu0 %v2441
    %5618 = vmatpush.bf16.msra.mxu0 %v2440
    %5619 = vmatmul.bf16.gmra.mxu0 %v4083
    %v5620 = vpop.f32.mrf.mxu0
    %v5621 = vadd.f32 %v5452, %v5620
    %v5622 = vpop.f32.mrf.mxu0
    %v5623 = vadd.f32 %v5454, %v5622
    %5624 = vmatmul.bf16.gmra.mxu0 %v4099
    %v5625 = vpop.f32.mrf.mxu0
    %v5626 = vadd.f32 %v5457, %v5625
    %v5627 = vpop.f32.mrf.mxu0
    %v5628 = vadd.f32 %v5459, %v5627
    %5629 = vmatmul.bf16.gmra.mxu0 %v4115
    %v5630 = vpop.f32.mrf.mxu0
    %v5631 = vadd.f32 %v5462, %v5630
    %v5632 = vpop.f32.mrf.mxu0
    %v5633 = vadd.f32 %v5464, %v5632
    %5634 = vmatmul.bf16.gmra.mxu0 %v4131
    %v5635 = vpop.f32.mrf.mxu0
    %v5636 = vadd.f32 %v5467, %v5635
    %v5637 = vpop.f32.mrf.mxu0
    %v5638 = vadd.f32 %v5469, %v5637
    %5639 = vmatmul.bf16.gmra.mxu0 %v4147
    %v5640 = vpop.f32.mrf.mxu0
    %v5641 = vadd.f32 %v5472, %v5640
    %v5642 = vpop.f32.mrf.mxu0
    %v5643 = vadd.f32 %v5474, %v5642
    %5644 = vmatmul.bf16.gmra.mxu0 %v4163
    %v5645 = vpop.f32.mrf.mxu0
    %v5646 = vadd.f32 %v5477, %v5645
    %v5647 = vpop.f32.mrf.mxu0
    %v5648 = vadd.f32 %v5479, %v5647
    %5649 = vmatmul.bf16.gmra.mxu0 %v4179
    %v5650 = vpop.f32.mrf.mxu0
    %v5651 = vadd.f32 %v5482, %v5650
    %v5652 = vpop.f32.mrf.mxu0
    %v5653 = vadd.f32 %v5484, %v5652
    %5654 = vmatmul.bf16.gmra.mxu0 %v4195
    %v5655 = vpop.f32.mrf.mxu0
    %v5656 = vadd.f32 %v5487, %v5655
    %v5657 = vpop.f32.mrf.mxu0
    %v5658 = vadd.f32 %v5489, %v5657
    %5659 = vmatmul.bf16.gmra.mxu0 %v4211
    %v5660 = vpop.f32.mrf.mxu0
    %v5661 = vadd.f32 %v5492, %v5660
    %v5662 = vpop.f32.mrf.mxu0
    %v5663 = vadd.f32 %v5494, %v5662
    %5664 = vmatmul.bf16.gmra.mxu0 %v4227
    %v5665 = vpop.f32.mrf.mxu0
    %v5666 = vadd.f32 %v5497, %v5665
    %v5667 = vpop.f32.mrf.mxu0
    %v5668 = vadd.f32 %v5499, %v5667
    %5669 = vmatmul.bf16.gmra.mxu0 %v4243
    %v5670 = vpop.f32.mrf.mxu0
    %v5671 = vadd.f32 %v5502, %v5670
    %v5672 = vpop.f32.mrf.mxu0
    %v5673 = vadd.f32 %v5504, %v5672
    %5674 = vmatmul.bf16.gmra.mxu0 %v4259
    %v5675 = vpop.f32.mrf.mxu0
    %v5676 = vadd.f32 %v5507, %v5675
    %v5677 = vpop.f32.mrf.mxu0
    %v5678 = vadd.f32 %v5509, %v5677
    %5679 = vmatmul.bf16.gmra.mxu0 %v4275
    %v5680 = vpop.f32.mrf.mxu0
    %v5681 = vadd.f32 %v5512, %v5680
    %v5682 = vpop.f32.mrf.mxu0
    %v5683 = vadd.f32 %v5514, %v5682
    %5684 = vmatmul.bf16.gmra.mxu0 %v4291
    %v5685 = vpop.f32.mrf.mxu0
    %v5686 = vadd.f32 %v5517, %v5685
    %v5687 = vpop.f32.mrf.mxu0
    %v5688 = vadd.f32 %v5519, %v5687
    %5689 = vmatmul.bf16.gmra.mxu0 %v4307
    %v5690 = vpop.f32.mrf.mxu0
    %v5691 = vadd.f32 %v5522, %v5690
    %v5692 = vpop.f32.mrf.mxu0
    %v5693 = vadd.f32 %v5524, %v5692
    %5694 = vmatmul.bf16.gmra.mxu0 %v4323
    %v5695 = vpop.f32.mrf.mxu0
    %v5696 = vadd.f32 %v5527, %v5695
    %v5697 = vpop.f32.mrf.mxu0
    %v5698 = vadd.f32 %v5529, %v5697
    %5699 = vmatmul.bf16.gmra.mxu0 %v4339
    %v5700 = vpop.f32.mrf.mxu0
    %v5701 = vadd.f32 %v5532, %v5700
    %v5702 = vpop.f32.mrf.mxu0
    %v5703 = vadd.f32 %v5534, %v5702
    %5704 = vmatmul.bf16.gmra.mxu0 %v4355
    %v5705 = vpop.f32.mrf.mxu0
    %v5706 = vadd.f32 %v5537, %v5705
    %v5707 = vpop.f32.mrf.mxu0
    %v5708 = vadd.f32 %v5539, %v5707
    %5709 = vmatmul.bf16.gmra.mxu0 %v4371
    %v5710 = vpop.f32.mrf.mxu0
    %v5711 = vadd.f32 %v5542, %v5710
    %v5712 = vpop.f32.mrf.mxu0
    %v5713 = vadd.f32 %v5544, %v5712
    %5714 = vmatmul.bf16.gmra.mxu0 %v4387
    %v5715 = vpop.f32.mrf.mxu0
    %v5716 = vadd.f32 %v5547, %v5715
    %v5717 = vpop.f32.mrf.mxu0
    %v5718 = vadd.f32 %v5549, %v5717
    %5719 = vmatmul.bf16.gmra.mxu0 %v4403
    %v5720 = vpop.f32.mrf.mxu0
    %v5721 = vadd.f32 %v5552, %v5720
    %v5722 = vpop.f32.mrf.mxu0
    %v5723 = vadd.f32 %v5554, %v5722
    %5724 = vmatmul.bf16.gmra.mxu0 %v4419
    %v5725 = vpop.f32.mrf.mxu0
    %v5726 = vadd.f32 %v5557, %v5725
    %v5727 = vpop.f32.mrf.mxu0
    %v5728 = vadd.f32 %v5559, %v5727
    %5729 = vmatmul.bf16.gmra.mxu0 %v4435
    %v5730 = vpop.f32.mrf.mxu0
    %v5731 = vadd.f32 %v5562, %v5730
    %v5732 = vpop.f32.mrf.mxu0
    %v5733 = vadd.f32 %v5564, %v5732
    %5734 = vmatmul.bf16.gmra.mxu0 %v4451
    %v5735 = vpop.f32.mrf.mxu0
    %v5736 = vadd.f32 %v5567, %v5735
    %v5737 = vpop.f32.mrf.mxu0
    %v5738 = vadd.f32 %v5569, %v5737
    %5739 = vmatmul.bf16.gmra.mxu0 %v4467
    %v5740 = vpop.f32.mrf.mxu0
    %v5741 = vadd.f32 %v5572, %v5740
    %v5742 = vpop.f32.mrf.mxu0
    %v5743 = vadd.f32 %v5574, %v5742
    %5744 = vmatmul.bf16.gmra.mxu0 %v4483
    %v5745 = vpop.f32.mrf.mxu0
    %v5746 = vadd.f32 %v5577, %v5745
    %v5747 = vpop.f32.mrf.mxu0
    %v5748 = vadd.f32 %v5579, %v5747
    %5749 = vmatmul.bf16.gmra.mxu0 %v4499
    %v5750 = vpop.f32.mrf.mxu0
    %v5751 = vadd.f32 %v5582, %v5750
    %v5752 = vpop.f32.mrf.mxu0
    %v5753 = vadd.f32 %v5584, %v5752
    %5754 = vmatmul.bf16.gmra.mxu0 %v4515
    %v5755 = vpop.f32.mrf.mxu0
    %v5756 = vadd.f32 %v5587, %v5755
    %v5757 = vpop.f32.mrf.mxu0
    %v5758 = vadd.f32 %v5589, %v5757
    %5759 = vmatmul.bf16.gmra.mxu0 %v4531
    %v5760 = vpop.f32.mrf.mxu0
    %v5761 = vadd.f32 %v5592, %v5760
    %v5762 = vpop.f32.mrf.mxu0
    %v5763 = vadd.f32 %v5594, %v5762
    %5764 = vmatmul.bf16.gmra.mxu0 %v4547
    %v5765 = vpop.f32.mrf.mxu0
    %v5766 = vadd.f32 %v5597, %v5765
    %v5767 = vpop.f32.mrf.mxu0
    %v5768 = vadd.f32 %v5599, %v5767
    %5769 = vmatmul.bf16.gmra.mxu0 %v4563
    %v5770 = vpop.f32.mrf.mxu0
    %v5771 = vadd.f32 %v5602, %v5770
    %v5772 = vpop.f32.mrf.mxu0
    %v5773 = vadd.f32 %v5604, %v5772
    %5774 = vmatmul.bf16.gmra.mxu0 %v4579
    %v5775 = vpop.f32.mrf.mxu0
    %v5776 = vadd.f32 %v5607, %v5775
    %v5777 = vpop.f32.mrf.mxu0
    %v5778 = vadd.f32 %v5609, %v5777
    %5779 = vdwg.mxu0
    %5780 = vmatpush.bf16.msra.mxu0 %v2455
    %5781 = vmatpush.bf16.msra.mxu0 %v2454
    %5782 = vmatpush.bf16.msra.mxu0 %v2453
    %5783 = vmatpush.bf16.msra.mxu0 %v2452
    %5784 = vmatpush.bf16.msra.mxu0 %v2451
    %5785 = vmatpush.bf16.msra.mxu0 %v2450
    %5786 = vmatpush.bf16.msra.mxu0 %v2449
    %5787 = vmatpush.bf16.msra.mxu0 %v2448
    %5788 = vmatmul.bf16.gmra.mxu0 %v4084
    %v5789 = vpop.f32.mrf.mxu0
    %v5790 = vadd.f32 %v5621, %v5789
    %v5791 = vpop.f32.mrf.mxu0
    %v5792 = vadd.f32 %v5623, %v5791
    %5793 = vmatmul.bf16.gmra.mxu0 %v4100
    %v5794 = vpop.f32.mrf.mxu0
    %v5795 = vadd.f32 %v5626, %v5794
    %v5796 = vpop.f32.mrf.mxu0
    %v5797 = vadd.f32 %v5628, %v5796
    %5798 = vmatmul.bf16.gmra.mxu0 %v4116
    %v5799 = vpop.f32.mrf.mxu0
    %v5800 = vadd.f32 %v5631, %v5799
    %v5801 = vpop.f32.mrf.mxu0
    %v5802 = vadd.f32 %v5633, %v5801
    %5803 = vmatmul.bf16.gmra.mxu0 %v4132
    %v5804 = vpop.f32.mrf.mxu0
    %v5805 = vadd.f32 %v5636, %v5804
    %v5806 = vpop.f32.mrf.mxu0
    %v5807 = vadd.f32 %v5638, %v5806
    %5808 = vmatmul.bf16.gmra.mxu0 %v4148
    %v5809 = vpop.f32.mrf.mxu0
    %v5810 = vadd.f32 %v5641, %v5809
    %v5811 = vpop.f32.mrf.mxu0
    %v5812 = vadd.f32 %v5643, %v5811
    %5813 = vmatmul.bf16.gmra.mxu0 %v4164
    %v5814 = vpop.f32.mrf.mxu0
    %v5815 = vadd.f32 %v5646, %v5814
    %v5816 = vpop.f32.mrf.mxu0
    %v5817 = vadd.f32 %v5648, %v5816
    %5818 = vmatmul.bf16.gmra.mxu0 %v4180
    %v5819 = vpop.f32.mrf.mxu0
    %v5820 = vadd.f32 %v5651, %v5819
    %v5821 = vpop.f32.mrf.mxu0
    %v5822 = vadd.f32 %v5653, %v5821
    %5823 = vmatmul.bf16.gmra.mxu0 %v4196
    %v5824 = vpop.f32.mrf.mxu0
    %v5825 = vadd.f32 %v5656, %v5824
    %v5826 = vpop.f32.mrf.mxu0
    %v5827 = vadd.f32 %v5658, %v5826
    %5828 = vmatmul.bf16.gmra.mxu0 %v4212
    %v5829 = vpop.f32.mrf.mxu0
    %v5830 = vadd.f32 %v5661, %v5829
    %v5831 = vpop.f32.mrf.mxu0
    %v5832 = vadd.f32 %v5663, %v5831
    %5833 = vmatmul.bf16.gmra.mxu0 %v4228
    %v5834 = vpop.f32.mrf.mxu0
    %v5835 = vadd.f32 %v5666, %v5834
    %v5836 = vpop.f32.mrf.mxu0
    %v5837 = vadd.f32 %v5668, %v5836
    %5838 = vmatmul.bf16.gmra.mxu0 %v4244
    %v5839 = vpop.f32.mrf.mxu0
    %v5840 = vadd.f32 %v5671, %v5839
    %v5841 = vpop.f32.mrf.mxu0
    %v5842 = vadd.f32 %v5673, %v5841
    %5843 = vmatmul.bf16.gmra.mxu0 %v4260
    %v5844 = vpop.f32.mrf.mxu0
    %v5845 = vadd.f32 %v5676, %v5844
    %v5846 = vpop.f32.mrf.mxu0
    %v5847 = vadd.f32 %v5678, %v5846
    %5848 = vmatmul.bf16.gmra.mxu0 %v4276
    %v5849 = vpop.f32.mrf.mxu0
    %v5850 = vadd.f32 %v5681, %v5849
    %v5851 = vpop.f32.mrf.mxu0
    %v5852 = vadd.f32 %v5683, %v5851
    %5853 = vmatmul.bf16.gmra.mxu0 %v4292
    %v5854 = vpop.f32.mrf.mxu0
    %v5855 = vadd.f32 %v5686, %v5854
    %v5856 = vpop.f32.mrf.mxu0
    %v5857 = vadd.f32 %v5688, %v5856
    %5858 = vmatmul.bf16.gmra.mxu0 %v4308
    %v5859 = vpop.f32.mrf.mxu0
    %v5860 = vadd.f32 %v5691, %v5859
    %v5861 = vpop.f32.mrf.mxu0
    %v5862 = vadd.f32 %v5693, %v5861
    %5863 = vmatmul.bf16.gmra.mxu0 %v4324
    %v5864 = vpop.f32.mrf.mxu0
    %v5865 = vadd.f32 %v5696, %v5864
    %v5866 = vpop.f32.mrf.mxu0
    %v5867 = vadd.f32 %v5698, %v5866
    %5868 = vmatmul.bf16.gmra.mxu0 %v4340
    %v5869 = vpop.f32.mrf.mxu0
    %v5870 = vadd.f32 %v5701, %v5869
    %v5871 = vpop.f32.mrf.mxu0
    %v5872 = vadd.f32 %v5703, %v5871
    %5873 = vmatmul.bf16.gmra.mxu0 %v4356
    %v5874 = vpop.f32.mrf.mxu0
    %v5875 = vadd.f32 %v5706, %v5874
    %v5876 = vpop.f32.mrf.mxu0
    %v5877 = vadd.f32 %v5708, %v5876
    %5878 = vmatmul.bf16.gmra.mxu0 %v4372
    %v5879 = vpop.f32.mrf.mxu0
    %v5880 = vadd.f32 %v5711, %v5879
    %v5881 = vpop.f32.mrf.mxu0
    %v5882 = vadd.f32 %v5713, %v5881
    %5883 = vmatmul.bf16.gmra.mxu0 %v4388
    %v5884 = vpop.f32.mrf.mxu0
    %v5885 = vadd.f32 %v5716, %v5884
    %v5886 = vpop.f32.mrf.mxu0
    %v5887 = vadd.f32 %v5718, %v5886
    %5888 = vmatmul.bf16.gmra.mxu0 %v4404
    %v5889 = vpop.f32.mrf.mxu0
    %v5890 = vadd.f32 %v5721, %v5889
    %v5891 = vpop.f32.mrf.mxu0
    %v5892 = vadd.f32 %v5723, %v5891
    %5893 = vmatmul.bf16.gmra.mxu0 %v4420
    %v5894 = vpop.f32.mrf.mxu0
    %v5895 = vadd.f32 %v5726, %v5894
    %v5896 = vpop.f32.mrf.mxu0
    %v5897 = vadd.f32 %v5728, %v5896
    %5898 = vmatmul.bf16.gmra.mxu0 %v4436
    %v5899 = vpop.f32.mrf.mxu0
    %v5900 = vadd.f32 %v5731, %v5899
    %v5901 = vpop.f32.mrf.mxu0
    %v5902 = vadd.f32 %v5733, %v5901
    %5903 = vmatmul.bf16.gmra.mxu0 %v4452
    %v5904 = vpop.f32.mrf.mxu0
    %v5905 = vadd.f32 %v5736, %v5904
    %v5906 = vpop.f32.mrf.mxu0
    %v5907 = vadd.f32 %v5738, %v5906
    %5908 = vmatmul.bf16.gmra.mxu0 %v4468
    %v5909 = vpop.f32.mrf.mxu0
    %v5910 = vadd.f32 %v5741, %v5909
    %v5911 = vpop.f32.mrf.mxu0
    %v5912 = vadd.f32 %v5743, %v5911
    %5913 = vmatmul.bf16.gmra.mxu0 %v4484
    %v5914 = vpop.f32.mrf.mxu0
    %v5915 = vadd.f32 %v5746, %v5914
    %v5916 = vpop.f32.mrf.mxu0
    %v5917 = vadd.f32 %v5748, %v5916
    %5918 = vmatmul.bf16.gmra.mxu0 %v4500
    %v5919 = vpop.f32.mrf.mxu0
    %v5920 = vadd.f32 %v5751, %v5919
    %v5921 = vpop.f32.mrf.mxu0
    %v5922 = vadd.f32 %v5753, %v5921
    %5923 = vmatmul.bf16.gmra.mxu0 %v4516
    %v5924 = vpop.f32.mrf.mxu0
    %v5925 = vadd.f32 %v5756, %v5924
    %v5926 = vpop.f32.mrf.mxu0
    %v5927 = vadd.f32 %v5758, %v5926
    %5928 = vmatmul.bf16.gmra.mxu0 %v4532
    %v5929 = vpop.f32.mrf.mxu0
    %v5930 = vadd.f32 %v5761, %v5929
    %v5931 = vpop.f32.mrf.mxu0
    %v5932 = vadd.f32 %v5763, %v5931
    %5933 = vmatmul.bf16.gmra.mxu0 %v4548
    %v5934 = vpop.f32.mrf.mxu0
    %v5935 = vadd.f32 %v5766, %v5934
    %v5936 = vpop.f32.mrf.mxu0
    %v5937 = vadd.f32 %v5768, %v5936
    %5938 = vmatmul.bf16.gmra.mxu0 %v4564
    %v5939 = vpop.f32.mrf.mxu0
    %v5940 = vadd.f32 %v5771, %v5939
    %v5941 = vpop.f32.mrf.mxu0
    %v5942 = vadd.f32 %v5773, %v5941
    %5943 = vmatmul.bf16.gmra.mxu0 %v4580
    %v5944 = vpop.f32.mrf.mxu0
    %v5945 = vadd.f32 %v5776, %v5944
    %v5946 = vpop.f32.mrf.mxu0
    %v5947 = vadd.f32 %v5778, %v5946
    %5948 = vdwg.mxu0
    %5949 = vmatpush.bf16.msra.mxu0 %v2463
    %5950 = vmatpush.bf16.msra.mxu0 %v2462
    %5951 = vmatpush.bf16.msra.mxu0 %v2461
    %5952 = vmatpush.bf16.msra.mxu0 %v2460
    %5953 = vmatpush.bf16.msra.mxu0 %v2459
    %5954 = vmatpush.bf16.msra.mxu0 %v2458
    %5955 = vmatpush.bf16.msra.mxu0 %v2457
    %5956 = vmatpush.bf16.msra.mxu0 %v2456
    %5957 = vmatmul.bf16.gmra.mxu0 %v4085
    %v5958 = vpop.f32.mrf.mxu0
    %v5959 = vadd.f32 %v5790, %v5958
    %v5960 = vpop.f32.mrf.mxu0
    %v5961 = vadd.f32 %v5792, %v5960
    %5962 = vmatmul.bf16.gmra.mxu0 %v4101
    %v5963 = vpop.f32.mrf.mxu0
    %v5964 = vadd.f32 %v5795, %v5963
    %v5965 = vpop.f32.mrf.mxu0
    %v5966 = vadd.f32 %v5797, %v5965
    %5967 = vmatmul.bf16.gmra.mxu0 %v4117
    %v5968 = vpop.f32.mrf.mxu0
    %v5969 = vadd.f32 %v5800, %v5968
    %v5970 = vpop.f32.mrf.mxu0
    %v5971 = vadd.f32 %v5802, %v5970
    %5972 = vmatmul.bf16.gmra.mxu0 %v4133
    %v5973 = vpop.f32.mrf.mxu0
    %v5974 = vadd.f32 %v5805, %v5973
    %v5975 = vpop.f32.mrf.mxu0
    %v5976 = vadd.f32 %v5807, %v5975
    %5977 = vmatmul.bf16.gmra.mxu0 %v4149
    %v5978 = vpop.f32.mrf.mxu0
    %v5979 = vadd.f32 %v5810, %v5978
    %v5980 = vpop.f32.mrf.mxu0
    %v5981 = vadd.f32 %v5812, %v5980
    %5982 = vmatmul.bf16.gmra.mxu0 %v4165
    %v5983 = vpop.f32.mrf.mxu0
    %v5984 = vadd.f32 %v5815, %v5983
    %v5985 = vpop.f32.mrf.mxu0
    %v5986 = vadd.f32 %v5817, %v5985
    %5987 = vmatmul.bf16.gmra.mxu0 %v4181
    %v5988 = vpop.f32.mrf.mxu0
    %v5989 = vadd.f32 %v5820, %v5988
    %v5990 = vpop.f32.mrf.mxu0
    %v5991 = vadd.f32 %v5822, %v5990
    %5992 = vmatmul.bf16.gmra.mxu0 %v4197
    %v5993 = vpop.f32.mrf.mxu0
    %v5994 = vadd.f32 %v5825, %v5993
    %v5995 = vpop.f32.mrf.mxu0
    %v5996 = vadd.f32 %v5827, %v5995
    %5997 = vmatmul.bf16.gmra.mxu0 %v4213
    %v5998 = vpop.f32.mrf.mxu0
    %v5999 = vadd.f32 %v5830, %v5998
    %v6000 = vpop.f32.mrf.mxu0
    %v6001 = vadd.f32 %v5832, %v6000
    %6002 = vmatmul.bf16.gmra.mxu0 %v4229
    %v6003 = vpop.f32.mrf.mxu0
    %v6004 = vadd.f32 %v5835, %v6003
    %v6005 = vpop.f32.mrf.mxu0
    %v6006 = vadd.f32 %v5837, %v6005
    %6007 = vmatmul.bf16.gmra.mxu0 %v4245
    %v6008 = vpop.f32.mrf.mxu0
    %v6009 = vadd.f32 %v5840, %v6008
    %v6010 = vpop.f32.mrf.mxu0
    %v6011 = vadd.f32 %v5842, %v6010
    %6012 = vmatmul.bf16.gmra.mxu0 %v4261
    %v6013 = vpop.f32.mrf.mxu0
    %v6014 = vadd.f32 %v5845, %v6013
    %v6015 = vpop.f32.mrf.mxu0
    %v6016 = vadd.f32 %v5847, %v6015
    %6017 = vmatmul.bf16.gmra.mxu0 %v4277
    %v6018 = vpop.f32.mrf.mxu0
    %v6019 = vadd.f32 %v5850, %v6018
    %v6020 = vpop.f32.mrf.mxu0
    %v6021 = vadd.f32 %v5852, %v6020
    %6022 = vmatmul.bf16.gmra.mxu0 %v4293
    %v6023 = vpop.f32.mrf.mxu0
    %v6024 = vadd.f32 %v5855, %v6023
    %v6025 = vpop.f32.mrf.mxu0
    %v6026 = vadd.f32 %v5857, %v6025
    %6027 = vmatmul.bf16.gmra.mxu0 %v4309
    %v6028 = vpop.f32.mrf.mxu0
    %v6029 = vadd.f32 %v5860, %v6028
    %v6030 = vpop.f32.mrf.mxu0
    %v6031 = vadd.f32 %v5862, %v6030
    %6032 = vmatmul.bf16.gmra.mxu0 %v4325
    %v6033 = vpop.f32.mrf.mxu0
    %v6034 = vadd.f32 %v5865, %v6033
    %v6035 = vpop.f32.mrf.mxu0
    %v6036 = vadd.f32 %v5867, %v6035
    %6037 = vmatmul.bf16.gmra.mxu0 %v4341
    %v6038 = vpop.f32.mrf.mxu0
    %v6039 = vadd.f32 %v5870, %v6038
    %v6040 = vpop.f32.mrf.mxu0
    %v6041 = vadd.f32 %v5872, %v6040
    %6042 = vmatmul.bf16.gmra.mxu0 %v4357
    %v6043 = vpop.f32.mrf.mxu0
    %v6044 = vadd.f32 %v5875, %v6043
    %v6045 = vpop.f32.mrf.mxu0
    %v6046 = vadd.f32 %v5877, %v6045
    %6047 = vmatmul.bf16.gmra.mxu0 %v4373
    %v6048 = vpop.f32.mrf.mxu0
    %v6049 = vadd.f32 %v5880, %v6048
    %v6050 = vpop.f32.mrf.mxu0
    %v6051 = vadd.f32 %v5882, %v6050
    %6052 = vmatmul.bf16.gmra.mxu0 %v4389
    %v6053 = vpop.f32.mrf.mxu0
    %v6054 = vadd.f32 %v5885, %v6053
    %v6055 = vpop.f32.mrf.mxu0
    %v6056 = vadd.f32 %v5887, %v6055
    %6057 = vmatmul.bf16.gmra.mxu0 %v4405
    %v6058 = vpop.f32.mrf.mxu0
    %v6059 = vadd.f32 %v5890, %v6058
    %v6060 = vpop.f32.mrf.mxu0
    %v6061 = vadd.f32 %v5892, %v6060
    %6062 = vmatmul.bf16.gmra.mxu0 %v4421
    %v6063 = vpop.f32.mrf.mxu0
    %v6064 = vadd.f32 %v5895, %v6063
    %v6065 = vpop.f32.mrf.mxu0
    %v6066 = vadd.f32 %v5897, %v6065
    %6067 = vmatmul.bf16.gmra.mxu0 %v4437
    %v6068 = vpop.f32.mrf.mxu0
    %v6069 = vadd.f32 %v5900, %v6068
    %v6070 = vpop.f32.mrf.mxu0
    %v6071 = vadd.f32 %v5902, %v6070
    %6072 = vmatmul.bf16.gmra.mxu0 %v4453
    %v6073 = vpop.f32.mrf.mxu0
    %v6074 = vadd.f32 %v5905, %v6073
    %v6075 = vpop.f32.mrf.mxu0
    %v6076 = vadd.f32 %v5907, %v6075
    %6077 = vmatmul.bf16.gmra.mxu0 %v4469
    %v6078 = vpop.f32.mrf.mxu0
    %v6079 = vadd.f32 %v5910, %v6078
    %v6080 = vpop.f32.mrf.mxu0
    %v6081 = vadd.f32 %v5912, %v6080
    %6082 = vmatmul.bf16.gmra.mxu0 %v4485
    %v6083 = vpop.f32.mrf.mxu0
    %v6084 = vadd.f32 %v5915, %v6083
    %v6085 = vpop.f32.mrf.mxu0
    %v6086 = vadd.f32 %v5917, %v6085
    %6087 = vmatmul.bf16.gmra.mxu0 %v4501
    %v6088 = vpop.f32.mrf.mxu0
    %v6089 = vadd.f32 %v5920, %v6088
    %v6090 = vpop.f32.mrf.mxu0
    %v6091 = vadd.f32 %v5922, %v6090
    %6092 = vmatmul.bf16.gmra.mxu0 %v4517
    %v6093 = vpop.f32.mrf.mxu0
    %v6094 = vadd.f32 %v5925, %v6093
    %v6095 = vpop.f32.mrf.mxu0
    %v6096 = vadd.f32 %v5927, %v6095
    %6097 = vmatmul.bf16.gmra.mxu0 %v4533
    %v6098 = vpop.f32.mrf.mxu0
    %v6099 = vadd.f32 %v5930, %v6098
    %v6100 = vpop.f32.mrf.mxu0
    %v6101 = vadd.f32 %v5932, %v6100
    %6102 = vmatmul.bf16.gmra.mxu0 %v4549
    %v6103 = vpop.f32.mrf.mxu0
    %v6104 = vadd.f32 %v5935, %v6103
    %v6105 = vpop.f32.mrf.mxu0
    %v6106 = vadd.f32 %v5937, %v6105
    %6107 = vmatmul.bf16.gmra.mxu0 %v4565
    %v6108 = vpop.f32.mrf.mxu0
    %v6109 = vadd.f32 %v5940, %v6108
    %v6110 = vpop.f32.mrf.mxu0
    %v6111 = vadd.f32 %v5942, %v6110
    %6112 = vmatmul.bf16.gmra.mxu0 %v4581
    %v6113 = vpop.f32.mrf.mxu0
    %v6114 = vadd.f32 %v5945, %v6113
    %v6115 = vpop.f32.mrf.mxu0
    %v6116 = vadd.f32 %v5947, %v6115
    %6117 = vdwg.mxu0
    %6118 = vmatpush.bf16.msra.mxu0 %v2471
    %6119 = vmatpush.bf16.msra.mxu0 %v2470
    %6120 = vmatpush.bf16.msra.mxu0 %v2469
    %6121 = vmatpush.bf16.msra.mxu0 %v2468
    %6122 = vmatpush.bf16.msra.mxu0 %v2467
    %6123 = vmatpush.bf16.msra.mxu0 %v2466
    %6124 = vmatpush.bf16.msra.mxu0 %v2465
    %6125 = vmatpush.bf16.msra.mxu0 %v2464
    %6126 = vmatmul.bf16.gmra.mxu0 %v4086
    %v6127 = vpop.f32.mrf.mxu0
    %v6128 = vadd.f32 %v5959, %v6127
    %v6129 = vpop.f32.mrf.mxu0
    %v6130 = vadd.f32 %v5961, %v6129
    %6131 = vmatmul.bf16.gmra.mxu0 %v4102
    %v6132 = vpop.f32.mrf.mxu0
    %v6133 = vadd.f32 %v5964, %v6132
    %v6134 = vpop.f32.mrf.mxu0
    %v6135 = vadd.f32 %v5966, %v6134
    %6136 = vmatmul.bf16.gmra.mxu0 %v4118
    %v6137 = vpop.f32.mrf.mxu0
    %v6138 = vadd.f32 %v5969, %v6137
    %v6139 = vpop.f32.mrf.mxu0
    %v6140 = vadd.f32 %v5971, %v6139
    %6141 = vmatmul.bf16.gmra.mxu0 %v4134
    %v6142 = vpop.f32.mrf.mxu0
    %v6143 = vadd.f32 %v5974, %v6142
    %v6144 = vpop.f32.mrf.mxu0
    %v6145 = vadd.f32 %v5976, %v6144
    %6146 = vmatmul.bf16.gmra.mxu0 %v4150
    %v6147 = vpop.f32.mrf.mxu0
    %v6148 = vadd.f32 %v5979, %v6147
    %v6149 = vpop.f32.mrf.mxu0
    %v6150 = vadd.f32 %v5981, %v6149
    %6151 = vmatmul.bf16.gmra.mxu0 %v4166
    %v6152 = vpop.f32.mrf.mxu0
    %v6153 = vadd.f32 %v5984, %v6152
    %v6154 = vpop.f32.mrf.mxu0
    %v6155 = vadd.f32 %v5986, %v6154
    %6156 = vmatmul.bf16.gmra.mxu0 %v4182
    %v6157 = vpop.f32.mrf.mxu0
    %v6158 = vadd.f32 %v5989, %v6157
    %v6159 = vpop.f32.mrf.mxu0
    %v6160 = vadd.f32 %v5991, %v6159
    %6161 = vmatmul.bf16.gmra.mxu0 %v4198
    %v6162 = vpop.f32.mrf.mxu0
    %v6163 = vadd.f32 %v5994, %v6162
    %v6164 = vpop.f32.mrf.mxu0
    %v6165 = vadd.f32 %v5996, %v6164
    %6166 = vmatmul.bf16.gmra.mxu0 %v4214
    %v6167 = vpop.f32.mrf.mxu0
    %v6168 = vadd.f32 %v5999, %v6167
    %v6169 = vpop.f32.mrf.mxu0
    %v6170 = vadd.f32 %v6001, %v6169
    %6171 = vmatmul.bf16.gmra.mxu0 %v4230
    %v6172 = vpop.f32.mrf.mxu0
    %v6173 = vadd.f32 %v6004, %v6172
    %v6174 = vpop.f32.mrf.mxu0
    %v6175 = vadd.f32 %v6006, %v6174
    %6176 = vmatmul.bf16.gmra.mxu0 %v4246
    %v6177 = vpop.f32.mrf.mxu0
    %v6178 = vadd.f32 %v6009, %v6177
    %v6179 = vpop.f32.mrf.mxu0
    %v6180 = vadd.f32 %v6011, %v6179
    %6181 = vmatmul.bf16.gmra.mxu0 %v4262
    %v6182 = vpop.f32.mrf.mxu0
    %v6183 = vadd.f32 %v6014, %v6182
    %v6184 = vpop.f32.mrf.mxu0
    %v6185 = vadd.f32 %v6016, %v6184
    %6186 = vmatmul.bf16.gmra.mxu0 %v4278
    %v6187 = vpop.f32.mrf.mxu0
    %v6188 = vadd.f32 %v6019, %v6187
    %v6189 = vpop.f32.mrf.mxu0
    %v6190 = vadd.f32 %v6021, %v6189
    %6191 = vmatmul.bf16.gmra.mxu0 %v4294
    %v6192 = vpop.f32.mrf.mxu0
    %v6193 = vadd.f32 %v6024, %v6192
    %v6194 = vpop.f32.mrf.mxu0
    %v6195 = vadd.f32 %v6026, %v6194
    %6196 = vmatmul.bf16.gmra.mxu0 %v4310
    %v6197 = vpop.f32.mrf.mxu0
    %v6198 = vadd.f32 %v6029, %v6197
    %v6199 = vpop.f32.mrf.mxu0
    %v6200 = vadd.f32 %v6031, %v6199
    %6201 = vmatmul.bf16.gmra.mxu0 %v4326
    %v6202 = vpop.f32.mrf.mxu0
    %v6203 = vadd.f32 %v6034, %v6202
    %v6204 = vpop.f32.mrf.mxu0
    %v6205 = vadd.f32 %v6036, %v6204
    %6206 = vmatmul.bf16.gmra.mxu0 %v4342
    %v6207 = vpop.f32.mrf.mxu0
    %v6208 = vadd.f32 %v6039, %v6207
    %v6209 = vpop.f32.mrf.mxu0
    %v6210 = vadd.f32 %v6041, %v6209
    %6211 = vmatmul.bf16.gmra.mxu0 %v4358
    %v6212 = vpop.f32.mrf.mxu0
    %v6213 = vadd.f32 %v6044, %v6212
    %v6214 = vpop.f32.mrf.mxu0
    %v6215 = vadd.f32 %v6046, %v6214
    %6216 = vmatmul.bf16.gmra.mxu0 %v4374
    %v6217 = vpop.f32.mrf.mxu0
    %v6218 = vadd.f32 %v6049, %v6217
    %v6219 = vpop.f32.mrf.mxu0
    %v6220 = vadd.f32 %v6051, %v6219
    %6221 = vmatmul.bf16.gmra.mxu0 %v4390
    %v6222 = vpop.f32.mrf.mxu0
    %v6223 = vadd.f32 %v6054, %v6222
    %v6224 = vpop.f32.mrf.mxu0
    %v6225 = vadd.f32 %v6056, %v6224
    %6226 = vmatmul.bf16.gmra.mxu0 %v4406
    %v6227 = vpop.f32.mrf.mxu0
    %v6228 = vadd.f32 %v6059, %v6227
    %v6229 = vpop.f32.mrf.mxu0
    %v6230 = vadd.f32 %v6061, %v6229
    %6231 = vmatmul.bf16.gmra.mxu0 %v4422
    %v6232 = vpop.f32.mrf.mxu0
    %v6233 = vadd.f32 %v6064, %v6232
    %v6234 = vpop.f32.mrf.mxu0
    %v6235 = vadd.f32 %v6066, %v6234
    %6236 = vmatmul.bf16.gmra.mxu0 %v4438
    %v6237 = vpop.f32.mrf.mxu0
    %v6238 = vadd.f32 %v6069, %v6237
    %v6239 = vpop.f32.mrf.mxu0
    %v6240 = vadd.f32 %v6071, %v6239
    %6241 = vmatmul.bf16.gmra.mxu0 %v4454
    %v6242 = vpop.f32.mrf.mxu0
    %v6243 = vadd.f32 %v6074, %v6242
    %v6244 = vpop.f32.mrf.mxu0
    %v6245 = vadd.f32 %v6076, %v6244
    %6246 = vmatmul.bf16.gmra.mxu0 %v4470
    %v6247 = vpop.f32.mrf.mxu0
    %v6248 = vadd.f32 %v6079, %v6247
    %v6249 = vpop.f32.mrf.mxu0
    %v6250 = vadd.f32 %v6081, %v6249
    %6251 = vmatmul.bf16.gmra.mxu0 %v4486
    %v6252 = vpop.f32.mrf.mxu0
    %v6253 = vadd.f32 %v6084, %v6252
    %v6254 = vpop.f32.mrf.mxu0
    %v6255 = vadd.f32 %v6086, %v6254
    %6256 = vmatmul.bf16.gmra.mxu0 %v4502
    %v6257 = vpop.f32.mrf.mxu0
    %v6258 = vadd.f32 %v6089, %v6257
    %v6259 = vpop.f32.mrf.mxu0
    %v6260 = vadd.f32 %v6091, %v6259
    %6261 = vmatmul.bf16.gmra.mxu0 %v4518
    %v6262 = vpop.f32.mrf.mxu0
    %v6263 = vadd.f32 %v6094, %v6262
    %v6264 = vpop.f32.mrf.mxu0
    %v6265 = vadd.f32 %v6096, %v6264
    %6266 = vmatmul.bf16.gmra.mxu0 %v4534
    %v6267 = vpop.f32.mrf.mxu0
    %v6268 = vadd.f32 %v6099, %v6267
    %v6269 = vpop.f32.mrf.mxu0
    %v6270 = vadd.f32 %v6101, %v6269
    %6271 = vmatmul.bf16.gmra.mxu0 %v4550
    %v6272 = vpop.f32.mrf.mxu0
    %v6273 = vadd.f32 %v6104, %v6272
    %v6274 = vpop.f32.mrf.mxu0
    %v6275 = vadd.f32 %v6106, %v6274
    %6276 = vmatmul.bf16.gmra.mxu0 %v4566
    %v6277 = vpop.f32.mrf.mxu0
    %v6278 = vadd.f32 %v6109, %v6277
    %v6279 = vpop.f32.mrf.mxu0
    %v6280 = vadd.f32 %v6111, %v6279
    %6281 = vmatmul.bf16.gmra.mxu0 %v4582
    %v6282 = vpop.f32.mrf.mxu0
    %v6283 = vadd.f32 %v6114, %v6282
    %v6284 = vpop.f32.mrf.mxu0
    %v6285 = vadd.f32 %v6116, %v6284
    %6286 = vdwg.mxu0
    %6287 = vmatpush.bf16.msra.mxu0 %v2479
    %6288 = vmatpush.bf16.msra.mxu0 %v2478
    %6289 = vmatpush.bf16.msra.mxu0 %v2477
    %6290 = vmatpush.bf16.msra.mxu0 %v2476
    %6291 = vmatpush.bf16.msra.mxu0 %v2475
    %6292 = vmatpush.bf16.msra.mxu0 %v2474
    %6293 = vmatpush.bf16.msra.mxu0 %v2473
    %6294 = vmatpush.bf16.msra.mxu0 %v2472
    %6295 = vmatmul.bf16.gmra.mxu0 %v4087
    %v6296 = vpop.f32.mrf.mxu0
    %v6297 = vadd.f32 %v6128, %v6296
    %v6298 = vpop.f32.mrf.mxu0
    %v6299 = vadd.f32 %v6130, %v6298
    %6300 = vmatmul.bf16.gmra.mxu0 %v4103
    %v6301 = vpop.f32.mrf.mxu0
    %v6302 = vadd.f32 %v6133, %v6301
    %v6303 = vpop.f32.mrf.mxu0
    %v6304 = vadd.f32 %v6135, %v6303
    %6305 = vmatmul.bf16.gmra.mxu0 %v4119
    %v6306 = vpop.f32.mrf.mxu0
    %v6307 = vadd.f32 %v6138, %v6306
    %v6308 = vpop.f32.mrf.mxu0
    %v6309 = vadd.f32 %v6140, %v6308
    %6310 = vmatmul.bf16.gmra.mxu0 %v4135
    %v6311 = vpop.f32.mrf.mxu0
    %v6312 = vadd.f32 %v6143, %v6311
    %v6313 = vpop.f32.mrf.mxu0
    %v6314 = vadd.f32 %v6145, %v6313
    %6315 = vmatmul.bf16.gmra.mxu0 %v4151
    %v6316 = vpop.f32.mrf.mxu0
    %v6317 = vadd.f32 %v6148, %v6316
    %v6318 = vpop.f32.mrf.mxu0
    %v6319 = vadd.f32 %v6150, %v6318
    %6320 = vmatmul.bf16.gmra.mxu0 %v4167
    %v6321 = vpop.f32.mrf.mxu0
    %v6322 = vadd.f32 %v6153, %v6321
    %v6323 = vpop.f32.mrf.mxu0
    %v6324 = vadd.f32 %v6155, %v6323
    %6325 = vmatmul.bf16.gmra.mxu0 %v4183
    %v6326 = vpop.f32.mrf.mxu0
    %v6327 = vadd.f32 %v6158, %v6326
    %v6328 = vpop.f32.mrf.mxu0
    %v6329 = vadd.f32 %v6160, %v6328
    %6330 = vmatmul.bf16.gmra.mxu0 %v4199
    %v6331 = vpop.f32.mrf.mxu0
    %v6332 = vadd.f32 %v6163, %v6331
    %v6333 = vpop.f32.mrf.mxu0
    %v6334 = vadd.f32 %v6165, %v6333
    %6335 = vmatmul.bf16.gmra.mxu0 %v4215
    %v6336 = vpop.f32.mrf.mxu0
    %v6337 = vadd.f32 %v6168, %v6336
    %v6338 = vpop.f32.mrf.mxu0
    %v6339 = vadd.f32 %v6170, %v6338
    %6340 = vmatmul.bf16.gmra.mxu0 %v4231
    %v6341 = vpop.f32.mrf.mxu0
    %v6342 = vadd.f32 %v6173, %v6341
    %v6343 = vpop.f32.mrf.mxu0
    %v6344 = vadd.f32 %v6175, %v6343
    %6345 = vmatmul.bf16.gmra.mxu0 %v4247
    %v6346 = vpop.f32.mrf.mxu0
    %v6347 = vadd.f32 %v6178, %v6346
    %v6348 = vpop.f32.mrf.mxu0
    %v6349 = vadd.f32 %v6180, %v6348
    %6350 = vmatmul.bf16.gmra.mxu0 %v4263
    %v6351 = vpop.f32.mrf.mxu0
    %v6352 = vadd.f32 %v6183, %v6351
    %v6353 = vpop.f32.mrf.mxu0
    %v6354 = vadd.f32 %v6185, %v6353
    %6355 = vmatmul.bf16.gmra.mxu0 %v4279
    %v6356 = vpop.f32.mrf.mxu0
    %v6357 = vadd.f32 %v6188, %v6356
    %v6358 = vpop.f32.mrf.mxu0
    %v6359 = vadd.f32 %v6190, %v6358
    %6360 = vmatmul.bf16.gmra.mxu0 %v4295
    %v6361 = vpop.f32.mrf.mxu0
    %v6362 = vadd.f32 %v6193, %v6361
    %v6363 = vpop.f32.mrf.mxu0
    %v6364 = vadd.f32 %v6195, %v6363
    %6365 = vmatmul.bf16.gmra.mxu0 %v4311
    %v6366 = vpop.f32.mrf.mxu0
    %v6367 = vadd.f32 %v6198, %v6366
    %v6368 = vpop.f32.mrf.mxu0
    %v6369 = vadd.f32 %v6200, %v6368
    %6370 = vmatmul.bf16.gmra.mxu0 %v4327
    %v6371 = vpop.f32.mrf.mxu0
    %v6372 = vadd.f32 %v6203, %v6371
    %v6373 = vpop.f32.mrf.mxu0
    %v6374 = vadd.f32 %v6205, %v6373
    %6375 = vmatmul.bf16.gmra.mxu0 %v4343
    %v6376 = vpop.f32.mrf.mxu0
    %v6377 = vadd.f32 %v6208, %v6376
    %v6378 = vpop.f32.mrf.mxu0
    %v6379 = vadd.f32 %v6210, %v6378
    %6380 = vmatmul.bf16.gmra.mxu0 %v4359
    %v6381 = vpop.f32.mrf.mxu0
    %v6382 = vadd.f32 %v6213, %v6381
    %v6383 = vpop.f32.mrf.mxu0
    %v6384 = vadd.f32 %v6215, %v6383
    %6385 = vmatmul.bf16.gmra.mxu0 %v4375
    %v6386 = vpop.f32.mrf.mxu0
    %v6387 = vadd.f32 %v6218, %v6386
    %v6388 = vpop.f32.mrf.mxu0
    %v6389 = vadd.f32 %v6220, %v6388
    %6390 = vmatmul.bf16.gmra.mxu0 %v4391
    %v6391 = vpop.f32.mrf.mxu0
    %v6392 = vadd.f32 %v6223, %v6391
    %v6393 = vpop.f32.mrf.mxu0
    %v6394 = vadd.f32 %v6225, %v6393
    %6395 = vmatmul.bf16.gmra.mxu0 %v4407
    %v6396 = vpop.f32.mrf.mxu0
    %v6397 = vadd.f32 %v6228, %v6396
    %v6398 = vpop.f32.mrf.mxu0
    %v6399 = vadd.f32 %v6230, %v6398
    %6400 = vmatmul.bf16.gmra.mxu0 %v4423
    %v6401 = vpop.f32.mrf.mxu0
    %v6402 = vadd.f32 %v6233, %v6401
    %v6403 = vpop.f32.mrf.mxu0
    %v6404 = vadd.f32 %v6235, %v6403
    %6405 = vmatmul.bf16.gmra.mxu0 %v4439
    %v6406 = vpop.f32.mrf.mxu0
    %v6407 = vadd.f32 %v6238, %v6406
    %v6408 = vpop.f32.mrf.mxu0
    %v6409 = vadd.f32 %v6240, %v6408
    %6410 = vmatmul.bf16.gmra.mxu0 %v4455
    %v6411 = vpop.f32.mrf.mxu0
    %v6412 = vadd.f32 %v6243, %v6411
    %v6413 = vpop.f32.mrf.mxu0
    %v6414 = vadd.f32 %v6245, %v6413
    %6415 = vmatmul.bf16.gmra.mxu0 %v4471
    %v6416 = vpop.f32.mrf.mxu0
    %v6417 = vadd.f32 %v6248, %v6416
    %v6418 = vpop.f32.mrf.mxu0
    %v6419 = vadd.f32 %v6250, %v6418
    %6420 = vmatmul.bf16.gmra.mxu0 %v4487
    %v6421 = vpop.f32.mrf.mxu0
    %v6422 = vadd.f32 %v6253, %v6421
    %v6423 = vpop.f32.mrf.mxu0
    %v6424 = vadd.f32 %v6255, %v6423
    %6425 = vmatmul.bf16.gmra.mxu0 %v4503
    %v6426 = vpop.f32.mrf.mxu0
    %v6427 = vadd.f32 %v6258, %v6426
    %v6428 = vpop.f32.mrf.mxu0
    %v6429 = vadd.f32 %v6260, %v6428
    %6430 = vmatmul.bf16.gmra.mxu0 %v4519
    %v6431 = vpop.f32.mrf.mxu0
    %v6432 = vadd.f32 %v6263, %v6431
    %v6433 = vpop.f32.mrf.mxu0
    %v6434 = vadd.f32 %v6265, %v6433
    %6435 = vmatmul.bf16.gmra.mxu0 %v4535
    %v6436 = vpop.f32.mrf.mxu0
    %v6437 = vadd.f32 %v6268, %v6436
    %v6438 = vpop.f32.mrf.mxu0
    %v6439 = vadd.f32 %v6270, %v6438
    %6440 = vmatmul.bf16.gmra.mxu0 %v4551
    %v6441 = vpop.f32.mrf.mxu0
    %v6442 = vadd.f32 %v6273, %v6441
    %v6443 = vpop.f32.mrf.mxu0
    %v6444 = vadd.f32 %v6275, %v6443
    %6445 = vmatmul.bf16.gmra.mxu0 %v4567
    %v6446 = vpop.f32.mrf.mxu0
    %v6447 = vadd.f32 %v6278, %v6446
    %v6448 = vpop.f32.mrf.mxu0
    %v6449 = vadd.f32 %v6280, %v6448
    %6450 = vmatmul.bf16.gmra.mxu0 %v4583
    %v6451 = vpop.f32.mrf.mxu0
    %v6452 = vadd.f32 %v6283, %v6451
    %v6453 = vpop.f32.mrf.mxu0
    %v6454 = vadd.f32 %v6285, %v6453
    %6455 = vdwg.mxu0
    %6456 = vmatpush.bf16.msra.mxu0 %v2487
    %6457 = vmatpush.bf16.msra.mxu0 %v2486
    %6458 = vmatpush.bf16.msra.mxu0 %v2485
    %6459 = vmatpush.bf16.msra.mxu0 %v2484
    %6460 = vmatpush.bf16.msra.mxu0 %v2483
    %6461 = vmatpush.bf16.msra.mxu0 %v2482
    %6462 = vmatpush.bf16.msra.mxu0 %v2481
    %6463 = vmatpush.bf16.msra.mxu0 %v2480
    %6464 = vmatmul.bf16.gmra.mxu0 %v4088
    %v6465 = vpop.f32.mrf.mxu0
    %v6466 = vadd.f32 %v6297, %v6465
    %v6467 = vpop.f32.mrf.mxu0
    %v6468 = vadd.f32 %v6299, %v6467
    %6469 = vmatmul.bf16.gmra.mxu0 %v4104
    %v6470 = vpop.f32.mrf.mxu0
    %v6471 = vadd.f32 %v6302, %v6470
    %v6472 = vpop.f32.mrf.mxu0
    %v6473 = vadd.f32 %v6304, %v6472
    %6474 = vmatmul.bf16.gmra.mxu0 %v4120
    %v6475 = vpop.f32.mrf.mxu0
    %v6476 = vadd.f32 %v6307, %v6475
    %v6477 = vpop.f32.mrf.mxu0
    %v6478 = vadd.f32 %v6309, %v6477
    %6479 = vmatmul.bf16.gmra.mxu0 %v4136
    %v6480 = vpop.f32.mrf.mxu0
    %v6481 = vadd.f32 %v6312, %v6480
    %v6482 = vpop.f32.mrf.mxu0
    %v6483 = vadd.f32 %v6314, %v6482
    %6484 = vmatmul.bf16.gmra.mxu0 %v4152
    %v6485 = vpop.f32.mrf.mxu0
    %v6486 = vadd.f32 %v6317, %v6485
    %v6487 = vpop.f32.mrf.mxu0
    %v6488 = vadd.f32 %v6319, %v6487
    %6489 = vmatmul.bf16.gmra.mxu0 %v4168
    %v6490 = vpop.f32.mrf.mxu0
    %v6491 = vadd.f32 %v6322, %v6490
    %v6492 = vpop.f32.mrf.mxu0
    %v6493 = vadd.f32 %v6324, %v6492
    %6494 = vmatmul.bf16.gmra.mxu0 %v4184
    %v6495 = vpop.f32.mrf.mxu0
    %v6496 = vadd.f32 %v6327, %v6495
    %v6497 = vpop.f32.mrf.mxu0
    %v6498 = vadd.f32 %v6329, %v6497
    %6499 = vmatmul.bf16.gmra.mxu0 %v4200
    %v6500 = vpop.f32.mrf.mxu0
    %v6501 = vadd.f32 %v6332, %v6500
    %v6502 = vpop.f32.mrf.mxu0
    %v6503 = vadd.f32 %v6334, %v6502
    %6504 = vmatmul.bf16.gmra.mxu0 %v4216
    %v6505 = vpop.f32.mrf.mxu0
    %v6506 = vadd.f32 %v6337, %v6505
    %v6507 = vpop.f32.mrf.mxu0
    %v6508 = vadd.f32 %v6339, %v6507
    %6509 = vmatmul.bf16.gmra.mxu0 %v4232
    %v6510 = vpop.f32.mrf.mxu0
    %v6511 = vadd.f32 %v6342, %v6510
    %v6512 = vpop.f32.mrf.mxu0
    %v6513 = vadd.f32 %v6344, %v6512
    %6514 = vmatmul.bf16.gmra.mxu0 %v4248
    %v6515 = vpop.f32.mrf.mxu0
    %v6516 = vadd.f32 %v6347, %v6515
    %v6517 = vpop.f32.mrf.mxu0
    %v6518 = vadd.f32 %v6349, %v6517
    %6519 = vmatmul.bf16.gmra.mxu0 %v4264
    %v6520 = vpop.f32.mrf.mxu0
    %v6521 = vadd.f32 %v6352, %v6520
    %v6522 = vpop.f32.mrf.mxu0
    %v6523 = vadd.f32 %v6354, %v6522
    %6524 = vmatmul.bf16.gmra.mxu0 %v4280
    %v6525 = vpop.f32.mrf.mxu0
    %v6526 = vadd.f32 %v6357, %v6525
    %v6527 = vpop.f32.mrf.mxu0
    %v6528 = vadd.f32 %v6359, %v6527
    %6529 = vmatmul.bf16.gmra.mxu0 %v4296
    %v6530 = vpop.f32.mrf.mxu0
    %v6531 = vadd.f32 %v6362, %v6530
    %v6532 = vpop.f32.mrf.mxu0
    %v6533 = vadd.f32 %v6364, %v6532
    %6534 = vmatmul.bf16.gmra.mxu0 %v4312
    %v6535 = vpop.f32.mrf.mxu0
    %v6536 = vadd.f32 %v6367, %v6535
    %v6537 = vpop.f32.mrf.mxu0
    %v6538 = vadd.f32 %v6369, %v6537
    %6539 = vmatmul.bf16.gmra.mxu0 %v4328
    %v6540 = vpop.f32.mrf.mxu0
    %v6541 = vadd.f32 %v6372, %v6540
    %v6542 = vpop.f32.mrf.mxu0
    %v6543 = vadd.f32 %v6374, %v6542
    %6544 = vmatmul.bf16.gmra.mxu0 %v4344
    %v6545 = vpop.f32.mrf.mxu0
    %v6546 = vadd.f32 %v6377, %v6545
    %v6547 = vpop.f32.mrf.mxu0
    %v6548 = vadd.f32 %v6379, %v6547
    %6549 = vmatmul.bf16.gmra.mxu0 %v4360
    %v6550 = vpop.f32.mrf.mxu0
    %v6551 = vadd.f32 %v6382, %v6550
    %v6552 = vpop.f32.mrf.mxu0
    %v6553 = vadd.f32 %v6384, %v6552
    %6554 = vmatmul.bf16.gmra.mxu0 %v4376
    %v6555 = vpop.f32.mrf.mxu0
    %v6556 = vadd.f32 %v6387, %v6555
    %v6557 = vpop.f32.mrf.mxu0
    %v6558 = vadd.f32 %v6389, %v6557
    %6559 = vmatmul.bf16.gmra.mxu0 %v4392
    %v6560 = vpop.f32.mrf.mxu0
    %v6561 = vadd.f32 %v6392, %v6560
    %v6562 = vpop.f32.mrf.mxu0
    %v6563 = vadd.f32 %v6394, %v6562
    %6564 = vmatmul.bf16.gmra.mxu0 %v4408
    %v6565 = vpop.f32.mrf.mxu0
    %v6566 = vadd.f32 %v6397, %v6565
    %v6567 = vpop.f32.mrf.mxu0
    %v6568 = vadd.f32 %v6399, %v6567
    %6569 = vmatmul.bf16.gmra.mxu0 %v4424
    %v6570 = vpop.f32.mrf.mxu0
    %v6571 = vadd.f32 %v6402, %v6570
    %v6572 = vpop.f32.mrf.mxu0
    %v6573 = vadd.f32 %v6404, %v6572
    %6574 = vmatmul.bf16.gmra.mxu0 %v4440
    %v6575 = vpop.f32.mrf.mxu0
    %v6576 = vadd.f32 %v6407, %v6575
    %v6577 = vpop.f32.mrf.mxu0
    %v6578 = vadd.f32 %v6409, %v6577
    %6579 = vmatmul.bf16.gmra.mxu0 %v4456
    %v6580 = vpop.f32.mrf.mxu0
    %v6581 = vadd.f32 %v6412, %v6580
    %v6582 = vpop.f32.mrf.mxu0
    %v6583 = vadd.f32 %v6414, %v6582
    %6584 = vmatmul.bf16.gmra.mxu0 %v4472
    %v6585 = vpop.f32.mrf.mxu0
    %v6586 = vadd.f32 %v6417, %v6585
    %v6587 = vpop.f32.mrf.mxu0
    %v6588 = vadd.f32 %v6419, %v6587
    %6589 = vmatmul.bf16.gmra.mxu0 %v4488
    %v6590 = vpop.f32.mrf.mxu0
    %v6591 = vadd.f32 %v6422, %v6590
    %v6592 = vpop.f32.mrf.mxu0
    %v6593 = vadd.f32 %v6424, %v6592
    %6594 = vmatmul.bf16.gmra.mxu0 %v4504
    %v6595 = vpop.f32.mrf.mxu0
    %v6596 = vadd.f32 %v6427, %v6595
    %v6597 = vpop.f32.mrf.mxu0
    %v6598 = vadd.f32 %v6429, %v6597
    %6599 = vmatmul.bf16.gmra.mxu0 %v4520
    %v6600 = vpop.f32.mrf.mxu0
    %v6601 = vadd.f32 %v6432, %v6600
    %v6602 = vpop.f32.mrf.mxu0
    %v6603 = vadd.f32 %v6434, %v6602
    %6604 = vmatmul.bf16.gmra.mxu0 %v4536
    %v6605 = vpop.f32.mrf.mxu0
    %v6606 = vadd.f32 %v6437, %v6605
    %v6607 = vpop.f32.mrf.mxu0
    %v6608 = vadd.f32 %v6439, %v6607
    %6609 = vmatmul.bf16.gmra.mxu0 %v4552
    %v6610 = vpop.f32.mrf.mxu0
    %v6611 = vadd.f32 %v6442, %v6610
    %v6612 = vpop.f32.mrf.mxu0
    %v6613 = vadd.f32 %v6444, %v6612
    %6614 = vmatmul.bf16.gmra.mxu0 %v4568
    %v6615 = vpop.f32.mrf.mxu0
    %v6616 = vadd.f32 %v6447, %v6615
    %v6617 = vpop.f32.mrf.mxu0
    %v6618 = vadd.f32 %v6449, %v6617
    %6619 = vmatmul.bf16.gmra.mxu0 %v4584
    %v6620 = vpop.f32.mrf.mxu0
    %v6621 = vadd.f32 %v6452, %v6620
    %v6622 = vpop.f32.mrf.mxu0
    %v6623 = vadd.f32 %v6454, %v6622
    %6624 = vdwg.mxu0
    %6625 = vmatpush.bf16.msra.mxu0 %v2495
    %6626 = vmatpush.bf16.msra.mxu0 %v2494
    %6627 = vmatpush.bf16.msra.mxu0 %v2493
    %6628 = vmatpush.bf16.msra.mxu0 %v2492
    %6629 = vmatpush.bf16.msra.mxu0 %v2491
    %6630 = vmatpush.bf16.msra.mxu0 %v2490
    %6631 = vmatpush.bf16.msra.mxu0 %v2489
    %6632 = vmatpush.bf16.msra.mxu0 %v2488
    %6633 = vmatmul.bf16.gmra.mxu0 %v4089
    %v6634 = vpop.f32.mrf.mxu0
    %v6635 = vadd.f32 %v6466, %v6634
    %v6636 = vpop.f32.mrf.mxu0
    %v6637 = vadd.f32 %v6468, %v6636
    %6638 = vmatmul.bf16.gmra.mxu0 %v4105
    %v6639 = vpop.f32.mrf.mxu0
    %v6640 = vadd.f32 %v6471, %v6639
    %v6641 = vpop.f32.mrf.mxu0
    %v6642 = vadd.f32 %v6473, %v6641
    %6643 = vmatmul.bf16.gmra.mxu0 %v4121
    %v6644 = vpop.f32.mrf.mxu0
    %v6645 = vadd.f32 %v6476, %v6644
    %v6646 = vpop.f32.mrf.mxu0
    %v6647 = vadd.f32 %v6478, %v6646
    %6648 = vmatmul.bf16.gmra.mxu0 %v4137
    %v6649 = vpop.f32.mrf.mxu0
    %v6650 = vadd.f32 %v6481, %v6649
    %v6651 = vpop.f32.mrf.mxu0
    %v6652 = vadd.f32 %v6483, %v6651
    %6653 = vmatmul.bf16.gmra.mxu0 %v4153
    %v6654 = vpop.f32.mrf.mxu0
    %v6655 = vadd.f32 %v6486, %v6654
    %v6656 = vpop.f32.mrf.mxu0
    %v6657 = vadd.f32 %v6488, %v6656
    %6658 = vmatmul.bf16.gmra.mxu0 %v4169
    %v6659 = vpop.f32.mrf.mxu0
    %v6660 = vadd.f32 %v6491, %v6659
    %v6661 = vpop.f32.mrf.mxu0
    %v6662 = vadd.f32 %v6493, %v6661
    %6663 = vmatmul.bf16.gmra.mxu0 %v4185
    %v6664 = vpop.f32.mrf.mxu0
    %v6665 = vadd.f32 %v6496, %v6664
    %v6666 = vpop.f32.mrf.mxu0
    %v6667 = vadd.f32 %v6498, %v6666
    %6668 = vmatmul.bf16.gmra.mxu0 %v4201
    %v6669 = vpop.f32.mrf.mxu0
    %v6670 = vadd.f32 %v6501, %v6669
    %v6671 = vpop.f32.mrf.mxu0
    %v6672 = vadd.f32 %v6503, %v6671
    %6673 = vmatmul.bf16.gmra.mxu0 %v4217
    %v6674 = vpop.f32.mrf.mxu0
    %v6675 = vadd.f32 %v6506, %v6674
    %v6676 = vpop.f32.mrf.mxu0
    %v6677 = vadd.f32 %v6508, %v6676
    %6678 = vmatmul.bf16.gmra.mxu0 %v4233
    %v6679 = vpop.f32.mrf.mxu0
    %v6680 = vadd.f32 %v6511, %v6679
    %v6681 = vpop.f32.mrf.mxu0
    %v6682 = vadd.f32 %v6513, %v6681
    %6683 = vmatmul.bf16.gmra.mxu0 %v4249
    %v6684 = vpop.f32.mrf.mxu0
    %v6685 = vadd.f32 %v6516, %v6684
    %v6686 = vpop.f32.mrf.mxu0
    %v6687 = vadd.f32 %v6518, %v6686
    %6688 = vmatmul.bf16.gmra.mxu0 %v4265
    %v6689 = vpop.f32.mrf.mxu0
    %v6690 = vadd.f32 %v6521, %v6689
    %v6691 = vpop.f32.mrf.mxu0
    %v6692 = vadd.f32 %v6523, %v6691
    %6693 = vmatmul.bf16.gmra.mxu0 %v4281
    %v6694 = vpop.f32.mrf.mxu0
    %v6695 = vadd.f32 %v6526, %v6694
    %v6696 = vpop.f32.mrf.mxu0
    %v6697 = vadd.f32 %v6528, %v6696
    %6698 = vmatmul.bf16.gmra.mxu0 %v4297
    %v6699 = vpop.f32.mrf.mxu0
    %v6700 = vadd.f32 %v6531, %v6699
    %v6701 = vpop.f32.mrf.mxu0
    %v6702 = vadd.f32 %v6533, %v6701
    %6703 = vmatmul.bf16.gmra.mxu0 %v4313
    %v6704 = vpop.f32.mrf.mxu0
    %v6705 = vadd.f32 %v6536, %v6704
    %v6706 = vpop.f32.mrf.mxu0
    %v6707 = vadd.f32 %v6538, %v6706
    %6708 = vmatmul.bf16.gmra.mxu0 %v4329
    %v6709 = vpop.f32.mrf.mxu0
    %v6710 = vadd.f32 %v6541, %v6709
    %v6711 = vpop.f32.mrf.mxu0
    %v6712 = vadd.f32 %v6543, %v6711
    %6713 = vmatmul.bf16.gmra.mxu0 %v4345
    %v6714 = vpop.f32.mrf.mxu0
    %v6715 = vadd.f32 %v6546, %v6714
    %v6716 = vpop.f32.mrf.mxu0
    %v6717 = vadd.f32 %v6548, %v6716
    %6718 = vmatmul.bf16.gmra.mxu0 %v4361
    %v6719 = vpop.f32.mrf.mxu0
    %v6720 = vadd.f32 %v6551, %v6719
    %v6721 = vpop.f32.mrf.mxu0
    %v6722 = vadd.f32 %v6553, %v6721
    %6723 = vmatmul.bf16.gmra.mxu0 %v4377
    %v6724 = vpop.f32.mrf.mxu0
    %v6725 = vadd.f32 %v6556, %v6724
    %v6726 = vpop.f32.mrf.mxu0
    %v6727 = vadd.f32 %v6558, %v6726
    %6728 = vmatmul.bf16.gmra.mxu0 %v4393
    %v6729 = vpop.f32.mrf.mxu0
    %v6730 = vadd.f32 %v6561, %v6729
    %v6731 = vpop.f32.mrf.mxu0
    %v6732 = vadd.f32 %v6563, %v6731
    %6733 = vmatmul.bf16.gmra.mxu0 %v4409
    %v6734 = vpop.f32.mrf.mxu0
    %v6735 = vadd.f32 %v6566, %v6734
    %v6736 = vpop.f32.mrf.mxu0
    %v6737 = vadd.f32 %v6568, %v6736
    %6738 = vmatmul.bf16.gmra.mxu0 %v4425
    %v6739 = vpop.f32.mrf.mxu0
    %v6740 = vadd.f32 %v6571, %v6739
    %v6741 = vpop.f32.mrf.mxu0
    %v6742 = vadd.f32 %v6573, %v6741
    %6743 = vmatmul.bf16.gmra.mxu0 %v4441
    %v6744 = vpop.f32.mrf.mxu0
    %v6745 = vadd.f32 %v6576, %v6744
    %v6746 = vpop.f32.mrf.mxu0
    %v6747 = vadd.f32 %v6578, %v6746
    %6748 = vmatmul.bf16.gmra.mxu0 %v4457
    %v6749 = vpop.f32.mrf.mxu0
    %v6750 = vadd.f32 %v6581, %v6749
    %v6751 = vpop.f32.mrf.mxu0
    %v6752 = vadd.f32 %v6583, %v6751
    %6753 = vmatmul.bf16.gmra.mxu0 %v4473
    %v6754 = vpop.f32.mrf.mxu0
    %v6755 = vadd.f32 %v6586, %v6754
    %v6756 = vpop.f32.mrf.mxu0
    %v6757 = vadd.f32 %v6588, %v6756
    %6758 = vmatmul.bf16.gmra.mxu0 %v4489
    %v6759 = vpop.f32.mrf.mxu0
    %v6760 = vadd.f32 %v6591, %v6759
    %v6761 = vpop.f32.mrf.mxu0
    %v6762 = vadd.f32 %v6593, %v6761
    %6763 = vmatmul.bf16.gmra.mxu0 %v4505
    %v6764 = vpop.f32.mrf.mxu0
    %v6765 = vadd.f32 %v6596, %v6764
    %v6766 = vpop.f32.mrf.mxu0
    %v6767 = vadd.f32 %v6598, %v6766
    %6768 = vmatmul.bf16.gmra.mxu0 %v4521
    %v6769 = vpop.f32.mrf.mxu0
    %v6770 = vadd.f32 %v6601, %v6769
    %v6771 = vpop.f32.mrf.mxu0
    %v6772 = vadd.f32 %v6603, %v6771
    %6773 = vmatmul.bf16.gmra.mxu0 %v4537
    %v6774 = vpop.f32.mrf.mxu0
    %v6775 = vadd.f32 %v6606, %v6774
    %v6776 = vpop.f32.mrf.mxu0
    %v6777 = vadd.f32 %v6608, %v6776
    %6778 = vmatmul.bf16.gmra.mxu0 %v4553
    %v6779 = vpop.f32.mrf.mxu0
    %v6780 = vadd.f32 %v6611, %v6779
    %v6781 = vpop.f32.mrf.mxu0
    %v6782 = vadd.f32 %v6613, %v6781
    %6783 = vmatmul.bf16.gmra.mxu0 %v4569
    %v6784 = vpop.f32.mrf.mxu0
    %v6785 = vadd.f32 %v6616, %v6784
    %v6786 = vpop.f32.mrf.mxu0
    %v6787 = vadd.f32 %v6618, %v6786
    %6788 = vmatmul.bf16.gmra.mxu0 %v4585
    %v6789 = vpop.f32.mrf.mxu0
    %v6790 = vadd.f32 %v6621, %v6789
    %v6791 = vpop.f32.mrf.mxu0
    %v6792 = vadd.f32 %v6623, %v6791
    %6793 = vdwg.mxu0
    %6794 = vmatpush.bf16.msra.mxu0 %v2503
    %6795 = vmatpush.bf16.msra.mxu0 %v2502
    %6796 = vmatpush.bf16.msra.mxu0 %v2501
    %6797 = vmatpush.bf16.msra.mxu0 %v2500
    %6798 = vmatpush.bf16.msra.mxu0 %v2499
    %6799 = vmatpush.bf16.msra.mxu0 %v2498
    %6800 = vmatpush.bf16.msra.mxu0 %v2497
    %6801 = vmatpush.bf16.msra.mxu0 %v2496
    %6802 = vmatmul.bf16.gmra.mxu0 %v4090
    %v6803 = vpop.f32.mrf.mxu0
    %v6804 = vadd.f32 %v6635, %v6803
    %v6805 = vpop.f32.mrf.mxu0
    %v6806 = vadd.f32 %v6637, %v6805
    %6807 = vmatmul.bf16.gmra.mxu0 %v4106
    %v6808 = vpop.f32.mrf.mxu0
    %v6809 = vadd.f32 %v6640, %v6808
    %v6810 = vpop.f32.mrf.mxu0
    %v6811 = vadd.f32 %v6642, %v6810
    %6812 = vmatmul.bf16.gmra.mxu0 %v4122
    %v6813 = vpop.f32.mrf.mxu0
    %v6814 = vadd.f32 %v6645, %v6813
    %v6815 = vpop.f32.mrf.mxu0
    %v6816 = vadd.f32 %v6647, %v6815
    %6817 = vmatmul.bf16.gmra.mxu0 %v4138
    %v6818 = vpop.f32.mrf.mxu0
    %v6819 = vadd.f32 %v6650, %v6818
    %v6820 = vpop.f32.mrf.mxu0
    %v6821 = vadd.f32 %v6652, %v6820
    %6822 = vmatmul.bf16.gmra.mxu0 %v4154
    %v6823 = vpop.f32.mrf.mxu0
    %v6824 = vadd.f32 %v6655, %v6823
    %v6825 = vpop.f32.mrf.mxu0
    %v6826 = vadd.f32 %v6657, %v6825
    %6827 = vmatmul.bf16.gmra.mxu0 %v4170
    %v6828 = vpop.f32.mrf.mxu0
    %v6829 = vadd.f32 %v6660, %v6828
    %v6830 = vpop.f32.mrf.mxu0
    %v6831 = vadd.f32 %v6662, %v6830
    %6832 = vmatmul.bf16.gmra.mxu0 %v4186
    %v6833 = vpop.f32.mrf.mxu0
    %v6834 = vadd.f32 %v6665, %v6833
    %v6835 = vpop.f32.mrf.mxu0
    %v6836 = vadd.f32 %v6667, %v6835
    %6837 = vmatmul.bf16.gmra.mxu0 %v4202
    %v6838 = vpop.f32.mrf.mxu0
    %v6839 = vadd.f32 %v6670, %v6838
    %v6840 = vpop.f32.mrf.mxu0
    %v6841 = vadd.f32 %v6672, %v6840
    %6842 = vmatmul.bf16.gmra.mxu0 %v4218
    %v6843 = vpop.f32.mrf.mxu0
    %v6844 = vadd.f32 %v6675, %v6843
    %v6845 = vpop.f32.mrf.mxu0
    %v6846 = vadd.f32 %v6677, %v6845
    %6847 = vmatmul.bf16.gmra.mxu0 %v4234
    %v6848 = vpop.f32.mrf.mxu0
    %v6849 = vadd.f32 %v6680, %v6848
    %v6850 = vpop.f32.mrf.mxu0
    %v6851 = vadd.f32 %v6682, %v6850
    %6852 = vmatmul.bf16.gmra.mxu0 %v4250
    %v6853 = vpop.f32.mrf.mxu0
    %v6854 = vadd.f32 %v6685, %v6853
    %v6855 = vpop.f32.mrf.mxu0
    %v6856 = vadd.f32 %v6687, %v6855
    %6857 = vmatmul.bf16.gmra.mxu0 %v4266
    %v6858 = vpop.f32.mrf.mxu0
    %v6859 = vadd.f32 %v6690, %v6858
    %v6860 = vpop.f32.mrf.mxu0
    %v6861 = vadd.f32 %v6692, %v6860
    %6862 = vmatmul.bf16.gmra.mxu0 %v4282
    %v6863 = vpop.f32.mrf.mxu0
    %v6864 = vadd.f32 %v6695, %v6863
    %v6865 = vpop.f32.mrf.mxu0
    %v6866 = vadd.f32 %v6697, %v6865
    %6867 = vmatmul.bf16.gmra.mxu0 %v4298
    %v6868 = vpop.f32.mrf.mxu0
    %v6869 = vadd.f32 %v6700, %v6868
    %v6870 = vpop.f32.mrf.mxu0
    %v6871 = vadd.f32 %v6702, %v6870
    %6872 = vmatmul.bf16.gmra.mxu0 %v4314
    %v6873 = vpop.f32.mrf.mxu0
    %v6874 = vadd.f32 %v6705, %v6873
    %v6875 = vpop.f32.mrf.mxu0
    %v6876 = vadd.f32 %v6707, %v6875
    %6877 = vmatmul.bf16.gmra.mxu0 %v4330
    %v6878 = vpop.f32.mrf.mxu0
    %v6879 = vadd.f32 %v6710, %v6878
    %v6880 = vpop.f32.mrf.mxu0
    %v6881 = vadd.f32 %v6712, %v6880
    %6882 = vmatmul.bf16.gmra.mxu0 %v4346
    %v6883 = vpop.f32.mrf.mxu0
    %v6884 = vadd.f32 %v6715, %v6883
    %v6885 = vpop.f32.mrf.mxu0
    %v6886 = vadd.f32 %v6717, %v6885
    %6887 = vmatmul.bf16.gmra.mxu0 %v4362
    %v6888 = vpop.f32.mrf.mxu0
    %v6889 = vadd.f32 %v6720, %v6888
    %v6890 = vpop.f32.mrf.mxu0
    %v6891 = vadd.f32 %v6722, %v6890
    %6892 = vmatmul.bf16.gmra.mxu0 %v4378
    %v6893 = vpop.f32.mrf.mxu0
    %v6894 = vadd.f32 %v6725, %v6893
    %v6895 = vpop.f32.mrf.mxu0
    %v6896 = vadd.f32 %v6727, %v6895
    %6897 = vmatmul.bf16.gmra.mxu0 %v4394
    %v6898 = vpop.f32.mrf.mxu0
    %v6899 = vadd.f32 %v6730, %v6898
    %v6900 = vpop.f32.mrf.mxu0
    %v6901 = vadd.f32 %v6732, %v6900
    %6902 = vmatmul.bf16.gmra.mxu0 %v4410
    %v6903 = vpop.f32.mrf.mxu0
    %v6904 = vadd.f32 %v6735, %v6903
    %v6905 = vpop.f32.mrf.mxu0
    %v6906 = vadd.f32 %v6737, %v6905
    %6907 = vmatmul.bf16.gmra.mxu0 %v4426
    %v6908 = vpop.f32.mrf.mxu0
    %v6909 = vadd.f32 %v6740, %v6908
    %v6910 = vpop.f32.mrf.mxu0
    %v6911 = vadd.f32 %v6742, %v6910
    %6912 = vmatmul.bf16.gmra.mxu0 %v4442
    %v6913 = vpop.f32.mrf.mxu0
    %v6914 = vadd.f32 %v6745, %v6913
    %v6915 = vpop.f32.mrf.mxu0
    %v6916 = vadd.f32 %v6747, %v6915
    %6917 = vmatmul.bf16.gmra.mxu0 %v4458
    %v6918 = vpop.f32.mrf.mxu0
    %v6919 = vadd.f32 %v6750, %v6918
    %v6920 = vpop.f32.mrf.mxu0
    %v6921 = vadd.f32 %v6752, %v6920
    %6922 = vmatmul.bf16.gmra.mxu0 %v4474
    %v6923 = vpop.f32.mrf.mxu0
    %v6924 = vadd.f32 %v6755, %v6923
    %v6925 = vpop.f32.mrf.mxu0
    %v6926 = vadd.f32 %v6757, %v6925
    %6927 = vmatmul.bf16.gmra.mxu0 %v4490
    %v6928 = vpop.f32.mrf.mxu0
    %v6929 = vadd.f32 %v6760, %v6928
    %v6930 = vpop.f32.mrf.mxu0
    %v6931 = vadd.f32 %v6762, %v6930
    %6932 = vmatmul.bf16.gmra.mxu0 %v4506
    %v6933 = vpop.f32.mrf.mxu0
    %v6934 = vadd.f32 %v6765, %v6933
    %v6935 = vpop.f32.mrf.mxu0
    %v6936 = vadd.f32 %v6767, %v6935
    %6937 = vmatmul.bf16.gmra.mxu0 %v4522
    %v6938 = vpop.f32.mrf.mxu0
    %v6939 = vadd.f32 %v6770, %v6938
    %v6940 = vpop.f32.mrf.mxu0
    %v6941 = vadd.f32 %v6772, %v6940
    %6942 = vmatmul.bf16.gmra.mxu0 %v4538
    %v6943 = vpop.f32.mrf.mxu0
    %v6944 = vadd.f32 %v6775, %v6943
    %v6945 = vpop.f32.mrf.mxu0
    %v6946 = vadd.f32 %v6777, %v6945
    %6947 = vmatmul.bf16.gmra.mxu0 %v4554
    %v6948 = vpop.f32.mrf.mxu0
    %v6949 = vadd.f32 %v6780, %v6948
    %v6950 = vpop.f32.mrf.mxu0
    %v6951 = vadd.f32 %v6782, %v6950
    %6952 = vmatmul.bf16.gmra.mxu0 %v4570
    %v6953 = vpop.f32.mrf.mxu0
    %v6954 = vadd.f32 %v6785, %v6953
    %v6955 = vpop.f32.mrf.mxu0
    %v6956 = vadd.f32 %v6787, %v6955
    %6957 = vmatmul.bf16.gmra.mxu0 %v4586
    %v6958 = vpop.f32.mrf.mxu0
    %v6959 = vadd.f32 %v6790, %v6958
    %v6960 = vpop.f32.mrf.mxu0
    %v6961 = vadd.f32 %v6792, %v6960
    %6962 = vdwg.mxu0
    %6963 = vmatpush.bf16.msra.mxu0 %v2511
    %6964 = vmatpush.bf16.msra.mxu0 %v2510
    %6965 = vmatpush.bf16.msra.mxu0 %v2509
    %6966 = vmatpush.bf16.msra.mxu0 %v2508
    %6967 = vmatpush.bf16.msra.mxu0 %v2507
    %6968 = vmatpush.bf16.msra.mxu0 %v2506
    %6969 = vmatpush.bf16.msra.mxu0 %v2505
    %6970 = vmatpush.bf16.msra.mxu0 %v2504
    %6971 = vmatmul.bf16.gmra.mxu0 %v4091
    %v6972 = vpop.f32.mrf.mxu0
    %v6973 = vadd.f32 %v6804, %v6972
    %v6974 = vpop.f32.mrf.mxu0
    %v6975 = vadd.f32 %v6806, %v6974
    %6976 = vmatmul.bf16.gmra.mxu0 %v4107
    %v6977 = vpop.f32.mrf.mxu0
    %v6978 = vadd.f32 %v6809, %v6977
    %v6979 = vpop.f32.mrf.mxu0
    %v6980 = vadd.f32 %v6811, %v6979
    %6981 = vmatmul.bf16.gmra.mxu0 %v4123
    %v6982 = vpop.f32.mrf.mxu0
    %v6983 = vadd.f32 %v6814, %v6982
    %v6984 = vpop.f32.mrf.mxu0
    %v6985 = vadd.f32 %v6816, %v6984
    %6986 = vmatmul.bf16.gmra.mxu0 %v4139
    %v6987 = vpop.f32.mrf.mxu0
    %v6988 = vadd.f32 %v6819, %v6987
    %v6989 = vpop.f32.mrf.mxu0
    %v6990 = vadd.f32 %v6821, %v6989
    %6991 = vmatmul.bf16.gmra.mxu0 %v4155
    %v6992 = vpop.f32.mrf.mxu0
    %v6993 = vadd.f32 %v6824, %v6992
    %v6994 = vpop.f32.mrf.mxu0
    %v6995 = vadd.f32 %v6826, %v6994
    %6996 = vmatmul.bf16.gmra.mxu0 %v4171
    %v6997 = vpop.f32.mrf.mxu0
    %v6998 = vadd.f32 %v6829, %v6997
    %v6999 = vpop.f32.mrf.mxu0
    %v7000 = vadd.f32 %v6831, %v6999
    %7001 = vmatmul.bf16.gmra.mxu0 %v4187
    %v7002 = vpop.f32.mrf.mxu0
    %v7003 = vadd.f32 %v6834, %v7002
    %v7004 = vpop.f32.mrf.mxu0
    %v7005 = vadd.f32 %v6836, %v7004
    %7006 = vmatmul.bf16.gmra.mxu0 %v4203
    %v7007 = vpop.f32.mrf.mxu0
    %v7008 = vadd.f32 %v6839, %v7007
    %v7009 = vpop.f32.mrf.mxu0
    %v7010 = vadd.f32 %v6841, %v7009
    %7011 = vmatmul.bf16.gmra.mxu0 %v4219
    %v7012 = vpop.f32.mrf.mxu0
    %v7013 = vadd.f32 %v6844, %v7012
    %v7014 = vpop.f32.mrf.mxu0
    %v7015 = vadd.f32 %v6846, %v7014
    %7016 = vmatmul.bf16.gmra.mxu0 %v4235
    %v7017 = vpop.f32.mrf.mxu0
    %v7018 = vadd.f32 %v6849, %v7017
    %v7019 = vpop.f32.mrf.mxu0
    %v7020 = vadd.f32 %v6851, %v7019
    %7021 = vmatmul.bf16.gmra.mxu0 %v4251
    %v7022 = vpop.f32.mrf.mxu0
    %v7023 = vadd.f32 %v6854, %v7022
    %v7024 = vpop.f32.mrf.mxu0
    %v7025 = vadd.f32 %v6856, %v7024
    %7026 = vmatmul.bf16.gmra.mxu0 %v4267
    %v7027 = vpop.f32.mrf.mxu0
    %v7028 = vadd.f32 %v6859, %v7027
    %v7029 = vpop.f32.mrf.mxu0
    %v7030 = vadd.f32 %v6861, %v7029
    %7031 = vmatmul.bf16.gmra.mxu0 %v4283
    %v7032 = vpop.f32.mrf.mxu0
    %v7033 = vadd.f32 %v6864, %v7032
    %v7034 = vpop.f32.mrf.mxu0
    %v7035 = vadd.f32 %v6866, %v7034
    %7036 = vmatmul.bf16.gmra.mxu0 %v4299
    %v7037 = vpop.f32.mrf.mxu0
    %v7038 = vadd.f32 %v6869, %v7037
    %v7039 = vpop.f32.mrf.mxu0
    %v7040 = vadd.f32 %v6871, %v7039
    %7041 = vmatmul.bf16.gmra.mxu0 %v4315
    %v7042 = vpop.f32.mrf.mxu0
    %v7043 = vadd.f32 %v6874, %v7042
    %v7044 = vpop.f32.mrf.mxu0
    %v7045 = vadd.f32 %v6876, %v7044
    %7046 = vmatmul.bf16.gmra.mxu0 %v4331
    %v7047 = vpop.f32.mrf.mxu0
    %v7048 = vadd.f32 %v6879, %v7047
    %v7049 = vpop.f32.mrf.mxu0
    %v7050 = vadd.f32 %v6881, %v7049
    %7051 = vmatmul.bf16.gmra.mxu0 %v4347
    %v7052 = vpop.f32.mrf.mxu0
    %v7053 = vadd.f32 %v6884, %v7052
    %v7054 = vpop.f32.mrf.mxu0
    %v7055 = vadd.f32 %v6886, %v7054
    %7056 = vmatmul.bf16.gmra.mxu0 %v4363
    %v7057 = vpop.f32.mrf.mxu0
    %v7058 = vadd.f32 %v6889, %v7057
    %v7059 = vpop.f32.mrf.mxu0
    %v7060 = vadd.f32 %v6891, %v7059
    %7061 = vmatmul.bf16.gmra.mxu0 %v4379
    %v7062 = vpop.f32.mrf.mxu0
    %v7063 = vadd.f32 %v6894, %v7062
    %v7064 = vpop.f32.mrf.mxu0
    %v7065 = vadd.f32 %v6896, %v7064
    %7066 = vmatmul.bf16.gmra.mxu0 %v4395
    %v7067 = vpop.f32.mrf.mxu0
    %v7068 = vadd.f32 %v6899, %v7067
    %v7069 = vpop.f32.mrf.mxu0
    %v7070 = vadd.f32 %v6901, %v7069
    %7071 = vmatmul.bf16.gmra.mxu0 %v4411
    %v7072 = vpop.f32.mrf.mxu0
    %v7073 = vadd.f32 %v6904, %v7072
    %v7074 = vpop.f32.mrf.mxu0
    %v7075 = vadd.f32 %v6906, %v7074
    %7076 = vmatmul.bf16.gmra.mxu0 %v4427
    %v7077 = vpop.f32.mrf.mxu0
    %v7078 = vadd.f32 %v6909, %v7077
    %v7079 = vpop.f32.mrf.mxu0
    %v7080 = vadd.f32 %v6911, %v7079
    %7081 = vmatmul.bf16.gmra.mxu0 %v4443
    %v7082 = vpop.f32.mrf.mxu0
    %v7083 = vadd.f32 %v6914, %v7082
    %v7084 = vpop.f32.mrf.mxu0
    %v7085 = vadd.f32 %v6916, %v7084
    %7086 = vmatmul.bf16.gmra.mxu0 %v4459
    %v7087 = vpop.f32.mrf.mxu0
    %v7088 = vadd.f32 %v6919, %v7087
    %v7089 = vpop.f32.mrf.mxu0
    %v7090 = vadd.f32 %v6921, %v7089
    %7091 = vmatmul.bf16.gmra.mxu0 %v4475
    %v7092 = vpop.f32.mrf.mxu0
    %v7093 = vadd.f32 %v6924, %v7092
    %v7094 = vpop.f32.mrf.mxu0
    %v7095 = vadd.f32 %v6926, %v7094
    %7096 = vmatmul.bf16.gmra.mxu0 %v4491
    %v7097 = vpop.f32.mrf.mxu0
    %v7098 = vadd.f32 %v6929, %v7097
    %v7099 = vpop.f32.mrf.mxu0
    %v7100 = vadd.f32 %v6931, %v7099
    %7101 = vmatmul.bf16.gmra.mxu0 %v4507
    %v7102 = vpop.f32.mrf.mxu0
    %v7103 = vadd.f32 %v6934, %v7102
    %v7104 = vpop.f32.mrf.mxu0
    %v7105 = vadd.f32 %v6936, %v7104
    %7106 = vmatmul.bf16.gmra.mxu0 %v4523
    %v7107 = vpop.f32.mrf.mxu0
    %v7108 = vadd.f32 %v6939, %v7107
    %v7109 = vpop.f32.mrf.mxu0
    %v7110 = vadd.f32 %v6941, %v7109
    %7111 = vmatmul.bf16.gmra.mxu0 %v4539
    %v7112 = vpop.f32.mrf.mxu0
    %v7113 = vadd.f32 %v6944, %v7112
    %v7114 = vpop.f32.mrf.mxu0
    %v7115 = vadd.f32 %v6946, %v7114
    %7116 = vmatmul.bf16.gmra.mxu0 %v4555
    %v7117 = vpop.f32.mrf.mxu0
    %v7118 = vadd.f32 %v6949, %v7117
    %v7119 = vpop.f32.mrf.mxu0
    %v7120 = vadd.f32 %v6951, %v7119
    %7121 = vmatmul.bf16.gmra.mxu0 %v4571
    %v7122 = vpop.f32.mrf.mxu0
    %v7123 = vadd.f32 %v6954, %v7122
    %v7124 = vpop.f32.mrf.mxu0
    %v7125 = vadd.f32 %v6956, %v7124
    %7126 = vmatmul.bf16.gmra.mxu0 %v4587
    %v7127 = vpop.f32.mrf.mxu0
    %v7128 = vadd.f32 %v6959, %v7127
    %v7129 = vpop.f32.mrf.mxu0
    %v7130 = vadd.f32 %v6961, %v7129
    %7131 = vdwg.mxu0
    %7132 = vmatpush.bf16.msra.mxu0 %v2519
    %7133 = vmatpush.bf16.msra.mxu0 %v2518
    %7134 = vmatpush.bf16.msra.mxu0 %v2517
    %7135 = vmatpush.bf16.msra.mxu0 %v2516
    %7136 = vmatpush.bf16.msra.mxu0 %v2515
    %7137 = vmatpush.bf16.msra.mxu0 %v2514
    %7138 = vmatpush.bf16.msra.mxu0 %v2513
    %7139 = vmatpush.bf16.msra.mxu0 %v2512
    %7140 = vmatmul.bf16.gmra.mxu0 %v4092
    %v7141 = vpop.f32.mrf.mxu0
    %v7142 = vadd.f32 %v6973, %v7141
    %v7143 = vpop.f32.mrf.mxu0
    %v7144 = vadd.f32 %v6975, %v7143
    %7145 = vmatmul.bf16.gmra.mxu0 %v4108
    %v7146 = vpop.f32.mrf.mxu0
    %v7147 = vadd.f32 %v6978, %v7146
    %v7148 = vpop.f32.mrf.mxu0
    %v7149 = vadd.f32 %v6980, %v7148
    %7150 = vmatmul.bf16.gmra.mxu0 %v4124
    %v7151 = vpop.f32.mrf.mxu0
    %v7152 = vadd.f32 %v6983, %v7151
    %v7153 = vpop.f32.mrf.mxu0
    %v7154 = vadd.f32 %v6985, %v7153
    %7155 = vmatmul.bf16.gmra.mxu0 %v4140
    %v7156 = vpop.f32.mrf.mxu0
    %v7157 = vadd.f32 %v6988, %v7156
    %v7158 = vpop.f32.mrf.mxu0
    %v7159 = vadd.f32 %v6990, %v7158
    %7160 = vmatmul.bf16.gmra.mxu0 %v4156
    %v7161 = vpop.f32.mrf.mxu0
    %v7162 = vadd.f32 %v6993, %v7161
    %v7163 = vpop.f32.mrf.mxu0
    %v7164 = vadd.f32 %v6995, %v7163
    %7165 = vmatmul.bf16.gmra.mxu0 %v4172
    %v7166 = vpop.f32.mrf.mxu0
    %v7167 = vadd.f32 %v6998, %v7166
    %v7168 = vpop.f32.mrf.mxu0
    %v7169 = vadd.f32 %v7000, %v7168
    %7170 = vmatmul.bf16.gmra.mxu0 %v4188
    %v7171 = vpop.f32.mrf.mxu0
    %v7172 = vadd.f32 %v7003, %v7171
    %v7173 = vpop.f32.mrf.mxu0
    %v7174 = vadd.f32 %v7005, %v7173
    %7175 = vmatmul.bf16.gmra.mxu0 %v4204
    %v7176 = vpop.f32.mrf.mxu0
    %v7177 = vadd.f32 %v7008, %v7176
    %v7178 = vpop.f32.mrf.mxu0
    %v7179 = vadd.f32 %v7010, %v7178
    %7180 = vmatmul.bf16.gmra.mxu0 %v4220
    %v7181 = vpop.f32.mrf.mxu0
    %v7182 = vadd.f32 %v7013, %v7181
    %v7183 = vpop.f32.mrf.mxu0
    %v7184 = vadd.f32 %v7015, %v7183
    %7185 = vmatmul.bf16.gmra.mxu0 %v4236
    %v7186 = vpop.f32.mrf.mxu0
    %v7187 = vadd.f32 %v7018, %v7186
    %v7188 = vpop.f32.mrf.mxu0
    %v7189 = vadd.f32 %v7020, %v7188
    %7190 = vmatmul.bf16.gmra.mxu0 %v4252
    %v7191 = vpop.f32.mrf.mxu0
    %v7192 = vadd.f32 %v7023, %v7191
    %v7193 = vpop.f32.mrf.mxu0
    %v7194 = vadd.f32 %v7025, %v7193
    %7195 = vmatmul.bf16.gmra.mxu0 %v4268
    %v7196 = vpop.f32.mrf.mxu0
    %v7197 = vadd.f32 %v7028, %v7196
    %v7198 = vpop.f32.mrf.mxu0
    %v7199 = vadd.f32 %v7030, %v7198
    %7200 = vmatmul.bf16.gmra.mxu0 %v4284
    %v7201 = vpop.f32.mrf.mxu0
    %v7202 = vadd.f32 %v7033, %v7201
    %v7203 = vpop.f32.mrf.mxu0
    %v7204 = vadd.f32 %v7035, %v7203
    %7205 = vmatmul.bf16.gmra.mxu0 %v4300
    %v7206 = vpop.f32.mrf.mxu0
    %v7207 = vadd.f32 %v7038, %v7206
    %v7208 = vpop.f32.mrf.mxu0
    %v7209 = vadd.f32 %v7040, %v7208
    %7210 = vmatmul.bf16.gmra.mxu0 %v4316
    %v7211 = vpop.f32.mrf.mxu0
    %v7212 = vadd.f32 %v7043, %v7211
    %v7213 = vpop.f32.mrf.mxu0
    %v7214 = vadd.f32 %v7045, %v7213
    %7215 = vmatmul.bf16.gmra.mxu0 %v4332
    %v7216 = vpop.f32.mrf.mxu0
    %v7217 = vadd.f32 %v7048, %v7216
    %v7218 = vpop.f32.mrf.mxu0
    %v7219 = vadd.f32 %v7050, %v7218
    %7220 = vmatmul.bf16.gmra.mxu0 %v4348
    %v7221 = vpop.f32.mrf.mxu0
    %v7222 = vadd.f32 %v7053, %v7221
    %v7223 = vpop.f32.mrf.mxu0
    %v7224 = vadd.f32 %v7055, %v7223
    %7225 = vmatmul.bf16.gmra.mxu0 %v4364
    %v7226 = vpop.f32.mrf.mxu0
    %v7227 = vadd.f32 %v7058, %v7226
    %v7228 = vpop.f32.mrf.mxu0
    %v7229 = vadd.f32 %v7060, %v7228
    %7230 = vmatmul.bf16.gmra.mxu0 %v4380
    %v7231 = vpop.f32.mrf.mxu0
    %v7232 = vadd.f32 %v7063, %v7231
    %v7233 = vpop.f32.mrf.mxu0
    %v7234 = vadd.f32 %v7065, %v7233
    %7235 = vmatmul.bf16.gmra.mxu0 %v4396
    %v7236 = vpop.f32.mrf.mxu0
    %v7237 = vadd.f32 %v7068, %v7236
    %v7238 = vpop.f32.mrf.mxu0
    %v7239 = vadd.f32 %v7070, %v7238
    %7240 = vmatmul.bf16.gmra.mxu0 %v4412
    %v7241 = vpop.f32.mrf.mxu0
    %v7242 = vadd.f32 %v7073, %v7241
    %v7243 = vpop.f32.mrf.mxu0
    %v7244 = vadd.f32 %v7075, %v7243
    %7245 = vmatmul.bf16.gmra.mxu0 %v4428
    %v7246 = vpop.f32.mrf.mxu0
    %v7247 = vadd.f32 %v7078, %v7246
    %v7248 = vpop.f32.mrf.mxu0
    %v7249 = vadd.f32 %v7080, %v7248
    %7250 = vmatmul.bf16.gmra.mxu0 %v4444
    %v7251 = vpop.f32.mrf.mxu0
    %v7252 = vadd.f32 %v7083, %v7251
    %v7253 = vpop.f32.mrf.mxu0
    %v7254 = vadd.f32 %v7085, %v7253
    %7255 = vmatmul.bf16.gmra.mxu0 %v4460
    %v7256 = vpop.f32.mrf.mxu0
    %v7257 = vadd.f32 %v7088, %v7256
    %v7258 = vpop.f32.mrf.mxu0
    %v7259 = vadd.f32 %v7090, %v7258
    %7260 = vmatmul.bf16.gmra.mxu0 %v4476
    %v7261 = vpop.f32.mrf.mxu0
    %v7262 = vadd.f32 %v7093, %v7261
    %v7263 = vpop.f32.mrf.mxu0
    %v7264 = vadd.f32 %v7095, %v7263
    %7265 = vmatmul.bf16.gmra.mxu0 %v4492
    %v7266 = vpop.f32.mrf.mxu0
    %v7267 = vadd.f32 %v7098, %v7266
    %v7268 = vpop.f32.mrf.mxu0
    %v7269 = vadd.f32 %v7100, %v7268
    %7270 = vmatmul.bf16.gmra.mxu0 %v4508
    %v7271 = vpop.f32.mrf.mxu0
    %v7272 = vadd.f32 %v7103, %v7271
    %v7273 = vpop.f32.mrf.mxu0
    %v7274 = vadd.f32 %v7105, %v7273
    %7275 = vmatmul.bf16.gmra.mxu0 %v4524
    %v7276 = vpop.f32.mrf.mxu0
    %v7277 = vadd.f32 %v7108, %v7276
    %v7278 = vpop.f32.mrf.mxu0
    %v7279 = vadd.f32 %v7110, %v7278
    %7280 = vmatmul.bf16.gmra.mxu0 %v4540
    %v7281 = vpop.f32.mrf.mxu0
    %v7282 = vadd.f32 %v7113, %v7281
    %v7283 = vpop.f32.mrf.mxu0
    %v7284 = vadd.f32 %v7115, %v7283
    %7285 = vmatmul.bf16.gmra.mxu0 %v4556
    %v7286 = vpop.f32.mrf.mxu0
    %v7287 = vadd.f32 %v7118, %v7286
    %v7288 = vpop.f32.mrf.mxu0
    %v7289 = vadd.f32 %v7120, %v7288
    %7290 = vmatmul.bf16.gmra.mxu0 %v4572
    %v7291 = vpop.f32.mrf.mxu0
    %v7292 = vadd.f32 %v7123, %v7291
    %v7293 = vpop.f32.mrf.mxu0
    %v7294 = vadd.f32 %v7125, %v7293
    %7295 = vmatmul.bf16.gmra.mxu0 %v4588
    %v7296 = vpop.f32.mrf.mxu0
    %v7297 = vadd.f32 %v7128, %v7296
    %v7298 = vpop.f32.mrf.mxu0
    %v7299 = vadd.f32 %v7130, %v7298
    %7300 = vdwg.mxu0
    %7301 = vmatpush.bf16.msra.mxu0 %v2527
    %7302 = vmatpush.bf16.msra.mxu0 %v2526
    %7303 = vmatpush.bf16.msra.mxu0 %v2525
    %7304 = vmatpush.bf16.msra.mxu0 %v2524
    %7305 = vmatpush.bf16.msra.mxu0 %v2523
    %7306 = vmatpush.bf16.msra.mxu0 %v2522
    %7307 = vmatpush.bf16.msra.mxu0 %v2521
    %7308 = vmatpush.bf16.msra.mxu0 %v2520
    %7309 = vmatmul.bf16.gmra.mxu0 %v4093
    %v7310 = vpop.f32.mrf.mxu0
    %v7311 = vadd.f32 %v7142, %v7310
    %v7312 = vpop.f32.mrf.mxu0
    %v7313 = vadd.f32 %v7144, %v7312
    %7314 = vmatmul.bf16.gmra.mxu0 %v4109
    %v7315 = vpop.f32.mrf.mxu0
    %v7316 = vadd.f32 %v7147, %v7315
    %v7317 = vpop.f32.mrf.mxu0
    %v7318 = vadd.f32 %v7149, %v7317
    %7319 = vmatmul.bf16.gmra.mxu0 %v4125
    %v7320 = vpop.f32.mrf.mxu0
    %v7321 = vadd.f32 %v7152, %v7320
    %v7322 = vpop.f32.mrf.mxu0
    %v7323 = vadd.f32 %v7154, %v7322
    %7324 = vmatmul.bf16.gmra.mxu0 %v4141
    %v7325 = vpop.f32.mrf.mxu0
    %v7326 = vadd.f32 %v7157, %v7325
    %v7327 = vpop.f32.mrf.mxu0
    %v7328 = vadd.f32 %v7159, %v7327
    %7329 = vmatmul.bf16.gmra.mxu0 %v4157
    %v7330 = vpop.f32.mrf.mxu0
    %v7331 = vadd.f32 %v7162, %v7330
    %v7332 = vpop.f32.mrf.mxu0
    %v7333 = vadd.f32 %v7164, %v7332
    %7334 = vmatmul.bf16.gmra.mxu0 %v4173
    %v7335 = vpop.f32.mrf.mxu0
    %v7336 = vadd.f32 %v7167, %v7335
    %v7337 = vpop.f32.mrf.mxu0
    %v7338 = vadd.f32 %v7169, %v7337
    %7339 = vmatmul.bf16.gmra.mxu0 %v4189
    %v7340 = vpop.f32.mrf.mxu0
    %v7341 = vadd.f32 %v7172, %v7340
    %v7342 = vpop.f32.mrf.mxu0
    %v7343 = vadd.f32 %v7174, %v7342
    %7344 = vmatmul.bf16.gmra.mxu0 %v4205
    %v7345 = vpop.f32.mrf.mxu0
    %v7346 = vadd.f32 %v7177, %v7345
    %v7347 = vpop.f32.mrf.mxu0
    %v7348 = vadd.f32 %v7179, %v7347
    %7349 = vmatmul.bf16.gmra.mxu0 %v4221
    %v7350 = vpop.f32.mrf.mxu0
    %v7351 = vadd.f32 %v7182, %v7350
    %v7352 = vpop.f32.mrf.mxu0
    %v7353 = vadd.f32 %v7184, %v7352
    %7354 = vmatmul.bf16.gmra.mxu0 %v4237
    %v7355 = vpop.f32.mrf.mxu0
    %v7356 = vadd.f32 %v7187, %v7355
    %v7357 = vpop.f32.mrf.mxu0
    %v7358 = vadd.f32 %v7189, %v7357
    %7359 = vmatmul.bf16.gmra.mxu0 %v4253
    %v7360 = vpop.f32.mrf.mxu0
    %v7361 = vadd.f32 %v7192, %v7360
    %v7362 = vpop.f32.mrf.mxu0
    %v7363 = vadd.f32 %v7194, %v7362
    %7364 = vmatmul.bf16.gmra.mxu0 %v4269
    %v7365 = vpop.f32.mrf.mxu0
    %v7366 = vadd.f32 %v7197, %v7365
    %v7367 = vpop.f32.mrf.mxu0
    %v7368 = vadd.f32 %v7199, %v7367
    %7369 = vmatmul.bf16.gmra.mxu0 %v4285
    %v7370 = vpop.f32.mrf.mxu0
    %v7371 = vadd.f32 %v7202, %v7370
    %v7372 = vpop.f32.mrf.mxu0
    %v7373 = vadd.f32 %v7204, %v7372
    %7374 = vmatmul.bf16.gmra.mxu0 %v4301
    %v7375 = vpop.f32.mrf.mxu0
    %v7376 = vadd.f32 %v7207, %v7375
    %v7377 = vpop.f32.mrf.mxu0
    %v7378 = vadd.f32 %v7209, %v7377
    %7379 = vmatmul.bf16.gmra.mxu0 %v4317
    %v7380 = vpop.f32.mrf.mxu0
    %v7381 = vadd.f32 %v7212, %v7380
    %v7382 = vpop.f32.mrf.mxu0
    %v7383 = vadd.f32 %v7214, %v7382
    %7384 = vmatmul.bf16.gmra.mxu0 %v4333
    %v7385 = vpop.f32.mrf.mxu0
    %v7386 = vadd.f32 %v7217, %v7385
    %v7387 = vpop.f32.mrf.mxu0
    %v7388 = vadd.f32 %v7219, %v7387
    %7389 = vmatmul.bf16.gmra.mxu0 %v4349
    %v7390 = vpop.f32.mrf.mxu0
    %v7391 = vadd.f32 %v7222, %v7390
    %v7392 = vpop.f32.mrf.mxu0
    %v7393 = vadd.f32 %v7224, %v7392
    %7394 = vmatmul.bf16.gmra.mxu0 %v4365
    %v7395 = vpop.f32.mrf.mxu0
    %v7396 = vadd.f32 %v7227, %v7395
    %v7397 = vpop.f32.mrf.mxu0
    %v7398 = vadd.f32 %v7229, %v7397
    %7399 = vmatmul.bf16.gmra.mxu0 %v4381
    %v7400 = vpop.f32.mrf.mxu0
    %v7401 = vadd.f32 %v7232, %v7400
    %v7402 = vpop.f32.mrf.mxu0
    %v7403 = vadd.f32 %v7234, %v7402
    %7404 = vmatmul.bf16.gmra.mxu0 %v4397
    %v7405 = vpop.f32.mrf.mxu0
    %v7406 = vadd.f32 %v7237, %v7405
    %v7407 = vpop.f32.mrf.mxu0
    %v7408 = vadd.f32 %v7239, %v7407
    %7409 = vmatmul.bf16.gmra.mxu0 %v4413
    %v7410 = vpop.f32.mrf.mxu0
    %v7411 = vadd.f32 %v7242, %v7410
    %v7412 = vpop.f32.mrf.mxu0
    %v7413 = vadd.f32 %v7244, %v7412
    %7414 = vmatmul.bf16.gmra.mxu0 %v4429
    %v7415 = vpop.f32.mrf.mxu0
    %v7416 = vadd.f32 %v7247, %v7415
    %v7417 = vpop.f32.mrf.mxu0
    %v7418 = vadd.f32 %v7249, %v7417
    %7419 = vmatmul.bf16.gmra.mxu0 %v4445
    %v7420 = vpop.f32.mrf.mxu0
    %v7421 = vadd.f32 %v7252, %v7420
    %v7422 = vpop.f32.mrf.mxu0
    %v7423 = vadd.f32 %v7254, %v7422
    %7424 = vmatmul.bf16.gmra.mxu0 %v4461
    %v7425 = vpop.f32.mrf.mxu0
    %v7426 = vadd.f32 %v7257, %v7425
    %v7427 = vpop.f32.mrf.mxu0
    %v7428 = vadd.f32 %v7259, %v7427
    %7429 = vmatmul.bf16.gmra.mxu0 %v4477
    %v7430 = vpop.f32.mrf.mxu0
    %v7431 = vadd.f32 %v7262, %v7430
    %v7432 = vpop.f32.mrf.mxu0
    %v7433 = vadd.f32 %v7264, %v7432
    %7434 = vmatmul.bf16.gmra.mxu0 %v4493
    %v7435 = vpop.f32.mrf.mxu0
    %v7436 = vadd.f32 %v7267, %v7435
    %v7437 = vpop.f32.mrf.mxu0
    %v7438 = vadd.f32 %v7269, %v7437
    %7439 = vmatmul.bf16.gmra.mxu0 %v4509
    %v7440 = vpop.f32.mrf.mxu0
    %v7441 = vadd.f32 %v7272, %v7440
    %v7442 = vpop.f32.mrf.mxu0
    %v7443 = vadd.f32 %v7274, %v7442
    %7444 = vmatmul.bf16.gmra.mxu0 %v4525
    %v7445 = vpop.f32.mrf.mxu0
    %v7446 = vadd.f32 %v7277, %v7445
    %v7447 = vpop.f32.mrf.mxu0
    %v7448 = vadd.f32 %v7279, %v7447
    %7449 = vmatmul.bf16.gmra.mxu0 %v4541
    %v7450 = vpop.f32.mrf.mxu0
    %v7451 = vadd.f32 %v7282, %v7450
    %v7452 = vpop.f32.mrf.mxu0
    %v7453 = vadd.f32 %v7284, %v7452
    %7454 = vmatmul.bf16.gmra.mxu0 %v4557
    %v7455 = vpop.f32.mrf.mxu0
    %v7456 = vadd.f32 %v7287, %v7455
    %v7457 = vpop.f32.mrf.mxu0
    %v7458 = vadd.f32 %v7289, %v7457
    %7459 = vmatmul.bf16.gmra.mxu0 %v4573
    %v7460 = vpop.f32.mrf.mxu0
    %v7461 = vadd.f32 %v7292, %v7460
    %v7462 = vpop.f32.mrf.mxu0
    %v7463 = vadd.f32 %v7294, %v7462
    %7464 = vmatmul.bf16.gmra.mxu0 %v4589
    %v7465 = vpop.f32.mrf.mxu0
    %v7466 = vadd.f32 %v7297, %v7465
    %v7467 = vpop.f32.mrf.mxu0
    %v7468 = vadd.f32 %v7299, %v7467
    %7469 = vdwg.mxu0
    %7470 = vmatpush.bf16.msra.mxu0 %v2535
    %7471 = vmatpush.bf16.msra.mxu0 %v2534
    %7472 = vmatpush.bf16.msra.mxu0 %v2533
    %7473 = vmatpush.bf16.msra.mxu0 %v2532
    %7474 = vmatpush.bf16.msra.mxu0 %v2531
    %7475 = vmatpush.bf16.msra.mxu0 %v2530
    %7476 = vmatpush.bf16.msra.mxu0 %v2529
    %7477 = vmatpush.bf16.msra.mxu0 %v2528
    %7478 = vmatmul.bf16.gmra.mxu0 %v4094
    %v7479 = vpop.f32.mrf.mxu0
    %v7480 = vadd.f32 %v7311, %v7479
    %v7481 = vpop.f32.mrf.mxu0
    %v7482 = vadd.f32 %v7313, %v7481
    %7483 = vmatmul.bf16.gmra.mxu0 %v4110
    %v7484 = vpop.f32.mrf.mxu0
    %v7485 = vadd.f32 %v7316, %v7484
    %v7486 = vpop.f32.mrf.mxu0
    %v7487 = vadd.f32 %v7318, %v7486
    %7488 = vmatmul.bf16.gmra.mxu0 %v4126
    %v7489 = vpop.f32.mrf.mxu0
    %v7490 = vadd.f32 %v7321, %v7489
    %v7491 = vpop.f32.mrf.mxu0
    %v7492 = vadd.f32 %v7323, %v7491
    %7493 = vmatmul.bf16.gmra.mxu0 %v4142
    %v7494 = vpop.f32.mrf.mxu0
    %v7495 = vadd.f32 %v7326, %v7494
    %v7496 = vpop.f32.mrf.mxu0
    %v7497 = vadd.f32 %v7328, %v7496
    %7498 = vmatmul.bf16.gmra.mxu0 %v4158
    %v7499 = vpop.f32.mrf.mxu0
    %v7500 = vadd.f32 %v7331, %v7499
    %v7501 = vpop.f32.mrf.mxu0
    %v7502 = vadd.f32 %v7333, %v7501
    %7503 = vmatmul.bf16.gmra.mxu0 %v4174
    %v7504 = vpop.f32.mrf.mxu0
    %v7505 = vadd.f32 %v7336, %v7504
    %v7506 = vpop.f32.mrf.mxu0
    %v7507 = vadd.f32 %v7338, %v7506
    %7508 = vmatmul.bf16.gmra.mxu0 %v4190
    %v7509 = vpop.f32.mrf.mxu0
    %v7510 = vadd.f32 %v7341, %v7509
    %v7511 = vpop.f32.mrf.mxu0
    %v7512 = vadd.f32 %v7343, %v7511
    %7513 = vmatmul.bf16.gmra.mxu0 %v4206
    %v7514 = vpop.f32.mrf.mxu0
    %v7515 = vadd.f32 %v7346, %v7514
    %v7516 = vpop.f32.mrf.mxu0
    %v7517 = vadd.f32 %v7348, %v7516
    %7518 = vmatmul.bf16.gmra.mxu0 %v4222
    %v7519 = vpop.f32.mrf.mxu0
    %v7520 = vadd.f32 %v7351, %v7519
    %v7521 = vpop.f32.mrf.mxu0
    %v7522 = vadd.f32 %v7353, %v7521
    %7523 = vmatmul.bf16.gmra.mxu0 %v4238
    %v7524 = vpop.f32.mrf.mxu0
    %v7525 = vadd.f32 %v7356, %v7524
    %v7526 = vpop.f32.mrf.mxu0
    %v7527 = vadd.f32 %v7358, %v7526
    %7528 = vmatmul.bf16.gmra.mxu0 %v4254
    %v7529 = vpop.f32.mrf.mxu0
    %v7530 = vadd.f32 %v7361, %v7529
    %v7531 = vpop.f32.mrf.mxu0
    %v7532 = vadd.f32 %v7363, %v7531
    %7533 = vmatmul.bf16.gmra.mxu0 %v4270
    %v7534 = vpop.f32.mrf.mxu0
    %v7535 = vadd.f32 %v7366, %v7534
    %v7536 = vpop.f32.mrf.mxu0
    %v7537 = vadd.f32 %v7368, %v7536
    %7538 = vmatmul.bf16.gmra.mxu0 %v4286
    %v7539 = vpop.f32.mrf.mxu0
    %v7540 = vadd.f32 %v7371, %v7539
    %v7541 = vpop.f32.mrf.mxu0
    %v7542 = vadd.f32 %v7373, %v7541
    %7543 = vmatmul.bf16.gmra.mxu0 %v4302
    %v7544 = vpop.f32.mrf.mxu0
    %v7545 = vadd.f32 %v7376, %v7544
    %v7546 = vpop.f32.mrf.mxu0
    %v7547 = vadd.f32 %v7378, %v7546
    %7548 = vmatmul.bf16.gmra.mxu0 %v4318
    %v7549 = vpop.f32.mrf.mxu0
    %v7550 = vadd.f32 %v7381, %v7549
    %v7551 = vpop.f32.mrf.mxu0
    %v7552 = vadd.f32 %v7383, %v7551
    %7553 = vmatmul.bf16.gmra.mxu0 %v4334
    %v7554 = vpop.f32.mrf.mxu0
    %v7555 = vadd.f32 %v7386, %v7554
    %v7556 = vpop.f32.mrf.mxu0
    %v7557 = vadd.f32 %v7388, %v7556
    %7558 = vmatmul.bf16.gmra.mxu0 %v4350
    %v7559 = vpop.f32.mrf.mxu0
    %v7560 = vadd.f32 %v7391, %v7559
    %v7561 = vpop.f32.mrf.mxu0
    %v7562 = vadd.f32 %v7393, %v7561
    %7563 = vmatmul.bf16.gmra.mxu0 %v4366
    %v7564 = vpop.f32.mrf.mxu0
    %v7565 = vadd.f32 %v7396, %v7564
    %v7566 = vpop.f32.mrf.mxu0
    %v7567 = vadd.f32 %v7398, %v7566
    %7568 = vmatmul.bf16.gmra.mxu0 %v4382
    %v7569 = vpop.f32.mrf.mxu0
    %v7570 = vadd.f32 %v7401, %v7569
    %v7571 = vpop.f32.mrf.mxu0
    %v7572 = vadd.f32 %v7403, %v7571
    %7573 = vmatmul.bf16.gmra.mxu0 %v4398
    %v7574 = vpop.f32.mrf.mxu0
    %v7575 = vadd.f32 %v7406, %v7574
    %v7576 = vpop.f32.mrf.mxu0
    %v7577 = vadd.f32 %v7408, %v7576
    %7578 = vmatmul.bf16.gmra.mxu0 %v4414
    %v7579 = vpop.f32.mrf.mxu0
    %v7580 = vadd.f32 %v7411, %v7579
    %v7581 = vpop.f32.mrf.mxu0
    %v7582 = vadd.f32 %v7413, %v7581
    %7583 = vmatmul.bf16.gmra.mxu0 %v4430
    %v7584 = vpop.f32.mrf.mxu0
    %v7585 = vadd.f32 %v7416, %v7584
    %v7586 = vpop.f32.mrf.mxu0
    %v7587 = vadd.f32 %v7418, %v7586
    %7588 = vmatmul.bf16.gmra.mxu0 %v4446
    %v7589 = vpop.f32.mrf.mxu0
    %v7590 = vadd.f32 %v7421, %v7589
    %v7591 = vpop.f32.mrf.mxu0
    %v7592 = vadd.f32 %v7423, %v7591
    %7593 = vmatmul.bf16.gmra.mxu0 %v4462
    %v7594 = vpop.f32.mrf.mxu0
    %v7595 = vadd.f32 %v7426, %v7594
    %v7596 = vpop.f32.mrf.mxu0
    %v7597 = vadd.f32 %v7428, %v7596
    %7598 = vmatmul.bf16.gmra.mxu0 %v4478
    %v7599 = vpop.f32.mrf.mxu0
    %v7600 = vadd.f32 %v7431, %v7599
    %v7601 = vpop.f32.mrf.mxu0
    %v7602 = vadd.f32 %v7433, %v7601
    %7603 = vmatmul.bf16.gmra.mxu0 %v4494
    %v7604 = vpop.f32.mrf.mxu0
    %v7605 = vadd.f32 %v7436, %v7604
    %v7606 = vpop.f32.mrf.mxu0
    %v7607 = vadd.f32 %v7438, %v7606
    %7608 = vmatmul.bf16.gmra.mxu0 %v4510
    %v7609 = vpop.f32.mrf.mxu0
    %v7610 = vadd.f32 %v7441, %v7609
    %v7611 = vpop.f32.mrf.mxu0
    %v7612 = vadd.f32 %v7443, %v7611
    %7613 = vmatmul.bf16.gmra.mxu0 %v4526
    %v7614 = vpop.f32.mrf.mxu0
    %v7615 = vadd.f32 %v7446, %v7614
    %v7616 = vpop.f32.mrf.mxu0
    %v7617 = vadd.f32 %v7448, %v7616
    %7618 = vmatmul.bf16.gmra.mxu0 %v4542
    %v7619 = vpop.f32.mrf.mxu0
    %v7620 = vadd.f32 %v7451, %v7619
    %v7621 = vpop.f32.mrf.mxu0
    %v7622 = vadd.f32 %v7453, %v7621
    %7623 = vmatmul.bf16.gmra.mxu0 %v4558
    %v7624 = vpop.f32.mrf.mxu0
    %v7625 = vadd.f32 %v7456, %v7624
    %v7626 = vpop.f32.mrf.mxu0
    %v7627 = vadd.f32 %v7458, %v7626
    %7628 = vmatmul.bf16.gmra.mxu0 %v4574
    %v7629 = vpop.f32.mrf.mxu0
    %v7630 = vadd.f32 %v7461, %v7629
    %v7631 = vpop.f32.mrf.mxu0
    %v7632 = vadd.f32 %v7463, %v7631
    %7633 = vmatmul.bf16.gmra.mxu0 %v4590
    %v7634 = vpop.f32.mrf.mxu0
    %v7635 = vadd.f32 %v7466, %v7634
    %v7636 = vpop.f32.mrf.mxu0
    %v7637 = vadd.f32 %v7468, %v7636
    %7638 = vdwg.mxu0
    %7639 = vmatpush.bf16.msra.mxu0 %v2543
    %7640 = vmatpush.bf16.msra.mxu0 %v2542
    %7641 = vmatpush.bf16.msra.mxu0 %v2541
    %7642 = vmatpush.bf16.msra.mxu0 %v2540
    %7643 = vmatpush.bf16.msra.mxu0 %v2539
    %7644 = vmatpush.bf16.msra.mxu0 %v2538
    %7645 = vmatpush.bf16.msra.mxu0 %v2537
    %7646 = vmatpush.bf16.msra.mxu0 %v2536
    %7647 = vmatmul.bf16.gmra.mxu0 %v4095
    %v7648 = vpop.f32.mrf.mxu0
    %v7649 = vadd.f32 %v7480, %v7648
    %v7650 = vpop.f32.mrf.mxu0
    %v7651 = vadd.f32 %v7482, %v7650
    %7652 = vmatmul.bf16.gmra.mxu0 %v4111
    %v7653 = vpop.f32.mrf.mxu0
    %v7654 = vadd.f32 %v7485, %v7653
    %v7655 = vpop.f32.mrf.mxu0
    %v7656 = vadd.f32 %v7487, %v7655
    %7657 = vmatmul.bf16.gmra.mxu0 %v4127
    %v7658 = vpop.f32.mrf.mxu0
    %v7659 = vadd.f32 %v7490, %v7658
    %v7660 = vpop.f32.mrf.mxu0
    %v7661 = vadd.f32 %v7492, %v7660
    %7662 = vmatmul.bf16.gmra.mxu0 %v4143
    %v7663 = vpop.f32.mrf.mxu0
    %v7664 = vadd.f32 %v7495, %v7663
    %v7665 = vpop.f32.mrf.mxu0
    %v7666 = vadd.f32 %v7497, %v7665
    %7667 = vmatmul.bf16.gmra.mxu0 %v4159
    %v7668 = vpop.f32.mrf.mxu0
    %v7669 = vadd.f32 %v7500, %v7668
    %v7670 = vpop.f32.mrf.mxu0
    %v7671 = vadd.f32 %v7502, %v7670
    %7672 = vmatmul.bf16.gmra.mxu0 %v4175
    %v7673 = vpop.f32.mrf.mxu0
    %v7674 = vadd.f32 %v7505, %v7673
    %v7675 = vpop.f32.mrf.mxu0
    %v7676 = vadd.f32 %v7507, %v7675
    %7677 = vmatmul.bf16.gmra.mxu0 %v4191
    %v7678 = vpop.f32.mrf.mxu0
    %v7679 = vadd.f32 %v7510, %v7678
    %v7680 = vpop.f32.mrf.mxu0
    %v7681 = vadd.f32 %v7512, %v7680
    %7682 = vmatmul.bf16.gmra.mxu0 %v4207
    %v7683 = vpop.f32.mrf.mxu0
    %v7684 = vadd.f32 %v7515, %v7683
    %v7685 = vpop.f32.mrf.mxu0
    %v7686 = vadd.f32 %v7517, %v7685
    %7687 = vmatmul.bf16.gmra.mxu0 %v4223
    %v7688 = vpop.f32.mrf.mxu0
    %v7689 = vadd.f32 %v7520, %v7688
    %v7690 = vpop.f32.mrf.mxu0
    %v7691 = vadd.f32 %v7522, %v7690
    %7692 = vmatmul.bf16.gmra.mxu0 %v4239
    %v7693 = vpop.f32.mrf.mxu0
    %v7694 = vadd.f32 %v7525, %v7693
    %v7695 = vpop.f32.mrf.mxu0
    %v7696 = vadd.f32 %v7527, %v7695
    %7697 = vmatmul.bf16.gmra.mxu0 %v4255
    %v7698 = vpop.f32.mrf.mxu0
    %v7699 = vadd.f32 %v7530, %v7698
    %v7700 = vpop.f32.mrf.mxu0
    %v7701 = vadd.f32 %v7532, %v7700
    %7702 = vmatmul.bf16.gmra.mxu0 %v4271
    %v7703 = vpop.f32.mrf.mxu0
    %v7704 = vadd.f32 %v7535, %v7703
    %v7705 = vpop.f32.mrf.mxu0
    %v7706 = vadd.f32 %v7537, %v7705
    %7707 = vmatmul.bf16.gmra.mxu0 %v4287
    %v7708 = vpop.f32.mrf.mxu0
    %v7709 = vadd.f32 %v7540, %v7708
    %v7710 = vpop.f32.mrf.mxu0
    %v7711 = vadd.f32 %v7542, %v7710
    %7712 = vmatmul.bf16.gmra.mxu0 %v4303
    %v7713 = vpop.f32.mrf.mxu0
    %v7714 = vadd.f32 %v7545, %v7713
    %v7715 = vpop.f32.mrf.mxu0
    %v7716 = vadd.f32 %v7547, %v7715
    %7717 = vmatmul.bf16.gmra.mxu0 %v4319
    %v7718 = vpop.f32.mrf.mxu0
    %v7719 = vadd.f32 %v7550, %v7718
    %v7720 = vpop.f32.mrf.mxu0
    %v7721 = vadd.f32 %v7552, %v7720
    %7722 = vmatmul.bf16.gmra.mxu0 %v4335
    %v7723 = vpop.f32.mrf.mxu0
    %v7724 = vadd.f32 %v7555, %v7723
    %v7725 = vpop.f32.mrf.mxu0
    %v7726 = vadd.f32 %v7557, %v7725
    %7727 = vmatmul.bf16.gmra.mxu0 %v4351
    %v7728 = vpop.f32.mrf.mxu0
    %v7729 = vadd.f32 %v7560, %v7728
    %v7730 = vpop.f32.mrf.mxu0
    %v7731 = vadd.f32 %v7562, %v7730
    %7732 = vmatmul.bf16.gmra.mxu0 %v4367
    %v7733 = vpop.f32.mrf.mxu0
    %v7734 = vadd.f32 %v7565, %v7733
    %v7735 = vpop.f32.mrf.mxu0
    %v7736 = vadd.f32 %v7567, %v7735
    %7737 = vmatmul.bf16.gmra.mxu0 %v4383
    %v7738 = vpop.f32.mrf.mxu0
    %v7739 = vadd.f32 %v7570, %v7738
    %v7740 = vpop.f32.mrf.mxu0
    %v7741 = vadd.f32 %v7572, %v7740
    %7742 = vmatmul.bf16.gmra.mxu0 %v4399
    %v7743 = vpop.f32.mrf.mxu0
    %v7744 = vadd.f32 %v7575, %v7743
    %v7745 = vpop.f32.mrf.mxu0
    %v7746 = vadd.f32 %v7577, %v7745
    %7747 = vmatmul.bf16.gmra.mxu0 %v4415
    %v7748 = vpop.f32.mrf.mxu0
    %v7749 = vadd.f32 %v7580, %v7748
    %v7750 = vpop.f32.mrf.mxu0
    %v7751 = vadd.f32 %v7582, %v7750
    %7752 = vmatmul.bf16.gmra.mxu0 %v4431
    %v7753 = vpop.f32.mrf.mxu0
    %v7754 = vadd.f32 %v7585, %v7753
    %v7755 = vpop.f32.mrf.mxu0
    %v7756 = vadd.f32 %v7587, %v7755
    %7757 = vmatmul.bf16.gmra.mxu0 %v4447
    %v7758 = vpop.f32.mrf.mxu0
    %v7759 = vadd.f32 %v7590, %v7758
    %v7760 = vpop.f32.mrf.mxu0
    %v7761 = vadd.f32 %v7592, %v7760
    %7762 = vmatmul.bf16.gmra.mxu0 %v4463
    %v7763 = vpop.f32.mrf.mxu0
    %v7764 = vadd.f32 %v7595, %v7763
    %v7765 = vpop.f32.mrf.mxu0
    %v7766 = vadd.f32 %v7597, %v7765
    %7767 = vmatmul.bf16.gmra.mxu0 %v4479
    %v7768 = vpop.f32.mrf.mxu0
    %v7769 = vadd.f32 %v7600, %v7768
    %v7770 = vpop.f32.mrf.mxu0
    %v7771 = vadd.f32 %v7602, %v7770
    %7772 = vmatmul.bf16.gmra.mxu0 %v4495
    %v7773 = vpop.f32.mrf.mxu0
    %v7774 = vadd.f32 %v7605, %v7773
    %v7775 = vpop.f32.mrf.mxu0
    %v7776 = vadd.f32 %v7607, %v7775
    %7777 = vmatmul.bf16.gmra.mxu0 %v4511
    %v7778 = vpop.f32.mrf.mxu0
    %v7779 = vadd.f32 %v7610, %v7778
    %v7780 = vpop.f32.mrf.mxu0
    %v7781 = vadd.f32 %v7612, %v7780
    %7782 = vmatmul.bf16.gmra.mxu0 %v4527
    %v7783 = vpop.f32.mrf.mxu0
    %v7784 = vadd.f32 %v7615, %v7783
    %v7785 = vpop.f32.mrf.mxu0
    %v7786 = vadd.f32 %v7617, %v7785
    %7787 = vmatmul.bf16.gmra.mxu0 %v4543
    %v7788 = vpop.f32.mrf.mxu0
    %v7789 = vadd.f32 %v7620, %v7788
    %v7790 = vpop.f32.mrf.mxu0
    %v7791 = vadd.f32 %v7622, %v7790
    %7792 = vmatmul.bf16.gmra.mxu0 %v4559
    %v7793 = vpop.f32.mrf.mxu0
    %v7794 = vadd.f32 %v7625, %v7793
    %v7795 = vpop.f32.mrf.mxu0
    %v7796 = vadd.f32 %v7627, %v7795
    %7797 = vmatmul.bf16.gmra.mxu0 %v4575
    %v7798 = vpop.f32.mrf.mxu0
    %v7799 = vadd.f32 %v7630, %v7798
    %v7800 = vpop.f32.mrf.mxu0
    %v7801 = vadd.f32 %v7632, %v7800
    %7802 = vmatmul.bf16.gmra.mxu0 %v4591
    %v7803 = vpop.f32.mrf.mxu0
    %v7804 = vadd.f32 %v7635, %v7803
    %v7805 = vpop.f32.mrf.mxu0
    %v7806 = vadd.f32 %v7637, %v7805
    %7807 = vdwg.mxu0
    %v7808 = vpack.c.bf16 %v7651, %v7649
    %v7809 = vpack.c.bf16 %v7656, %v7654
    %v7810 = vpack.c.bf16 %v7661, %v7659
    %v7811 = vpack.c.bf16 %v7666, %v7664
    %v7812 = vpack.c.bf16 %v7671, %v7669
    %v7813 = vpack.c.bf16 %v7676, %v7674
    %v7814 = vpack.c.bf16 %v7681, %v7679
    %v7815 = vpack.c.bf16 %v7686, %v7684
    %v7816 = vpack.c.bf16 %v7691, %v7689
    %v7817 = vpack.c.bf16 %v7696, %v7694
    %v7818 = vpack.c.bf16 %v7701, %v7699
    %v7819 = vpack.c.bf16 %v7706, %v7704
    %v7820 = vpack.c.bf16 %v7711, %v7709
    %v7821 = vpack.c.bf16 %v7716, %v7714
    %v7822 = vpack.c.bf16 %v7721, %v7719
    %v7823 = vpack.c.bf16 %v7726, %v7724
    %v7824 = vpack.c.bf16 %v7731, %v7729
    %v7825 = vpack.c.bf16 %v7736, %v7734
    %v7826 = vpack.c.bf16 %v7741, %v7739
    %v7827 = vpack.c.bf16 %v7746, %v7744
    %v7828 = vpack.c.bf16 %v7751, %v7749
    %v7829 = vpack.c.bf16 %v7756, %v7754
    %v7830 = vpack.c.bf16 %v7761, %v7759
    %v7831 = vpack.c.bf16 %v7766, %v7764
    %v7832 = vpack.c.bf16 %v7771, %v7769
    %v7833 = vpack.c.bf16 %v7776, %v7774
    %v7834 = vpack.c.bf16 %v7781, %v7779
    %v7835 = vpack.c.bf16 %v7786, %v7784
    %v7836 = vpack.c.bf16 %v7791, %v7789
    %v7837 = vpack.c.bf16 %v7796, %v7794
    %v7838 = vpack.c.bf16 %v7801, %v7799
    %v7839 = vpack.c.bf16 %v7806, %v7804
    %v7840 = vld [vmem:[#allocation4] sm:$0xf]
    %v7841 = vld [vmem:[#allocation4 + $0x4] sm:$0xf]
    %v7842 = vld [vmem:[#allocation10 + $0x1] ss:$0 sm:$0xff]
    %v7845 = vunpack.c.l.b16 %v7840
    %v7846 = vunpack.c.l.b16 %v7841
    %v7847 = vpack.c.b16 %v7846, %v7845
    %vm7849 = vcmask 130048
    %v7851 = vsel %vm7849, %v7808, 0
    %v7854 = vsel %vm7849, %v7809, 0
    %v7857 = vsel %vm7849, %v7810, 0
    %v7860 = vsel %vm7849, %v7811, 0
    %v7863 = vsel %vm7849, %v7812, 0
    %v7866 = vsel %vm7849, %v7813, 0
    %v7869 = vsel %vm7849, %v7814, 0
    %v7872 = vsel %vm7849, %v7815, 0
    %v7875 = vsel %vm7849, %v7816, 0
    %v7878 = vsel %vm7849, %v7817, 0
    %v7881 = vsel %vm7849, %v7818, 0
    %v7884 = vsel %vm7849, %v7819, 0
    %v7887 = vsel %vm7849, %v7820, 0
    %v7890 = vsel %vm7849, %v7821, 0
    %v7893 = vsel %vm7849, %v7822, 0
    %v7896 = vsel %vm7849, %v7823, 0
    %v7899 = vsel %vm7849, %v7824, 0
    %v7902 = vsel %vm7849, %v7825, 0
    %v7905 = vsel %vm7849, %v7826, 0
    %v7908 = vsel %vm7849, %v7827, 0
    %v7911 = vsel %vm7849, %v7828, 0
    %v7914 = vsel %vm7849, %v7829, 0
    %v7917 = vsel %vm7849, %v7830, 0
    %v7920 = vsel %vm7849, %v7831, 0
    %v7923 = vsel %vm7849, %v7832, 0
    %v7926 = vsel %vm7849, %v7833, 0
    %v7929 = vsel %vm7849, %v7834, 0
    %v7932 = vsel %vm7849, %v7835, 0
    %v7935 = vsel %vm7849, %v7836, 0
    %v7938 = vsel %vm7849, %v7837, 0
    %v7941 = vsel %vm7849, %v7838, 0
    %v7944 = vsel %vm7849, %v7839, 0
    %7946 = vmatpush.bf16.msra.mxu0 0
    %7947 = vmatpush.bf16.msra.mxu0 0
    %7948 = vmatpush.bf16.msra.mxu0 0
    %7949 = vmatpush.bf16.msra.mxu0 0
    %7950 = vmatpush.bf16.msra.mxu0 0
    %7951 = vmatpush.bf16.msra.mxu0 0
    %7952 = vmatpush.bf16.msra.mxu0 0
    %7953 = vmatpush.bf16.msra.mxu0 %v7847
    %7954 = vmatmul.bf16.gmra.mxu0 %v7851
    %v7955 = vpop.f32.mrf.mxu0
    %v7956 = vadd.f32 %v7842, %v7955
    %v7957 = vpop.f32.mrf.mxu0
    %v7958 = vadd.f32 %v7842, %v7957
    %7959 = vmatmul.bf16.gmra.mxu0 %v7854
    %v7960 = vpop.f32.mrf.mxu0
    %v7961 = vadd.f32 %v7842, %v7960
    %v7962 = vpop.f32.mrf.mxu0
    %v7963 = vadd.f32 %v7842, %v7962
    %7964 = vmatmul.bf16.gmra.mxu0 %v7857
    %v7965 = vpop.f32.mrf.mxu0
    %v7966 = vadd.f32 %v7842, %v7965
    %v7967 = vpop.f32.mrf.mxu0
    %v7968 = vadd.f32 %v7842, %v7967
    %7969 = vmatmul.bf16.gmra.mxu0 %v7860
    %v7970 = vpop.f32.mrf.mxu0
    %v7971 = vadd.f32 %v7842, %v7970
    %v7972 = vpop.f32.mrf.mxu0
    %v7973 = vadd.f32 %v7842, %v7972
    %7974 = vmatmul.bf16.gmra.mxu0 %v7863
    %v7975 = vpop.f32.mrf.mxu0
    %v7976 = vadd.f32 %v7842, %v7975
    %v7977 = vpop.f32.mrf.mxu0
    %v7978 = vadd.f32 %v7842, %v7977
    %7979 = vmatmul.bf16.gmra.mxu0 %v7866
    %v7980 = vpop.f32.mrf.mxu0
    %v7981 = vadd.f32 %v7842, %v7980
    %v7982 = vpop.f32.mrf.mxu0
    %v7983 = vadd.f32 %v7842, %v7982
    %7984 = vmatmul.bf16.gmra.mxu0 %v7869
    %v7985 = vpop.f32.mrf.mxu0
    %v7986 = vadd.f32 %v7842, %v7985
    %v7987 = vpop.f32.mrf.mxu0
    %v7988 = vadd.f32 %v7842, %v7987
    %7989 = vmatmul.bf16.gmra.mxu0 %v7872
    %v7990 = vpop.f32.mrf.mxu0
    %v7991 = vadd.f32 %v7842, %v7990
    %v7992 = vpop.f32.mrf.mxu0
    %v7993 = vadd.f32 %v7842, %v7992
    %7994 = vmatmul.bf16.gmra.mxu0 %v7875
    %v7995 = vpop.f32.mrf.mxu0
    %v7996 = vadd.f32 %v7842, %v7995
    %v7997 = vpop.f32.mrf.mxu0
    %v7998 = vadd.f32 %v7842, %v7997
    %7999 = vmatmul.bf16.gmra.mxu0 %v7878
    %v8000 = vpop.f32.mrf.mxu0
    %v8001 = vadd.f32 %v7842, %v8000
    %v8002 = vpop.f32.mrf.mxu0
    %v8003 = vadd.f32 %v7842, %v8002
    %8004 = vmatmul.bf16.gmra.mxu0 %v7881
    %v8005 = vpop.f32.mrf.mxu0
    %v8006 = vadd.f32 %v7842, %v8005
    %v8007 = vpop.f32.mrf.mxu0
    %v8008 = vadd.f32 %v7842, %v8007
    %8009 = vmatmul.bf16.gmra.mxu0 %v7884
    %v8010 = vpop.f32.mrf.mxu0
    %v8011 = vadd.f32 %v7842, %v8010
    %v8012 = vpop.f32.mrf.mxu0
    %v8013 = vadd.f32 %v7842, %v8012
    %8014 = vmatmul.bf16.gmra.mxu0 %v7887
    %v8015 = vpop.f32.mrf.mxu0
    %v8016 = vadd.f32 %v7842, %v8015
    %v8017 = vpop.f32.mrf.mxu0
    %v8018 = vadd.f32 %v7842, %v8017
    %8019 = vmatmul.bf16.gmra.mxu0 %v7890
    %v8020 = vpop.f32.mrf.mxu0
    %v8021 = vadd.f32 %v7842, %v8020
    %v8022 = vpop.f32.mrf.mxu0
    %v8023 = vadd.f32 %v7842, %v8022
    %8024 = vmatmul.bf16.gmra.mxu0 %v7893
    %v8025 = vpop.f32.mrf.mxu0
    %v8026 = vadd.f32 %v7842, %v8025
    %v8027 = vpop.f32.mrf.mxu0
    %v8028 = vadd.f32 %v7842, %v8027
    %8029 = vmatmul.bf16.gmra.mxu0 %v7896
    %v8030 = vpop.f32.mrf.mxu0
    %v8031 = vadd.f32 %v7842, %v8030
    %v8032 = vpop.f32.mrf.mxu0
    %v8033 = vadd.f32 %v7842, %v8032
    %8034 = vmatmul.bf16.gmra.mxu0 %v7899
    %v8035 = vpop.f32.mrf.mxu0
    %v8036 = vadd.f32 %v7842, %v8035
    %v8037 = vpop.f32.mrf.mxu0
    %v8038 = vadd.f32 %v7842, %v8037
    %8039 = vmatmul.bf16.gmra.mxu0 %v7902
    %v8040 = vpop.f32.mrf.mxu0
    %v8041 = vadd.f32 %v7842, %v8040
    %v8042 = vpop.f32.mrf.mxu0
    %v8043 = vadd.f32 %v7842, %v8042
    %8044 = vmatmul.bf16.gmra.mxu0 %v7905
    %v8045 = vpop.f32.mrf.mxu0
    %v8046 = vadd.f32 %v7842, %v8045
    %v8047 = vpop.f32.mrf.mxu0
    %v8048 = vadd.f32 %v7842, %v8047
    %8049 = vmatmul.bf16.gmra.mxu0 %v7908
    %v8050 = vpop.f32.mrf.mxu0
    %v8051 = vadd.f32 %v7842, %v8050
    %v8052 = vpop.f32.mrf.mxu0
    %v8053 = vadd.f32 %v7842, %v8052
    %8054 = vmatmul.bf16.gmra.mxu0 %v7911
    %v8055 = vpop.f32.mrf.mxu0
    %v8056 = vadd.f32 %v7842, %v8055
    %v8057 = vpop.f32.mrf.mxu0
    %v8058 = vadd.f32 %v7842, %v8057
    %8059 = vmatmul.bf16.gmra.mxu0 %v7914
    %v8060 = vpop.f32.mrf.mxu0
    %v8061 = vadd.f32 %v7842, %v8060
    %v8062 = vpop.f32.mrf.mxu0
    %v8063 = vadd.f32 %v7842, %v8062
    %8064 = vmatmul.bf16.gmra.mxu0 %v7917
    %v8065 = vpop.f32.mrf.mxu0
    %v8066 = vadd.f32 %v7842, %v8065
    %v8067 = vpop.f32.mrf.mxu0
    %v8068 = vadd.f32 %v7842, %v8067
    %8069 = vmatmul.bf16.gmra.mxu0 %v7920
    %v8070 = vpop.f32.mrf.mxu0
    %v8071 = vadd.f32 %v7842, %v8070
    %v8072 = vpop.f32.mrf.mxu0
    %v8073 = vadd.f32 %v7842, %v8072
    %8074 = vmatmul.bf16.gmra.mxu0 %v7923
    %v8075 = vpop.f32.mrf.mxu0
    %v8076 = vadd.f32 %v7842, %v8075
    %v8077 = vpop.f32.mrf.mxu0
    %v8078 = vadd.f32 %v7842, %v8077
    %8079 = vmatmul.bf16.gmra.mxu0 %v7926
    %v8080 = vpop.f32.mrf.mxu0
    %v8081 = vadd.f32 %v7842, %v8080
    %v8082 = vpop.f32.mrf.mxu0
    %v8083 = vadd.f32 %v7842, %v8082
    %8084 = vmatmul.bf16.gmra.mxu0 %v7929
    %v8085 = vpop.f32.mrf.mxu0
    %v8086 = vadd.f32 %v7842, %v8085
    %v8087 = vpop.f32.mrf.mxu0
    %v8088 = vadd.f32 %v7842, %v8087
    %8089 = vmatmul.bf16.gmra.mxu0 %v7932
    %v8090 = vpop.f32.mrf.mxu0
    %v8091 = vadd.f32 %v7842, %v8090
    %v8092 = vpop.f32.mrf.mxu0
    %v8093 = vadd.f32 %v7842, %v8092
    %8094 = vmatmul.bf16.gmra.mxu0 %v7935
    %v8095 = vpop.f32.mrf.mxu0
    %v8096 = vadd.f32 %v7842, %v8095
    %v8097 = vpop.f32.mrf.mxu0
    %v8098 = vadd.f32 %v7842, %v8097
    %8099 = vmatmul.bf16.gmra.mxu0 %v7938
    %v8100 = vpop.f32.mrf.mxu0
    %v8101 = vadd.f32 %v7842, %v8100
    %v8102 = vpop.f32.mrf.mxu0
    %v8103 = vadd.f32 %v7842, %v8102
    %8104 = vmatmul.bf16.gmra.mxu0 %v7941
    %v8105 = vpop.f32.mrf.mxu0
    %v8106 = vadd.f32 %v7842, %v8105
    %v8107 = vpop.f32.mrf.mxu0
    %v8108 = vadd.f32 %v7842, %v8107
    %8109 = vmatmul.bf16.gmra.mxu0 %v7944
    %v8110 = vpop.f32.mrf.mxu0
    %v8111 = vadd.f32 %v7842, %v8110
    %v8112 = vpop.f32.mrf.mxu0
    %v8113 = vadd.f32 %v7842, %v8112
    %8114 = vdwg.mxu0
    %v8115 = vmax.f32 %v7956, 0.0
    %v8116 = vmax.f32 %v7958, 0.0
    %v8117 = vmax.f32 %v7961, 0.0
    %v8118 = vmax.f32 %v7963, 0.0
    %v8119 = vmax.f32 %v7966, 0.0
    %v8120 = vmax.f32 %v7968, 0.0
    %v8121 = vmax.f32 %v7971, 0.0
    %v8122 = vmax.f32 %v7973, 0.0
    %v8123 = vmax.f32 %v7976, 0.0
    %v8124 = vmax.f32 %v7978, 0.0
    %v8125 = vmax.f32 %v7981, 0.0
    %v8126 = vmax.f32 %v7983, 0.0
    %v8127 = vmax.f32 %v7986, 0.0
    %v8128 = vmax.f32 %v7988, 0.0
    %v8129 = vmax.f32 %v7991, 0.0
    %v8130 = vmax.f32 %v7993, 0.0
    %v8131 = vmax.f32 %v7996, 0.0
    %v8132 = vmax.f32 %v7998, 0.0
    %v8133 = vmax.f32 %v8001, 0.0
    %v8134 = vmax.f32 %v8003, 0.0
    %v8135 = vmax.f32 %v8006, 0.0
    %v8136 = vmax.f32 %v8008, 0.0
    %v8137 = vmax.f32 %v8011, 0.0
    %v8138 = vmax.f32 %v8013, 0.0
    %v8139 = vmax.f32 %v8016, 0.0
    %v8140 = vmax.f32 %v8018, 0.0
    %v8141 = vmax.f32 %v8021, 0.0
    %v8142 = vmax.f32 %v8023, 0.0
    %v8143 = vmax.f32 %v8026, 0.0
    %v8144 = vmax.f32 %v8028, 0.0
    %v8145 = vmax.f32 %v8031, 0.0
    %v8146 = vmax.f32 %v8033, 0.0
    %v8147 = vmax.f32 %v8036, 0.0
    %v8148 = vmax.f32 %v8038, 0.0
    %v8149 = vmax.f32 %v8041, 0.0
    %v8150 = vmax.f32 %v8043, 0.0
    %v8151 = vmax.f32 %v8046, 0.0
    %v8152 = vmax.f32 %v8048, 0.0
    %v8153 = vmax.f32 %v8051, 0.0
    %v8154 = vmax.f32 %v8053, 0.0
    %v8155 = vmax.f32 %v8056, 0.0
    %v8156 = vmax.f32 %v8058, 0.0
    %v8157 = vmax.f32 %v8061, 0.0
    %v8158 = vmax.f32 %v8063, 0.0
    %v8159 = vmax.f32 %v8066, 0.0
    %v8160 = vmax.f32 %v8068, 0.0
    %v8161 = vmax.f32 %v8071, 0.0
    %v8162 = vmax.f32 %v8073, 0.0
    %v8163 = vmax.f32 %v8076, 0.0
    %v8164 = vmax.f32 %v8078, 0.0
    %v8165 = vmax.f32 %v8081, 0.0
    %v8166 = vmax.f32 %v8083, 0.0
    %v8167 = vmax.f32 %v8086, 0.0
    %v8168 = vmax.f32 %v8088, 0.0
    %v8169 = vmax.f32 %v8091, 0.0
    %v8170 = vmax.f32 %v8093, 0.0
    %v8171 = vmax.f32 %v8096, 0.0
    %v8172 = vmax.f32 %v8098, 0.0
    %v8173 = vmax.f32 %v8101, 0.0
    %v8174 = vmax.f32 %v8103, 0.0
    %v8175 = vmax.f32 %v8106, 0.0
    %v8176 = vmax.f32 %v8108, 0.0
    %v8177 = vmax.f32 %v8111, 0.0
    %v8178 = vmax.f32 %v8113, 0.0
    %v8179 = vld [vmem:[#allocation13] sm:$0xff]
    %v8180 = vld [vmem:[#allocation13 + $0x8] sm:$0xff]
    %v8181 = vld [vmem:[#allocation13 + $0x10] sm:$0xff]
    %v8182 = vld [vmem:[#allocation13 + $0x18] sm:$0xff]
    %v8183 = vld [vmem:[#allocation13 + $0x20] sm:$0xff]
    %v8184 = vld [vmem:[#allocation13 + $0x28] sm:$0xff]
    %v8185 = vld [vmem:[#allocation13 + $0x30] sm:$0xff]
    %v8186 = vld [vmem:[#allocation13 + $0x38] sm:$0xff]
    %v8187 = vld [vmem:[#allocation13 + $0x40] sm:$0xff]
    %v8188 = vld [vmem:[#allocation13 + $0x48] sm:$0xff]
    %v8189 = vld [vmem:[#allocation13 + $0x50] sm:$0xff]
    %v8190 = vld [vmem:[#allocation13 + $0x58] sm:$0xff]
    %v8191 = vld [vmem:[#allocation13 + $0x60] sm:$0xff]
    %v8192 = vld [vmem:[#allocation13 + $0x68] sm:$0xff]
    %v8193 = vld [vmem:[#allocation13 + $0x70] sm:$0xff]
    %v8194 = vld [vmem:[#allocation13 + $0x78] sm:$0xff]
    %v8195 = vld [vmem:[#allocation13 + $0x80] sm:$0xff]
    %v8196 = vld [vmem:[#allocation13 + $0x88] sm:$0xff]
    %v8197 = vld [vmem:[#allocation13 + $0x90] sm:$0xff]
    %v8198 = vld [vmem:[#allocation13 + $0x98] sm:$0xff]
    %v8199 = vld [vmem:[#allocation13 + $0xa0] sm:$0xff]
    %v8200 = vld [vmem:[#allocation13 + $0xa8] sm:$0xff]
    %v8201 = vld [vmem:[#allocation13 + $0xb0] sm:$0xff]
    %v8202 = vld [vmem:[#allocation13 + $0xb8] sm:$0xff]
    %v8203 = vld [vmem:[#allocation13 + $0xc0] sm:$0xff]
    %v8204 = vld [vmem:[#allocation13 + $0xc8] sm:$0xff]
    %v8205 = vld [vmem:[#allocation13 + $0xd0] sm:$0xff]
    %v8206 = vld [vmem:[#allocation13 + $0xd8] sm:$0xff]
    %v8207 = vld [vmem:[#allocation13 + $0xe0] sm:$0xff]
    %v8208 = vld [vmem:[#allocation13 + $0xe8] sm:$0xff]
    %v8209 = vld [vmem:[#allocation13 + $0xf0] sm:$0xff]
    %v8210 = vld [vmem:[#allocation13 + $0xf8] sm:$0xff]
    %v8211 = vpack.c.bf16 %v8116, %v8115
    %v8212 = vpack.c.bf16 %v8118, %v8117
    %v8213 = vpack.c.bf16 %v8120, %v8119
    %v8214 = vpack.c.bf16 %v8122, %v8121
    %v8215 = vpack.c.bf16 %v8124, %v8123
    %v8216 = vpack.c.bf16 %v8126, %v8125
    %v8217 = vpack.c.bf16 %v8128, %v8127
    %v8218 = vpack.c.bf16 %v8130, %v8129
    %v8219 = vpack.c.bf16 %v8132, %v8131
    %v8220 = vpack.c.bf16 %v8134, %v8133
    %v8221 = vpack.c.bf16 %v8136, %v8135
    %v8222 = vpack.c.bf16 %v8138, %v8137
    %v8223 = vpack.c.bf16 %v8140, %v8139
    %v8224 = vpack.c.bf16 %v8142, %v8141
    %v8225 = vpack.c.bf16 %v8144, %v8143
    %v8226 = vpack.c.bf16 %v8146, %v8145
    %v8227 = vpack.c.bf16 %v8148, %v8147
    %v8228 = vpack.c.bf16 %v8150, %v8149
    %v8229 = vpack.c.bf16 %v8152, %v8151
    %v8230 = vpack.c.bf16 %v8154, %v8153
    %v8231 = vpack.c.bf16 %v8156, %v8155
    %v8232 = vpack.c.bf16 %v8158, %v8157
    %v8233 = vpack.c.bf16 %v8160, %v8159
    %v8234 = vpack.c.bf16 %v8162, %v8161
    %v8235 = vpack.c.bf16 %v8164, %v8163
    %v8236 = vpack.c.bf16 %v8166, %v8165
    %v8237 = vpack.c.bf16 %v8168, %v8167
    %v8238 = vpack.c.bf16 %v8170, %v8169
    %v8239 = vpack.c.bf16 %v8172, %v8171
    %v8240 = vpack.c.bf16 %v8174, %v8173
    %v8241 = vpack.c.bf16 %v8176, %v8175
    %v8242 = vpack.c.bf16 %v8178, %v8177
    %v8275 = vunpack.c.l.b16 %v8179
    %v8276 = vunpack.c.h.b16 %v8179
    %v8277 = vunpack.c.l.b16 %v8180
    %v8278 = vunpack.c.h.b16 %v8180
    %v8279 = vunpack.c.l.b16 %v8181
    %v8280 = vunpack.c.h.b16 %v8181
    %v8281 = vunpack.c.l.b16 %v8182
    %v8282 = vunpack.c.h.b16 %v8182
    %v8283 = vunpack.c.l.b16 %v8183
    %v8284 = vunpack.c.h.b16 %v8183
    %v8285 = vunpack.c.l.b16 %v8184
    %v8286 = vunpack.c.h.b16 %v8184
    %v8287 = vunpack.c.l.b16 %v8185
    %v8288 = vunpack.c.h.b16 %v8185
    %v8289 = vunpack.c.l.b16 %v8186
    %v8290 = vunpack.c.h.b16 %v8186
    %v8291 = vunpack.c.l.b16 %v8187
    %v8292 = vunpack.c.h.b16 %v8187
    %v8293 = vunpack.c.l.b16 %v8188
    %v8294 = vunpack.c.h.b16 %v8188
    %v8295 = vunpack.c.l.b16 %v8189
    %v8296 = vunpack.c.h.b16 %v8189
    %v8297 = vunpack.c.l.b16 %v8190
    %v8298 = vunpack.c.h.b16 %v8190
    %v8299 = vunpack.c.l.b16 %v8191
    %v8300 = vunpack.c.h.b16 %v8191
    %v8301 = vunpack.c.l.b16 %v8192
    %v8302 = vunpack.c.h.b16 %v8192
    %v8303 = vunpack.c.l.b16 %v8193
    %v8304 = vunpack.c.h.b16 %v8193
    %v8305 = vunpack.c.l.b16 %v8194
    %v8306 = vunpack.c.h.b16 %v8194
    %v8307 = vunpack.c.l.b16 %v8195
    %v8308 = vunpack.c.h.b16 %v8195
    %v8309 = vunpack.c.l.b16 %v8196
    %v8310 = vunpack.c.h.b16 %v8196
    %v8311 = vunpack.c.l.b16 %v8197
    %v8312 = vunpack.c.h.b16 %v8197
    %v8313 = vunpack.c.l.b16 %v8198
    %v8314 = vunpack.c.h.b16 %v8198
    %v8315 = vunpack.c.l.b16 %v8199
    %v8316 = vunpack.c.h.b16 %v8199
    %v8317 = vunpack.c.l.b16 %v8200
    %v8318 = vunpack.c.h.b16 %v8200
    %v8319 = vunpack.c.l.b16 %v8201
    %v8320 = vunpack.c.h.b16 %v8201
    %v8321 = vunpack.c.l.b16 %v8202
    %v8322 = vunpack.c.h.b16 %v8202
    %v8323 = vunpack.c.l.b16 %v8203
    %v8324 = vunpack.c.h.b16 %v8203
    %v8325 = vunpack.c.l.b16 %v8204
    %v8326 = vunpack.c.h.b16 %v8204
    %v8327 = vunpack.c.l.b16 %v8205
    %v8328 = vunpack.c.h.b16 %v8205
    %v8329 = vunpack.c.l.b16 %v8206
    %v8330 = vunpack.c.h.b16 %v8206
    %v8331 = vunpack.c.l.b16 %v8207
    %v8332 = vunpack.c.h.b16 %v8207
    %v8333 = vunpack.c.l.b16 %v8208
    %v8334 = vunpack.c.h.b16 %v8208
    %v8335 = vunpack.c.l.b16 %v8209
    %v8336 = vunpack.c.h.b16 %v8209
    %v8337 = vunpack.c.l.b16 %v8210
    %v8338 = vunpack.c.h.b16 %v8210
    %v8339 = vpack.c.b16 %v8279, %v8275
    %v8340 = vpack.c.b16 %v8280, %v8276
    %v8341 = vpack.c.b16 %v8281, %v8277
    %v8342 = vpack.c.b16 %v8282, %v8278
    %v8343 = vpack.c.b16 %v8287, %v8283
    %v8344 = vpack.c.b16 %v8288, %v8284
    %v8345 = vpack.c.b16 %v8289, %v8285
    %v8346 = vpack.c.b16 %v8290, %v8286
    %v8347 = vpack.c.b16 %v8295, %v8291
    %v8348 = vpack.c.b16 %v8296, %v8292
    %v8349 = vpack.c.b16 %v8297, %v8293
    %v8350 = vpack.c.b16 %v8298, %v8294
    %v8351 = vpack.c.b16 %v8303, %v8299
    %v8352 = vpack.c.b16 %v8304, %v8300
    %v8353 = vpack.c.b16 %v8305, %v8301
    %v8354 = vpack.c.b16 %v8306, %v8302
    %v8355 = vpack.c.b16 %v8311, %v8307
    %v8356 = vpack.c.b16 %v8312, %v8308
    %v8357 = vpack.c.b16 %v8313, %v8309
    %v8358 = vpack.c.b16 %v8314, %v8310
    %v8359 = vpack.c.b16 %v8319, %v8315
    %v8360 = vpack.c.b16 %v8320, %v8316
    %v8361 = vpack.c.b16 %v8321, %v8317
    %v8362 = vpack.c.b16 %v8322, %v8318
    %v8363 = vpack.c.b16 %v8327, %v8323
    %v8364 = vpack.c.b16 %v8328, %v8324
    %v8365 = vpack.c.b16 %v8329, %v8325
    %v8366 = vpack.c.b16 %v8330, %v8326
    %v8367 = vpack.c.b16 %v8335, %v8331
    %v8368 = vpack.c.b16 %v8336, %v8332
    %v8369 = vpack.c.b16 %v8337, %v8333
    %v8370 = vpack.c.b16 %v8338, %v8334
    %8403 = vmatpush.bf16.msra.mxu0 %v8218
    %8404 = vmatpush.bf16.msra.mxu0 %v8217
    %8405 = vmatpush.bf16.msra.mxu0 %v8216
    %8406 = vmatpush.bf16.msra.mxu0 %v8215
    %8407 = vmatpush.bf16.msra.mxu0 %v8214
    %8408 = vmatpush.bf16.msra.mxu0 %v8213
    %8409 = vmatpush.bf16.msra.mxu0 %v8212
    %8410 = vmatpush.bf16.msra.mxu0 %v8211
    %8411 = vmatmul.bf16.gmra.mxu0 %v8339
    %v8412 = vpop.f32.mrf.mxu0
    %v8413 = vadd.f32 0.0, %v8412
    %v8414 = vpop.f32.mrf.mxu0
    %v8415 = vadd.f32 0.0, %v8414
    %8416 = vmatmul.bf16.gmra.mxu0 %v8343
    %v8417 = vpop.f32.mrf.mxu0
    %v8418 = vadd.f32 0.0, %v8417
    %v8419 = vpop.f32.mrf.mxu0
    %v8420 = vadd.f32 0.0, %v8419
    %8421 = vmatmul.bf16.gmra.mxu0 %v8347
    %v8422 = vpop.f32.mrf.mxu0
    %v8423 = vadd.f32 0.0, %v8422
    %v8424 = vpop.f32.mrf.mxu0
    %v8425 = vadd.f32 0.0, %v8424
    %8426 = vmatmul.bf16.gmra.mxu0 %v8351
    %v8427 = vpop.f32.mrf.mxu0
    %v8428 = vadd.f32 0.0, %v8427
    %v8429 = vpop.f32.mrf.mxu0
    %v8430 = vadd.f32 0.0, %v8429
    %8431 = vmatmul.bf16.gmra.mxu0 %v8355
    %v8432 = vpop.f32.mrf.mxu0
    %v8433 = vadd.f32 0.0, %v8432
    %v8434 = vpop.f32.mrf.mxu0
    %v8435 = vadd.f32 0.0, %v8434
    %8436 = vmatmul.bf16.gmra.mxu0 %v8359
    %v8437 = vpop.f32.mrf.mxu0
    %v8438 = vadd.f32 0.0, %v8437
    %v8439 = vpop.f32.mrf.mxu0
    %v8440 = vadd.f32 0.0, %v8439
    %8441 = vmatmul.bf16.gmra.mxu0 %v8363
    %v8442 = vpop.f32.mrf.mxu0
    %v8443 = vadd.f32 0.0, %v8442
    %v8444 = vpop.f32.mrf.mxu0
    %v8445 = vadd.f32 0.0, %v8444
    %8446 = vmatmul.bf16.gmra.mxu0 %v8367
    %v8447 = vpop.f32.mrf.mxu0
    %v8448 = vadd.f32 0.0, %v8447
    %v8449 = vpop.f32.mrf.mxu0
    %v8450 = vadd.f32 0.0, %v8449
    %8451 = vdwg.mxu0
    %8452 = vmatpush.bf16.msra.mxu0 %v8226
    %8453 = vmatpush.bf16.msra.mxu0 %v8225
    %8454 = vmatpush.bf16.msra.mxu0 %v8224
    %8455 = vmatpush.bf16.msra.mxu0 %v8223
    %8456 = vmatpush.bf16.msra.mxu0 %v8222
    %8457 = vmatpush.bf16.msra.mxu0 %v8221
    %8458 = vmatpush.bf16.msra.mxu0 %v8220
    %8459 = vmatpush.bf16.msra.mxu0 %v8219
    %8460 = vmatmul.bf16.gmra.mxu0 %v8340
    %v8461 = vpop.f32.mrf.mxu0
    %v8462 = vadd.f32 %v8413, %v8461
    %v8463 = vpop.f32.mrf.mxu0
    %v8464 = vadd.f32 %v8415, %v8463
    %8465 = vmatmul.bf16.gmra.mxu0 %v8344
    %v8466 = vpop.f32.mrf.mxu0
    %v8467 = vadd.f32 %v8418, %v8466
    %v8468 = vpop.f32.mrf.mxu0
    %v8469 = vadd.f32 %v8420, %v8468
    %8470 = vmatmul.bf16.gmra.mxu0 %v8348
    %v8471 = vpop.f32.mrf.mxu0
    %v8472 = vadd.f32 %v8423, %v8471
    %v8473 = vpop.f32.mrf.mxu0
    %v8474 = vadd.f32 %v8425, %v8473
    %8475 = vmatmul.bf16.gmra.mxu0 %v8352
    %v8476 = vpop.f32.mrf.mxu0
    %v8477 = vadd.f32 %v8428, %v8476
    %v8478 = vpop.f32.mrf.mxu0
    %v8479 = vadd.f32 %v8430, %v8478
    %8480 = vmatmul.bf16.gmra.mxu0 %v8356
    %v8481 = vpop.f32.mrf.mxu0
    %v8482 = vadd.f32 %v8433, %v8481
    %v8483 = vpop.f32.mrf.mxu0
    %v8484 = vadd.f32 %v8435, %v8483
    %8485 = vmatmul.bf16.gmra.mxu0 %v8360
    %v8486 = vpop.f32.mrf.mxu0
    %v8487 = vadd.f32 %v8438, %v8486
    %v8488 = vpop.f32.mrf.mxu0
    %v8489 = vadd.f32 %v8440, %v8488
    %8490 = vmatmul.bf16.gmra.mxu0 %v8364
    %v8491 = vpop.f32.mrf.mxu0
    %v8492 = vadd.f32 %v8443, %v8491
    %v8493 = vpop.f32.mrf.mxu0
    %v8494 = vadd.f32 %v8445, %v8493
    %8495 = vmatmul.bf16.gmra.mxu0 %v8368
    %v8496 = vpop.f32.mrf.mxu0
    %v8497 = vadd.f32 %v8448, %v8496
    %v8498 = vpop.f32.mrf.mxu0
    %v8499 = vadd.f32 %v8450, %v8498
    %8500 = vdwg.mxu0
    %8501 = vmatpush.bf16.msra.mxu0 %v8234
    %8502 = vmatpush.bf16.msra.mxu0 %v8233
    %8503 = vmatpush.bf16.msra.mxu0 %v8232
    %8504 = vmatpush.bf16.msra.mxu0 %v8231
    %8505 = vmatpush.bf16.msra.mxu0 %v8230
    %8506 = vmatpush.bf16.msra.mxu0 %v8229
    %8507 = vmatpush.bf16.msra.mxu0 %v8228
    %8508 = vmatpush.bf16.msra.mxu0 %v8227
    %8509 = vmatmul.bf16.gmra.mxu0 %v8341
    %v8510 = vpop.f32.mrf.mxu0
    %v8511 = vadd.f32 %v8462, %v8510
    %v8512 = vpop.f32.mrf.mxu0
    %v8513 = vadd.f32 %v8464, %v8512
    %8514 = vmatmul.bf16.gmra.mxu0 %v8345
    %v8515 = vpop.f32.mrf.mxu0
    %v8516 = vadd.f32 %v8467, %v8515
    %v8517 = vpop.f32.mrf.mxu0
    %v8518 = vadd.f32 %v8469, %v8517
    %8519 = vmatmul.bf16.gmra.mxu0 %v8349
    %v8520 = vpop.f32.mrf.mxu0
    %v8521 = vadd.f32 %v8472, %v8520
    %v8522 = vpop.f32.mrf.mxu0
    %v8523 = vadd.f32 %v8474, %v8522
    %8524 = vmatmul.bf16.gmra.mxu0 %v8353
    %v8525 = vpop.f32.mrf.mxu0
    %v8526 = vadd.f32 %v8477, %v8525
    %v8527 = vpop.f32.mrf.mxu0
    %v8528 = vadd.f32 %v8479, %v8527
    %8529 = vmatmul.bf16.gmra.mxu0 %v8357
    %v8530 = vpop.f32.mrf.mxu0
    %v8531 = vadd.f32 %v8482, %v8530
    %v8532 = vpop.f32.mrf.mxu0
    %v8533 = vadd.f32 %v8484, %v8532
    %8534 = vmatmul.bf16.gmra.mxu0 %v8361
    %v8535 = vpop.f32.mrf.mxu0
    %v8536 = vadd.f32 %v8487, %v8535
    %v8537 = vpop.f32.mrf.mxu0
    %v8538 = vadd.f32 %v8489, %v8537
    %8539 = vmatmul.bf16.gmra.mxu0 %v8365
    %v8540 = vpop.f32.mrf.mxu0
    %v8541 = vadd.f32 %v8492, %v8540
    %v8542 = vpop.f32.mrf.mxu0
    %v8543 = vadd.f32 %v8494, %v8542
    %8544 = vmatmul.bf16.gmra.mxu0 %v8369
    %v8545 = vpop.f32.mrf.mxu0
    %v8546 = vadd.f32 %v8497, %v8545
    %v8547 = vpop.f32.mrf.mxu0
    %v8548 = vadd.f32 %v8499, %v8547
    %8549 = vdwg.mxu0
    %8550 = vmatpush.bf16.msra.mxu0 %v8242
    %8551 = vmatpush.bf16.msra.mxu0 %v8241
    %8552 = vmatpush.bf16.msra.mxu0 %v8240
    %8553 = vmatpush.bf16.msra.mxu0 %v8239
    %8554 = vmatpush.bf16.msra.mxu0 %v8238
    %8555 = vmatpush.bf16.msra.mxu0 %v8237
    %8556 = vmatpush.bf16.msra.mxu0 %v8236
    %8557 = vmatpush.bf16.msra.mxu0 %v8235
    %8558 = vmatmul.bf16.gmra.mxu0 %v8342
    %v8559 = vpop.f32.mrf.mxu0
    %v8560 = vadd.f32 %v8511, %v8559
    %v8561 = vpop.f32.mrf.mxu0
    %v8562 = vadd.f32 %v8513, %v8561
    %8563 = vmatmul.bf16.gmra.mxu0 %v8346
    %v8564 = vpop.f32.mrf.mxu0
    %v8565 = vadd.f32 %v8516, %v8564
    %v8566 = vpop.f32.mrf.mxu0
    %v8567 = vadd.f32 %v8518, %v8566
    %8568 = vmatmul.bf16.gmra.mxu0 %v8350
    %v8569 = vpop.f32.mrf.mxu0
    %v8570 = vadd.f32 %v8521, %v8569
    %v8571 = vpop.f32.mrf.mxu0
    %v8572 = vadd.f32 %v8523, %v8571
    %8573 = vmatmul.bf16.gmra.mxu0 %v8354
    %v8574 = vpop.f32.mrf.mxu0
    %v8575 = vadd.f32 %v8526, %v8574
    %v8576 = vpop.f32.mrf.mxu0
    %v8577 = vadd.f32 %v8528, %v8576
    %8578 = vmatmul.bf16.gmra.mxu0 %v8358
    %v8579 = vpop.f32.mrf.mxu0
    %v8580 = vadd.f32 %v8531, %v8579
    %v8581 = vpop.f32.mrf.mxu0
    %v8582 = vadd.f32 %v8533, %v8581
    %8583 = vmatmul.bf16.gmra.mxu0 %v8362
    %v8584 = vpop.f32.mrf.mxu0
    %v8585 = vadd.f32 %v8536, %v8584
    %v8586 = vpop.f32.mrf.mxu0
    %v8587 = vadd.f32 %v8538, %v8586
    %8588 = vmatmul.bf16.gmra.mxu0 %v8366
    %v8589 = vpop.f32.mrf.mxu0
    %v8590 = vadd.f32 %v8541, %v8589
    %v8591 = vpop.f32.mrf.mxu0
    %v8592 = vadd.f32 %v8543, %v8591
    %8593 = vmatmul.bf16.gmra.mxu0 %v8370
    %v8594 = vpop.f32.mrf.mxu0
    %v8595 = vadd.f32 %v8546, %v8594
    %v8596 = vpop.f32.mrf.mxu0
    %v8597 = vadd.f32 %v8548, %v8596
    %8598 = vdwg.mxu0
    %v8599 = vpack.c.bf16 %v8562, %v8560
    %v8600 = vpack.c.bf16 %v8567, %v8565
    %v8601 = vpack.c.bf16 %v8572, %v8570
    %v8602 = vpack.c.bf16 %v8577, %v8575
    %v8603 = vpack.c.bf16 %v8582, %v8580
    %v8604 = vpack.c.bf16 %v8587, %v8585
    %v8605 = vpack.c.bf16 %v8592, %v8590
    %v8606 = vpack.c.bf16 %v8597, %v8595
    %v8607 = vld [vmem:[#allocation6] sm:$0xf]
    %v8608 = vld [vmem:[#allocation6 + $0x4] sm:$0xf]
    %v8609 = vld [vmem:[#allocation6 + $0x8] sm:$0xf]
    %v8610 = vld [vmem:[#allocation6 + $0xc] sm:$0xf]
    %v8611 = vld [vmem:[#allocation10 + $0x2] ss:$0 sm:$0xff]
    %v8616 = vunpack.c.l.b16 %v8607
    %v8617 = vunpack.c.l.b16 %v8608
    %v8618 = vunpack.c.l.b16 %v8609
    %v8619 = vunpack.c.l.b16 %v8610
    %v8620 = vpack.c.b16 %v8617, %v8616
    %v8621 = vpack.c.b16 %v8619, %v8618
    %vm8624 = vcmask 261120
    %v8626 = vsel %vm8624, %v8599, 0
    %v8629 = vsel %vm8624, %v8600, 0
    %v8632 = vsel %vm8624, %v8601, 0
    %v8635 = vsel %vm8624, %v8602, 0
    %v8638 = vsel %vm8624, %v8603, 0
    %v8641 = vsel %vm8624, %v8604, 0
    %v8644 = vsel %vm8624, %v8605, 0
    %v8647 = vsel %vm8624, %v8606, 0
    %8649 = vmatpush.bf16.msra.mxu0 0
    %8650 = vmatpush.bf16.msra.mxu0 0
    %8651 = vmatpush.bf16.msra.mxu0 0
    %8652 = vmatpush.bf16.msra.mxu0 0
    %8653 = vmatpush.bf16.msra.mxu0 0
    %8654 = vmatpush.bf16.msra.mxu0 0
    %8655 = vmatpush.bf16.msra.mxu0 %v8621
    %8656 = vmatpush.bf16.msra.mxu0 %v8620
    %8657 = vmatmul.bf16.gmra.mxu0 %v8626
    %v8658 = vpop.f32.mrf.mxu0
    %v8659 = vadd.f32 %v8611, %v8658
    %v8660 = vpop.f32.mrf.mxu0
    %v8661 = vadd.f32 %v8611, %v8660
    %8662 = vmatmul.bf16.gmra.mxu0 %v8629
    %v8663 = vpop.f32.mrf.mxu0
    %v8664 = vadd.f32 %v8611, %v8663
    %v8665 = vpop.f32.mrf.mxu0
    %v8666 = vadd.f32 %v8611, %v8665
    %8667 = vmatmul.bf16.gmra.mxu0 %v8632
    %v8668 = vpop.f32.mrf.mxu0
    %v8669 = vadd.f32 %v8611, %v8668
    %v8670 = vpop.f32.mrf.mxu0
    %v8671 = vadd.f32 %v8611, %v8670
    %8672 = vmatmul.bf16.gmra.mxu0 %v8635
    %v8673 = vpop.f32.mrf.mxu0
    %v8674 = vadd.f32 %v8611, %v8673
    %v8675 = vpop.f32.mrf.mxu0
    %v8676 = vadd.f32 %v8611, %v8675
    %8677 = vmatmul.bf16.gmra.mxu0 %v8638
    %v8678 = vpop.f32.mrf.mxu0
    %v8679 = vadd.f32 %v8611, %v8678
    %v8680 = vpop.f32.mrf.mxu0
    %v8681 = vadd.f32 %v8611, %v8680
    %8682 = vmatmul.bf16.gmra.mxu0 %v8641
    %v8683 = vpop.f32.mrf.mxu0
    %v8684 = vadd.f32 %v8611, %v8683
    %v8685 = vpop.f32.mrf.mxu0
    %v8686 = vadd.f32 %v8611, %v8685
    %8687 = vmatmul.bf16.gmra.mxu0 %v8644
    %v8688 = vpop.f32.mrf.mxu0
    %v8689 = vadd.f32 %v8611, %v8688
    %v8690 = vpop.f32.mrf.mxu0
    %v8691 = vadd.f32 %v8611, %v8690
    %8692 = vmatmul.bf16.gmra.mxu0 %v8647
    %v8693 = vpop.f32.mrf.mxu0
    %v8694 = vadd.f32 %v8611, %v8693
    %v8695 = vpop.f32.mrf.mxu0
    %v8696 = vadd.f32 %v8611, %v8695
    %8697 = vdwg.mxu0
    %v8698 = vmax.f32 %v8659, 0.0
    %v8699 = vmax.f32 %v8661, 0.0
    %v8700 = vmax.f32 %v8664, 0.0
    %v8701 = vmax.f32 %v8666, 0.0
    %v8702 = vmax.f32 %v8669, 0.0
    %v8703 = vmax.f32 %v8671, 0.0
    %v8704 = vmax.f32 %v8674, 0.0
    %v8705 = vmax.f32 %v8676, 0.0
    %v8706 = vmax.f32 %v8679, 0.0
    %v8707 = vmax.f32 %v8681, 0.0
    %v8708 = vmax.f32 %v8684, 0.0
    %v8709 = vmax.f32 %v8686, 0.0
    %v8710 = vmax.f32 %v8689, 0.0
    %v8711 = vmax.f32 %v8691, 0.0
    %v8712 = vmax.f32 %v8694, 0.0
    %v8713 = vmax.f32 %v8696, 0.0
    %v8714 = vld [vmem:[#allocation15] sm:$0xf]
    %v8715 = vld [vmem:[#allocation15 + $0x4] sm:$0xf]
    %v8716 = vld [vmem:[#allocation15 + $0x8] sm:$0xf]
    %v8717 = vld [vmem:[#allocation15 + $0xc] sm:$0xf]
    %v8718 = vpack.c.bf16 %v8699, %v8698
    %v8719 = vpack.c.bf16 %v8701, %v8700
    %v8720 = vpack.c.bf16 %v8703, %v8702
    %v8721 = vpack.c.bf16 %v8705, %v8704
    %v8722 = vpack.c.bf16 %v8707, %v8706
    %v8723 = vpack.c.bf16 %v8709, %v8708
    %v8724 = vpack.c.bf16 %v8711, %v8710
    %v8725 = vpack.c.bf16 %v8713, %v8712
    %v8730 = vunpack.c.l.b16 %v8714
    %v8731 = vunpack.c.l.b16 %v8715
    %v8732 = vunpack.c.l.b16 %v8716
    %v8733 = vunpack.c.l.b16 %v8717
    %v8734 = vpack.c.b16 %v8731, %v8730
    %v8735 = vpack.c.b16 %v8733, %v8732
    %8738 = vmatpush.bf16.msra.mxu0 %v8725
    %8739 = vmatpush.bf16.msra.mxu0 %v8724
    %8740 = vmatpush.bf16.msra.mxu0 %v8723
    %8741 = vmatpush.bf16.msra.mxu0 %v8722
    %8742 = vmatpush.bf16.msra.mxu0 %v8721
    %8743 = vmatpush.bf16.msra.mxu0 %v8720
    %8744 = vmatpush.bf16.msra.mxu0 %v8719
    %8745 = vmatpush.bf16.msra.mxu0 %v8718
    %8746 = vmatmul.bf16.gmra.mxu0 %v8734
    %v8747 = vpop.f32.mrf.mxu0
    %v8748 = vadd.f32 0.0, %v8747
    %v8749 = vpop.f32.mrf.mxu0
    %v8750 = vadd.f32 0.0, %v8749
    %8751 = vmatmul.bf16.gmra.mxu0 %v8735
    %v8752 = vpop.f32.mrf.mxu0
    %v8753 = vadd.f32 0.0, %v8752
    %v8754 = vpop.f32.mrf.mxu0
    %v8755 = vadd.f32 0.0, %v8754
    %8756 = vdwg.mxu0
    %v8757 = vpack.c.bf16 %v8750, %v8748
    %v8758 = vpack.c.bf16 %v8755, %v8753
    %v8759 = vld [vmem:[#allocation7] sm:$0xf]
    %v8760 = vld [vmem:[#allocation7 + $0x4] sm:$0xf]
    %v8761 = vld [vmem:[#allocation7 + $0x8] sm:$0xf]
    %v8762 = vld [vmem:[#allocation7 + $0xc] sm:$0xf]
    %v8763 = vld [vmem:[#allocation7 + $0x10] sm:$0xf]
    %v8764 = vld [vmem:[#allocation7 + $0x14] sm:$0xf]
    %v8765 = vld [vmem:[#allocation7 + $0x18] sm:$0xf]
    %v8766 = vld [vmem:[#allocation7 + $0x1c] sm:$0xf]
    %v8767 = vld [vmem:[#allocation10 + $0x3] ss:$0 sm:$0xff]
    %v8776 = vunpack.c.l.b16 %v8759
    %v8777 = vunpack.c.l.b16 %v8760
    %v8778 = vunpack.c.l.b16 %v8761
    %v8779 = vunpack.c.l.b16 %v8762
    %v8780 = vunpack.c.l.b16 %v8763
    %v8781 = vunpack.c.l.b16 %v8764
    %v8782 = vunpack.c.l.b16 %v8765
    %v8783 = vunpack.c.l.b16 %v8766
    %v8784 = vpack.c.b16 %v8777, %v8776
    %v8785 = vpack.c.b16 %v8779, %v8778
    %v8786 = vpack.c.b16 %v8781, %v8780
    %v8787 = vpack.c.b16 %v8783, %v8782
    %vm8792 = vcmask 523264
    %v8794 = vsel %vm8792, %v8757, 0
    %v8797 = vsel %vm8792, %v8758, 0
    %8799 = vmatpush.bf16.msra.mxu0 0
    %8800 = vmatpush.bf16.msra.mxu0 0
    %8801 = vmatpush.bf16.msra.mxu0 0
    %8802 = vmatpush.bf16.msra.mxu0 0
    %8803 = vmatpush.bf16.msra.mxu0 %v8787
    %8804 = vmatpush.bf16.msra.mxu0 %v8786
    %8805 = vmatpush.bf16.msra.mxu0 %v8785
    %8806 = vmatpush.bf16.msra.mxu0 %v8784
    %8807 = vmatmul.bf16.gmra.mxu0 %v8794
    %v8808 = vpop.f32.mrf.mxu0
    %v8809 = vadd.f32 %v8767, %v8808
    %v8810 = vpop.f32.mrf.mxu0
    %v8811 = vadd.f32 %v8767, %v8810
    %8812 = vmatmul.bf16.gmra.mxu0 %v8797
    %v8813 = vpop.f32.mrf.mxu0
    %v8814 = vadd.f32 %v8767, %v8813
    %v8815 = vpop.f32.mrf.mxu0
    %v8816 = vadd.f32 %v8767, %v8815
    %8817 = vdwg.mxu0
    %v8818 = vmax.f32 %v8809, 0.0
    %v8819 = vmax.f32 %v8811, 0.0
    %v8820 = vmax.f32 %v8814, 0.0
    %v8821 = vmax.f32 %v8816, 0.0
    %v8822 = vld [vmem:[#allocation16] sm:$0xf]
    %v8823 = vpack.c.bf16 %v8819, %v8818
    %v8824 = vpack.c.bf16 %v8821, %v8820
    %v8826 = vsel %vm8624, %v8822, 0
    %8828 = vmatpush.bf16.msra.mxu0 0
    %8829 = vmatpush.bf16.msra.mxu0 0
    %8830 = vmatpush.bf16.msra.mxu0 0
    %8831 = vmatpush.bf16.msra.mxu0 0
    %8832 = vmatpush.bf16.msra.mxu0 0
    %8833 = vmatpush.bf16.msra.mxu0 0
    %8834 = vmatpush.bf16.msra.mxu0 %v8824
    %8835 = vmatpush.bf16.msra.mxu0 %v8823
    %8836 = vmatmul.bf16.gmra.mxu0 %v8826
    %v8837 = vpop.f32.mrf.mxu0
    %v8838 = vadd.f32 0.0, %v8837
    %v8839 = vpop.f32.mrf.mxu0
    %8840 = vdwg.mxu0
    %v8841 = vpack.c.bf16 %v8838, %v8838
    %v8842 = vld [vmem:[%s5] sm:$0xff]
    %v8843 = vld [vmem:[%s5 + $0x8] sm:$0xff]
    %s8844 = scalar_lea.vmem [#allocation10], 4
    %v8845 = vld [vmem:[%s8844] ss:$8 sm:$0x3]
    %v8847 = vperm.slane %v8845, 0
    %v8848 = vperm.slane %v8845, 1
    %v8853 = vunpack.c.l.b16 %v8842
    %v8854 = vunpack.c.h.b16 %v8842
    %v8855 = vunpack.c.l.b16 %v8843
    %v8856 = vunpack.c.h.b16 %v8843
    %v8857 = vpack.c.b16 %v8855, %v8853
    %v8858 = vpack.c.b16 %v8856, %v8854
    %8861 = vmatpush.bf16.msra.mxu0 0
    %8862 = vmatpush.bf16.msra.mxu0 0
    %8863 = vmatpush.bf16.msra.mxu0 0
    %8864 = vmatpush.bf16.msra.mxu0 0
    %8865 = vmatpush.bf16.msra.mxu0 0
    %8866 = vmatpush.bf16.msra.mxu0 0
    %8867 = vmatpush.bf16.msra.mxu0 0
    %8868 = vmatpush.bf16.msra.mxu0 %v8857
    %8869 = vmatmul.bf16.gmra.mxu0 %v7851
    %v8870 = vpop.f32.mrf.mxu0
    %v8871 = vadd.f32 %v8847, %v8870
    %v8872 = vpop.f32.mrf.mxu0
    %v8873 = vadd.f32 %v8847, %v8872
    %8874 = vmatmul.bf16.gmra.mxu0 %v7854
    %v8875 = vpop.f32.mrf.mxu0
    %v8876 = vadd.f32 %v8847, %v8875
    %v8877 = vpop.f32.mrf.mxu0
    %v8878 = vadd.f32 %v8847, %v8877
    %8879 = vmatmul.bf16.gmra.mxu0 %v7857
    %v8880 = vpop.f32.mrf.mxu0
    %v8881 = vadd.f32 %v8847, %v8880
    %v8882 = vpop.f32.mrf.mxu0
    %v8883 = vadd.f32 %v8847, %v8882
    %8884 = vmatmul.bf16.gmra.mxu0 %v7860
    %v8885 = vpop.f32.mrf.mxu0
    %v8886 = vadd.f32 %v8847, %v8885
    %v8887 = vpop.f32.mrf.mxu0
    %v8888 = vadd.f32 %v8847, %v8887
    %8889 = vmatmul.bf16.gmra.mxu0 %v7863
    %v8890 = vpop.f32.mrf.mxu0
    %v8891 = vadd.f32 %v8847, %v8890
    %v8892 = vpop.f32.mrf.mxu0
    %v8893 = vadd.f32 %v8847, %v8892
    %8894 = vmatmul.bf16.gmra.mxu0 %v7866
    %v8895 = vpop.f32.mrf.mxu0
    %v8896 = vadd.f32 %v8847, %v8895
    %v8897 = vpop.f32.mrf.mxu0
    %v8898 = vadd.f32 %v8847, %v8897
    %8899 = vmatmul.bf16.gmra.mxu0 %v7869
    %v8900 = vpop.f32.mrf.mxu0
    %v8901 = vadd.f32 %v8847, %v8900
    %v8902 = vpop.f32.mrf.mxu0
    %v8903 = vadd.f32 %v8847, %v8902
    %8904 = vmatmul.bf16.gmra.mxu0 %v7872
    %v8905 = vpop.f32.mrf.mxu0
    %v8906 = vadd.f32 %v8847, %v8905
    %v8907 = vpop.f32.mrf.mxu0
    %v8908 = vadd.f32 %v8847, %v8907
    %8909 = vmatmul.bf16.gmra.mxu0 %v7875
    %v8910 = vpop.f32.mrf.mxu0
    %v8911 = vadd.f32 %v8847, %v8910
    %v8912 = vpop.f32.mrf.mxu0
    %v8913 = vadd.f32 %v8847, %v8912
    %8914 = vmatmul.bf16.gmra.mxu0 %v7878
    %v8915 = vpop.f32.mrf.mxu0
    %v8916 = vadd.f32 %v8847, %v8915
    %v8917 = vpop.f32.mrf.mxu0
    %v8918 = vadd.f32 %v8847, %v8917
    %8919 = vmatmul.bf16.gmra.mxu0 %v7881
    %v8920 = vpop.f32.mrf.mxu0
    %v8921 = vadd.f32 %v8847, %v8920
    %v8922 = vpop.f32.mrf.mxu0
    %v8923 = vadd.f32 %v8847, %v8922
    %8924 = vmatmul.bf16.gmra.mxu0 %v7884
    %v8925 = vpop.f32.mrf.mxu0
    %v8926 = vadd.f32 %v8847, %v8925
    %v8927 = vpop.f32.mrf.mxu0
    %v8928 = vadd.f32 %v8847, %v8927
    %8929 = vmatmul.bf16.gmra.mxu0 %v7887
    %v8930 = vpop.f32.mrf.mxu0
    %v8931 = vadd.f32 %v8847, %v8930
    %v8932 = vpop.f32.mrf.mxu0
    %v8933 = vadd.f32 %v8847, %v8932
    %8934 = vmatmul.bf16.gmra.mxu0 %v7890
    %v8935 = vpop.f32.mrf.mxu0
    %v8936 = vadd.f32 %v8847, %v8935
    %v8937 = vpop.f32.mrf.mxu0
    %v8938 = vadd.f32 %v8847, %v8937
    %8939 = vmatmul.bf16.gmra.mxu0 %v7893
    %v8940 = vpop.f32.mrf.mxu0
    %v8941 = vadd.f32 %v8847, %v8940
    %v8942 = vpop.f32.mrf.mxu0
    %v8943 = vadd.f32 %v8847, %v8942
    %8944 = vmatmul.bf16.gmra.mxu0 %v7896
    %v8945 = vpop.f32.mrf.mxu0
    %v8946 = vadd.f32 %v8847, %v8945
    %v8947 = vpop.f32.mrf.mxu0
    %v8948 = vadd.f32 %v8847, %v8947
    %8949 = vmatmul.bf16.gmra.mxu0 %v7899
    %v8950 = vpop.f32.mrf.mxu0
    %v8951 = vadd.f32 %v8847, %v8950
    %v8952 = vpop.f32.mrf.mxu0
    %v8953 = vadd.f32 %v8847, %v8952
    %8954 = vmatmul.bf16.gmra.mxu0 %v7902
    %v8955 = vpop.f32.mrf.mxu0
    %v8956 = vadd.f32 %v8847, %v8955
    %v8957 = vpop.f32.mrf.mxu0
    %v8958 = vadd.f32 %v8847, %v8957
    %8959 = vmatmul.bf16.gmra.mxu0 %v7905
    %v8960 = vpop.f32.mrf.mxu0
    %v8961 = vadd.f32 %v8847, %v8960
    %v8962 = vpop.f32.mrf.mxu0
    %v8963 = vadd.f32 %v8847, %v8962
    %8964 = vmatmul.bf16.gmra.mxu0 %v7908
    %v8965 = vpop.f32.mrf.mxu0
    %v8966 = vadd.f32 %v8847, %v8965
    %v8967 = vpop.f32.mrf.mxu0
    %v8968 = vadd.f32 %v8847, %v8967
    %8969 = vmatmul.bf16.gmra.mxu0 %v7911
    %v8970 = vpop.f32.mrf.mxu0
    %v8971 = vadd.f32 %v8847, %v8970
    %v8972 = vpop.f32.mrf.mxu0
    %v8973 = vadd.f32 %v8847, %v8972
    %8974 = vmatmul.bf16.gmra.mxu0 %v7914
    %v8975 = vpop.f32.mrf.mxu0
    %v8976 = vadd.f32 %v8847, %v8975
    %v8977 = vpop.f32.mrf.mxu0
    %v8978 = vadd.f32 %v8847, %v8977
    %8979 = vmatmul.bf16.gmra.mxu0 %v7917
    %v8980 = vpop.f32.mrf.mxu0
    %v8981 = vadd.f32 %v8847, %v8980
    %v8982 = vpop.f32.mrf.mxu0
    %v8983 = vadd.f32 %v8847, %v8982
    %8984 = vmatmul.bf16.gmra.mxu0 %v7920
    %v8985 = vpop.f32.mrf.mxu0
    %v8986 = vadd.f32 %v8847, %v8985
    %v8987 = vpop.f32.mrf.mxu0
    %v8988 = vadd.f32 %v8847, %v8987
    %8989 = vmatmul.bf16.gmra.mxu0 %v7923
    %v8990 = vpop.f32.mrf.mxu0
    %v8991 = vadd.f32 %v8847, %v8990
    %v8992 = vpop.f32.mrf.mxu0
    %v8993 = vadd.f32 %v8847, %v8992
    %8994 = vmatmul.bf16.gmra.mxu0 %v7926
    %v8995 = vpop.f32.mrf.mxu0
    %v8996 = vadd.f32 %v8847, %v8995
    %v8997 = vpop.f32.mrf.mxu0
    %v8998 = vadd.f32 %v8847, %v8997
    %8999 = vmatmul.bf16.gmra.mxu0 %v7929
    %v9000 = vpop.f32.mrf.mxu0
    %v9001 = vadd.f32 %v8847, %v9000
    %v9002 = vpop.f32.mrf.mxu0
    %v9003 = vadd.f32 %v8847, %v9002
    %9004 = vmatmul.bf16.gmra.mxu0 %v7932
    %v9005 = vpop.f32.mrf.mxu0
    %v9006 = vadd.f32 %v8847, %v9005
    %v9007 = vpop.f32.mrf.mxu0
    %v9008 = vadd.f32 %v8847, %v9007
    %9009 = vmatmul.bf16.gmra.mxu0 %v7935
    %v9010 = vpop.f32.mrf.mxu0
    %v9011 = vadd.f32 %v8847, %v9010
    %v9012 = vpop.f32.mrf.mxu0
    %v9013 = vadd.f32 %v8847, %v9012
    %9014 = vmatmul.bf16.gmra.mxu0 %v7938
    %v9015 = vpop.f32.mrf.mxu0
    %v9016 = vadd.f32 %v8847, %v9015
    %v9017 = vpop.f32.mrf.mxu0
    %v9018 = vadd.f32 %v8847, %v9017
    %9019 = vmatmul.bf16.gmra.mxu0 %v7941
    %v9020 = vpop.f32.mrf.mxu0
    %v9021 = vadd.f32 %v8847, %v9020
    %v9022 = vpop.f32.mrf.mxu0
    %v9023 = vadd.f32 %v8847, %v9022
    %9024 = vmatmul.bf16.gmra.mxu0 %v7944
    %v9025 = vpop.f32.mrf.mxu0
    %v9026 = vadd.f32 %v8847, %v9025
    %v9027 = vpop.f32.mrf.mxu0
    %v9028 = vadd.f32 %v8847, %v9027
    %9029 = vdwg.mxu0
    %9030 = vmatpush.bf16.msra.mxu0 0
    %9031 = vmatpush.bf16.msra.mxu0 0
    %9032 = vmatpush.bf16.msra.mxu0 0
    %9033 = vmatpush.bf16.msra.mxu0 0
    %9034 = vmatpush.bf16.msra.mxu0 0
    %9035 = vmatpush.bf16.msra.mxu0 0
    %9036 = vmatpush.bf16.msra.mxu0 0
    %9037 = vmatpush.bf16.msra.mxu0 %v8858
    %9038 = vmatmul.bf16.gmra.mxu0 %v7851
    %v9039 = vpop.f32.mrf.mxu0
    %v9040 = vadd.f32 %v8848, %v9039
    %v9041 = vpop.f32.mrf.mxu0
    %v9042 = vadd.f32 %v8848, %v9041
    %9043 = vmatmul.bf16.gmra.mxu0 %v7854
    %v9044 = vpop.f32.mrf.mxu0
    %v9045 = vadd.f32 %v8848, %v9044
    %v9046 = vpop.f32.mrf.mxu0
    %v9047 = vadd.f32 %v8848, %v9046
    %9048 = vmatmul.bf16.gmra.mxu0 %v7857
    %v9049 = vpop.f32.mrf.mxu0
    %v9050 = vadd.f32 %v8848, %v9049
    %v9051 = vpop.f32.mrf.mxu0
    %v9052 = vadd.f32 %v8848, %v9051
    %9053 = vmatmul.bf16.gmra.mxu0 %v7860
    %v9054 = vpop.f32.mrf.mxu0
    %v9055 = vadd.f32 %v8848, %v9054
    %v9056 = vpop.f32.mrf.mxu0
    %v9057 = vadd.f32 %v8848, %v9056
    %9058 = vmatmul.bf16.gmra.mxu0 %v7863
    %v9059 = vpop.f32.mrf.mxu0
    %v9060 = vadd.f32 %v8848, %v9059
    %v9061 = vpop.f32.mrf.mxu0
    %v9062 = vadd.f32 %v8848, %v9061
    %9063 = vmatmul.bf16.gmra.mxu0 %v7866
    %v9064 = vpop.f32.mrf.mxu0
    %v9065 = vadd.f32 %v8848, %v9064
    %v9066 = vpop.f32.mrf.mxu0
    %v9067 = vadd.f32 %v8848, %v9066
    %9068 = vmatmul.bf16.gmra.mxu0 %v7869
    %v9069 = vpop.f32.mrf.mxu0
    %v9070 = vadd.f32 %v8848, %v9069
    %v9071 = vpop.f32.mrf.mxu0
    %v9072 = vadd.f32 %v8848, %v9071
    %9073 = vmatmul.bf16.gmra.mxu0 %v7872
    %v9074 = vpop.f32.mrf.mxu0
    %v9075 = vadd.f32 %v8848, %v9074
    %v9076 = vpop.f32.mrf.mxu0
    %v9077 = vadd.f32 %v8848, %v9076
    %9078 = vmatmul.bf16.gmra.mxu0 %v7875
    %v9079 = vpop.f32.mrf.mxu0
    %v9080 = vadd.f32 %v8848, %v9079
    %v9081 = vpop.f32.mrf.mxu0
    %v9082 = vadd.f32 %v8848, %v9081
    %9083 = vmatmul.bf16.gmra.mxu0 %v7878
    %v9084 = vpop.f32.mrf.mxu0
    %v9085 = vadd.f32 %v8848, %v9084
    %v9086 = vpop.f32.mrf.mxu0
    %v9087 = vadd.f32 %v8848, %v9086
    %9088 = vmatmul.bf16.gmra.mxu0 %v7881
    %v9089 = vpop.f32.mrf.mxu0
    %v9090 = vadd.f32 %v8848, %v9089
    %v9091 = vpop.f32.mrf.mxu0
    %v9092 = vadd.f32 %v8848, %v9091
    %9093 = vmatmul.bf16.gmra.mxu0 %v7884
    %v9094 = vpop.f32.mrf.mxu0
    %v9095 = vadd.f32 %v8848, %v9094
    %v9096 = vpop.f32.mrf.mxu0
    %v9097 = vadd.f32 %v8848, %v9096
    %9098 = vmatmul.bf16.gmra.mxu0 %v7887
    %v9099 = vpop.f32.mrf.mxu0
    %v9100 = vadd.f32 %v8848, %v9099
    %v9101 = vpop.f32.mrf.mxu0
    %v9102 = vadd.f32 %v8848, %v9101
    %9103 = vmatmul.bf16.gmra.mxu0 %v7890
    %v9104 = vpop.f32.mrf.mxu0
    %v9105 = vadd.f32 %v8848, %v9104
    %v9106 = vpop.f32.mrf.mxu0
    %v9107 = vadd.f32 %v8848, %v9106
    %9108 = vmatmul.bf16.gmra.mxu0 %v7893
    %v9109 = vpop.f32.mrf.mxu0
    %v9110 = vadd.f32 %v8848, %v9109
    %v9111 = vpop.f32.mrf.mxu0
    %v9112 = vadd.f32 %v8848, %v9111
    %9113 = vmatmul.bf16.gmra.mxu0 %v7896
    %v9114 = vpop.f32.mrf.mxu0
    %v9115 = vadd.f32 %v8848, %v9114
    %v9116 = vpop.f32.mrf.mxu0
    %v9117 = vadd.f32 %v8848, %v9116
    %9118 = vmatmul.bf16.gmra.mxu0 %v7899
    %v9119 = vpop.f32.mrf.mxu0
    %v9120 = vadd.f32 %v8848, %v9119
    %v9121 = vpop.f32.mrf.mxu0
    %v9122 = vadd.f32 %v8848, %v9121
    %9123 = vmatmul.bf16.gmra.mxu0 %v7902
    %v9124 = vpop.f32.mrf.mxu0
    %v9125 = vadd.f32 %v8848, %v9124
    %v9126 = vpop.f32.mrf.mxu0
    %v9127 = vadd.f32 %v8848, %v9126
    %9128 = vmatmul.bf16.gmra.mxu0 %v7905
    %v9129 = vpop.f32.mrf.mxu0
    %v9130 = vadd.f32 %v8848, %v9129
    %v9131 = vpop.f32.mrf.mxu0
    %v9132 = vadd.f32 %v8848, %v9131
    %9133 = vmatmul.bf16.gmra.mxu0 %v7908
    %v9134 = vpop.f32.mrf.mxu0
    %v9135 = vadd.f32 %v8848, %v9134
    %v9136 = vpop.f32.mrf.mxu0
    %v9137 = vadd.f32 %v8848, %v9136
    %9138 = vmatmul.bf16.gmra.mxu0 %v7911
    %v9139 = vpop.f32.mrf.mxu0
    %v9140 = vadd.f32 %v8848, %v9139
    %v9141 = vpop.f32.mrf.mxu0
    %v9142 = vadd.f32 %v8848, %v9141
    %9143 = vmatmul.bf16.gmra.mxu0 %v7914
    %v9144 = vpop.f32.mrf.mxu0
    %v9145 = vadd.f32 %v8848, %v9144
    %v9146 = vpop.f32.mrf.mxu0
    %v9147 = vadd.f32 %v8848, %v9146
    %9148 = vmatmul.bf16.gmra.mxu0 %v7917
    %v9149 = vpop.f32.mrf.mxu0
    %v9150 = vadd.f32 %v8848, %v9149
    %v9151 = vpop.f32.mrf.mxu0
    %v9152 = vadd.f32 %v8848, %v9151
    %9153 = vmatmul.bf16.gmra.mxu0 %v7920
    %v9154 = vpop.f32.mrf.mxu0
    %v9155 = vadd.f32 %v8848, %v9154
    %v9156 = vpop.f32.mrf.mxu0
    %v9157 = vadd.f32 %v8848, %v9156
    %9158 = vmatmul.bf16.gmra.mxu0 %v7923
    %v9159 = vpop.f32.mrf.mxu0
    %v9160 = vadd.f32 %v8848, %v9159
    %v9161 = vpop.f32.mrf.mxu0
    %v9162 = vadd.f32 %v8848, %v9161
    %9163 = vmatmul.bf16.gmra.mxu0 %v7926
    %v9164 = vpop.f32.mrf.mxu0
    %v9165 = vadd.f32 %v8848, %v9164
    %v9166 = vpop.f32.mrf.mxu0
    %v9167 = vadd.f32 %v8848, %v9166
    %9168 = vmatmul.bf16.gmra.mxu0 %v7929
    %v9169 = vpop.f32.mrf.mxu0
    %v9170 = vadd.f32 %v8848, %v9169
    %v9171 = vpop.f32.mrf.mxu0
    %v9172 = vadd.f32 %v8848, %v9171
    %9173 = vmatmul.bf16.gmra.mxu0 %v7932
    %v9174 = vpop.f32.mrf.mxu0
    %v9175 = vadd.f32 %v8848, %v9174
    %v9176 = vpop.f32.mrf.mxu0
    %v9177 = vadd.f32 %v8848, %v9176
    %9178 = vmatmul.bf16.gmra.mxu0 %v7935
    %v9179 = vpop.f32.mrf.mxu0
    %v9180 = vadd.f32 %v8848, %v9179
    %v9181 = vpop.f32.mrf.mxu0
    %v9182 = vadd.f32 %v8848, %v9181
    %9183 = vmatmul.bf16.gmra.mxu0 %v7938
    %v9184 = vpop.f32.mrf.mxu0
    %v9185 = vadd.f32 %v8848, %v9184
    %v9186 = vpop.f32.mrf.mxu0
    %v9187 = vadd.f32 %v8848, %v9186
    %9188 = vmatmul.bf16.gmra.mxu0 %v7941
    %v9189 = vpop.f32.mrf.mxu0
    %v9190 = vadd.f32 %v8848, %v9189
    %v9191 = vpop.f32.mrf.mxu0
    %v9192 = vadd.f32 %v8848, %v9191
    %9193 = vmatmul.bf16.gmra.mxu0 %v7944
    %v9194 = vpop.f32.mrf.mxu0
    %v9195 = vadd.f32 %v8848, %v9194
    %v9196 = vpop.f32.mrf.mxu0
    %v9197 = vadd.f32 %v8848, %v9196
    %9198 = vdwg.mxu0
    %v9199 = vld [vmem:[%s5 + $0x10] sm:$0xff]
    %v9200 = vld [vmem:[%s5 + $0x18] sm:$0xff]
    %v9201 = vld [vmem:[%s5 + $0x20] sm:$0xff]
    %v9202 = vld [vmem:[%s5 + $0x28] sm:$0xff]
    %s9203 = scalar_lea.vmem [#allocation10], 5
    %v9204 = vld [vmem:[%s9203] ss:$8 sm:$0x3]
    %v9206 = vperm.slane %v9204, 0
    %v9207 = vperm.slane %v9204, 1
    %v9214 = vunpack.c.l.b16 %v9199
    %v9215 = vunpack.c.h.b16 %v9199
    %v9216 = vunpack.c.l.b16 %v9200
    %v9217 = vunpack.c.h.b16 %v9200
    %v9218 = vunpack.c.l.b16 %v9201
    %v9219 = vunpack.c.h.b16 %v9201
    %v9220 = vunpack.c.l.b16 %v9202
    %v9221 = vunpack.c.h.b16 %v9202
    %v9222 = vpack.c.b16 %v9216, %v9214
    %v9223 = vpack.c.b16 %v9217, %v9215
    %v9224 = vpack.c.b16 %v9220, %v9218
    %v9225 = vpack.c.b16 %v9221, %v9219
    %9230 = vmatpush.bf16.msra.mxu0 0
    %9231 = vmatpush.bf16.msra.mxu0 0
    %9232 = vmatpush.bf16.msra.mxu0 0
    %9233 = vmatpush.bf16.msra.mxu0 0
    %9234 = vmatpush.bf16.msra.mxu0 0
    %9235 = vmatpush.bf16.msra.mxu0 0
    %9236 = vmatpush.bf16.msra.mxu0 %v9224
    %9237 = vmatpush.bf16.msra.mxu0 %v9222
    %9238 = vmatmul.bf16.gmra.mxu0 %v8626
    %v9239 = vpop.f32.mrf.mxu0
    %v9240 = vadd.f32 %v9206, %v9239
    %v9241 = vpop.f32.mrf.mxu0
    %v9242 = vadd.f32 %v9206, %v9241
    %9243 = vmatmul.bf16.gmra.mxu0 %v8629
    %v9244 = vpop.f32.mrf.mxu0
    %v9245 = vadd.f32 %v9206, %v9244
    %v9246 = vpop.f32.mrf.mxu0
    %v9247 = vadd.f32 %v9206, %v9246
    %9248 = vmatmul.bf16.gmra.mxu0 %v8632
    %v9249 = vpop.f32.mrf.mxu0
    %v9250 = vadd.f32 %v9206, %v9249
    %v9251 = vpop.f32.mrf.mxu0
    %v9252 = vadd.f32 %v9206, %v9251
    %9253 = vmatmul.bf16.gmra.mxu0 %v8635
    %v9254 = vpop.f32.mrf.mxu0
    %v9255 = vadd.f32 %v9206, %v9254
    %v9256 = vpop.f32.mrf.mxu0
    %v9257 = vadd.f32 %v9206, %v9256
    %9258 = vmatmul.bf16.gmra.mxu0 %v8638
    %v9259 = vpop.f32.mrf.mxu0
    %v9260 = vadd.f32 %v9206, %v9259
    %v9261 = vpop.f32.mrf.mxu0
    %v9262 = vadd.f32 %v9206, %v9261
    %9263 = vmatmul.bf16.gmra.mxu0 %v8641
    %v9264 = vpop.f32.mrf.mxu0
    %v9265 = vadd.f32 %v9206, %v9264
    %v9266 = vpop.f32.mrf.mxu0
    %v9267 = vadd.f32 %v9206, %v9266
    %9268 = vmatmul.bf16.gmra.mxu0 %v8644
    %v9269 = vpop.f32.mrf.mxu0
    %v9270 = vadd.f32 %v9206, %v9269
    %v9271 = vpop.f32.mrf.mxu0
    %v9272 = vadd.f32 %v9206, %v9271
    %9273 = vmatmul.bf16.gmra.mxu0 %v8647
    %v9274 = vpop.f32.mrf.mxu0
    %v9275 = vadd.f32 %v9206, %v9274
    %v9276 = vpop.f32.mrf.mxu0
    %v9277 = vadd.f32 %v9206, %v9276
    %9278 = vdwg.mxu0
    %9279 = vmatpush.bf16.msra.mxu0 0
    %9280 = vmatpush.bf16.msra.mxu0 0
    %9281 = vmatpush.bf16.msra.mxu0 0
    %9282 = vmatpush.bf16.msra.mxu0 0
    %9283 = vmatpush.bf16.msra.mxu0 0
    %9284 = vmatpush.bf16.msra.mxu0 0
    %9285 = vmatpush.bf16.msra.mxu0 %v9225
    %9286 = vmatpush.bf16.msra.mxu0 %v9223
    %9287 = vmatmul.bf16.gmra.mxu0 %v8626
    %v9288 = vpop.f32.mrf.mxu0
    %v9289 = vadd.f32 %v9207, %v9288
    %v9290 = vpop.f32.mrf.mxu0
    %v9291 = vadd.f32 %v9207, %v9290
    %9292 = vmatmul.bf16.gmra.mxu0 %v8629
    %v9293 = vpop.f32.mrf.mxu0
    %v9294 = vadd.f32 %v9207, %v9293
    %v9295 = vpop.f32.mrf.mxu0
    %v9296 = vadd.f32 %v9207, %v9295
    %9297 = vmatmul.bf16.gmra.mxu0 %v8632
    %v9298 = vpop.f32.mrf.mxu0
    %v9299 = vadd.f32 %v9207, %v9298
    %v9300 = vpop.f32.mrf.mxu0
    %v9301 = vadd.f32 %v9207, %v9300
    %9302 = vmatmul.bf16.gmra.mxu0 %v8635
    %v9303 = vpop.f32.mrf.mxu0
    %v9304 = vadd.f32 %v9207, %v9303
    %v9305 = vpop.f32.mrf.mxu0
    %v9306 = vadd.f32 %v9207, %v9305
    %9307 = vmatmul.bf16.gmra.mxu0 %v8638
    %v9308 = vpop.f32.mrf.mxu0
    %v9309 = vadd.f32 %v9207, %v9308
    %v9310 = vpop.f32.mrf.mxu0
    %v9311 = vadd.f32 %v9207, %v9310
    %9312 = vmatmul.bf16.gmra.mxu0 %v8641
    %v9313 = vpop.f32.mrf.mxu0
    %v9314 = vadd.f32 %v9207, %v9313
    %v9315 = vpop.f32.mrf.mxu0
    %v9316 = vadd.f32 %v9207, %v9315
    %9317 = vmatmul.bf16.gmra.mxu0 %v8644
    %v9318 = vpop.f32.mrf.mxu0
    %v9319 = vadd.f32 %v9207, %v9318
    %v9320 = vpop.f32.mrf.mxu0
    %v9321 = vadd.f32 %v9207, %v9320
    %9322 = vmatmul.bf16.gmra.mxu0 %v8647
    %v9323 = vpop.f32.mrf.mxu0
    %v9324 = vadd.f32 %v9207, %v9323
    %v9325 = vpop.f32.mrf.mxu0
    %v9326 = vadd.f32 %v9207, %v9325
    %9327 = vdwg.mxu0
    %v9328 = vld [vmem:[%s5 + $0x30] sm:$0xff]
    %v9329 = vld [vmem:[%s5 + $0x38] sm:$0xff]
    %v9330 = vld [vmem:[%s5 + $0x40] sm:$0xff]
    %v9331 = vld [vmem:[%s5 + $0x48] sm:$0xff]
    %v9332 = vld [vmem:[%s5 + $0x50] sm:$0xff]
    %v9333 = vld [vmem:[%s5 + $0x58] sm:$0xff]
    %v9334 = vld [vmem:[%s5 + $0x60] sm:$0xff]
    %v9335 = vld [vmem:[%s5 + $0x68] sm:$0xff]
    %s9336 = scalar_lea.vmem [#allocation10], 6
    %v9337 = vld [vmem:[%s9336] ss:$8 sm:$0x3]
    %v9339 = vperm.slane %v9337, 0
    %v9340 = vperm.slane %v9337, 1
    %v9351 = vunpack.c.l.b16 %v9328
    %v9352 = vunpack.c.h.b16 %v9328
    %v9353 = vunpack.c.l.b16 %v9329
    %v9354 = vunpack.c.h.b16 %v9329
    %v9355 = vunpack.c.l.b16 %v9330
    %v9356 = vunpack.c.h.b16 %v9330
    %v9357 = vunpack.c.l.b16 %v9331
    %v9358 = vunpack.c.h.b16 %v9331
    %v9359 = vunpack.c.l.b16 %v9332
    %v9360 = vunpack.c.h.b16 %v9332
    %v9361 = vunpack.c.l.b16 %v9333
    %v9362 = vunpack.c.h.b16 %v9333
    %v9363 = vunpack.c.l.b16 %v9334
    %v9364 = vunpack.c.h.b16 %v9334
    %v9365 = vunpack.c.l.b16 %v9335
    %v9366 = vunpack.c.h.b16 %v9335
    %v9367 = vpack.c.b16 %v9353, %v9351
    %v9368 = vpack.c.b16 %v9354, %v9352
    %v9369 = vpack.c.b16 %v9357, %v9355
    %v9370 = vpack.c.b16 %v9358, %v9356
    %v9371 = vpack.c.b16 %v9361, %v9359
    %v9372 = vpack.c.b16 %v9362, %v9360
    %v9373 = vpack.c.b16 %v9365, %v9363
    %v9374 = vpack.c.b16 %v9366, %v9364
    %9383 = vmatpush.bf16.msra.mxu0 0
    %9384 = vmatpush.bf16.msra.mxu0 0
    %9385 = vmatpush.bf16.msra.mxu0 0
    %9386 = vmatpush.bf16.msra.mxu0 0
    %9387 = vmatpush.bf16.msra.mxu0 %v9373
    %9388 = vmatpush.bf16.msra.mxu0 %v9371
    %9389 = vmatpush.bf16.msra.mxu0 %v9369
    %9390 = vmatpush.bf16.msra.mxu0 %v9367
    %9391 = vmatmul.bf16.gmra.mxu0 %v8794
    %v9392 = vpop.f32.mrf.mxu0
    %v9393 = vadd.f32 %v9339, %v9392
    %v9394 = vpop.f32.mrf.mxu0
    %v9395 = vadd.f32 %v9339, %v9394
    %9396 = vmatmul.bf16.gmra.mxu0 %v8797
    %v9397 = vpop.f32.mrf.mxu0
    %v9398 = vadd.f32 %v9339, %v9397
    %v9399 = vpop.f32.mrf.mxu0
    %v9400 = vadd.f32 %v9339, %v9399
    %9401 = vdwg.mxu0
    %9402 = vmatpush.bf16.msra.mxu0 0
    %9403 = vmatpush.bf16.msra.mxu0 0
    %9404 = vmatpush.bf16.msra.mxu0 0
    %9405 = vmatpush.bf16.msra.mxu0 0
    %9406 = vmatpush.bf16.msra.mxu0 %v9374
    %9407 = vmatpush.bf16.msra.mxu0 %v9372
    %9408 = vmatpush.bf16.msra.mxu0 %v9370
    %9409 = vmatpush.bf16.msra.mxu0 %v9368
    %9410 = vmatmul.bf16.gmra.mxu0 %v8794
    %v9411 = vpop.f32.mrf.mxu0
    %v9412 = vadd.f32 %v9340, %v9411
    %v9413 = vpop.f32.mrf.mxu0
    %v9414 = vadd.f32 %v9340, %v9413
    %9415 = vmatmul.bf16.gmra.mxu0 %v8797
    %v9416 = vpop.f32.mrf.mxu0
    %v9417 = vadd.f32 %v9340, %v9416
    %v9418 = vpop.f32.mrf.mxu0
    %v9419 = vadd.f32 %v9340, %v9418
    %9420 = vdwg.mxu0
    %v9421 = vld [vmem:[%s5 + $0x70] sm:$0xff]
    %v9422 = vld [vmem:[%s5 + $0x78] sm:$0xff]
    %v9423 = vld [vmem:[%s5 + $0x80] sm:$0xff]
    %v9424 = vld [vmem:[%s5 + $0x88] sm:$0xff]
    %v9425 = vld [vmem:[%s5 + $0x90] sm:$0xff]
    %v9426 = vld [vmem:[%s5 + $0x98] sm:$0xff]
    %v9427 = vld [vmem:[%s5 + $0xa0] sm:$0xff]
    %v9428 = vld [vmem:[%s5 + $0xa8] sm:$0xff]
    %v9429 = vld [vmem:[%s5 + $0xb0] sm:$0xff]
    %v9430 = vld [vmem:[%s5 + $0xb8] sm:$0xff]
    %v9431 = vld [vmem:[%s5 + $0xc0] sm:$0xff]
    %v9432 = vld [vmem:[%s5 + $0xc8] sm:$0xff]
    %v9433 = vld [vmem:[%s5 + $0xd0] sm:$0xff]
    %v9434 = vld [vmem:[%s5 + $0xd8] sm:$0xff]
    %v9435 = vld [vmem:[%s5 + $0xe0] sm:$0xff]
    %v9436 = vld [vmem:[%s5 + $0xe8] sm:$0xff]
    %s9437 = scalar_lea.vmem [#allocation10], 7
    %v9438 = vld [vmem:[%s9437] ss:$8 sm:$0x3]
    %v9440 = vperm.slane %v9438, 0
    %v9441 = vperm.slane %v9438, 1
    %v9460 = vunpack.c.l.b16 %v9421
    %v9461 = vunpack.c.h.b16 %v9421
    %v9462 = vunpack.c.l.b16 %v9422
    %v9463 = vunpack.c.h.b16 %v9422
    %v9464 = vunpack.c.l.b16 %v9423
    %v9465 = vunpack.c.h.b16 %v9423
    %v9466 = vunpack.c.l.b16 %v9424
    %v9467 = vunpack.c.h.b16 %v9424
    %v9468 = vunpack.c.l.b16 %v9425
    %v9469 = vunpack.c.h.b16 %v9425
    %v9470 = vunpack.c.l.b16 %v9426
    %v9471 = vunpack.c.h.b16 %v9426
    %v9472 = vunpack.c.l.b16 %v9427
    %v9473 = vunpack.c.h.b16 %v9427
    %v9474 = vunpack.c.l.b16 %v9428
    %v9475 = vunpack.c.h.b16 %v9428
    %v9476 = vunpack.c.l.b16 %v9429
    %v9477 = vunpack.c.h.b16 %v9429
    %v9478 = vunpack.c.l.b16 %v9430
    %v9479 = vunpack.c.h.b16 %v9430
    %v9480 = vunpack.c.l.b16 %v9431
    %v9481 = vunpack.c.h.b16 %v9431
    %v9482 = vunpack.c.l.b16 %v9432
    %v9483 = vunpack.c.h.b16 %v9432
    %v9484 = vunpack.c.l.b16 %v9433
    %v9485 = vunpack.c.h.b16 %v9433
    %v9486 = vunpack.c.l.b16 %v9434
    %v9487 = vunpack.c.h.b16 %v9434
    %v9488 = vunpack.c.l.b16 %v9435
    %v9489 = vunpack.c.h.b16 %v9435
    %v9490 = vunpack.c.l.b16 %v9436
    %v9491 = vunpack.c.h.b16 %v9436
    %v9492 = vpack.c.b16 %v9462, %v9460
    %v9493 = vpack.c.b16 %v9463, %v9461
    %v9494 = vpack.c.b16 %v9466, %v9464
    %v9495 = vpack.c.b16 %v9467, %v9465
    %v9496 = vpack.c.b16 %v9470, %v9468
    %v9497 = vpack.c.b16 %v9471, %v9469
    %v9498 = vpack.c.b16 %v9474, %v9472
    %v9499 = vpack.c.b16 %v9475, %v9473
    %v9500 = vpack.c.b16 %v9478, %v9476
    %v9501 = vpack.c.b16 %v9479, %v9477
    %v9502 = vpack.c.b16 %v9482, %v9480
    %v9503 = vpack.c.b16 %v9483, %v9481
    %v9504 = vpack.c.b16 %v9486, %v9484
    %v9505 = vpack.c.b16 %v9487, %v9485
    %v9506 = vpack.c.b16 %v9490, %v9488
    %v9507 = vpack.c.b16 %v9491, %v9489
    %9524 = vmatpush.bf16.msra.mxu0 %v9506
    %9525 = vmatpush.bf16.msra.mxu0 %v9504
    %9526 = vmatpush.bf16.msra.mxu0 %v9502
    %9527 = vmatpush.bf16.msra.mxu0 %v9500
    %9528 = vmatpush.bf16.msra.mxu0 %v9498
    %9529 = vmatpush.bf16.msra.mxu0 %v9496
    %9530 = vmatpush.bf16.msra.mxu0 %v9494
    %9531 = vmatpush.bf16.msra.mxu0 %v9492
    %9532 = vmatmul.bf16.gmra.mxu0 %v8841
    %v9533 = vpop.f32.mrf.mxu0
    %v9534 = vadd.f32 %v9440, %v9533
    %v9535 = vpop.f32.mrf.mxu0
    %9536 = vdwg.mxu0
    %9537 = vmatpush.bf16.msra.mxu0 %v9507
    %9538 = vmatpush.bf16.msra.mxu0 %v9505
    %9539 = vmatpush.bf16.msra.mxu0 %v9503
    %9540 = vmatpush.bf16.msra.mxu0 %v9501
    %9541 = vmatpush.bf16.msra.mxu0 %v9499
    %9542 = vmatpush.bf16.msra.mxu0 %v9497
    %9543 = vmatpush.bf16.msra.mxu0 %v9495
    %9544 = vmatpush.bf16.msra.mxu0 %v9493
    %9545 = vmatmul.bf16.gmra.mxu0 %v8841
    %v9546 = vpop.f32.mrf.mxu0
    %v9547 = vadd.f32 %v9441, %v9546
    %v9548 = vpop.f32.mrf.mxu0
    %9549 = vdwg.mxu0
    %v9550 = vld [vmem:[%s13] sm:$0xf]
    %v9551 = vld [vmem:[%s13 + $0x4] sm:$0xf]
    %v9552 = vld [vmem:[%s13 + $0x8] sm:$0xf]
    %v9553 = vld [vmem:[%s13 + $0xc] sm:$0xf]
    %v9554 = vld [vmem:[%s14] sm:$0xf]
    %v9555 = vld [vmem:[%s14 + $0x4] sm:$0xf]
    %v9556 = vld [vmem:[%s14 + $0x8] sm:$0xf]
    %v9557 = vld [vmem:[%s14 + $0xc] sm:$0xf]
    %v9558 = vld [vmem:[%s14 + $0x10] sm:$0xf]
    %v9559 = vld [vmem:[%s14 + $0x14] sm:$0xf]
    %v9560 = vld [vmem:[%s14 + $0x18] sm:$0xf]
    %v9561 = vld [vmem:[%s14 + $0x1c] sm:$0xf]
    %v9562 = vld [vmem:[%s14 + $0x20] sm:$0xf]
    %v9563 = vld [vmem:[%s14 + $0x24] sm:$0xf]
    %v9564 = vld [vmem:[%s14 + $0x28] sm:$0xf]
    %v9565 = vld [vmem:[%s14 + $0x2c] sm:$0xf]
    %v9566 = vld [vmem:[%s14 + $0x30] sm:$0xf]
    %v9567 = vld [vmem:[%s14 + $0x34] sm:$0xf]
    %v9568 = vld [vmem:[%s14 + $0x38] sm:$0xf]
    %v9569 = vld [vmem:[%s14 + $0x3c] sm:$0xf]
    %v9570 = vld [vmem:[#allocation18] sm:$0xf]
    %v9571 = vld [vmem:[#allocation18 + $0x4] sm:$0xf]
    %v9572 = vld [vmem:[#allocation18 + $0x8] sm:$0xf]
    %v9573 = vld [vmem:[#allocation18 + $0xc] sm:$0xf]
    %v9574 = vld [vmem:[#allocation18 + $0x10] sm:$0xf]
    %v9575 = vld [vmem:[#allocation18 + $0x14] sm:$0xf]
    %v9576 = vld [vmem:[#allocation18 + $0x18] sm:$0xf]
    %v9577 = vld [vmem:[#allocation18 + $0x1c] sm:$0xf]
    %v9578 = vld [vmem:[#allocation18 + $0x20] sm:$0xf]
    %v9579 = vld [vmem:[#allocation18 + $0x24] sm:$0xf]
    %v9580 = vld [vmem:[#allocation18 + $0x28] sm:$0xf]
    %v9581 = vld [vmem:[#allocation18 + $0x2c] sm:$0xf]
    %v9582 = vld [vmem:[#allocation18 + $0x30] sm:$0xf]
    %v9583 = vld [vmem:[#allocation18 + $0x34] sm:$0xf]
    %v9584 = vld [vmem:[#allocation18 + $0x38] sm:$0xf]
    %v9585 = vld [vmem:[#allocation18 + $0x3c] sm:$0xf]
    %v9586 = vld [vmem:[#allocation18 + $0x40] sm:$0xf]
    %v9587 = vld [vmem:[#allocation18 + $0x44] sm:$0xf]
    %v9588 = vld [vmem:[#allocation18 + $0x48] sm:$0xf]
    %v9589 = vld [vmem:[#allocation18 + $0x4c] sm:$0xf]
    %v9590 = vld [vmem:[#allocation18 + $0x50] sm:$0xf]
    %v9591 = vld [vmem:[#allocation18 + $0x54] sm:$0xf]
    %v9592 = vld [vmem:[#allocation18 + $0x58] sm:$0xf]
    %v9593 = vld [vmem:[#allocation18 + $0x5c] sm:$0xf]
    %v9594 = vld [vmem:[#allocation18 + $0x60] sm:$0xf]
    %v9595 = vld [vmem:[#allocation18 + $0x64] sm:$0xf]
    %v9596 = vld [vmem:[#allocation18 + $0x68] sm:$0xf]
    %v9597 = vld [vmem:[#allocation18 + $0x6c] sm:$0xf]
    %v9598 = vld [vmem:[#allocation18 + $0x70] sm:$0xf]
    %v9599 = vld [vmem:[#allocation18 + $0x74] sm:$0xf]
    %v9600 = vld [vmem:[#allocation18 + $0x78] sm:$0xf]
    %v9601 = vld [vmem:[#allocation18 + $0x7c] sm:$0xf]
    %v9602 = vld [vmem:[#allocation18 + $0x80] sm:$0xf]
    %v9603 = vld [vmem:[#allocation18 + $0x84] sm:$0xf]
    %v9604 = vld [vmem:[#allocation18 + $0x88] sm:$0xf]
    %v9605 = vld [vmem:[#allocation18 + $0x8c] sm:$0xf]
    %v9606 = vld [vmem:[#allocation18 + $0x90] sm:$0xf]
    %v9607 = vld [vmem:[#allocation18 + $0x94] sm:$0xf]
    %v9608 = vld [vmem:[#allocation18 + $0x98] sm:$0xf]
    %v9609 = vld [vmem:[#allocation18 + $0x9c] sm:$0xf]
    %v9610 = vld [vmem:[#allocation18 + $0xa0] sm:$0xf]
    %v9611 = vld [vmem:[#allocation18 + $0xa4] sm:$0xf]
    %v9612 = vld [vmem:[#allocation18 + $0xa8] sm:$0xf]
    %v9613 = vld [vmem:[#allocation18 + $0xac] sm:$0xf]
    %v9614 = vld [vmem:[#allocation18 + $0xb0] sm:$0xf]
    %v9615 = vld [vmem:[#allocation18 + $0xb4] sm:$0xf]
    %v9616 = vld [vmem:[#allocation18 + $0xb8] sm:$0xf]
    %v9617 = vld [vmem:[#allocation18 + $0xbc] sm:$0xf]
    %v9618 = vld [vmem:[#allocation18 + $0xc0] sm:$0xf]
    %v9619 = vld [vmem:[#allocation18 + $0xc4] sm:$0xf]
    %v9620 = vld [vmem:[#allocation18 + $0xc8] sm:$0xf]
    %v9621 = vld [vmem:[#allocation18 + $0xcc] sm:$0xf]
    %v9622 = vld [vmem:[#allocation18 + $0xd0] sm:$0xf]
    %v9623 = vld [vmem:[#allocation18 + $0xd4] sm:$0xf]
    %v9624 = vld [vmem:[#allocation18 + $0xd8] sm:$0xf]
    %v9625 = vld [vmem:[#allocation18 + $0xdc] sm:$0xf]
    %v9626 = vld [vmem:[#allocation18 + $0xe0] sm:$0xf]
    %v9627 = vld [vmem:[#allocation18 + $0xe4] sm:$0xf]
    %v9628 = vld [vmem:[#allocation18 + $0xe8] sm:$0xf]
    %v9629 = vld [vmem:[#allocation18 + $0xec] sm:$0xf]
    %v9630 = vld [vmem:[#allocation18 + $0xf0] sm:$0xf]
    %v9631 = vld [vmem:[#allocation18 + $0xf4] sm:$0xf]
    %v9632 = vld [vmem:[#allocation18 + $0xf8] sm:$0xf]
    %v9633 = vld [vmem:[#allocation18 + $0xfc] sm:$0xf]
    %v9634 = vld [vmem:[%s7] sm:$0xf]
    %v9635 = vld [vmem:[%s7 + $0x4] sm:$0xf]
    %v9636 = vld [vmem:[%s7 + $0x8] sm:$0xf]
    %v9637 = vld [vmem:[%s7 + $0xc] sm:$0xf]
    %v9638 = vld [vmem:[%s7 + $0x10] sm:$0xf]
    %v9639 = vld [vmem:[%s7 + $0x14] sm:$0xf]
    %v9640 = vld [vmem:[%s7 + $0x18] sm:$0xf]
    %v9641 = vld [vmem:[%s7 + $0x1c] sm:$0xf]
    %v9642 = vld [vmem:[%s7 + $0x20] sm:$0xf]
    %v9643 = vld [vmem:[%s7 + $0x24] sm:$0xf]
    %v9644 = vld [vmem:[%s7 + $0x28] sm:$0xf]
    %v9645 = vld [vmem:[%s7 + $0x2c] sm:$0xf]
    %v9646 = vld [vmem:[%s7 + $0x30] sm:$0xf]
    %v9647 = vld [vmem:[%s7 + $0x34] sm:$0xf]
    %v9648 = vld [vmem:[%s7 + $0x38] sm:$0xf]
    %v9649 = vld [vmem:[%s7 + $0x3c] sm:$0xf]
    %v9650 = vld [vmem:[%s7 + $0x40] sm:$0xf]
    %v9651 = vld [vmem:[%s7 + $0x44] sm:$0xf]
    %v9652 = vld [vmem:[%s7 + $0x48] sm:$0xf]
    %v9653 = vld [vmem:[%s7 + $0x4c] sm:$0xf]
    %v9654 = vpack.c.bf16 %v9534, %v9534
    %v9655 = vpack.c.bf16 %v9547, %v9547
    %v9660 = vunpack.c.l.b16 %v9550
    %v9661 = vunpack.c.l.b16 %v9551
    %v9662 = vunpack.c.l.b16 %v9552
    %v9663 = vunpack.c.l.b16 %v9553
    %v9664 = vpack.c.b16 %v9661, %v9660
    %v9665 = vpack.c.b16 %v9663, %v9662
    %vm9666 = vcmask 64512
    %v9668 = vsel %vm9666, %v9664, 0
    %v9671 = vsel %vm9666, %v9665, 0
    %vm9673 = vcmask 1043456
    %v9675 = vsel %vm9673, %v9654, 0
    %v9678 = vsel %vm9673, %v9655, 0
    %9680 = vmatpush.bf16.msra.mxu0 0
    %9681 = vmatpush.bf16.msra.mxu0 0
    %9682 = vmatpush.bf16.msra.mxu0 0
    %9683 = vmatpush.bf16.msra.mxu0 0
    %9684 = vmatpush.bf16.msra.mxu0 0
    %9685 = vmatpush.bf16.msra.mxu0 0
    %9686 = vmatpush.bf16.msra.mxu0 0
    %9687 = vmatpush.bf16.msra.mxu0 %v9675
    %9688 = vmatmul.bf16.gmra.mxu0 %v9668
    %v9689 = vpop.f32.mrf.mxu0
    %v9690 = vadd.f32 0.0, %v9689
    %v9691 = vpop.f32.mrf.mxu0
    %v9692 = vadd.f32 0.0, %v9691
    %9693 = vmatmul.bf16.gmra.mxu0 %v9671
    %v9694 = vpop.f32.mrf.mxu0
    %v9695 = vadd.f32 0.0, %v9694
    %v9696 = vpop.f32.mrf.mxu0
    %v9697 = vadd.f32 0.0, %v9696
    %9698 = vdwg.mxu0
    %9699 = vmatpush.bf16.msra.mxu0 0
    %9700 = vmatpush.bf16.msra.mxu0 0
    %9701 = vmatpush.bf16.msra.mxu0 0
    %9702 = vmatpush.bf16.msra.mxu0 0
    %9703 = vmatpush.bf16.msra.mxu0 0
    %9704 = vmatpush.bf16.msra.mxu0 0
    %9705 = vmatpush.bf16.msra.mxu0 0
    %9706 = vmatpush.bf16.msra.mxu0 %v9678
    %9707 = vmatmul.bf16.gmra.mxu0 %v9668
    %v9708 = vpop.f32.mrf.mxu0
    %v9709 = vadd.f32 0.0, %v9708
    %v9710 = vpop.f32.mrf.mxu0
    %v9711 = vadd.f32 0.0, %v9710
    %9712 = vmatmul.bf16.gmra.mxu0 %v9671
    %v9713 = vpop.f32.mrf.mxu0
    %v9714 = vadd.f32 0.0, %v9713
    %v9715 = vpop.f32.mrf.mxu0
    %v9716 = vadd.f32 0.0, %v9715
    %9717 = vdwg.mxu0
    %v9718 = vadd.f32 %v9393, %v9690
    %v9719 = vadd.f32 %v9412, %v9709
    %v9720 = vadd.f32 %v9395, %v9692
    %v9721 = vadd.f32 %v9414, %v9711
    %v9722 = vadd.f32 %v9398, %v9695
    %v9723 = vadd.f32 %v9417, %v9714
    %v9724 = vadd.f32 %v9400, %v9697
    %v9725 = vadd.f32 %v9419, %v9716
    %v9726 = vpack.c.bf16 %v9720, %v9718
    %v9727 = vpack.c.bf16 %v9721, %v9719
    %v9728 = vpack.c.bf16 %v9724, %v9722
    %v9729 = vpack.c.bf16 %v9725, %v9723
    %v9730 = vld [vmem:[#allocation9] sm:$0xff]
    %v9731 = vld [vmem:[#allocation9 + $0x8] sm:$0xff]
    %v9732 = vld [vmem:[#allocation9 + $0x10] sm:$0xff]
    %v9733 = vld [vmem:[#allocation9 + $0x18] sm:$0xff]
    %v9734 = vld [vmem:[#allocation9 + $0x20] sm:$0xff]
    %v9735 = vld [vmem:[#allocation9 + $0x28] sm:$0xff]
    %v9736 = vld [vmem:[#allocation9 + $0x30] sm:$0xff]
    %v9737 = vld [vmem:[#allocation9 + $0x38] sm:$0xff]
    %v9738 = vld [vmem:[#allocation9 + $0x40] sm:$0xff]
    %v9739 = vld [vmem:[#allocation9 + $0x48] sm:$0xff]
    %v9740 = vld [vmem:[#allocation9 + $0x50] sm:$0xff]
    %v9741 = vld [vmem:[#allocation9 + $0x58] sm:$0xff]
    %v9742 = vld [vmem:[#allocation9 + $0x60] sm:$0xff]
    %v9743 = vld [vmem:[#allocation9 + $0x68] sm:$0xff]
    %v9744 = vld [vmem:[#allocation9 + $0x70] sm:$0xff]
    %v9745 = vld [vmem:[#allocation9 + $0x78] sm:$0xff]
    %v9746 = vld [vmem:[#allocation9 + $0x80] sm:$0xff]
    %v9747 = vld [vmem:[#allocation9 + $0x88] sm:$0xff]
    %v9748 = vld [vmem:[#allocation9 + $0x90] sm:$0xff]
    %v9749 = vld [vmem:[#allocation9 + $0x98] sm:$0xff]
    %s9750 = scalar_lea.vmem [#allocation10], 16
    %v9751 = vld [vmem:[%s9750] ss:$8 sm:$0x3]
    %v9753 = vperm.slane %v9751, 0
    %v9754 = vperm.slane %v9751, 1
    %v9777 = vunpack.c.l.b16 %v9730
    %v9778 = vunpack.c.h.b16 %v9730
    %v9779 = vunpack.c.l.b16 %v9731
    %v9780 = vunpack.c.h.b16 %v9731
    %v9781 = vunpack.c.l.b16 %v9732
    %v9782 = vunpack.c.h.b16 %v9732
    %v9783 = vunpack.c.l.b16 %v9733
    %v9784 = vunpack.c.h.b16 %v9733
    %v9785 = vunpack.c.l.b16 %v9734
    %v9786 = vunpack.c.h.b16 %v9734
    %v9787 = vunpack.c.l.b16 %v9735
    %v9788 = vunpack.c.h.b16 %v9735
    %v9789 = vunpack.c.l.b16 %v9736
    %v9790 = vunpack.c.h.b16 %v9736
    %v9791 = vunpack.c.l.b16 %v9737
    %v9792 = vunpack.c.h.b16 %v9737
    %v9793 = vunpack.c.l.b16 %v9738
    %v9794 = vunpack.c.h.b16 %v9738
    %v9795 = vunpack.c.l.b16 %v9739
    %v9796 = vunpack.c.h.b16 %v9739
    %v9797 = vunpack.c.l.b16 %v9740
    %v9798 = vunpack.c.h.b16 %v9740
    %v9799 = vunpack.c.l.b16 %v9741
    %v9800 = vunpack.c.h.b16 %v9741
    %v9801 = vunpack.c.l.b16 %v9742
    %v9802 = vunpack.c.h.b16 %v9742
    %v9803 = vunpack.c.l.b16 %v9743
    %v9804 = vunpack.c.h.b16 %v9743
    %v9805 = vunpack.c.l.b16 %v9744
    %v9806 = vunpack.c.h.b16 %v9744
    %v9807 = vunpack.c.l.b16 %v9745
    %v9808 = vunpack.c.h.b16 %v9745
    %v9809 = vunpack.c.l.b16 %v9746
    %v9810 = vunpack.c.h.b16 %v9746
    %v9811 = vunpack.c.l.b16 %v9747
    %v9812 = vunpack.c.h.b16 %v9747
    %v9813 = vunpack.c.l.b16 %v9748
    %v9814 = vunpack.c.h.b16 %v9748
    %v9815 = vunpack.c.l.b16 %v9749
    %v9816 = vunpack.c.h.b16 %v9749
    %v9817 = vpack.c.b16 %v9779, %v9777
    %v9818 = vpack.c.b16 %v9780, %v9778
    %v9819 = vpack.c.b16 %v9783, %v9781
    %v9820 = vpack.c.b16 %v9784, %v9782
    %v9821 = vpack.c.b16 %v9787, %v9785
    %v9822 = vpack.c.b16 %v9788, %v9786
    %v9823 = vpack.c.b16 %v9791, %v9789
    %v9824 = vpack.c.b16 %v9792, %v9790
    %v9825 = vpack.c.b16 %v9795, %v9793
    %v9826 = vpack.c.b16 %v9796, %v9794
    %v9827 = vpack.c.b16 %v9799, %v9797
    %v9828 = vpack.c.b16 %v9800, %v9798
    %v9829 = vpack.c.b16 %v9803, %v9801
    %v9830 = vpack.c.b16 %v9804, %v9802
    %v9831 = vpack.c.b16 %v9807, %v9805
    %v9832 = vpack.c.b16 %v9808, %v9806
    %v9833 = vpack.c.b16 %v9811, %v9809
    %v9834 = vpack.c.b16 %v9812, %v9810
    %v9835 = vpack.c.b16 %v9815, %v9813
    %v9836 = vpack.c.b16 %v9816, %v9814
    %v9858 = vsel %vm8624, %v9727, 0
    %v9861 = vsel %vm8624, %v9729, 0
    %9863 = vmatpush.bf16.msra.mxu0 %v9831
    %9864 = vmatpush.bf16.msra.mxu0 %v9829
    %9865 = vmatpush.bf16.msra.mxu0 %v9827
    %9866 = vmatpush.bf16.msra.mxu0 %v9825
    %9867 = vmatpush.bf16.msra.mxu0 %v9823
    %9868 = vmatpush.bf16.msra.mxu0 %v9821
    %9869 = vmatpush.bf16.msra.mxu0 %v9819
    %9870 = vmatpush.bf16.msra.mxu0 %v9817
    %9871 = vmatmul.bf16.gmra.mxu0 %v9726
    %v9872 = vpop.f32.mrf.mxu0
    %v9873 = vadd.f32 %v9753, %v9872
    %v9874 = vpop.f32.mrf.mxu0
    %v9875 = vadd.f32 %v9753, %v9874
    %9876 = vmatmul.bf16.gmra.mxu0 %v9728
    %v9877 = vpop.f32.mrf.mxu0
    %v9878 = vadd.f32 %v9753, %v9877
    %v9879 = vpop.f32.mrf.mxu0
    %v9880 = vadd.f32 %v9753, %v9879
    %9881 = vdwg.mxu0
    %9882 = vmatpush.bf16.msra.mxu0 0
    %9883 = vmatpush.bf16.msra.mxu0 0
    %9884 = vmatpush.bf16.msra.mxu0 0
    %9885 = vmatpush.bf16.msra.mxu0 0
    %9886 = vmatpush.bf16.msra.mxu0 0
    %9887 = vmatpush.bf16.msra.mxu0 0
    %9888 = vmatpush.bf16.msra.mxu0 %v9835
    %9889 = vmatpush.bf16.msra.mxu0 %v9833
    %9890 = vmatmul.bf16.gmra.mxu0 %v9858
    %v9891 = vpop.f32.mrf.mxu0
    %v9892 = vadd.f32 %v9873, %v9891
    %v9893 = vpop.f32.mrf.mxu0
    %v9894 = vadd.f32 %v9875, %v9893
    %9895 = vmatmul.bf16.gmra.mxu0 %v9861
    %v9896 = vpop.f32.mrf.mxu0
    %v9897 = vadd.f32 %v9878, %v9896
    %v9898 = vpop.f32.mrf.mxu0
    %v9899 = vadd.f32 %v9880, %v9898
    %9900 = vdwg.mxu0
    %9901 = vmatpush.bf16.msra.mxu0 %v9832
    %9902 = vmatpush.bf16.msra.mxu0 %v9830
    %9903 = vmatpush.bf16.msra.mxu0 %v9828
    %9904 = vmatpush.bf16.msra.mxu0 %v9826
    %9905 = vmatpush.bf16.msra.mxu0 %v9824
    %9906 = vmatpush.bf16.msra.mxu0 %v9822
    %9907 = vmatpush.bf16.msra.mxu0 %v9820
    %9908 = vmatpush.bf16.msra.mxu0 %v9818
    %9909 = vmatmul.bf16.gmra.mxu0 %v9726
    %v9910 = vpop.f32.mrf.mxu0
    %v9911 = vadd.f32 %v9754, %v9910
    %v9912 = vpop.f32.mrf.mxu0
    %v9913 = vadd.f32 %v9754, %v9912
    %9914 = vmatmul.bf16.gmra.mxu0 %v9728
    %v9915 = vpop.f32.mrf.mxu0
    %v9916 = vadd.f32 %v9754, %v9915
    %v9917 = vpop.f32.mrf.mxu0
    %v9918 = vadd.f32 %v9754, %v9917
    %9919 = vdwg.mxu0
    %9920 = vmatpush.bf16.msra.mxu0 0
    %9921 = vmatpush.bf16.msra.mxu0 0
    %9922 = vmatpush.bf16.msra.mxu0 0
    %9923 = vmatpush.bf16.msra.mxu0 0
    %9924 = vmatpush.bf16.msra.mxu0 0
    %9925 = vmatpush.bf16.msra.mxu0 0
    %9926 = vmatpush.bf16.msra.mxu0 %v9836
    %9927 = vmatpush.bf16.msra.mxu0 %v9834
    %9928 = vmatmul.bf16.gmra.mxu0 %v9858
    %v9929 = vpop.f32.mrf.mxu0
    %v9930 = vadd.f32 %v9911, %v9929
    %v9931 = vpop.f32.mrf.mxu0
    %v9932 = vadd.f32 %v9913, %v9931
    %9933 = vmatmul.bf16.gmra.mxu0 %v9861
    %v9934 = vpop.f32.mrf.mxu0
    %v9935 = vadd.f32 %v9916, %v9934
    %v9936 = vpop.f32.mrf.mxu0
    %v9937 = vadd.f32 %v9918, %v9936
    %9938 = vdwg.mxu0
    %v9939 = vmax.f32 %v9892, 0.0
    %v9940 = vmax.f32 %v9930, 0.0
    %v9941 = vmax.f32 %v9894, 0.0
    %v9942 = vmax.f32 %v9932, 0.0
    %v9943 = vmax.f32 %v9897, 0.0
    %v9944 = vmax.f32 %v9935, 0.0
    %v9945 = vmax.f32 %v9899, 0.0
    %v9946 = vmax.f32 %v9937, 0.0
    %v9947 = vpack.c.bf16 %v9941, %v9939
    %v9948 = vpack.c.bf16 %v9942, %v9940
    %v9949 = vpack.c.bf16 %v9945, %v9943
    %v9950 = vpack.c.bf16 %v9946, %v9944
    %v9967 = vunpack.c.l.b16 %v9554
    %v9968 = vunpack.c.l.b16 %v9555
    %v9969 = vunpack.c.l.b16 %v9556
    %v9970 = vunpack.c.l.b16 %v9557
    %v9971 = vunpack.c.l.b16 %v9558
    %v9972 = vunpack.c.l.b16 %v9559
    %v9973 = vunpack.c.l.b16 %v9560
    %v9974 = vunpack.c.l.b16 %v9561
    %v9975 = vunpack.c.l.b16 %v9562
    %v9976 = vunpack.c.l.b16 %v9563
    %v9977 = vunpack.c.l.b16 %v9564
    %v9978 = vunpack.c.l.b16 %v9565
    %v9979 = vunpack.c.l.b16 %v9566
    %v9980 = vunpack.c.l.b16 %v9567
    %v9981 = vunpack.c.l.b16 %v9568
    %v9982 = vunpack.c.l.b16 %v9569
    %v9983 = vpack.c.b16 %v9968, %v9967
    %v9984 = vpack.c.b16 %v9970, %v9969
    %v9985 = vpack.c.b16 %v9972, %v9971
    %v9986 = vpack.c.b16 %v9974, %v9973
    %v9987 = vpack.c.b16 %v9976, %v9975
    %v9988 = vpack.c.b16 %v9978, %v9977
    %v9989 = vpack.c.b16 %v9980, %v9979
    %v9990 = vpack.c.b16 %v9982, %v9981
    %v9992 = vsel %vm8624, %v9983, 0
    %v9995 = vsel %vm8624, %v9984, 0
    %v9998 = vsel %vm8624, %v9985, 0
    %v10001 = vsel %vm8624, %v9986, 0
    %v10004 = vsel %vm8624, %v9987, 0
    %v10007 = vsel %vm8624, %v9988, 0
    %v10010 = vsel %vm8624, %v9989, 0
    %v10013 = vsel %vm8624, %v9990, 0
    %10015 = vmatpush.bf16.msra.mxu0 0
    %10016 = vmatpush.bf16.msra.mxu0 0
    %10017 = vmatpush.bf16.msra.mxu0 0
    %10018 = vmatpush.bf16.msra.mxu0 0
    %10019 = vmatpush.bf16.msra.mxu0 0
    %10020 = vmatpush.bf16.msra.mxu0 0
    %10021 = vmatpush.bf16.msra.mxu0 %v9949
    %10022 = vmatpush.bf16.msra.mxu0 %v9947
    %10023 = vmatmul.bf16.gmra.mxu0 %v9992
    %v10024 = vpop.f32.mrf.mxu0
    %v10025 = vadd.f32 0.0, %v10024
    %v10026 = vpop.f32.mrf.mxu0
    %v10027 = vadd.f32 0.0, %v10026
    %10028 = vmatmul.bf16.gmra.mxu0 %v9995
    %v10029 = vpop.f32.mrf.mxu0
    %v10030 = vadd.f32 0.0, %v10029
    %v10031 = vpop.f32.mrf.mxu0
    %v10032 = vadd.f32 0.0, %v10031
    %10033 = vmatmul.bf16.gmra.mxu0 %v9998
    %v10034 = vpop.f32.mrf.mxu0
    %v10035 = vadd.f32 0.0, %v10034
    %v10036 = vpop.f32.mrf.mxu0
    %v10037 = vadd.f32 0.0, %v10036
    %10038 = vmatmul.bf16.gmra.mxu0 %v10001
    %v10039 = vpop.f32.mrf.mxu0
    %v10040 = vadd.f32 0.0, %v10039
    %v10041 = vpop.f32.mrf.mxu0
    %v10042 = vadd.f32 0.0, %v10041
    %10043 = vmatmul.bf16.gmra.mxu0 %v10004
    %v10044 = vpop.f32.mrf.mxu0
    %v10045 = vadd.f32 0.0, %v10044
    %v10046 = vpop.f32.mrf.mxu0
    %v10047 = vadd.f32 0.0, %v10046
    %10048 = vmatmul.bf16.gmra.mxu0 %v10007
    %v10049 = vpop.f32.mrf.mxu0
    %v10050 = vadd.f32 0.0, %v10049
    %v10051 = vpop.f32.mrf.mxu0
    %v10052 = vadd.f32 0.0, %v10051
    %10053 = vmatmul.bf16.gmra.mxu0 %v10010
    %v10054 = vpop.f32.mrf.mxu0
    %v10055 = vadd.f32 0.0, %v10054
    %v10056 = vpop.f32.mrf.mxu0
    %v10057 = vadd.f32 0.0, %v10056
    %10058 = vmatmul.bf16.gmra.mxu0 %v10013
    %v10059 = vpop.f32.mrf.mxu0
    %v10060 = vadd.f32 0.0, %v10059
    %v10061 = vpop.f32.mrf.mxu0
    %v10062 = vadd.f32 0.0, %v10061
    %10063 = vdwg.mxu0
    %10064 = vmatpush.bf16.msra.mxu0 0
    %10065 = vmatpush.bf16.msra.mxu0 0
    %10066 = vmatpush.bf16.msra.mxu0 0
    %10067 = vmatpush.bf16.msra.mxu0 0
    %10068 = vmatpush.bf16.msra.mxu0 0
    %10069 = vmatpush.bf16.msra.mxu0 0
    %10070 = vmatpush.bf16.msra.mxu0 %v9950
    %10071 = vmatpush.bf16.msra.mxu0 %v9948
    %10072 = vmatmul.bf16.gmra.mxu0 %v9992
    %v10073 = vpop.f32.mrf.mxu0
    %v10074 = vadd.f32 0.0, %v10073
    %v10075 = vpop.f32.mrf.mxu0
    %v10076 = vadd.f32 0.0, %v10075
    %10077 = vmatmul.bf16.gmra.mxu0 %v9995
    %v10078 = vpop.f32.mrf.mxu0
    %v10079 = vadd.f32 0.0, %v10078
    %v10080 = vpop.f32.mrf.mxu0
    %v10081 = vadd.f32 0.0, %v10080
    %10082 = vmatmul.bf16.gmra.mxu0 %v9998
    %v10083 = vpop.f32.mrf.mxu0
    %v10084 = vadd.f32 0.0, %v10083
    %v10085 = vpop.f32.mrf.mxu0
    %v10086 = vadd.f32 0.0, %v10085
    %10087 = vmatmul.bf16.gmra.mxu0 %v10001
    %v10088 = vpop.f32.mrf.mxu0
    %v10089 = vadd.f32 0.0, %v10088
    %v10090 = vpop.f32.mrf.mxu0
    %v10091 = vadd.f32 0.0, %v10090
    %10092 = vmatmul.bf16.gmra.mxu0 %v10004
    %v10093 = vpop.f32.mrf.mxu0
    %v10094 = vadd.f32 0.0, %v10093
    %v10095 = vpop.f32.mrf.mxu0
    %v10096 = vadd.f32 0.0, %v10095
    %10097 = vmatmul.bf16.gmra.mxu0 %v10007
    %v10098 = vpop.f32.mrf.mxu0
    %v10099 = vadd.f32 0.0, %v10098
    %v10100 = vpop.f32.mrf.mxu0
    %v10101 = vadd.f32 0.0, %v10100
    %10102 = vmatmul.bf16.gmra.mxu0 %v10010
    %v10103 = vpop.f32.mrf.mxu0
    %v10104 = vadd.f32 0.0, %v10103
    %v10105 = vpop.f32.mrf.mxu0
    %v10106 = vadd.f32 0.0, %v10105
    %10107 = vmatmul.bf16.gmra.mxu0 %v10013
    %v10108 = vpop.f32.mrf.mxu0
    %v10109 = vadd.f32 0.0, %v10108
    %v10110 = vpop.f32.mrf.mxu0
    %v10111 = vadd.f32 0.0, %v10110
    %10112 = vdwg.mxu0
    %v10113 = vadd.f32 %v9240, %v10025
    %v10114 = vadd.f32 %v9289, %v10074
    %v10115 = vadd.f32 %v9242, %v10027
    %v10116 = vadd.f32 %v9291, %v10076
    %v10117 = vadd.f32 %v9245, %v10030
    %v10118 = vadd.f32 %v9294, %v10079
    %v10119 = vadd.f32 %v9247, %v10032
    %v10120 = vadd.f32 %v9296, %v10081
    %v10121 = vadd.f32 %v9250, %v10035
    %v10122 = vadd.f32 %v9299, %v10084
    %v10123 = vadd.f32 %v9252, %v10037
    %v10124 = vadd.f32 %v9301, %v10086
    %v10125 = vadd.f32 %v9255, %v10040
    %v10126 = vadd.f32 %v9304, %v10089
    %v10127 = vadd.f32 %v9257, %v10042
    %v10128 = vadd.f32 %v9306, %v10091
    %v10129 = vadd.f32 %v9260, %v10045
    %v10130 = vadd.f32 %v9309, %v10094
    %v10131 = vadd.f32 %v9262, %v10047
    %v10132 = vadd.f32 %v9311, %v10096
    %v10133 = vadd.f32 %v9265, %v10050
    %v10134 = vadd.f32 %v9314, %v10099
    %v10135 = vadd.f32 %v9267, %v10052
    %v10136 = vadd.f32 %v9316, %v10101
    %v10137 = vadd.f32 %v9270, %v10055
    %v10138 = vadd.f32 %v9319, %v10104
    %v10139 = vadd.f32 %v9272, %v10057
    %v10140 = vadd.f32 %v9321, %v10106
    %v10141 = vadd.f32 %v9275, %v10060
    %v10142 = vadd.f32 %v9324, %v10109
    %v10143 = vadd.f32 %v9277, %v10062
    %v10144 = vadd.f32 %v9326, %v10111
    %v10145 = vpack.c.bf16 %v10115, %v10113
    %v10146 = vpack.c.bf16 %v10116, %v10114
    %v10147 = vpack.c.bf16 %v10119, %v10117
    %v10148 = vpack.c.bf16 %v10120, %v10118
    %v10149 = vpack.c.bf16 %v10123, %v10121
    %v10150 = vpack.c.bf16 %v10124, %v10122
    %v10151 = vpack.c.bf16 %v10127, %v10125
    %v10152 = vpack.c.bf16 %v10128, %v10126
    %v10153 = vpack.c.bf16 %v10131, %v10129
    %v10154 = vpack.c.bf16 %v10132, %v10130
    %v10155 = vpack.c.bf16 %v10135, %v10133
    %v10156 = vpack.c.bf16 %v10136, %v10134
    %v10157 = vpack.c.bf16 %v10139, %v10137
    %v10158 = vpack.c.bf16 %v10140, %v10138
    %v10159 = vpack.c.bf16 %v10143, %v10141
    %v10160 = vpack.c.bf16 %v10144, %v10142
    %s10161 = scalar_lea.vmem [#allocation9], 160
    %v10162 = vld [vmem:[%s10161] sm:$0xff]
    %v10163 = vld [vmem:[%s10161 + $0x8] sm:$0xff]
    %v10164 = vld [vmem:[%s10161 + $0x10] sm:$0xff]
    %v10165 = vld [vmem:[%s10161 + $0x18] sm:$0xff]
    %v10166 = vld [vmem:[%s10161 + $0x20] sm:$0xff]
    %v10167 = vld [vmem:[%s10161 + $0x28] sm:$0xff]
    %v10168 = vld [vmem:[%s10161 + $0x30] sm:$0xff]
    %v10169 = vld [vmem:[%s10161 + $0x38] sm:$0xff]
    %v10170 = vld [vmem:[%s10161 + $0x40] sm:$0xff]
    %v10171 = vld [vmem:[%s10161 + $0x48] sm:$0xff]
    %v10172 = vld [vmem:[%s10161 + $0x50] sm:$0xff]
    %v10173 = vld [vmem:[%s10161 + $0x58] sm:$0xff]
    %v10174 = vld [vmem:[%s10161 + $0x60] sm:$0xff]
    %v10175 = vld [vmem:[%s10161 + $0x68] sm:$0xff]
    %v10176 = vld [vmem:[%s10161 + $0x70] sm:$0xff]
    %v10177 = vld [vmem:[%s10161 + $0x78] sm:$0xff]
    %v10178 = vld [vmem:[%s10161 + $0x80] sm:$0xff]
    %v10179 = vld [vmem:[%s10161 + $0x88] sm:$0xff]
    %v10180 = vld [vmem:[%s10161 + $0x90] sm:$0xff]
    %v10181 = vld [vmem:[%s10161 + $0x98] sm:$0xff]
    %s10182 = scalar_lea.vmem [#allocation10], 17
    %v10183 = vld [vmem:[%s10182] ss:$8 sm:$0x3]
    %v10185 = vperm.slane %v10183, 0
    %v10186 = vperm.slane %v10183, 1
    %v10209 = vunpack.c.l.b16 %v10162
    %v10210 = vunpack.c.h.b16 %v10162
    %v10211 = vunpack.c.l.b16 %v10163
    %v10212 = vunpack.c.h.b16 %v10163
    %v10213 = vunpack.c.l.b16 %v10164
    %v10214 = vunpack.c.h.b16 %v10164
    %v10215 = vunpack.c.l.b16 %v10165
    %v10216 = vunpack.c.h.b16 %v10165
    %v10217 = vunpack.c.l.b16 %v10166
    %v10218 = vunpack.c.h.b16 %v10166
    %v10219 = vunpack.c.l.b16 %v10167
    %v10220 = vunpack.c.h.b16 %v10167
    %v10221 = vunpack.c.l.b16 %v10168
    %v10222 = vunpack.c.h.b16 %v10168
    %v10223 = vunpack.c.l.b16 %v10169
    %v10224 = vunpack.c.h.b16 %v10169
    %v10225 = vunpack.c.l.b16 %v10170
    %v10226 = vunpack.c.h.b16 %v10170
    %v10227 = vunpack.c.l.b16 %v10171
    %v10228 = vunpack.c.h.b16 %v10171
    %v10229 = vunpack.c.l.b16 %v10172
    %v10230 = vunpack.c.h.b16 %v10172
    %v10231 = vunpack.c.l.b16 %v10173
    %v10232 = vunpack.c.h.b16 %v10173
    %v10233 = vunpack.c.l.b16 %v10174
    %v10234 = vunpack.c.h.b16 %v10174
    %v10235 = vunpack.c.l.b16 %v10175
    %v10236 = vunpack.c.h.b16 %v10175
    %v10237 = vunpack.c.l.b16 %v10176
    %v10238 = vunpack.c.h.b16 %v10176
    %v10239 = vunpack.c.l.b16 %v10177
    %v10240 = vunpack.c.h.b16 %v10177
    %v10241 = vunpack.c.l.b16 %v10178
    %v10242 = vunpack.c.h.b16 %v10178
    %v10243 = vunpack.c.l.b16 %v10179
    %v10244 = vunpack.c.h.b16 %v10179
    %v10245 = vunpack.c.l.b16 %v10180
    %v10246 = vunpack.c.h.b16 %v10180
    %v10247 = vunpack.c.l.b16 %v10181
    %v10248 = vunpack.c.h.b16 %v10181
    %v10249 = vpack.c.b16 %v10211, %v10209
    %v10250 = vpack.c.b16 %v10212, %v10210
    %v10251 = vpack.c.b16 %v10215, %v10213
    %v10252 = vpack.c.b16 %v10216, %v10214
    %v10253 = vpack.c.b16 %v10219, %v10217
    %v10254 = vpack.c.b16 %v10220, %v10218
    %v10255 = vpack.c.b16 %v10223, %v10221
    %v10256 = vpack.c.b16 %v10224, %v10222
    %v10257 = vpack.c.b16 %v10227, %v10225
    %v10258 = vpack.c.b16 %v10228, %v10226
    %v10259 = vpack.c.b16 %v10231, %v10229
    %v10260 = vpack.c.b16 %v10232, %v10230
    %v10261 = vpack.c.b16 %v10235, %v10233
    %v10262 = vpack.c.b16 %v10236, %v10234
    %v10263 = vpack.c.b16 %v10239, %v10237
    %v10264 = vpack.c.b16 %v10240, %v10238
    %v10265 = vpack.c.b16 %v10243, %v10241
    %v10266 = vpack.c.b16 %v10244, %v10242
    %v10267 = vpack.c.b16 %v10247, %v10245
    %v10268 = vpack.c.b16 %v10248, %v10246
    %v10290 = vsel %vm8624, %v10146, 0
    %v10293 = vsel %vm8624, %v10148, 0
    %v10296 = vsel %vm8624, %v10150, 0
    %v10299 = vsel %vm8624, %v10152, 0
    %v10302 = vsel %vm8624, %v10154, 0
    %v10305 = vsel %vm8624, %v10156, 0
    %v10308 = vsel %vm8624, %v10158, 0
    %v10311 = vsel %vm8624, %v10160, 0
    %10313 = vmatpush.bf16.msra.mxu0 %v10263
    %10314 = vmatpush.bf16.msra.mxu0 %v10261
    %10315 = vmatpush.bf16.msra.mxu0 %v10259
    %10316 = vmatpush.bf16.msra.mxu0 %v10257
    %10317 = vmatpush.bf16.msra.mxu0 %v10255
    %10318 = vmatpush.bf16.msra.mxu0 %v10253
    %10319 = vmatpush.bf16.msra.mxu0 %v10251
    %10320 = vmatpush.bf16.msra.mxu0 %v10249
    %10321 = vmatmul.bf16.gmra.mxu0 %v10145
    %v10322 = vpop.f32.mrf.mxu0
    %v10323 = vadd.f32 %v10185, %v10322
    %v10324 = vpop.f32.mrf.mxu0
    %v10325 = vadd.f32 %v10185, %v10324
    %10326 = vmatmul.bf16.gmra.mxu0 %v10147
    %v10327 = vpop.f32.mrf.mxu0
    %v10328 = vadd.f32 %v10185, %v10327
    %v10329 = vpop.f32.mrf.mxu0
    %v10330 = vadd.f32 %v10185, %v10329
    %10331 = vmatmul.bf16.gmra.mxu0 %v10149
    %v10332 = vpop.f32.mrf.mxu0
    %v10333 = vadd.f32 %v10185, %v10332
    %v10334 = vpop.f32.mrf.mxu0
    %v10335 = vadd.f32 %v10185, %v10334
    %10336 = vmatmul.bf16.gmra.mxu0 %v10151
    %v10337 = vpop.f32.mrf.mxu0
    %v10338 = vadd.f32 %v10185, %v10337
    %v10339 = vpop.f32.mrf.mxu0
    %v10340 = vadd.f32 %v10185, %v10339
    %10341 = vmatmul.bf16.gmra.mxu0 %v10153
    %v10342 = vpop.f32.mrf.mxu0
    %v10343 = vadd.f32 %v10185, %v10342
    %v10344 = vpop.f32.mrf.mxu0
    %v10345 = vadd.f32 %v10185, %v10344
    %10346 = vmatmul.bf16.gmra.mxu0 %v10155
    %v10347 = vpop.f32.mrf.mxu0
    %v10348 = vadd.f32 %v10185, %v10347
    %v10349 = vpop.f32.mrf.mxu0
    %v10350 = vadd.f32 %v10185, %v10349
    %10351 = vmatmul.bf16.gmra.mxu0 %v10157
    %v10352 = vpop.f32.mrf.mxu0
    %v10353 = vadd.f32 %v10185, %v10352
    %v10354 = vpop.f32.mrf.mxu0
    %v10355 = vadd.f32 %v10185, %v10354
    %10356 = vmatmul.bf16.gmra.mxu0 %v10159
    %v10357 = vpop.f32.mrf.mxu0
    %v10358 = vadd.f32 %v10185, %v10357
    %v10359 = vpop.f32.mrf.mxu0
    %v10360 = vadd.f32 %v10185, %v10359
    %10361 = vdwg.mxu0
    %10362 = vmatpush.bf16.msra.mxu0 0
    %10363 = vmatpush.bf16.msra.mxu0 0
    %10364 = vmatpush.bf16.msra.mxu0 0
    %10365 = vmatpush.bf16.msra.mxu0 0
    %10366 = vmatpush.bf16.msra.mxu0 0
    %10367 = vmatpush.bf16.msra.mxu0 0
    %10368 = vmatpush.bf16.msra.mxu0 %v10267
    %10369 = vmatpush.bf16.msra.mxu0 %v10265
    %10370 = vmatmul.bf16.gmra.mxu0 %v10290
    %v10371 = vpop.f32.mrf.mxu0
    %v10372 = vadd.f32 %v10323, %v10371
    %v10373 = vpop.f32.mrf.mxu0
    %v10374 = vadd.f32 %v10325, %v10373
    %10375 = vmatmul.bf16.gmra.mxu0 %v10293
    %v10376 = vpop.f32.mrf.mxu0
    %v10377 = vadd.f32 %v10328, %v10376
    %v10378 = vpop.f32.mrf.mxu0
    %v10379 = vadd.f32 %v10330, %v10378
    %10380 = vmatmul.bf16.gmra.mxu0 %v10296
    %v10381 = vpop.f32.mrf.mxu0
    %v10382 = vadd.f32 %v10333, %v10381
    %v10383 = vpop.f32.mrf.mxu0
    %v10384 = vadd.f32 %v10335, %v10383
    %10385 = vmatmul.bf16.gmra.mxu0 %v10299
    %v10386 = vpop.f32.mrf.mxu0
    %v10387 = vadd.f32 %v10338, %v10386
    %v10388 = vpop.f32.mrf.mxu0
    %v10389 = vadd.f32 %v10340, %v10388
    %10390 = vmatmul.bf16.gmra.mxu0 %v10302
    %v10391 = vpop.f32.mrf.mxu0
    %v10392 = vadd.f32 %v10343, %v10391
    %v10393 = vpop.f32.mrf.mxu0
    %v10394 = vadd.f32 %v10345, %v10393
    %10395 = vmatmul.bf16.gmra.mxu0 %v10305
    %v10396 = vpop.f32.mrf.mxu0
    %v10397 = vadd.f32 %v10348, %v10396
    %v10398 = vpop.f32.mrf.mxu0
    %v10399 = vadd.f32 %v10350, %v10398
    %10400 = vmatmul.bf16.gmra.mxu0 %v10308
    %v10401 = vpop.f32.mrf.mxu0
    %v10402 = vadd.f32 %v10353, %v10401
    %v10403 = vpop.f32.mrf.mxu0
    %v10404 = vadd.f32 %v10355, %v10403
    %10405 = vmatmul.bf16.gmra.mxu0 %v10311
    %v10406 = vpop.f32.mrf.mxu0
    %v10407 = vadd.f32 %v10358, %v10406
    %v10408 = vpop.f32.mrf.mxu0
    %v10409 = vadd.f32 %v10360, %v10408
    %10410 = vdwg.mxu0
    %10411 = vmatpush.bf16.msra.mxu0 %v10264
    %10412 = vmatpush.bf16.msra.mxu0 %v10262
    %10413 = vmatpush.bf16.msra.mxu0 %v10260
    %10414 = vmatpush.bf16.msra.mxu0 %v10258
    %10415 = vmatpush.bf16.msra.mxu0 %v10256
    %10416 = vmatpush.bf16.msra.mxu0 %v10254
    %10417 = vmatpush.bf16.msra.mxu0 %v10252
    %10418 = vmatpush.bf16.msra.mxu0 %v10250
    %10419 = vmatmul.bf16.gmra.mxu0 %v10145
    %v10420 = vpop.f32.mrf.mxu0
    %v10421 = vadd.f32 %v10186, %v10420
    %v10422 = vpop.f32.mrf.mxu0
    %v10423 = vadd.f32 %v10186, %v10422
    %10424 = vmatmul.bf16.gmra.mxu0 %v10147
    %v10425 = vpop.f32.mrf.mxu0
    %v10426 = vadd.f32 %v10186, %v10425
    %v10427 = vpop.f32.mrf.mxu0
    %v10428 = vadd.f32 %v10186, %v10427
    %10429 = vmatmul.bf16.gmra.mxu0 %v10149
    %v10430 = vpop.f32.mrf.mxu0
    %v10431 = vadd.f32 %v10186, %v10430
    %v10432 = vpop.f32.mrf.mxu0
    %v10433 = vadd.f32 %v10186, %v10432
    %10434 = vmatmul.bf16.gmra.mxu0 %v10151
    %v10435 = vpop.f32.mrf.mxu0
    %v10436 = vadd.f32 %v10186, %v10435
    %v10437 = vpop.f32.mrf.mxu0
    %v10438 = vadd.f32 %v10186, %v10437
    %10439 = vmatmul.bf16.gmra.mxu0 %v10153
    %v10440 = vpop.f32.mrf.mxu0
    %v10441 = vadd.f32 %v10186, %v10440
    %v10442 = vpop.f32.mrf.mxu0
    %v10443 = vadd.f32 %v10186, %v10442
    %10444 = vmatmul.bf16.gmra.mxu0 %v10155
    %v10445 = vpop.f32.mrf.mxu0
    %v10446 = vadd.f32 %v10186, %v10445
    %v10447 = vpop.f32.mrf.mxu0
    %v10448 = vadd.f32 %v10186, %v10447
    %10449 = vmatmul.bf16.gmra.mxu0 %v10157
    %v10450 = vpop.f32.mrf.mxu0
    %v10451 = vadd.f32 %v10186, %v10450
    %v10452 = vpop.f32.mrf.mxu0
    %v10453 = vadd.f32 %v10186, %v10452
    %10454 = vmatmul.bf16.gmra.mxu0 %v10159
    %v10455 = vpop.f32.mrf.mxu0
    %v10456 = vadd.f32 %v10186, %v10455
    %v10457 = vpop.f32.mrf.mxu0
    %v10458 = vadd.f32 %v10186, %v10457
    %10459 = vdwg.mxu0
    %10460 = vmatpush.bf16.msra.mxu0 0
    %10461 = vmatpush.bf16.msra.mxu0 0
    %10462 = vmatpush.bf16.msra.mxu0 0
    %10463 = vmatpush.bf16.msra.mxu0 0
    %10464 = vmatpush.bf16.msra.mxu0 0
    %10465 = vmatpush.bf16.msra.mxu0 0
    %10466 = vmatpush.bf16.msra.mxu0 %v10268
    %10467 = vmatpush.bf16.msra.mxu0 %v10266
    %10468 = vmatmul.bf16.gmra.mxu0 %v10290
    %v10469 = vpop.f32.mrf.mxu0
    %v10470 = vadd.f32 %v10421, %v10469
    %v10471 = vpop.f32.mrf.mxu0
    %v10472 = vadd.f32 %v10423, %v10471
    %10473 = vmatmul.bf16.gmra.mxu0 %v10293
    %v10474 = vpop.f32.mrf.mxu0
    %v10475 = vadd.f32 %v10426, %v10474
    %v10476 = vpop.f32.mrf.mxu0
    %v10477 = vadd.f32 %v10428, %v10476
    %10478 = vmatmul.bf16.gmra.mxu0 %v10296
    %v10479 = vpop.f32.mrf.mxu0
    %v10480 = vadd.f32 %v10431, %v10479
    %v10481 = vpop.f32.mrf.mxu0
    %v10482 = vadd.f32 %v10433, %v10481
    %10483 = vmatmul.bf16.gmra.mxu0 %v10299
    %v10484 = vpop.f32.mrf.mxu0
    %v10485 = vadd.f32 %v10436, %v10484
    %v10486 = vpop.f32.mrf.mxu0
    %v10487 = vadd.f32 %v10438, %v10486
    %10488 = vmatmul.bf16.gmra.mxu0 %v10302
    %v10489 = vpop.f32.mrf.mxu0
    %v10490 = vadd.f32 %v10441, %v10489
    %v10491 = vpop.f32.mrf.mxu0
    %v10492 = vadd.f32 %v10443, %v10491
    %10493 = vmatmul.bf16.gmra.mxu0 %v10305
    %v10494 = vpop.f32.mrf.mxu0
    %v10495 = vadd.f32 %v10446, %v10494
    %v10496 = vpop.f32.mrf.mxu0
    %v10497 = vadd.f32 %v10448, %v10496
    %10498 = vmatmul.bf16.gmra.mxu0 %v10308
    %v10499 = vpop.f32.mrf.mxu0
    %v10500 = vadd.f32 %v10451, %v10499
    %v10501 = vpop.f32.mrf.mxu0
    %v10502 = vadd.f32 %v10453, %v10501
    %10503 = vmatmul.bf16.gmra.mxu0 %v10311
    %v10504 = vpop.f32.mrf.mxu0
    %v10505 = vadd.f32 %v10456, %v10504
    %v10506 = vpop.f32.mrf.mxu0
    %v10507 = vadd.f32 %v10458, %v10506
    %10508 = vdwg.mxu0
    %v10509 = vmax.f32 %v10372, 0.0
    %v10510 = vmax.f32 %v10470, 0.0
    %v10511 = vmax.f32 %v10374, 0.0
    %v10512 = vmax.f32 %v10472, 0.0
    %v10513 = vmax.f32 %v10377, 0.0
    %v10514 = vmax.f32 %v10475, 0.0
    %v10515 = vmax.f32 %v10379, 0.0
    %v10516 = vmax.f32 %v10477, 0.0
    %v10517 = vmax.f32 %v10382, 0.0
    %v10518 = vmax.f32 %v10480, 0.0
    %v10519 = vmax.f32 %v10384, 0.0
    %v10520 = vmax.f32 %v10482, 0.0
    %v10521 = vmax.f32 %v10387, 0.0
    %v10522 = vmax.f32 %v10485, 0.0
    %v10523 = vmax.f32 %v10389, 0.0
    %v10524 = vmax.f32 %v10487, 0.0
    %v10525 = vmax.f32 %v10392, 0.0
    %v10526 = vmax.f32 %v10490, 0.0
    %v10527 = vmax.f32 %v10394, 0.0
    %v10528 = vmax.f32 %v10492, 0.0
    %v10529 = vmax.f32 %v10397, 0.0
    %v10530 = vmax.f32 %v10495, 0.0
    %v10531 = vmax.f32 %v10399, 0.0
    %v10532 = vmax.f32 %v10497, 0.0
    %v10533 = vmax.f32 %v10402, 0.0
    %v10534 = vmax.f32 %v10500, 0.0
    %v10535 = vmax.f32 %v10404, 0.0
    %v10536 = vmax.f32 %v10502, 0.0
    %v10537 = vmax.f32 %v10407, 0.0
    %v10538 = vmax.f32 %v10505, 0.0
    %v10539 = vmax.f32 %v10409, 0.0
    %v10540 = vmax.f32 %v10507, 0.0
    %v10541 = vpack.c.bf16 %v10511, %v10509
    %v10542 = vpack.c.bf16 %v10512, %v10510
    %v10543 = vpack.c.bf16 %v10515, %v10513
    %v10544 = vpack.c.bf16 %v10516, %v10514
    %v10545 = vpack.c.bf16 %v10519, %v10517
    %v10546 = vpack.c.bf16 %v10520, %v10518
    %v10547 = vpack.c.bf16 %v10523, %v10521
    %v10548 = vpack.c.bf16 %v10524, %v10522
    %v10549 = vpack.c.bf16 %v10527, %v10525
    %v10550 = vpack.c.bf16 %v10528, %v10526
    %v10551 = vpack.c.bf16 %v10531, %v10529
    %v10552 = vpack.c.bf16 %v10532, %v10530
    %v10553 = vpack.c.bf16 %v10535, %v10533
    %v10554 = vpack.c.bf16 %v10536, %v10534
    %v10555 = vpack.c.bf16 %v10539, %v10537
    %v10556 = vpack.c.bf16 %v10540, %v10538
    %v10621 = vunpack.c.l.b16 %v9570
    %v10622 = vunpack.c.l.b16 %v9571
    %v10623 = vunpack.c.l.b16 %v9572
    %v10624 = vunpack.c.l.b16 %v9573
    %v10625 = vunpack.c.l.b16 %v9574
    %v10626 = vunpack.c.l.b16 %v9575
    %v10627 = vunpack.c.l.b16 %v9576
    %v10628 = vunpack.c.l.b16 %v9577
    %v10629 = vunpack.c.l.b16 %v9578
    %v10630 = vunpack.c.l.b16 %v9579
    %v10631 = vunpack.c.l.b16 %v9580
    %v10632 = vunpack.c.l.b16 %v9581
    %v10633 = vunpack.c.l.b16 %v9582
    %v10634 = vunpack.c.l.b16 %v9583
    %v10635 = vunpack.c.l.b16 %v9584
    %v10636 = vunpack.c.l.b16 %v9585
    %v10637 = vunpack.c.l.b16 %v9586
    %v10638 = vunpack.c.l.b16 %v9587
    %v10639 = vunpack.c.l.b16 %v9588
    %v10640 = vunpack.c.l.b16 %v9589
    %v10641 = vunpack.c.l.b16 %v9590
    %v10642 = vunpack.c.l.b16 %v9591
    %v10643 = vunpack.c.l.b16 %v9592
    %v10644 = vunpack.c.l.b16 %v9593
    %v10645 = vunpack.c.l.b16 %v9594
    %v10646 = vunpack.c.l.b16 %v9595
    %v10647 = vunpack.c.l.b16 %v9596
    %v10648 = vunpack.c.l.b16 %v9597
    %v10649 = vunpack.c.l.b16 %v9598
    %v10650 = vunpack.c.l.b16 %v9599
    %v10651 = vunpack.c.l.b16 %v9600
    %v10652 = vunpack.c.l.b16 %v9601
    %v10653 = vunpack.c.l.b16 %v9602
    %v10654 = vunpack.c.l.b16 %v9603
    %v10655 = vunpack.c.l.b16 %v9604
    %v10656 = vunpack.c.l.b16 %v9605
    %v10657 = vunpack.c.l.b16 %v9606
    %v10658 = vunpack.c.l.b16 %v9607
    %v10659 = vunpack.c.l.b16 %v9608
    %v10660 = vunpack.c.l.b16 %v9609
    %v10661 = vunpack.c.l.b16 %v9610
    %v10662 = vunpack.c.l.b16 %v9611
    %v10663 = vunpack.c.l.b16 %v9612
    %v10664 = vunpack.c.l.b16 %v9613
    %v10665 = vunpack.c.l.b16 %v9614
    %v10666 = vunpack.c.l.b16 %v9615
    %v10667 = vunpack.c.l.b16 %v9616
    %v10668 = vunpack.c.l.b16 %v9617
    %v10669 = vunpack.c.l.b16 %v9618
    %v10670 = vunpack.c.l.b16 %v9619
    %v10671 = vunpack.c.l.b16 %v9620
    %v10672 = vunpack.c.l.b16 %v9621
    %v10673 = vunpack.c.l.b16 %v9622
    %v10674 = vunpack.c.l.b16 %v9623
    %v10675 = vunpack.c.l.b16 %v9624
    %v10676 = vunpack.c.l.b16 %v9625
    %v10677 = vunpack.c.l.b16 %v9626
    %v10678 = vunpack.c.l.b16 %v9627
    %v10679 = vunpack.c.l.b16 %v9628
    %v10680 = vunpack.c.l.b16 %v9629
    %v10681 = vunpack.c.l.b16 %v9630
    %v10682 = vunpack.c.l.b16 %v9631
    %v10683 = vunpack.c.l.b16 %v9632
    %v10684 = vunpack.c.l.b16 %v9633
    %v10685 = vpack.c.b16 %v10622, %v10621
    %v10686 = vpack.c.b16 %v10624, %v10623
    %v10687 = vpack.c.b16 %v10626, %v10625
    %v10688 = vpack.c.b16 %v10628, %v10627
    %v10689 = vpack.c.b16 %v10630, %v10629
    %v10690 = vpack.c.b16 %v10632, %v10631
    %v10691 = vpack.c.b16 %v10634, %v10633
    %v10692 = vpack.c.b16 %v10636, %v10635
    %v10693 = vpack.c.b16 %v10638, %v10637
    %v10694 = vpack.c.b16 %v10640, %v10639
    %v10695 = vpack.c.b16 %v10642, %v10641
    %v10696 = vpack.c.b16 %v10644, %v10643
    %v10697 = vpack.c.b16 %v10646, %v10645
    %v10698 = vpack.c.b16 %v10648, %v10647
    %v10699 = vpack.c.b16 %v10650, %v10649
    %v10700 = vpack.c.b16 %v10652, %v10651
    %v10701 = vpack.c.b16 %v10654, %v10653
    %v10702 = vpack.c.b16 %v10656, %v10655
    %v10703 = vpack.c.b16 %v10658, %v10657
    %v10704 = vpack.c.b16 %v10660, %v10659
    %v10705 = vpack.c.b16 %v10662, %v10661
    %v10706 = vpack.c.b16 %v10664, %v10663
    %v10707 = vpack.c.b16 %v10666, %v10665
    %v10708 = vpack.c.b16 %v10668, %v10667
    %v10709 = vpack.c.b16 %v10670, %v10669
    %v10710 = vpack.c.b16 %v10672, %v10671
    %v10711 = vpack.c.b16 %v10674, %v10673
    %v10712 = vpack.c.b16 %v10676, %v10675
    %v10713 = vpack.c.b16 %v10678, %v10677
    %v10714 = vpack.c.b16 %v10680, %v10679
    %v10715 = vpack.c.b16 %v10682, %v10681
    %v10716 = vpack.c.b16 %v10684, %v10683
    %10749 = vmatpush.bf16.msra.mxu0 %v10555
    %10750 = vmatpush.bf16.msra.mxu0 %v10553
    %10751 = vmatpush.bf16.msra.mxu0 %v10551
    %10752 = vmatpush.bf16.msra.mxu0 %v10549
    %10753 = vmatpush.bf16.msra.mxu0 %v10547
    %10754 = vmatpush.bf16.msra.mxu0 %v10545
    %10755 = vmatpush.bf16.msra.mxu0 %v10543
    %10756 = vmatpush.bf16.msra.mxu0 %v10541
    %10757 = vmatmul.bf16.gmra.mxu0 %v10685
    %v10758 = vpop.f32.mrf.mxu0
    %v10759 = vadd.f32 0.0, %v10758
    %v10760 = vpop.f32.mrf.mxu0
    %v10761 = vadd.f32 0.0, %v10760
    %10762 = vmatmul.bf16.gmra.mxu0 %v10686
    %v10763 = vpop.f32.mrf.mxu0
    %v10764 = vadd.f32 0.0, %v10763
    %v10765 = vpop.f32.mrf.mxu0
    %v10766 = vadd.f32 0.0, %v10765
    %10767 = vmatmul.bf16.gmra.mxu0 %v10687
    %v10768 = vpop.f32.mrf.mxu0
    %v10769 = vadd.f32 0.0, %v10768
    %v10770 = vpop.f32.mrf.mxu0
    %v10771 = vadd.f32 0.0, %v10770
    %10772 = vmatmul.bf16.gmra.mxu0 %v10688
    %v10773 = vpop.f32.mrf.mxu0
    %v10774 = vadd.f32 0.0, %v10773
    %v10775 = vpop.f32.mrf.mxu0
    %v10776 = vadd.f32 0.0, %v10775
    %10777 = vmatmul.bf16.gmra.mxu0 %v10689
    %v10778 = vpop.f32.mrf.mxu0
    %v10779 = vadd.f32 0.0, %v10778
    %v10780 = vpop.f32.mrf.mxu0
    %v10781 = vadd.f32 0.0, %v10780
    %10782 = vmatmul.bf16.gmra.mxu0 %v10690
    %v10783 = vpop.f32.mrf.mxu0
    %v10784 = vadd.f32 0.0, %v10783
    %v10785 = vpop.f32.mrf.mxu0
    %v10786 = vadd.f32 0.0, %v10785
    %10787 = vmatmul.bf16.gmra.mxu0 %v10691
    %v10788 = vpop.f32.mrf.mxu0
    %v10789 = vadd.f32 0.0, %v10788
    %v10790 = vpop.f32.mrf.mxu0
    %v10791 = vadd.f32 0.0, %v10790
    %10792 = vmatmul.bf16.gmra.mxu0 %v10692
    %v10793 = vpop.f32.mrf.mxu0
    %v10794 = vadd.f32 0.0, %v10793
    %v10795 = vpop.f32.mrf.mxu0
    %v10796 = vadd.f32 0.0, %v10795
    %10797 = vmatmul.bf16.gmra.mxu0 %v10693
    %v10798 = vpop.f32.mrf.mxu0
    %v10799 = vadd.f32 0.0, %v10798
    %v10800 = vpop.f32.mrf.mxu0
    %v10801 = vadd.f32 0.0, %v10800
    %10802 = vmatmul.bf16.gmra.mxu0 %v10694
    %v10803 = vpop.f32.mrf.mxu0
    %v10804 = vadd.f32 0.0, %v10803
    %v10805 = vpop.f32.mrf.mxu0
    %v10806 = vadd.f32 0.0, %v10805
    %10807 = vmatmul.bf16.gmra.mxu0 %v10695
    %v10808 = vpop.f32.mrf.mxu0
    %v10809 = vadd.f32 0.0, %v10808
    %v10810 = vpop.f32.mrf.mxu0
    %v10811 = vadd.f32 0.0, %v10810
    %10812 = vmatmul.bf16.gmra.mxu0 %v10696
    %v10813 = vpop.f32.mrf.mxu0
    %v10814 = vadd.f32 0.0, %v10813
    %v10815 = vpop.f32.mrf.mxu0
    %v10816 = vadd.f32 0.0, %v10815
    %10817 = vmatmul.bf16.gmra.mxu0 %v10697
    %v10818 = vpop.f32.mrf.mxu0
    %v10819 = vadd.f32 0.0, %v10818
    %v10820 = vpop.f32.mrf.mxu0
    %v10821 = vadd.f32 0.0, %v10820
    %10822 = vmatmul.bf16.gmra.mxu0 %v10698
    %v10823 = vpop.f32.mrf.mxu0
    %v10824 = vadd.f32 0.0, %v10823
    %v10825 = vpop.f32.mrf.mxu0
    %v10826 = vadd.f32 0.0, %v10825
    %10827 = vmatmul.bf16.gmra.mxu0 %v10699
    %v10828 = vpop.f32.mrf.mxu0
    %v10829 = vadd.f32 0.0, %v10828
    %v10830 = vpop.f32.mrf.mxu0
    %v10831 = vadd.f32 0.0, %v10830
    %10832 = vmatmul.bf16.gmra.mxu0 %v10700
    %v10833 = vpop.f32.mrf.mxu0
    %v10834 = vadd.f32 0.0, %v10833
    %v10835 = vpop.f32.mrf.mxu0
    %v10836 = vadd.f32 0.0, %v10835
    %10837 = vmatmul.bf16.gmra.mxu0 %v10701
    %v10838 = vpop.f32.mrf.mxu0
    %v10839 = vadd.f32 0.0, %v10838
    %v10840 = vpop.f32.mrf.mxu0
    %v10841 = vadd.f32 0.0, %v10840
    %10842 = vmatmul.bf16.gmra.mxu0 %v10702
    %v10843 = vpop.f32.mrf.mxu0
    %v10844 = vadd.f32 0.0, %v10843
    %v10845 = vpop.f32.mrf.mxu0
    %v10846 = vadd.f32 0.0, %v10845
    %10847 = vmatmul.bf16.gmra.mxu0 %v10703
    %v10848 = vpop.f32.mrf.mxu0
    %v10849 = vadd.f32 0.0, %v10848
    %v10850 = vpop.f32.mrf.mxu0
    %v10851 = vadd.f32 0.0, %v10850
    %10852 = vmatmul.bf16.gmra.mxu0 %v10704
    %v10853 = vpop.f32.mrf.mxu0
    %v10854 = vadd.f32 0.0, %v10853
    %v10855 = vpop.f32.mrf.mxu0
    %v10856 = vadd.f32 0.0, %v10855
    %10857 = vmatmul.bf16.gmra.mxu0 %v10705
    %v10858 = vpop.f32.mrf.mxu0
    %v10859 = vadd.f32 0.0, %v10858
    %v10860 = vpop.f32.mrf.mxu0
    %v10861 = vadd.f32 0.0, %v10860
    %10862 = vmatmul.bf16.gmra.mxu0 %v10706
    %v10863 = vpop.f32.mrf.mxu0
    %v10864 = vadd.f32 0.0, %v10863
    %v10865 = vpop.f32.mrf.mxu0
    %v10866 = vadd.f32 0.0, %v10865
    %10867 = vmatmul.bf16.gmra.mxu0 %v10707
    %v10868 = vpop.f32.mrf.mxu0
    %v10869 = vadd.f32 0.0, %v10868
    %v10870 = vpop.f32.mrf.mxu0
    %v10871 = vadd.f32 0.0, %v10870
    %10872 = vmatmul.bf16.gmra.mxu0 %v10708
    %v10873 = vpop.f32.mrf.mxu0
    %v10874 = vadd.f32 0.0, %v10873
    %v10875 = vpop.f32.mrf.mxu0
    %v10876 = vadd.f32 0.0, %v10875
    %10877 = vmatmul.bf16.gmra.mxu0 %v10709
    %v10878 = vpop.f32.mrf.mxu0
    %v10879 = vadd.f32 0.0, %v10878
    %v10880 = vpop.f32.mrf.mxu0
    %v10881 = vadd.f32 0.0, %v10880
    %10882 = vmatmul.bf16.gmra.mxu0 %v10710
    %v10883 = vpop.f32.mrf.mxu0
    %v10884 = vadd.f32 0.0, %v10883
    %v10885 = vpop.f32.mrf.mxu0
    %v10886 = vadd.f32 0.0, %v10885
    %10887 = vmatmul.bf16.gmra.mxu0 %v10711
    %v10888 = vpop.f32.mrf.mxu0
    %v10889 = vadd.f32 0.0, %v10888
    %v10890 = vpop.f32.mrf.mxu0
    %v10891 = vadd.f32 0.0, %v10890
    %10892 = vmatmul.bf16.gmra.mxu0 %v10712
    %v10893 = vpop.f32.mrf.mxu0
    %v10894 = vadd.f32 0.0, %v10893
    %v10895 = vpop.f32.mrf.mxu0
    %v10896 = vadd.f32 0.0, %v10895
    %10897 = vmatmul.bf16.gmra.mxu0 %v10713
    %v10898 = vpop.f32.mrf.mxu0
    %v10899 = vadd.f32 0.0, %v10898
    %v10900 = vpop.f32.mrf.mxu0
    %v10901 = vadd.f32 0.0, %v10900
    %10902 = vmatmul.bf16.gmra.mxu0 %v10714
    %v10903 = vpop.f32.mrf.mxu0
    %v10904 = vadd.f32 0.0, %v10903
    %v10905 = vpop.f32.mrf.mxu0
    %v10906 = vadd.f32 0.0, %v10905
    %10907 = vmatmul.bf16.gmra.mxu0 %v10715
    %v10908 = vpop.f32.mrf.mxu0
    %v10909 = vadd.f32 0.0, %v10908
    %v10910 = vpop.f32.mrf.mxu0
    %v10911 = vadd.f32 0.0, %v10910
    %10912 = vmatmul.bf16.gmra.mxu0 %v10716
    %v10913 = vpop.f32.mrf.mxu0
    %v10914 = vadd.f32 0.0, %v10913
    %v10915 = vpop.f32.mrf.mxu0
    %v10916 = vadd.f32 0.0, %v10915
    %10917 = vdwg.mxu0
    %10918 = vmatpush.bf16.msra.mxu0 %v10556
    %10919 = vmatpush.bf16.msra.mxu0 %v10554
    %10920 = vmatpush.bf16.msra.mxu0 %v10552
    %10921 = vmatpush.bf16.msra.mxu0 %v10550
    %10922 = vmatpush.bf16.msra.mxu0 %v10548
    %10923 = vmatpush.bf16.msra.mxu0 %v10546
    %10924 = vmatpush.bf16.msra.mxu0 %v10544
    %10925 = vmatpush.bf16.msra.mxu0 %v10542
    %10926 = vmatmul.bf16.gmra.mxu0 %v10685
    %v10927 = vpop.f32.mrf.mxu0
    %v10928 = vadd.f32 0.0, %v10927
    %v10929 = vpop.f32.mrf.mxu0
    %v10930 = vadd.f32 0.0, %v10929
    %10931 = vmatmul.bf16.gmra.mxu0 %v10686
    %v10932 = vpop.f32.mrf.mxu0
    %v10933 = vadd.f32 0.0, %v10932
    %v10934 = vpop.f32.mrf.mxu0
    %v10935 = vadd.f32 0.0, %v10934
    %10936 = vmatmul.bf16.gmra.mxu0 %v10687
    %v10937 = vpop.f32.mrf.mxu0
    %v10938 = vadd.f32 0.0, %v10937
    %v10939 = vpop.f32.mrf.mxu0
    %v10940 = vadd.f32 0.0, %v10939
    %10941 = vmatmul.bf16.gmra.mxu0 %v10688
    %v10942 = vpop.f32.mrf.mxu0
    %v10943 = vadd.f32 0.0, %v10942
    %v10944 = vpop.f32.mrf.mxu0
    %v10945 = vadd.f32 0.0, %v10944
    %10946 = vmatmul.bf16.gmra.mxu0 %v10689
    %v10947 = vpop.f32.mrf.mxu0
    %v10948 = vadd.f32 0.0, %v10947
    %v10949 = vpop.f32.mrf.mxu0
    %v10950 = vadd.f32 0.0, %v10949
    %10951 = vmatmul.bf16.gmra.mxu0 %v10690
    %v10952 = vpop.f32.mrf.mxu0
    %v10953 = vadd.f32 0.0, %v10952
    %v10954 = vpop.f32.mrf.mxu0
    %v10955 = vadd.f32 0.0, %v10954
    %10956 = vmatmul.bf16.gmra.mxu0 %v10691
    %v10957 = vpop.f32.mrf.mxu0
    %v10958 = vadd.f32 0.0, %v10957
    %v10959 = vpop.f32.mrf.mxu0
    %v10960 = vadd.f32 0.0, %v10959
    %10961 = vmatmul.bf16.gmra.mxu0 %v10692
    %v10962 = vpop.f32.mrf.mxu0
    %v10963 = vadd.f32 0.0, %v10962
    %v10964 = vpop.f32.mrf.mxu0
    %v10965 = vadd.f32 0.0, %v10964
    %10966 = vmatmul.bf16.gmra.mxu0 %v10693
    %v10967 = vpop.f32.mrf.mxu0
    %v10968 = vadd.f32 0.0, %v10967
    %v10969 = vpop.f32.mrf.mxu0
    %v10970 = vadd.f32 0.0, %v10969
    %10971 = vmatmul.bf16.gmra.mxu0 %v10694
    %v10972 = vpop.f32.mrf.mxu0
    %v10973 = vadd.f32 0.0, %v10972
    %v10974 = vpop.f32.mrf.mxu0
    %v10975 = vadd.f32 0.0, %v10974
    %10976 = vmatmul.bf16.gmra.mxu0 %v10695
    %v10977 = vpop.f32.mrf.mxu0
    %v10978 = vadd.f32 0.0, %v10977
    %v10979 = vpop.f32.mrf.mxu0
    %v10980 = vadd.f32 0.0, %v10979
    %10981 = vmatmul.bf16.gmra.mxu0 %v10696
    %v10982 = vpop.f32.mrf.mxu0
    %v10983 = vadd.f32 0.0, %v10982
    %v10984 = vpop.f32.mrf.mxu0
    %v10985 = vadd.f32 0.0, %v10984
    %10986 = vmatmul.bf16.gmra.mxu0 %v10697
    %v10987 = vpop.f32.mrf.mxu0
    %v10988 = vadd.f32 0.0, %v10987
    %v10989 = vpop.f32.mrf.mxu0
    %v10990 = vadd.f32 0.0, %v10989
    %10991 = vmatmul.bf16.gmra.mxu0 %v10698
    %v10992 = vpop.f32.mrf.mxu0
    %v10993 = vadd.f32 0.0, %v10992
    %v10994 = vpop.f32.mrf.mxu0
    %v10995 = vadd.f32 0.0, %v10994
    %10996 = vmatmul.bf16.gmra.mxu0 %v10699
    %v10997 = vpop.f32.mrf.mxu0
    %v10998 = vadd.f32 0.0, %v10997
    %v10999 = vpop.f32.mrf.mxu0
    %v11000 = vadd.f32 0.0, %v10999
    %11001 = vmatmul.bf16.gmra.mxu0 %v10700
    %v11002 = vpop.f32.mrf.mxu0
    %v11003 = vadd.f32 0.0, %v11002
    %v11004 = vpop.f32.mrf.mxu0
    %v11005 = vadd.f32 0.0, %v11004
    %11006 = vmatmul.bf16.gmra.mxu0 %v10701
    %v11007 = vpop.f32.mrf.mxu0
    %v11008 = vadd.f32 0.0, %v11007
    %v11009 = vpop.f32.mrf.mxu0
    %v11010 = vadd.f32 0.0, %v11009
    %11011 = vmatmul.bf16.gmra.mxu0 %v10702
    %v11012 = vpop.f32.mrf.mxu0
    %v11013 = vadd.f32 0.0, %v11012
    %v11014 = vpop.f32.mrf.mxu0
    %v11015 = vadd.f32 0.0, %v11014
    %11016 = vmatmul.bf16.gmra.mxu0 %v10703
    %v11017 = vpop.f32.mrf.mxu0
    %v11018 = vadd.f32 0.0, %v11017
    %v11019 = vpop.f32.mrf.mxu0
    %v11020 = vadd.f32 0.0, %v11019
    %11021 = vmatmul.bf16.gmra.mxu0 %v10704
    %v11022 = vpop.f32.mrf.mxu0
    %v11023 = vadd.f32 0.0, %v11022
    %v11024 = vpop.f32.mrf.mxu0
    %v11025 = vadd.f32 0.0, %v11024
    %11026 = vmatmul.bf16.gmra.mxu0 %v10705
    %v11027 = vpop.f32.mrf.mxu0
    %v11028 = vadd.f32 0.0, %v11027
    %v11029 = vpop.f32.mrf.mxu0
    %v11030 = vadd.f32 0.0, %v11029
    %11031 = vmatmul.bf16.gmra.mxu0 %v10706
    %v11032 = vpop.f32.mrf.mxu0
    %v11033 = vadd.f32 0.0, %v11032
    %v11034 = vpop.f32.mrf.mxu0
    %v11035 = vadd.f32 0.0, %v11034
    %11036 = vmatmul.bf16.gmra.mxu0 %v10707
    %v11037 = vpop.f32.mrf.mxu0
    %v11038 = vadd.f32 0.0, %v11037
    %v11039 = vpop.f32.mrf.mxu0
    %v11040 = vadd.f32 0.0, %v11039
    %11041 = vmatmul.bf16.gmra.mxu0 %v10708
    %v11042 = vpop.f32.mrf.mxu0
    %v11043 = vadd.f32 0.0, %v11042
    %v11044 = vpop.f32.mrf.mxu0
    %v11045 = vadd.f32 0.0, %v11044
    %11046 = vmatmul.bf16.gmra.mxu0 %v10709
    %v11047 = vpop.f32.mrf.mxu0
    %v11048 = vadd.f32 0.0, %v11047
    %v11049 = vpop.f32.mrf.mxu0
    %v11050 = vadd.f32 0.0, %v11049
    %11051 = vmatmul.bf16.gmra.mxu0 %v10710
    %v11052 = vpop.f32.mrf.mxu0
    %v11053 = vadd.f32 0.0, %v11052
    %v11054 = vpop.f32.mrf.mxu0
    %v11055 = vadd.f32 0.0, %v11054
    %11056 = vmatmul.bf16.gmra.mxu0 %v10711
    %v11057 = vpop.f32.mrf.mxu0
    %v11058 = vadd.f32 0.0, %v11057
    %v11059 = vpop.f32.mrf.mxu0
    %v11060 = vadd.f32 0.0, %v11059
    %11061 = vmatmul.bf16.gmra.mxu0 %v10712
    %v11062 = vpop.f32.mrf.mxu0
    %v11063 = vadd.f32 0.0, %v11062
    %v11064 = vpop.f32.mrf.mxu0
    %v11065 = vadd.f32 0.0, %v11064
    %11066 = vmatmul.bf16.gmra.mxu0 %v10713
    %v11067 = vpop.f32.mrf.mxu0
    %v11068 = vadd.f32 0.0, %v11067
    %v11069 = vpop.f32.mrf.mxu0
    %v11070 = vadd.f32 0.0, %v11069
    %11071 = vmatmul.bf16.gmra.mxu0 %v10714
    %v11072 = vpop.f32.mrf.mxu0
    %v11073 = vadd.f32 0.0, %v11072
    %v11074 = vpop.f32.mrf.mxu0
    %v11075 = vadd.f32 0.0, %v11074
    %11076 = vmatmul.bf16.gmra.mxu0 %v10715
    %v11077 = vpop.f32.mrf.mxu0
    %v11078 = vadd.f32 0.0, %v11077
    %v11079 = vpop.f32.mrf.mxu0
    %v11080 = vadd.f32 0.0, %v11079
    %11081 = vmatmul.bf16.gmra.mxu0 %v10716
    %v11082 = vpop.f32.mrf.mxu0
    %v11083 = vadd.f32 0.0, %v11082
    %v11084 = vpop.f32.mrf.mxu0
    %v11085 = vadd.f32 0.0, %v11084
    %11086 = vdwg.mxu0
    %v11087 = vadd.f32 %v8871, %v10759
    %v11088 = vadd.f32 %v9040, %v10928
    %v11089 = vadd.f32 %v8873, %v10761
    %v11090 = vadd.f32 %v9042, %v10930
    %v11091 = vadd.f32 %v8876, %v10764
    %v11092 = vadd.f32 %v9045, %v10933
    %v11093 = vadd.f32 %v8878, %v10766
    %v11094 = vadd.f32 %v9047, %v10935
    %v11095 = vadd.f32 %v8881, %v10769
    %v11096 = vadd.f32 %v9050, %v10938
    %v11097 = vadd.f32 %v8883, %v10771
    %v11098 = vadd.f32 %v9052, %v10940
    %v11099 = vadd.f32 %v8886, %v10774
    %v11100 = vadd.f32 %v9055, %v10943
    %v11101 = vadd.f32 %v8888, %v10776
    %v11102 = vadd.f32 %v9057, %v10945
    %v11103 = vadd.f32 %v8891, %v10779
    %v11104 = vadd.f32 %v9060, %v10948
    %v11105 = vadd.f32 %v8893, %v10781
    %v11106 = vadd.f32 %v9062, %v10950
    %v11107 = vadd.f32 %v8896, %v10784
    %v11108 = vadd.f32 %v9065, %v10953
    %v11109 = vadd.f32 %v8898, %v10786
    %v11110 = vadd.f32 %v9067, %v10955
    %v11111 = vadd.f32 %v8901, %v10789
    %v11112 = vadd.f32 %v9070, %v10958
    %v11113 = vadd.f32 %v8903, %v10791
    %v11114 = vadd.f32 %v9072, %v10960
    %v11115 = vadd.f32 %v8906, %v10794
    %v11116 = vadd.f32 %v9075, %v10963
    %v11117 = vadd.f32 %v8908, %v10796
    %v11118 = vadd.f32 %v9077, %v10965
    %v11119 = vadd.f32 %v8911, %v10799
    %v11120 = vadd.f32 %v9080, %v10968
    %v11121 = vadd.f32 %v8913, %v10801
    %v11122 = vadd.f32 %v9082, %v10970
    %v11123 = vadd.f32 %v8916, %v10804
    %v11124 = vadd.f32 %v9085, %v10973
    %v11125 = vadd.f32 %v8918, %v10806
    %v11126 = vadd.f32 %v9087, %v10975
    %v11127 = vadd.f32 %v8921, %v10809
    %v11128 = vadd.f32 %v9090, %v10978
    %v11129 = vadd.f32 %v8923, %v10811
    %v11130 = vadd.f32 %v9092, %v10980
    %v11131 = vadd.f32 %v8926, %v10814
    %v11132 = vadd.f32 %v9095, %v10983
    %v11133 = vadd.f32 %v8928, %v10816
    %v11134 = vadd.f32 %v9097, %v10985
    %v11135 = vadd.f32 %v8931, %v10819
    %v11136 = vadd.f32 %v9100, %v10988
    %v11137 = vadd.f32 %v8933, %v10821
    %v11138 = vadd.f32 %v9102, %v10990
    %v11139 = vadd.f32 %v8936, %v10824
    %v11140 = vadd.f32 %v9105, %v10993
    %v11141 = vadd.f32 %v8938, %v10826
    %v11142 = vadd.f32 %v9107, %v10995
    %v11143 = vadd.f32 %v8941, %v10829
    %v11144 = vadd.f32 %v9110, %v10998
    %v11145 = vadd.f32 %v8943, %v10831
    %v11146 = vadd.f32 %v9112, %v11000
    %v11147 = vadd.f32 %v8946, %v10834
    %v11148 = vadd.f32 %v9115, %v11003
    %v11149 = vadd.f32 %v8948, %v10836
    %v11150 = vadd.f32 %v9117, %v11005
    %v11151 = vadd.f32 %v8951, %v10839
    %v11152 = vadd.f32 %v9120, %v11008
    %v11153 = vadd.f32 %v8953, %v10841
    %v11154 = vadd.f32 %v9122, %v11010
    %v11155 = vadd.f32 %v8956, %v10844
    %v11156 = vadd.f32 %v9125, %v11013
    %v11157 = vadd.f32 %v8958, %v10846
    %v11158 = vadd.f32 %v9127, %v11015
    %v11159 = vadd.f32 %v8961, %v10849
    %v11160 = vadd.f32 %v9130, %v11018
    %v11161 = vadd.f32 %v8963, %v10851
    %v11162 = vadd.f32 %v9132, %v11020
    %v11163 = vadd.f32 %v8966, %v10854
    %v11164 = vadd.f32 %v9135, %v11023
    %v11165 = vadd.f32 %v8968, %v10856
    %v11166 = vadd.f32 %v9137, %v11025
    %v11167 = vadd.f32 %v8971, %v10859
    %v11168 = vadd.f32 %v9140, %v11028
    %v11169 = vadd.f32 %v8973, %v10861
    %v11170 = vadd.f32 %v9142, %v11030
    %v11171 = vadd.f32 %v8976, %v10864
    %v11172 = vadd.f32 %v9145, %v11033
    %v11173 = vadd.f32 %v8978, %v10866
    %v11174 = vadd.f32 %v9147, %v11035
    %v11175 = vadd.f32 %v8981, %v10869
    %v11176 = vadd.f32 %v9150, %v11038
    %v11177 = vadd.f32 %v8983, %v10871
    %v11178 = vadd.f32 %v9152, %v11040
    %v11179 = vadd.f32 %v8986, %v10874
    %v11180 = vadd.f32 %v9155, %v11043
    %v11181 = vadd.f32 %v8988, %v10876
    %v11182 = vadd.f32 %v9157, %v11045
    %v11183 = vadd.f32 %v8991, %v10879
    %v11184 = vadd.f32 %v9160, %v11048
    %v11185 = vadd.f32 %v8993, %v10881
    %v11186 = vadd.f32 %v9162, %v11050
    %v11187 = vadd.f32 %v8996, %v10884
    %v11188 = vadd.f32 %v9165, %v11053
    %v11189 = vadd.f32 %v8998, %v10886
    %v11190 = vadd.f32 %v9167, %v11055
    %v11191 = vadd.f32 %v9001, %v10889
    %v11192 = vadd.f32 %v9170, %v11058
    %v11193 = vadd.f32 %v9003, %v10891
    %v11194 = vadd.f32 %v9172, %v11060
    %v11195 = vadd.f32 %v9006, %v10894
    %v11196 = vadd.f32 %v9175, %v11063
    %v11197 = vadd.f32 %v9008, %v10896
    %v11198 = vadd.f32 %v9177, %v11065
    %v11199 = vadd.f32 %v9011, %v10899
    %v11200 = vadd.f32 %v9180, %v11068
    %v11201 = vadd.f32 %v9013, %v10901
    %v11202 = vadd.f32 %v9182, %v11070
    %v11203 = vadd.f32 %v9016, %v10904
    %v11204 = vadd.f32 %v9185, %v11073
    %v11205 = vadd.f32 %v9018, %v10906
    %v11206 = vadd.f32 %v9187, %v11075
    %v11207 = vadd.f32 %v9021, %v10909
    %v11208 = vadd.f32 %v9190, %v11078
    %v11209 = vadd.f32 %v9023, %v10911
    %v11210 = vadd.f32 %v9192, %v11080
    %v11211 = vadd.f32 %v9026, %v10914
    %v11212 = vadd.f32 %v9195, %v11083
    %v11213 = vadd.f32 %v9028, %v10916
    %v11214 = vadd.f32 %v9197, %v11085
    %v11215 = vpack.c.bf16 %v11089, %v11087
    %v11216 = vpack.c.bf16 %v11090, %v11088
    %v11217 = vpack.c.bf16 %v11093, %v11091
    %v11218 = vpack.c.bf16 %v11094, %v11092
    %v11219 = vpack.c.bf16 %v11097, %v11095
    %v11220 = vpack.c.bf16 %v11098, %v11096
    %v11221 = vpack.c.bf16 %v11101, %v11099
    %v11222 = vpack.c.bf16 %v11102, %v11100
    %v11223 = vpack.c.bf16 %v11105, %v11103
    %v11224 = vpack.c.bf16 %v11106, %v11104
    %v11225 = vpack.c.bf16 %v11109, %v11107
    %v11226 = vpack.c.bf16 %v11110, %v11108
    %v11227 = vpack.c.bf16 %v11113, %v11111
    %v11228 = vpack.c.bf16 %v11114, %v11112
    %v11229 = vpack.c.bf16 %v11117, %v11115
    %v11230 = vpack.c.bf16 %v11118, %v11116
    %v11231 = vpack.c.bf16 %v11121, %v11119
    %v11232 = vpack.c.bf16 %v11122, %v11120
    %v11233 = vpack.c.bf16 %v11125, %v11123
    %v11234 = vpack.c.bf16 %v11126, %v11124
    %v11235 = vpack.c.bf16 %v11129, %v11127
    %v11236 = vpack.c.bf16 %v11130, %v11128
    %v11237 = vpack.c.bf16 %v11133, %v11131
    %v11238 = vpack.c.bf16 %v11134, %v11132
    %v11239 = vpack.c.bf16 %v11137, %v11135
    %v11240 = vpack.c.bf16 %v11138, %v11136
    %v11241 = vpack.c.bf16 %v11141, %v11139
    %v11242 = vpack.c.bf16 %v11142, %v11140
    %v11243 = vpack.c.bf16 %v11145, %v11143
    %v11244 = vpack.c.bf16 %v11146, %v11144
    %v11245 = vpack.c.bf16 %v11149, %v11147
    %v11246 = vpack.c.bf16 %v11150, %v11148
    %v11247 = vpack.c.bf16 %v11153, %v11151
    %v11248 = vpack.c.bf16 %v11154, %v11152
    %v11249 = vpack.c.bf16 %v11157, %v11155
    %v11250 = vpack.c.bf16 %v11158, %v11156
    %v11251 = vpack.c.bf16 %v11161, %v11159
    %v11252 = vpack.c.bf16 %v11162, %v11160
    %v11253 = vpack.c.bf16 %v11165, %v11163
    %v11254 = vpack.c.bf16 %v11166, %v11164
    %v11255 = vpack.c.bf16 %v11169, %v11167
    %v11256 = vpack.c.bf16 %v11170, %v11168
    %v11257 = vpack.c.bf16 %v11173, %v11171
    %v11258 = vpack.c.bf16 %v11174, %v11172
    %v11259 = vpack.c.bf16 %v11177, %v11175
    %v11260 = vpack.c.bf16 %v11178, %v11176
    %v11261 = vpack.c.bf16 %v11181, %v11179
    %v11262 = vpack.c.bf16 %v11182, %v11180
    %v11263 = vpack.c.bf16 %v11185, %v11183
    %v11264 = vpack.c.bf16 %v11186, %v11184
    %v11265 = vpack.c.bf16 %v11189, %v11187
    %v11266 = vpack.c.bf16 %v11190, %v11188
    %v11267 = vpack.c.bf16 %v11193, %v11191
    %v11268 = vpack.c.bf16 %v11194, %v11192
    %v11269 = vpack.c.bf16 %v11197, %v11195
    %v11270 = vpack.c.bf16 %v11198, %v11196
    %v11271 = vpack.c.bf16 %v11201, %v11199
    %v11272 = vpack.c.bf16 %v11202, %v11200
    %v11273 = vpack.c.bf16 %v11205, %v11203
    %v11274 = vpack.c.bf16 %v11206, %v11204
    %v11275 = vpack.c.bf16 %v11209, %v11207
    %v11276 = vpack.c.bf16 %v11210, %v11208
    %v11277 = vpack.c.bf16 %v11213, %v11211
    %v11278 = vpack.c.bf16 %v11214, %v11212
    %s11279 = scalar_lea.vmem [#allocation9], 320
    %v11280 = vld [vmem:[%s11279] sm:$0xff]
    %v11281 = vld [vmem:[%s11279 + $0x8] sm:$0xff]
    %v11282 = vld [vmem:[%s11279 + $0x10] sm:$0xff]
    %v11283 = vld [vmem:[%s11279 + $0x18] sm:$0xff]
    %v11284 = vld [vmem:[%s11279 + $0x20] sm:$0xff]
    %v11285 = vld [vmem:[%s11279 + $0x28] sm:$0xff]
    %v11286 = vld [vmem:[%s11279 + $0x30] sm:$0xff]
    %v11287 = vld [vmem:[%s11279 + $0x38] sm:$0xff]
    %v11288 = vld [vmem:[%s11279 + $0x40] sm:$0xff]
    %v11289 = vld [vmem:[%s11279 + $0x48] sm:$0xff]
    %v11290 = vld [vmem:[%s11279 + $0x50] sm:$0xff]
    %v11291 = vld [vmem:[%s11279 + $0x58] sm:$0xff]
    %v11292 = vld [vmem:[%s11279 + $0x60] sm:$0xff]
    %v11293 = vld [vmem:[%s11279 + $0x68] sm:$0xff]
    %v11294 = vld [vmem:[%s11279 + $0x70] sm:$0xff]
    %v11295 = vld [vmem:[%s11279 + $0x78] sm:$0xff]
    %v11296 = vld [vmem:[%s11279 + $0x80] sm:$0xff]
    %v11297 = vld [vmem:[%s11279 + $0x88] sm:$0xff]
    %v11298 = vld [vmem:[%s11279 + $0x90] sm:$0xff]
    %v11299 = vld [vmem:[%s11279 + $0x98] sm:$0xff]
    %s11300 = scalar_lea.vmem [#allocation10], 18
    %v11301 = vld [vmem:[%s11300] ss:$8 sm:$0x3]
    %v11303 = vperm.slane %v11301, 0
    %v11304 = vperm.slane %v11301, 1
    %v11327 = vunpack.c.l.b16 %v11280
    %v11328 = vunpack.c.h.b16 %v11280
    %v11329 = vunpack.c.l.b16 %v11281
    %v11330 = vunpack.c.h.b16 %v11281
    %v11331 = vunpack.c.l.b16 %v11282
    %v11332 = vunpack.c.h.b16 %v11282
    %v11333 = vunpack.c.l.b16 %v11283
    %v11334 = vunpack.c.h.b16 %v11283
    %v11335 = vunpack.c.l.b16 %v11284
    %v11336 = vunpack.c.h.b16 %v11284
    %v11337 = vunpack.c.l.b16 %v11285
    %v11338 = vunpack.c.h.b16 %v11285
    %v11339 = vunpack.c.l.b16 %v11286
    %v11340 = vunpack.c.h.b16 %v11286
    %v11341 = vunpack.c.l.b16 %v11287
    %v11342 = vunpack.c.h.b16 %v11287
    %v11343 = vunpack.c.l.b16 %v11288
    %v11344 = vunpack.c.h.b16 %v11288
    %v11345 = vunpack.c.l.b16 %v11289
    %v11346 = vunpack.c.h.b16 %v11289
    %v11347 = vunpack.c.l.b16 %v11290
    %v11348 = vunpack.c.h.b16 %v11290
    %v11349 = vunpack.c.l.b16 %v11291
    %v11350 = vunpack.c.h.b16 %v11291
    %v11351 = vunpack.c.l.b16 %v11292
    %v11352 = vunpack.c.h.b16 %v11292
    %v11353 = vunpack.c.l.b16 %v11293
    %v11354 = vunpack.c.h.b16 %v11293
    %v11355 = vunpack.c.l.b16 %v11294
    %v11356 = vunpack.c.h.b16 %v11294
    %v11357 = vunpack.c.l.b16 %v11295
    %v11358 = vunpack.c.h.b16 %v11295
    %v11359 = vunpack.c.l.b16 %v11296
    %v11360 = vunpack.c.h.b16 %v11296
    %v11361 = vunpack.c.l.b16 %v11297
    %v11362 = vunpack.c.h.b16 %v11297
    %v11363 = vunpack.c.l.b16 %v11298
    %v11364 = vunpack.c.h.b16 %v11298
    %v11365 = vunpack.c.l.b16 %v11299
    %v11366 = vunpack.c.h.b16 %v11299
    %v11367 = vpack.c.b16 %v11329, %v11327
    %v11368 = vpack.c.b16 %v11330, %v11328
    %v11369 = vpack.c.b16 %v11333, %v11331
    %v11370 = vpack.c.b16 %v11334, %v11332
    %v11371 = vpack.c.b16 %v11337, %v11335
    %v11372 = vpack.c.b16 %v11338, %v11336
    %v11373 = vpack.c.b16 %v11341, %v11339
    %v11374 = vpack.c.b16 %v11342, %v11340
    %v11375 = vpack.c.b16 %v11345, %v11343
    %v11376 = vpack.c.b16 %v11346, %v11344
    %v11377 = vpack.c.b16 %v11349, %v11347
    %v11378 = vpack.c.b16 %v11350, %v11348
    %v11379 = vpack.c.b16 %v11353, %v11351
    %v11380 = vpack.c.b16 %v11354, %v11352
    %v11381 = vpack.c.b16 %v11357, %v11355
    %v11382 = vpack.c.b16 %v11358, %v11356
    %v11383 = vpack.c.b16 %v11361, %v11359
    %v11384 = vpack.c.b16 %v11362, %v11360
    %v11385 = vpack.c.b16 %v11365, %v11363
    %v11386 = vpack.c.b16 %v11366, %v11364
    %v11408 = vsel %vm8624, %v11216, 0
    %v11411 = vsel %vm8624, %v11218, 0
    %v11414 = vsel %vm8624, %v11220, 0
    %v11417 = vsel %vm8624, %v11222, 0
    %v11420 = vsel %vm8624, %v11224, 0
    %v11423 = vsel %vm8624, %v11226, 0
    %v11426 = vsel %vm8624, %v11228, 0
    %v11429 = vsel %vm8624, %v11230, 0
    %v11432 = vsel %vm8624, %v11232, 0
    %v11435 = vsel %vm8624, %v11234, 0
    %v11438 = vsel %vm8624, %v11236, 0
    %v11441 = vsel %vm8624, %v11238, 0
    %v11444 = vsel %vm8624, %v11240, 0
    %v11447 = vsel %vm8624, %v11242, 0
    %v11450 = vsel %vm8624, %v11244, 0
    %v11453 = vsel %vm8624, %v11246, 0
    %v11456 = vsel %vm8624, %v11248, 0
    %v11459 = vsel %vm8624, %v11250, 0
    %v11462 = vsel %vm8624, %v11252, 0
    %v11465 = vsel %vm8624, %v11254, 0
    %v11468 = vsel %vm8624, %v11256, 0
    %v11471 = vsel %vm8624, %v11258, 0
    %v11474 = vsel %vm8624, %v11260, 0
    %v11477 = vsel %vm8624, %v11262, 0
    %v11480 = vsel %vm8624, %v11264, 0
    %v11483 = vsel %vm8624, %v11266, 0
    %v11486 = vsel %vm8624, %v11268, 0
    %v11489 = vsel %vm8624, %v11270, 0
    %v11492 = vsel %vm8624, %v11272, 0
    %v11495 = vsel %vm8624, %v11274, 0
    %v11498 = vsel %vm8624, %v11276, 0
    %v11501 = vsel %vm8624, %v11278, 0
    %11503 = vmatpush.bf16.msra.mxu0 %v11381
    %11504 = vmatpush.bf16.msra.mxu0 %v11379
    %11505 = vmatpush.bf16.msra.mxu0 %v11377
    %11506 = vmatpush.bf16.msra.mxu0 %v11375
    %11507 = vmatpush.bf16.msra.mxu0 %v11373
    %11508 = vmatpush.bf16.msra.mxu0 %v11371
    %11509 = vmatpush.bf16.msra.mxu0 %v11369
    %11510 = vmatpush.bf16.msra.mxu0 %v11367
    %11511 = vmatmul.bf16.gmra.mxu0 %v11215
    %v11512 = vpop.f32.mrf.mxu0
    %v11513 = vadd.f32 %v11303, %v11512
    %v11514 = vpop.f32.mrf.mxu0
    %v11515 = vadd.f32 %v11303, %v11514
    %11516 = vmatmul.bf16.gmra.mxu0 %v11217
    %v11517 = vpop.f32.mrf.mxu0
    %v11518 = vadd.f32 %v11303, %v11517
    %v11519 = vpop.f32.mrf.mxu0
    %v11520 = vadd.f32 %v11303, %v11519
    %11521 = vmatmul.bf16.gmra.mxu0 %v11219
    %v11522 = vpop.f32.mrf.mxu0
    %v11523 = vadd.f32 %v11303, %v11522
    %v11524 = vpop.f32.mrf.mxu0
    %v11525 = vadd.f32 %v11303, %v11524
    %11526 = vmatmul.bf16.gmra.mxu0 %v11221
    %v11527 = vpop.f32.mrf.mxu0
    %v11528 = vadd.f32 %v11303, %v11527
    %v11529 = vpop.f32.mrf.mxu0
    %v11530 = vadd.f32 %v11303, %v11529
    %11531 = vmatmul.bf16.gmra.mxu0 %v11223
    %v11532 = vpop.f32.mrf.mxu0
    %v11533 = vadd.f32 %v11303, %v11532
    %v11534 = vpop.f32.mrf.mxu0
    %v11535 = vadd.f32 %v11303, %v11534
    %11536 = vmatmul.bf16.gmra.mxu0 %v11225
    %v11537 = vpop.f32.mrf.mxu0
    %v11538 = vadd.f32 %v11303, %v11537
    %v11539 = vpop.f32.mrf.mxu0
    %v11540 = vadd.f32 %v11303, %v11539
    %11541 = vmatmul.bf16.gmra.mxu0 %v11227
    %v11542 = vpop.f32.mrf.mxu0
    %v11543 = vadd.f32 %v11303, %v11542
    %v11544 = vpop.f32.mrf.mxu0
    %v11545 = vadd.f32 %v11303, %v11544
    %11546 = vmatmul.bf16.gmra.mxu0 %v11229
    %v11547 = vpop.f32.mrf.mxu0
    %v11548 = vadd.f32 %v11303, %v11547
    %v11549 = vpop.f32.mrf.mxu0
    %v11550 = vadd.f32 %v11303, %v11549
    %11551 = vmatmul.bf16.gmra.mxu0 %v11231
    %v11552 = vpop.f32.mrf.mxu0
    %v11553 = vadd.f32 %v11303, %v11552
    %v11554 = vpop.f32.mrf.mxu0
    %v11555 = vadd.f32 %v11303, %v11554
    %11556 = vmatmul.bf16.gmra.mxu0 %v11233
    %v11557 = vpop.f32.mrf.mxu0
    %v11558 = vadd.f32 %v11303, %v11557
    %v11559 = vpop.f32.mrf.mxu0
    %v11560 = vadd.f32 %v11303, %v11559
    %11561 = vmatmul.bf16.gmra.mxu0 %v11235
    %v11562 = vpop.f32.mrf.mxu0
    %v11563 = vadd.f32 %v11303, %v11562
    %v11564 = vpop.f32.mrf.mxu0
    %v11565 = vadd.f32 %v11303, %v11564
    %11566 = vmatmul.bf16.gmra.mxu0 %v11237
    %v11567 = vpop.f32.mrf.mxu0
    %v11568 = vadd.f32 %v11303, %v11567
    %v11569 = vpop.f32.mrf.mxu0
    %v11570 = vadd.f32 %v11303, %v11569
    %11571 = vmatmul.bf16.gmra.mxu0 %v11239
    %v11572 = vpop.f32.mrf.mxu0
    %v11573 = vadd.f32 %v11303, %v11572
    %v11574 = vpop.f32.mrf.mxu0
    %v11575 = vadd.f32 %v11303, %v11574
    %11576 = vmatmul.bf16.gmra.mxu0 %v11241
    %v11577 = vpop.f32.mrf.mxu0
    %v11578 = vadd.f32 %v11303, %v11577
    %v11579 = vpop.f32.mrf.mxu0
    %v11580 = vadd.f32 %v11303, %v11579
    %11581 = vmatmul.bf16.gmra.mxu0 %v11243
    %v11582 = vpop.f32.mrf.mxu0
    %v11583 = vadd.f32 %v11303, %v11582
    %v11584 = vpop.f32.mrf.mxu0
    %v11585 = vadd.f32 %v11303, %v11584
    %11586 = vmatmul.bf16.gmra.mxu0 %v11245
    %v11587 = vpop.f32.mrf.mxu0
    %v11588 = vadd.f32 %v11303, %v11587
    %v11589 = vpop.f32.mrf.mxu0
    %v11590 = vadd.f32 %v11303, %v11589
    %11591 = vmatmul.bf16.gmra.mxu0 %v11247
    %v11592 = vpop.f32.mrf.mxu0
    %v11593 = vadd.f32 %v11303, %v11592
    %v11594 = vpop.f32.mrf.mxu0
    %v11595 = vadd.f32 %v11303, %v11594
    %11596 = vmatmul.bf16.gmra.mxu0 %v11249
    %v11597 = vpop.f32.mrf.mxu0
    %v11598 = vadd.f32 %v11303, %v11597
    %v11599 = vpop.f32.mrf.mxu0
    %v11600 = vadd.f32 %v11303, %v11599
    %11601 = vmatmul.bf16.gmra.mxu0 %v11251
    %v11602 = vpop.f32.mrf.mxu0
    %v11603 = vadd.f32 %v11303, %v11602
    %v11604 = vpop.f32.mrf.mxu0
    %v11605 = vadd.f32 %v11303, %v11604
    %11606 = vmatmul.bf16.gmra.mxu0 %v11253
    %v11607 = vpop.f32.mrf.mxu0
    %v11608 = vadd.f32 %v11303, %v11607
    %v11609 = vpop.f32.mrf.mxu0
    %v11610 = vadd.f32 %v11303, %v11609
    %11611 = vmatmul.bf16.gmra.mxu0 %v11255
    %v11612 = vpop.f32.mrf.mxu0
    %v11613 = vadd.f32 %v11303, %v11612
    %v11614 = vpop.f32.mrf.mxu0
    %v11615 = vadd.f32 %v11303, %v11614
    %11616 = vmatmul.bf16.gmra.mxu0 %v11257
    %v11617 = vpop.f32.mrf.mxu0
    %v11618 = vadd.f32 %v11303, %v11617
    %v11619 = vpop.f32.mrf.mxu0
    %v11620 = vadd.f32 %v11303, %v11619
    %11621 = vmatmul.bf16.gmra.mxu0 %v11259
    %v11622 = vpop.f32.mrf.mxu0
    %v11623 = vadd.f32 %v11303, %v11622
    %v11624 = vpop.f32.mrf.mxu0
    %v11625 = vadd.f32 %v11303, %v11624
    %11626 = vmatmul.bf16.gmra.mxu0 %v11261
    %v11627 = vpop.f32.mrf.mxu0
    %v11628 = vadd.f32 %v11303, %v11627
    %v11629 = vpop.f32.mrf.mxu0
    %v11630 = vadd.f32 %v11303, %v11629
    %11631 = vmatmul.bf16.gmra.mxu0 %v11263
    %v11632 = vpop.f32.mrf.mxu0
    %v11633 = vadd.f32 %v11303, %v11632
    %v11634 = vpop.f32.mrf.mxu0
    %v11635 = vadd.f32 %v11303, %v11634
    %11636 = vmatmul.bf16.gmra.mxu0 %v11265
    %v11637 = vpop.f32.mrf.mxu0
    %v11638 = vadd.f32 %v11303, %v11637
    %v11639 = vpop.f32.mrf.mxu0
    %v11640 = vadd.f32 %v11303, %v11639
    %11641 = vmatmul.bf16.gmra.mxu0 %v11267
    %v11642 = vpop.f32.mrf.mxu0
    %v11643 = vadd.f32 %v11303, %v11642
    %v11644 = vpop.f32.mrf.mxu0
    %v11645 = vadd.f32 %v11303, %v11644
    %11646 = vmatmul.bf16.gmra.mxu0 %v11269
    %v11647 = vpop.f32.mrf.mxu0
    %v11648 = vadd.f32 %v11303, %v11647
    %v11649 = vpop.f32.mrf.mxu0
    %v11650 = vadd.f32 %v11303, %v11649
    %11651 = vmatmul.bf16.gmra.mxu0 %v11271
    %v11652 = vpop.f32.mrf.mxu0
    %v11653 = vadd.f32 %v11303, %v11652
    %v11654 = vpop.f32.mrf.mxu0
    %v11655 = vadd.f32 %v11303, %v11654
    %11656 = vmatmul.bf16.gmra.mxu0 %v11273
    %v11657 = vpop.f32.mrf.mxu0
    %v11658 = vadd.f32 %v11303, %v11657
    %v11659 = vpop.f32.mrf.mxu0
    %v11660 = vadd.f32 %v11303, %v11659
    %11661 = vmatmul.bf16.gmra.mxu0 %v11275
    %v11662 = vpop.f32.mrf.mxu0
    %v11663 = vadd.f32 %v11303, %v11662
    %v11664 = vpop.f32.mrf.mxu0
    %v11665 = vadd.f32 %v11303, %v11664
    %11666 = vmatmul.bf16.gmra.mxu0 %v11277
    %v11667 = vpop.f32.mrf.mxu0
    %v11668 = vadd.f32 %v11303, %v11667
    %v11669 = vpop.f32.mrf.mxu0
    %v11670 = vadd.f32 %v11303, %v11669
    %11671 = vdwg.mxu0
    %11672 = vmatpush.bf16.msra.mxu0 0
    %11673 = vmatpush.bf16.msra.mxu0 0
    %11674 = vmatpush.bf16.msra.mxu0 0
    %11675 = vmatpush.bf16.msra.mxu0 0
    %11676 = vmatpush.bf16.msra.mxu0 0
    %11677 = vmatpush.bf16.msra.mxu0 0
    %11678 = vmatpush.bf16.msra.mxu0 %v11385
    %11679 = vmatpush.bf16.msra.mxu0 %v11383
    %11680 = vmatmul.bf16.gmra.mxu0 %v11408
    %v11681 = vpop.f32.mrf.mxu0
    %v11682 = vadd.f32 %v11513, %v11681
    %v11683 = vpop.f32.mrf.mxu0
    %v11684 = vadd.f32 %v11515, %v11683
    %11685 = vmatmul.bf16.gmra.mxu0 %v11411
    %v11686 = vpop.f32.mrf.mxu0
    %v11687 = vadd.f32 %v11518, %v11686
    %v11688 = vpop.f32.mrf.mxu0
    %v11689 = vadd.f32 %v11520, %v11688
    %11690 = vmatmul.bf16.gmra.mxu0 %v11414
    %v11691 = vpop.f32.mrf.mxu0
    %v11692 = vadd.f32 %v11523, %v11691
    %v11693 = vpop.f32.mrf.mxu0
    %v11694 = vadd.f32 %v11525, %v11693
    %11695 = vmatmul.bf16.gmra.mxu0 %v11417
    %v11696 = vpop.f32.mrf.mxu0
    %v11697 = vadd.f32 %v11528, %v11696
    %v11698 = vpop.f32.mrf.mxu0
    %v11699 = vadd.f32 %v11530, %v11698
    %11700 = vmatmul.bf16.gmra.mxu0 %v11420
    %v11701 = vpop.f32.mrf.mxu0
    %v11702 = vadd.f32 %v11533, %v11701
    %v11703 = vpop.f32.mrf.mxu0
    %v11704 = vadd.f32 %v11535, %v11703
    %11705 = vmatmul.bf16.gmra.mxu0 %v11423
    %v11706 = vpop.f32.mrf.mxu0
    %v11707 = vadd.f32 %v11538, %v11706
    %v11708 = vpop.f32.mrf.mxu0
    %v11709 = vadd.f32 %v11540, %v11708
    %11710 = vmatmul.bf16.gmra.mxu0 %v11426
    %v11711 = vpop.f32.mrf.mxu0
    %v11712 = vadd.f32 %v11543, %v11711
    %v11713 = vpop.f32.mrf.mxu0
    %v11714 = vadd.f32 %v11545, %v11713
    %11715 = vmatmul.bf16.gmra.mxu0 %v11429
    %v11716 = vpop.f32.mrf.mxu0
    %v11717 = vadd.f32 %v11548, %v11716
    %v11718 = vpop.f32.mrf.mxu0
    %v11719 = vadd.f32 %v11550, %v11718
    %11720 = vmatmul.bf16.gmra.mxu0 %v11432
    %v11721 = vpop.f32.mrf.mxu0
    %v11722 = vadd.f32 %v11553, %v11721
    %v11723 = vpop.f32.mrf.mxu0
    %v11724 = vadd.f32 %v11555, %v11723
    %11725 = vmatmul.bf16.gmra.mxu0 %v11435
    %v11726 = vpop.f32.mrf.mxu0
    %v11727 = vadd.f32 %v11558, %v11726
    %v11728 = vpop.f32.mrf.mxu0
    %v11729 = vadd.f32 %v11560, %v11728
    %11730 = vmatmul.bf16.gmra.mxu0 %v11438
    %v11731 = vpop.f32.mrf.mxu0
    %v11732 = vadd.f32 %v11563, %v11731
    %v11733 = vpop.f32.mrf.mxu0
    %v11734 = vadd.f32 %v11565, %v11733
    %11735 = vmatmul.bf16.gmra.mxu0 %v11441
    %v11736 = vpop.f32.mrf.mxu0
    %v11737 = vadd.f32 %v11568, %v11736
    %v11738 = vpop.f32.mrf.mxu0
    %v11739 = vadd.f32 %v11570, %v11738
    %11740 = vmatmul.bf16.gmra.mxu0 %v11444
    %v11741 = vpop.f32.mrf.mxu0
    %v11742 = vadd.f32 %v11573, %v11741
    %v11743 = vpop.f32.mrf.mxu0
    %v11744 = vadd.f32 %v11575, %v11743
    %11745 = vmatmul.bf16.gmra.mxu0 %v11447
    %v11746 = vpop.f32.mrf.mxu0
    %v11747 = vadd.f32 %v11578, %v11746
    %v11748 = vpop.f32.mrf.mxu0
    %v11749 = vadd.f32 %v11580, %v11748
    %11750 = vmatmul.bf16.gmra.mxu0 %v11450
    %v11751 = vpop.f32.mrf.mxu0
    %v11752 = vadd.f32 %v11583, %v11751
    %v11753 = vpop.f32.mrf.mxu0
    %v11754 = vadd.f32 %v11585, %v11753
    %11755 = vmatmul.bf16.gmra.mxu0 %v11453
    %v11756 = vpop.f32.mrf.mxu0
    %v11757 = vadd.f32 %v11588, %v11756
    %v11758 = vpop.f32.mrf.mxu0
    %v11759 = vadd.f32 %v11590, %v11758
    %11760 = vmatmul.bf16.gmra.mxu0 %v11456
    %v11761 = vpop.f32.mrf.mxu0
    %v11762 = vadd.f32 %v11593, %v11761
    %v11763 = vpop.f32.mrf.mxu0
    %v11764 = vadd.f32 %v11595, %v11763
    %11765 = vmatmul.bf16.gmra.mxu0 %v11459
    %v11766 = vpop.f32.mrf.mxu0
    %v11767 = vadd.f32 %v11598, %v11766
    %v11768 = vpop.f32.mrf.mxu0
    %v11769 = vadd.f32 %v11600, %v11768
    %11770 = vmatmul.bf16.gmra.mxu0 %v11462
    %v11771 = vpop.f32.mrf.mxu0
    %v11772 = vadd.f32 %v11603, %v11771
    %v11773 = vpop.f32.mrf.mxu0
    %v11774 = vadd.f32 %v11605, %v11773
    %11775 = vmatmul.bf16.gmra.mxu0 %v11465
    %v11776 = vpop.f32.mrf.mxu0
    %v11777 = vadd.f32 %v11608, %v11776
    %v11778 = vpop.f32.mrf.mxu0
    %v11779 = vadd.f32 %v11610, %v11778
    %11780 = vmatmul.bf16.gmra.mxu0 %v11468
    %v11781 = vpop.f32.mrf.mxu0
    %v11782 = vadd.f32 %v11613, %v11781
    %v11783 = vpop.f32.mrf.mxu0
    %v11784 = vadd.f32 %v11615, %v11783
    %11785 = vmatmul.bf16.gmra.mxu0 %v11471
    %v11786 = vpop.f32.mrf.mxu0
    %v11787 = vadd.f32 %v11618, %v11786
    %v11788 = vpop.f32.mrf.mxu0
    %v11789 = vadd.f32 %v11620, %v11788
    %11790 = vmatmul.bf16.gmra.mxu0 %v11474
    %v11791 = vpop.f32.mrf.mxu0
    %v11792 = vadd.f32 %v11623, %v11791
    %v11793 = vpop.f32.mrf.mxu0
    %v11794 = vadd.f32 %v11625, %v11793
    %11795 = vmatmul.bf16.gmra.mxu0 %v11477
    %v11796 = vpop.f32.mrf.mxu0
    %v11797 = vadd.f32 %v11628, %v11796
    %v11798 = vpop.f32.mrf.mxu0
    %v11799 = vadd.f32 %v11630, %v11798
    %11800 = vmatmul.bf16.gmra.mxu0 %v11480
    %v11801 = vpop.f32.mrf.mxu0
    %v11802 = vadd.f32 %v11633, %v11801
    %v11803 = vpop.f32.mrf.mxu0
    %v11804 = vadd.f32 %v11635, %v11803
    %11805 = vmatmul.bf16.gmra.mxu0 %v11483
    %v11806 = vpop.f32.mrf.mxu0
    %v11807 = vadd.f32 %v11638, %v11806
    %v11808 = vpop.f32.mrf.mxu0
    %v11809 = vadd.f32 %v11640, %v11808
    %11810 = vmatmul.bf16.gmra.mxu0 %v11486
    %v11811 = vpop.f32.mrf.mxu0
    %v11812 = vadd.f32 %v11643, %v11811
    %v11813 = vpop.f32.mrf.mxu0
    %v11814 = vadd.f32 %v11645, %v11813
    %11815 = vmatmul.bf16.gmra.mxu0 %v11489
    %v11816 = vpop.f32.mrf.mxu0
    %v11817 = vadd.f32 %v11648, %v11816
    %v11818 = vpop.f32.mrf.mxu0
    %v11819 = vadd.f32 %v11650, %v11818
    %11820 = vmatmul.bf16.gmra.mxu0 %v11492
    %v11821 = vpop.f32.mrf.mxu0
    %v11822 = vadd.f32 %v11653, %v11821
    %v11823 = vpop.f32.mrf.mxu0
    %v11824 = vadd.f32 %v11655, %v11823
    %11825 = vmatmul.bf16.gmra.mxu0 %v11495
    %v11826 = vpop.f32.mrf.mxu0
    %v11827 = vadd.f32 %v11658, %v11826
    %v11828 = vpop.f32.mrf.mxu0
    %v11829 = vadd.f32 %v11660, %v11828
    %11830 = vmatmul.bf16.gmra.mxu0 %v11498
    %v11831 = vpop.f32.mrf.mxu0
    %v11832 = vadd.f32 %v11663, %v11831
    %v11833 = vpop.f32.mrf.mxu0
    %v11834 = vadd.f32 %v11665, %v11833
    %11835 = vmatmul.bf16.gmra.mxu0 %v11501
    %v11836 = vpop.f32.mrf.mxu0
    %v11837 = vadd.f32 %v11668, %v11836
    %v11838 = vpop.f32.mrf.mxu0
    %v11839 = vadd.f32 %v11670, %v11838
    %11840 = vdwg.mxu0
    %11841 = vmatpush.bf16.msra.mxu0 %v11382
    %11842 = vmatpush.bf16.msra.mxu0 %v11380
    %11843 = vmatpush.bf16.msra.mxu0 %v11378
    %11844 = vmatpush.bf16.msra.mxu0 %v11376
    %11845 = vmatpush.bf16.msra.mxu0 %v11374
    %11846 = vmatpush.bf16.msra.mxu0 %v11372
    %11847 = vmatpush.bf16.msra.mxu0 %v11370
    %11848 = vmatpush.bf16.msra.mxu0 %v11368
    %11849 = vmatmul.bf16.gmra.mxu0 %v11215
    %v11850 = vpop.f32.mrf.mxu0
    %v11851 = vadd.f32 %v11304, %v11850
    %v11852 = vpop.f32.mrf.mxu0
    %v11853 = vadd.f32 %v11304, %v11852
    %11854 = vmatmul.bf16.gmra.mxu0 %v11217
    %v11855 = vpop.f32.mrf.mxu0
    %v11856 = vadd.f32 %v11304, %v11855
    %v11857 = vpop.f32.mrf.mxu0
    %v11858 = vadd.f32 %v11304, %v11857
    %11859 = vmatmul.bf16.gmra.mxu0 %v11219
    %v11860 = vpop.f32.mrf.mxu0
    %v11861 = vadd.f32 %v11304, %v11860
    %v11862 = vpop.f32.mrf.mxu0
    %v11863 = vadd.f32 %v11304, %v11862
    %11864 = vmatmul.bf16.gmra.mxu0 %v11221
    %v11865 = vpop.f32.mrf.mxu0
    %v11866 = vadd.f32 %v11304, %v11865
    %v11867 = vpop.f32.mrf.mxu0
    %v11868 = vadd.f32 %v11304, %v11867
    %11869 = vmatmul.bf16.gmra.mxu0 %v11223
    %v11870 = vpop.f32.mrf.mxu0
    %v11871 = vadd.f32 %v11304, %v11870
    %v11872 = vpop.f32.mrf.mxu0
    %v11873 = vadd.f32 %v11304, %v11872
    %11874 = vmatmul.bf16.gmra.mxu0 %v11225
    %v11875 = vpop.f32.mrf.mxu0
    %v11876 = vadd.f32 %v11304, %v11875
    %v11877 = vpop.f32.mrf.mxu0
    %v11878 = vadd.f32 %v11304, %v11877
    %11879 = vmatmul.bf16.gmra.mxu0 %v11227
    %v11880 = vpop.f32.mrf.mxu0
    %v11881 = vadd.f32 %v11304, %v11880
    %v11882 = vpop.f32.mrf.mxu0
    %v11883 = vadd.f32 %v11304, %v11882
    %11884 = vmatmul.bf16.gmra.mxu0 %v11229
    %v11885 = vpop.f32.mrf.mxu0
    %v11886 = vadd.f32 %v11304, %v11885
    %v11887 = vpop.f32.mrf.mxu0
    %v11888 = vadd.f32 %v11304, %v11887
    %11889 = vmatmul.bf16.gmra.mxu0 %v11231
    %v11890 = vpop.f32.mrf.mxu0
    %v11891 = vadd.f32 %v11304, %v11890
    %v11892 = vpop.f32.mrf.mxu0
    %v11893 = vadd.f32 %v11304, %v11892
    %11894 = vmatmul.bf16.gmra.mxu0 %v11233
    %v11895 = vpop.f32.mrf.mxu0
    %v11896 = vadd.f32 %v11304, %v11895
    %v11897 = vpop.f32.mrf.mxu0
    %v11898 = vadd.f32 %v11304, %v11897
    %11899 = vmatmul.bf16.gmra.mxu0 %v11235
    %v11900 = vpop.f32.mrf.mxu0
    %v11901 = vadd.f32 %v11304, %v11900
    %v11902 = vpop.f32.mrf.mxu0
    %v11903 = vadd.f32 %v11304, %v11902
    %11904 = vmatmul.bf16.gmra.mxu0 %v11237
    %v11905 = vpop.f32.mrf.mxu0
    %v11906 = vadd.f32 %v11304, %v11905
    %v11907 = vpop.f32.mrf.mxu0
    %v11908 = vadd.f32 %v11304, %v11907
    %11909 = vmatmul.bf16.gmra.mxu0 %v11239
    %v11910 = vpop.f32.mrf.mxu0
    %v11911 = vadd.f32 %v11304, %v11910
    %v11912 = vpop.f32.mrf.mxu0
    %v11913 = vadd.f32 %v11304, %v11912
    %11914 = vmatmul.bf16.gmra.mxu0 %v11241
    %v11915 = vpop.f32.mrf.mxu0
    %v11916 = vadd.f32 %v11304, %v11915
    %v11917 = vpop.f32.mrf.mxu0
    %v11918 = vadd.f32 %v11304, %v11917
    %11919 = vmatmul.bf16.gmra.mxu0 %v11243
    %v11920 = vpop.f32.mrf.mxu0
    %v11921 = vadd.f32 %v11304, %v11920
    %v11922 = vpop.f32.mrf.mxu0
    %v11923 = vadd.f32 %v11304, %v11922
    %11924 = vmatmul.bf16.gmra.mxu0 %v11245
    %v11925 = vpop.f32.mrf.mxu0
    %v11926 = vadd.f32 %v11304, %v11925
    %v11927 = vpop.f32.mrf.mxu0
    %v11928 = vadd.f32 %v11304, %v11927
    %11929 = vmatmul.bf16.gmra.mxu0 %v11247
    %v11930 = vpop.f32.mrf.mxu0
    %v11931 = vadd.f32 %v11304, %v11930
    %v11932 = vpop.f32.mrf.mxu0
    %v11933 = vadd.f32 %v11304, %v11932
    %11934 = vmatmul.bf16.gmra.mxu0 %v11249
    %v11935 = vpop.f32.mrf.mxu0
    %v11936 = vadd.f32 %v11304, %v11935
    %v11937 = vpop.f32.mrf.mxu0
    %v11938 = vadd.f32 %v11304, %v11937
    %11939 = vmatmul.bf16.gmra.mxu0 %v11251
    %v11940 = vpop.f32.mrf.mxu0
    %v11941 = vadd.f32 %v11304, %v11940
    %v11942 = vpop.f32.mrf.mxu0
    %v11943 = vadd.f32 %v11304, %v11942
    %11944 = vmatmul.bf16.gmra.mxu0 %v11253
    %v11945 = vpop.f32.mrf.mxu0
    %v11946 = vadd.f32 %v11304, %v11945
    %v11947 = vpop.f32.mrf.mxu0
    %v11948 = vadd.f32 %v11304, %v11947
    %11949 = vmatmul.bf16.gmra.mxu0 %v11255
    %v11950 = vpop.f32.mrf.mxu0
    %v11951 = vadd.f32 %v11304, %v11950
    %v11952 = vpop.f32.mrf.mxu0
    %v11953 = vadd.f32 %v11304, %v11952
    %11954 = vmatmul.bf16.gmra.mxu0 %v11257
    %v11955 = vpop.f32.mrf.mxu0
    %v11956 = vadd.f32 %v11304, %v11955
    %v11957 = vpop.f32.mrf.mxu0
    %v11958 = vadd.f32 %v11304, %v11957
    %11959 = vmatmul.bf16.gmra.mxu0 %v11259
    %v11960 = vpop.f32.mrf.mxu0
    %v11961 = vadd.f32 %v11304, %v11960
    %v11962 = vpop.f32.mrf.mxu0
    %v11963 = vadd.f32 %v11304, %v11962
    %11964 = vmatmul.bf16.gmra.mxu0 %v11261
    %v11965 = vpop.f32.mrf.mxu0
    %v11966 = vadd.f32 %v11304, %v11965
    %v11967 = vpop.f32.mrf.mxu0
    %v11968 = vadd.f32 %v11304, %v11967
    %11969 = vmatmul.bf16.gmra.mxu0 %v11263
    %v11970 = vpop.f32.mrf.mxu0
    %v11971 = vadd.f32 %v11304, %v11970
    %v11972 = vpop.f32.mrf.mxu0
    %v11973 = vadd.f32 %v11304, %v11972
    %11974 = vmatmul.bf16.gmra.mxu0 %v11265
    %v11975 = vpop.f32.mrf.mxu0
    %v11976 = vadd.f32 %v11304, %v11975
    %v11977 = vpop.f32.mrf.mxu0
    %v11978 = vadd.f32 %v11304, %v11977
    %11979 = vmatmul.bf16.gmra.mxu0 %v11267
    %v11980 = vpop.f32.mrf.mxu0
    %v11981 = vadd.f32 %v11304, %v11980
    %v11982 = vpop.f32.mrf.mxu0
    %v11983 = vadd.f32 %v11304, %v11982
    %11984 = vmatmul.bf16.gmra.mxu0 %v11269
    %v11985 = vpop.f32.mrf.mxu0
    %v11986 = vadd.f32 %v11304, %v11985
    %v11987 = vpop.f32.mrf.mxu0
    %v11988 = vadd.f32 %v11304, %v11987
    %11989 = vmatmul.bf16.gmra.mxu0 %v11271
    %v11990 = vpop.f32.mrf.mxu0
    %v11991 = vadd.f32 %v11304, %v11990
    %v11992 = vpop.f32.mrf.mxu0
    %v11993 = vadd.f32 %v11304, %v11992
    %11994 = vmatmul.bf16.gmra.mxu0 %v11273
    %v11995 = vpop.f32.mrf.mxu0
    %v11996 = vadd.f32 %v11304, %v11995
    %v11997 = vpop.f32.mrf.mxu0
    %v11998 = vadd.f32 %v11304, %v11997
    %11999 = vmatmul.bf16.gmra.mxu0 %v11275
    %v12000 = vpop.f32.mrf.mxu0
    %v12001 = vadd.f32 %v11304, %v12000
    %v12002 = vpop.f32.mrf.mxu0
    %v12003 = vadd.f32 %v11304, %v12002
    %12004 = vmatmul.bf16.gmra.mxu0 %v11277
    %v12005 = vpop.f32.mrf.mxu0
    %v12006 = vadd.f32 %v11304, %v12005
    %v12007 = vpop.f32.mrf.mxu0
    %v12008 = vadd.f32 %v11304, %v12007
    %12009 = vdwg.mxu0
    %12010 = vmatpush.bf16.msra.mxu0 0
    %12011 = vmatpush.bf16.msra.mxu0 0
    %12012 = vmatpush.bf16.msra.mxu0 0
    %12013 = vmatpush.bf16.msra.mxu0 0
    %12014 = vmatpush.bf16.msra.mxu0 0
    %12015 = vmatpush.bf16.msra.mxu0 0
    %12016 = vmatpush.bf16.msra.mxu0 %v11386
    %12017 = vmatpush.bf16.msra.mxu0 %v11384
    %12018 = vmatmul.bf16.gmra.mxu0 %v11408
    %v12019 = vpop.f32.mrf.mxu0
    %v12020 = vadd.f32 %v11851, %v12019
    %v12021 = vpop.f32.mrf.mxu0
    %v12022 = vadd.f32 %v11853, %v12021
    %12023 = vmatmul.bf16.gmra.mxu0 %v11411
    %v12024 = vpop.f32.mrf.mxu0
    %v12025 = vadd.f32 %v11856, %v12024
    %v12026 = vpop.f32.mrf.mxu0
    %v12027 = vadd.f32 %v11858, %v12026
    %12028 = vmatmul.bf16.gmra.mxu0 %v11414
    %v12029 = vpop.f32.mrf.mxu0
    %v12030 = vadd.f32 %v11861, %v12029
    %v12031 = vpop.f32.mrf.mxu0
    %v12032 = vadd.f32 %v11863, %v12031
    %12033 = vmatmul.bf16.gmra.mxu0 %v11417
    %v12034 = vpop.f32.mrf.mxu0
    %v12035 = vadd.f32 %v11866, %v12034
    %v12036 = vpop.f32.mrf.mxu0
    %v12037 = vadd.f32 %v11868, %v12036
    %12038 = vmatmul.bf16.gmra.mxu0 %v11420
    %v12039 = vpop.f32.mrf.mxu0
    %v12040 = vadd.f32 %v11871, %v12039
    %v12041 = vpop.f32.mrf.mxu0
    %v12042 = vadd.f32 %v11873, %v12041
    %12043 = vmatmul.bf16.gmra.mxu0 %v11423
    %v12044 = vpop.f32.mrf.mxu0
    %v12045 = vadd.f32 %v11876, %v12044
    %v12046 = vpop.f32.mrf.mxu0
    %v12047 = vadd.f32 %v11878, %v12046
    %12048 = vmatmul.bf16.gmra.mxu0 %v11426
    %v12049 = vpop.f32.mrf.mxu0
    %v12050 = vadd.f32 %v11881, %v12049
    %v12051 = vpop.f32.mrf.mxu0
    %v12052 = vadd.f32 %v11883, %v12051
    %12053 = vmatmul.bf16.gmra.mxu0 %v11429
    %v12054 = vpop.f32.mrf.mxu0
    %v12055 = vadd.f32 %v11886, %v12054
    %v12056 = vpop.f32.mrf.mxu0
    %v12057 = vadd.f32 %v11888, %v12056
    %12058 = vmatmul.bf16.gmra.mxu0 %v11432
    %v12059 = vpop.f32.mrf.mxu0
    %v12060 = vadd.f32 %v11891, %v12059
    %v12061 = vpop.f32.mrf.mxu0
    %v12062 = vadd.f32 %v11893, %v12061
    %12063 = vmatmul.bf16.gmra.mxu0 %v11435
    %v12064 = vpop.f32.mrf.mxu0
    %v12065 = vadd.f32 %v11896, %v12064
    %v12066 = vpop.f32.mrf.mxu0
    %v12067 = vadd.f32 %v11898, %v12066
    %12068 = vmatmul.bf16.gmra.mxu0 %v11438
    %v12069 = vpop.f32.mrf.mxu0
    %v12070 = vadd.f32 %v11901, %v12069
    %v12071 = vpop.f32.mrf.mxu0
    %v12072 = vadd.f32 %v11903, %v12071
    %12073 = vmatmul.bf16.gmra.mxu0 %v11441
    %v12074 = vpop.f32.mrf.mxu0
    %v12075 = vadd.f32 %v11906, %v12074
    %v12076 = vpop.f32.mrf.mxu0
    %v12077 = vadd.f32 %v11908, %v12076
    %12078 = vmatmul.bf16.gmra.mxu0 %v11444
    %v12079 = vpop.f32.mrf.mxu0
    %v12080 = vadd.f32 %v11911, %v12079
    %v12081 = vpop.f32.mrf.mxu0
    %v12082 = vadd.f32 %v11913, %v12081
    %12083 = vmatmul.bf16.gmra.mxu0 %v11447
    %v12084 = vpop.f32.mrf.mxu0
    %v12085 = vadd.f32 %v11916, %v12084
    %v12086 = vpop.f32.mrf.mxu0
    %v12087 = vadd.f32 %v11918, %v12086
    %12088 = vmatmul.bf16.gmra.mxu0 %v11450
    %v12089 = vpop.f32.mrf.mxu0
    %v12090 = vadd.f32 %v11921, %v12089
    %v12091 = vpop.f32.mrf.mxu0
    %v12092 = vadd.f32 %v11923, %v12091
    %12093 = vmatmul.bf16.gmra.mxu0 %v11453
    %v12094 = vpop.f32.mrf.mxu0
    %v12095 = vadd.f32 %v11926, %v12094
    %v12096 = vpop.f32.mrf.mxu0
    %v12097 = vadd.f32 %v11928, %v12096
    %12098 = vmatmul.bf16.gmra.mxu0 %v11456
    %v12099 = vpop.f32.mrf.mxu0
    %v12100 = vadd.f32 %v11931, %v12099
    %v12101 = vpop.f32.mrf.mxu0
    %v12102 = vadd.f32 %v11933, %v12101
    %12103 = vmatmul.bf16.gmra.mxu0 %v11459
    %v12104 = vpop.f32.mrf.mxu0
    %v12105 = vadd.f32 %v11936, %v12104
    %v12106 = vpop.f32.mrf.mxu0
    %v12107 = vadd.f32 %v11938, %v12106
    %12108 = vmatmul.bf16.gmra.mxu0 %v11462
    %v12109 = vpop.f32.mrf.mxu0
    %v12110 = vadd.f32 %v11941, %v12109
    %v12111 = vpop.f32.mrf.mxu0
    %v12112 = vadd.f32 %v11943, %v12111
    %12113 = vmatmul.bf16.gmra.mxu0 %v11465
    %v12114 = vpop.f32.mrf.mxu0
    %v12115 = vadd.f32 %v11946, %v12114
    %v12116 = vpop.f32.mrf.mxu0
    %v12117 = vadd.f32 %v11948, %v12116
    %12118 = vmatmul.bf16.gmra.mxu0 %v11468
    %v12119 = vpop.f32.mrf.mxu0
    %v12120 = vadd.f32 %v11951, %v12119
    %v12121 = vpop.f32.mrf.mxu0
    %v12122 = vadd.f32 %v11953, %v12121
    %12123 = vmatmul.bf16.gmra.mxu0 %v11471
    %v12124 = vpop.f32.mrf.mxu0
    %v12125 = vadd.f32 %v11956, %v12124
    %v12126 = vpop.f32.mrf.mxu0
    %v12127 = vadd.f32 %v11958, %v12126
    %12128 = vmatmul.bf16.gmra.mxu0 %v11474
    %v12129 = vpop.f32.mrf.mxu0
    %v12130 = vadd.f32 %v11961, %v12129
    %v12131 = vpop.f32.mrf.mxu0
    %v12132 = vadd.f32 %v11963, %v12131
    %12133 = vmatmul.bf16.gmra.mxu0 %v11477
    %v12134 = vpop.f32.mrf.mxu0
    %v12135 = vadd.f32 %v11966, %v12134
    %v12136 = vpop.f32.mrf.mxu0
    %v12137 = vadd.f32 %v11968, %v12136
    %12138 = vmatmul.bf16.gmra.mxu0 %v11480
    %v12139 = vpop.f32.mrf.mxu0
    %v12140 = vadd.f32 %v11971, %v12139
    %v12141 = vpop.f32.mrf.mxu0
    %v12142 = vadd.f32 %v11973, %v12141
    %12143 = vmatmul.bf16.gmra.mxu0 %v11483
    %v12144 = vpop.f32.mrf.mxu0
    %v12145 = vadd.f32 %v11976, %v12144
    %v12146 = vpop.f32.mrf.mxu0
    %v12147 = vadd.f32 %v11978, %v12146
    %12148 = vmatmul.bf16.gmra.mxu0 %v11486
    %v12149 = vpop.f32.mrf.mxu0
    %v12150 = vadd.f32 %v11981, %v12149
    %v12151 = vpop.f32.mrf.mxu0
    %v12152 = vadd.f32 %v11983, %v12151
    %12153 = vmatmul.bf16.gmra.mxu0 %v11489
    %v12154 = vpop.f32.mrf.mxu0
    %v12155 = vadd.f32 %v11986, %v12154
    %v12156 = vpop.f32.mrf.mxu0
    %v12157 = vadd.f32 %v11988, %v12156
    %12158 = vmatmul.bf16.gmra.mxu0 %v11492
    %v12159 = vpop.f32.mrf.mxu0
    %v12160 = vadd.f32 %v11991, %v12159
    %v12161 = vpop.f32.mrf.mxu0
    %v12162 = vadd.f32 %v11993, %v12161
    %12163 = vmatmul.bf16.gmra.mxu0 %v11495
    %v12164 = vpop.f32.mrf.mxu0
    %v12165 = vadd.f32 %v11996, %v12164
    %v12166 = vpop.f32.mrf.mxu0
    %v12167 = vadd.f32 %v11998, %v12166
    %12168 = vmatmul.bf16.gmra.mxu0 %v11498
    %v12169 = vpop.f32.mrf.mxu0
    %v12170 = vadd.f32 %v12001, %v12169
    %v12171 = vpop.f32.mrf.mxu0
    %v12172 = vadd.f32 %v12003, %v12171
    %12173 = vmatmul.bf16.gmra.mxu0 %v11501
    %v12174 = vpop.f32.mrf.mxu0
    %v12175 = vadd.f32 %v12006, %v12174
    %v12176 = vpop.f32.mrf.mxu0
    %v12177 = vadd.f32 %v12008, %v12176
    %12178 = vdwg.mxu0
    %v12179 = vmax.f32 %v11682, 0.0
    %v12180 = vmax.f32 %v12020, 0.0
    %v12181 = vmax.f32 %v11684, 0.0
    %v12182 = vmax.f32 %v12022, 0.0
    %v12183 = vmax.f32 %v11687, 0.0
    %v12184 = vmax.f32 %v12025, 0.0
    %v12185 = vmax.f32 %v11689, 0.0
    %v12186 = vmax.f32 %v12027, 0.0
    %v12187 = vmax.f32 %v11692, 0.0
    %v12188 = vmax.f32 %v12030, 0.0
    %v12189 = vmax.f32 %v11694, 0.0
    %v12190 = vmax.f32 %v12032, 0.0
    %v12191 = vmax.f32 %v11697, 0.0
    %v12192 = vmax.f32 %v12035, 0.0
    %v12193 = vmax.f32 %v11699, 0.0
    %v12194 = vmax.f32 %v12037, 0.0
    %v12195 = vmax.f32 %v11702, 0.0
    %v12196 = vmax.f32 %v12040, 0.0
    %v12197 = vmax.f32 %v11704, 0.0
    %v12198 = vmax.f32 %v12042, 0.0
    %v12199 = vmax.f32 %v11707, 0.0
    %v12200 = vmax.f32 %v12045, 0.0
    %v12201 = vmax.f32 %v11709, 0.0
    %v12202 = vmax.f32 %v12047, 0.0
    %v12203 = vmax.f32 %v11712, 0.0
    %v12204 = vmax.f32 %v12050, 0.0
    %v12205 = vmax.f32 %v11714, 0.0
    %v12206 = vmax.f32 %v12052, 0.0
    %v12207 = vmax.f32 %v11717, 0.0
    %v12208 = vmax.f32 %v12055, 0.0
    %v12209 = vmax.f32 %v11719, 0.0
    %v12210 = vmax.f32 %v12057, 0.0
    %v12211 = vmax.f32 %v11722, 0.0
    %v12212 = vmax.f32 %v12060, 0.0
    %v12213 = vmax.f32 %v11724, 0.0
    %v12214 = vmax.f32 %v12062, 0.0
    %v12215 = vmax.f32 %v11727, 0.0
    %v12216 = vmax.f32 %v12065, 0.0
    %v12217 = vmax.f32 %v11729, 0.0
    %v12218 = vmax.f32 %v12067, 0.0
    %v12219 = vmax.f32 %v11732, 0.0
    %v12220 = vmax.f32 %v12070, 0.0
    %v12221 = vmax.f32 %v11734, 0.0
    %v12222 = vmax.f32 %v12072, 0.0
    %v12223 = vmax.f32 %v11737, 0.0
    %v12224 = vmax.f32 %v12075, 0.0
    %v12225 = vmax.f32 %v11739, 0.0
    %v12226 = vmax.f32 %v12077, 0.0
    %v12227 = vmax.f32 %v11742, 0.0
    %v12228 = vmax.f32 %v12080, 0.0
    %v12229 = vmax.f32 %v11744, 0.0
    %v12230 = vmax.f32 %v12082, 0.0
    %v12231 = vmax.f32 %v11747, 0.0
    %v12232 = vmax.f32 %v12085, 0.0
    %v12233 = vmax.f32 %v11749, 0.0
    %v12234 = vmax.f32 %v12087, 0.0
    %v12235 = vmax.f32 %v11752, 0.0
    %v12236 = vmax.f32 %v12090, 0.0
    %v12237 = vmax.f32 %v11754, 0.0
    %v12238 = vmax.f32 %v12092, 0.0
    %v12239 = vmax.f32 %v11757, 0.0
    %v12240 = vmax.f32 %v12095, 0.0
    %v12241 = vmax.f32 %v11759, 0.0
    %v12242 = vmax.f32 %v12097, 0.0
    %v12243 = vmax.f32 %v11762, 0.0
    %v12244 = vmax.f32 %v12100, 0.0
    %v12245 = vmax.f32 %v11764, 0.0
    %v12246 = vmax.f32 %v12102, 0.0
    %v12247 = vmax.f32 %v11767, 0.0
    %v12248 = vmax.f32 %v12105, 0.0
    %v12249 = vmax.f32 %v11769, 0.0
    %v12250 = vmax.f32 %v12107, 0.0
    %v12251 = vmax.f32 %v11772, 0.0
    %v12252 = vmax.f32 %v12110, 0.0
    %v12253 = vmax.f32 %v11774, 0.0
    %v12254 = vmax.f32 %v12112, 0.0
    %v12255 = vmax.f32 %v11777, 0.0
    %v12256 = vmax.f32 %v12115, 0.0
    %v12257 = vmax.f32 %v11779, 0.0
    %v12258 = vmax.f32 %v12117, 0.0
    %v12259 = vmax.f32 %v11782, 0.0
    %v12260 = vmax.f32 %v12120, 0.0
    %v12261 = vmax.f32 %v11784, 0.0
    %v12262 = vmax.f32 %v12122, 0.0
    %v12263 = vmax.f32 %v11787, 0.0
    %v12264 = vmax.f32 %v12125, 0.0
    %v12265 = vmax.f32 %v11789, 0.0
    %v12266 = vmax.f32 %v12127, 0.0
    %v12267 = vmax.f32 %v11792, 0.0
    %v12268 = vmax.f32 %v12130, 0.0
    %v12269 = vmax.f32 %v11794, 0.0
    %v12270 = vmax.f32 %v12132, 0.0
    %v12271 = vmax.f32 %v11797, 0.0
    %v12272 = vmax.f32 %v12135, 0.0
    %v12273 = vmax.f32 %v11799, 0.0
    %v12274 = vmax.f32 %v12137, 0.0
    %v12275 = vmax.f32 %v11802, 0.0
    %v12276 = vmax.f32 %v12140, 0.0
    %v12277 = vmax.f32 %v11804, 0.0
    %v12278 = vmax.f32 %v12142, 0.0
    %v12279 = vmax.f32 %v11807, 0.0
    %v12280 = vmax.f32 %v12145, 0.0
    %v12281 = vmax.f32 %v11809, 0.0
    %v12282 = vmax.f32 %v12147, 0.0
    %v12283 = vmax.f32 %v11812, 0.0
    %v12284 = vmax.f32 %v12150, 0.0
    %v12285 = vmax.f32 %v11814, 0.0
    %v12286 = vmax.f32 %v12152, 0.0
    %v12287 = vmax.f32 %v11817, 0.0
    %v12288 = vmax.f32 %v12155, 0.0
    %v12289 = vmax.f32 %v11819, 0.0
    %v12290 = vmax.f32 %v12157, 0.0
    %v12291 = vmax.f32 %v11822, 0.0
    %v12292 = vmax.f32 %v12160, 0.0
    %v12293 = vmax.f32 %v11824, 0.0
    %v12294 = vmax.f32 %v12162, 0.0
    %v12295 = vmax.f32 %v11827, 0.0
    %v12296 = vmax.f32 %v12165, 0.0
    %v12297 = vmax.f32 %v11829, 0.0
    %v12298 = vmax.f32 %v12167, 0.0
    %v12299 = vmax.f32 %v11832, 0.0
    %v12300 = vmax.f32 %v12170, 0.0
    %v12301 = vmax.f32 %v11834, 0.0
    %v12302 = vmax.f32 %v12172, 0.0
    %v12303 = vmax.f32 %v11837, 0.0
    %v12304 = vmax.f32 %v12175, 0.0
    %v12305 = vmax.f32 %v11839, 0.0
    %v12306 = vmax.f32 %v12177, 0.0
    %v12307 = vpack.c.bf16 %v9692, %v9690
    %v12308 = vpack.c.bf16 %v9711, %v9709
    %v12309 = vpack.c.bf16 %v9697, %v9695
    %v12310 = vpack.c.bf16 %v9716, %v9714
    %v12331 = vunpack.c.l.b16 %v9634
    %v12332 = vunpack.c.l.b16 %v9635
    %v12333 = vunpack.c.l.b16 %v9636
    %v12334 = vunpack.c.l.b16 %v9637
    %v12335 = vunpack.c.l.b16 %v9638
    %v12336 = vunpack.c.l.b16 %v9639
    %v12337 = vunpack.c.l.b16 %v9640
    %v12338 = vunpack.c.l.b16 %v9641
    %v12339 = vunpack.c.l.b16 %v9642
    %v12340 = vunpack.c.l.b16 %v9643
    %v12341 = vunpack.c.l.b16 %v9644
    %v12342 = vunpack.c.l.b16 %v9645
    %v12343 = vunpack.c.l.b16 %v9646
    %v12344 = vunpack.c.l.b16 %v9647
    %v12345 = vunpack.c.l.b16 %v9648
    %v12346 = vunpack.c.l.b16 %v9649
    %v12347 = vunpack.c.l.b16 %v9650
    %v12348 = vunpack.c.l.b16 %v9651
    %v12349 = vunpack.c.l.b16 %v9652
    %v12350 = vunpack.c.l.b16 %v9653
    %v12351 = vpack.c.b16 %v12332, %v12331
    %v12352 = vpack.c.b16 %v12334, %v12333
    %v12353 = vpack.c.b16 %v12336, %v12335
    %v12354 = vpack.c.b16 %v12338, %v12337
    %v12355 = vpack.c.b16 %v12340, %v12339
    %v12356 = vpack.c.b16 %v12342, %v12341
    %v12357 = vpack.c.b16 %v12344, %v12343
    %v12358 = vpack.c.b16 %v12346, %v12345
    %v12359 = vpack.c.b16 %v12348, %v12347
    %v12360 = vpack.c.b16 %v12350, %v12349
    %v12372 = vsel %vm8624, %v12308, 0
    %v12375 = vsel %vm8624, %v12310, 0
    %12377 = vmatpush.bf16.msra.mxu0 %v12358
    %12378 = vmatpush.bf16.msra.mxu0 %v12357
    %12379 = vmatpush.bf16.msra.mxu0 %v12356
    %12380 = vmatpush.bf16.msra.mxu0 %v12355
    %12381 = vmatpush.bf16.msra.mxu0 %v12354
    %12382 = vmatpush.bf16.msra.mxu0 %v12353
    %12383 = vmatpush.bf16.msra.mxu0 %v12352
    %12384 = vmatpush.bf16.msra.mxu0 %v12351
    %12385 = vmatmul.bf16.gmra.mxu0 %v12307
    %v12386 = vpop.f32.mrf.mxu0
    %v12387 = vadd.f32 0.0, %v12386
    %v12388 = vpop.f32.mrf.mxu0
    %v12389 = vadd.f32 0.0, %v12388
    %12390 = vmatmul.bf16.gmra.mxu0 %v12309
    %v12391 = vpop.f32.mrf.mxu0
    %v12392 = vadd.f32 0.0, %v12391
    %v12393 = vpop.f32.mrf.mxu0
    %v12394 = vadd.f32 0.0, %v12393
    %12395 = vdwg.mxu0
    %12396 = vmatpush.bf16.msra.mxu0 0
    %12397 = vmatpush.bf16.msra.mxu0 0
    %12398 = vmatpush.bf16.msra.mxu0 0
    %12399 = vmatpush.bf16.msra.mxu0 0
    %12400 = vmatpush.bf16.msra.mxu0 0
    %12401 = vmatpush.bf16.msra.mxu0 0
    %12402 = vmatpush.bf16.msra.mxu0 %v12360
    %12403 = vmatpush.bf16.msra.mxu0 %v12359
    %12404 = vmatmul.bf16.gmra.mxu0 %v12372
    %v12405 = vpop.f32.mrf.mxu0
    %v12406 = vadd.f32 %v12387, %v12405
    %v12407 = vpop.f32.mrf.mxu0
    %v12408 = vadd.f32 %v12389, %v12407
    %12409 = vmatmul.bf16.gmra.mxu0 %v12375
    %v12410 = vpop.f32.mrf.mxu0
    %v12411 = vadd.f32 %v12392, %v12410
    %v12412 = vpop.f32.mrf.mxu0
    %v12413 = vadd.f32 %v12394, %v12412
    %12414 = vdwg.mxu0
    %v12415 = vpack.c.bf16 %v10027, %v10025
    %v12416 = vpack.c.bf16 %v10076, %v10074
    %v12417 = vpack.c.bf16 %v10032, %v10030
    %v12418 = vpack.c.bf16 %v10081, %v10079
    %v12419 = vpack.c.bf16 %v10037, %v10035
    %v12420 = vpack.c.bf16 %v10086, %v10084
    %v12421 = vpack.c.bf16 %v10042, %v10040
    %v12422 = vpack.c.bf16 %v10091, %v10089
    %v12423 = vpack.c.bf16 %v10047, %v10045
    %v12424 = vpack.c.bf16 %v10096, %v10094
    %v12425 = vpack.c.bf16 %v10052, %v10050
    %v12426 = vpack.c.bf16 %v10101, %v10099
    %v12427 = vpack.c.bf16 %v10057, %v10055
    %v12428 = vpack.c.bf16 %v10106, %v10104
    %v12429 = vpack.c.bf16 %v10062, %v10060
    %v12430 = vpack.c.bf16 %v10111, %v10109
    %v12431 = vpack.c.bf16 %v12408, %v12406
    %v12432 = vpack.c.bf16 %v12413, %v12411
    %12433 = vmatpush.bf16.msra.mxu0 0
    %12434 = vmatpush.bf16.msra.mxu0 0
    %12435 = vmatpush.bf16.msra.mxu0 0
    %12436 = vmatpush.bf16.msra.mxu0 0
    %12437 = vmatpush.bf16.msra.mxu0 0
    %12438 = vmatpush.bf16.msra.mxu0 0
    %12439 = vmatpush.bf16.msra.mxu0 %v12432
    %12440 = vmatpush.bf16.msra.mxu0 %v12431
    %12441 = vmatmul.bf16.gmra.mxu0 %v9992
    %v12442 = vpop.f32.mrf.mxu0
    %v12443 = vadd.f32 0.0, %v12442
    %v12444 = vpop.f32.mrf.mxu0
    %v12445 = vadd.f32 0.0, %v12444
    %12446 = vmatmul.bf16.gmra.mxu0 %v9995
    %v12447 = vpop.f32.mrf.mxu0
    %v12448 = vadd.f32 0.0, %v12447
    %v12449 = vpop.f32.mrf.mxu0
    %v12450 = vadd.f32 0.0, %v12449
    %12451 = vmatmul.bf16.gmra.mxu0 %v9998
    %v12452 = vpop.f32.mrf.mxu0
    %v12453 = vadd.f32 0.0, %v12452
    %v12454 = vpop.f32.mrf.mxu0
    %v12455 = vadd.f32 0.0, %v12454
    %12456 = vmatmul.bf16.gmra.mxu0 %v10001
    %v12457 = vpop.f32.mrf.mxu0
    %v12458 = vadd.f32 0.0, %v12457
    %v12459 = vpop.f32.mrf.mxu0
    %v12460 = vadd.f32 0.0, %v12459
    %12461 = vmatmul.bf16.gmra.mxu0 %v10004
    %v12462 = vpop.f32.mrf.mxu0
    %v12463 = vadd.f32 0.0, %v12462
    %v12464 = vpop.f32.mrf.mxu0
    %v12465 = vadd.f32 0.0, %v12464
    %12466 = vmatmul.bf16.gmra.mxu0 %v10007
    %v12467 = vpop.f32.mrf.mxu0
    %v12468 = vadd.f32 0.0, %v12467
    %v12469 = vpop.f32.mrf.mxu0
    %v12470 = vadd.f32 0.0, %v12469
    %12471 = vmatmul.bf16.gmra.mxu0 %v10010
    %v12472 = vpop.f32.mrf.mxu0
    %v12473 = vadd.f32 0.0, %v12472
    %v12474 = vpop.f32.mrf.mxu0
    %v12475 = vadd.f32 0.0, %v12474
    %12476 = vmatmul.bf16.gmra.mxu0 %v10013
    %v12477 = vpop.f32.mrf.mxu0
    %v12478 = vadd.f32 0.0, %v12477
    %v12479 = vpop.f32.mrf.mxu0
    %v12480 = vadd.f32 0.0, %v12479
    %12481 = vdwg.mxu0
    %v12483 = vsel %vm8624, %v12416, 0
    %v12486 = vsel %vm8624, %v12418, 0
    %v12489 = vsel %vm8624, %v12420, 0
    %v12492 = vsel %vm8624, %v12422, 0
    %v12495 = vsel %vm8624, %v12424, 0
    %v12498 = vsel %vm8624, %v12426, 0
    %v12501 = vsel %vm8624, %v12428, 0
    %v12504 = vsel %vm8624, %v12430, 0
    %12506 = vmatpush.bf16.msra.mxu0 %v12358
    %12507 = vmatpush.bf16.msra.mxu0 %v12357
    %12508 = vmatpush.bf16.msra.mxu0 %v12356
    %12509 = vmatpush.bf16.msra.mxu0 %v12355
    %12510 = vmatpush.bf16.msra.mxu0 %v12354
    %12511 = vmatpush.bf16.msra.mxu0 %v12353
    %12512 = vmatpush.bf16.msra.mxu0 %v12352
    %12513 = vmatpush.bf16.msra.mxu0 %v12351
    %12514 = vmatmul.bf16.gmra.mxu0 %v12415
    %v12515 = vpop.f32.mrf.mxu0
    %v12516 = vadd.f32 %v12443, %v12515
    %v12517 = vpop.f32.mrf.mxu0
    %v12518 = vadd.f32 %v12445, %v12517
    %12519 = vmatmul.bf16.gmra.mxu0 %v12417
    %v12520 = vpop.f32.mrf.mxu0
    %v12521 = vadd.f32 %v12448, %v12520
    %v12522 = vpop.f32.mrf.mxu0
    %v12523 = vadd.f32 %v12450, %v12522
    %12524 = vmatmul.bf16.gmra.mxu0 %v12419
    %v12525 = vpop.f32.mrf.mxu0
    %v12526 = vadd.f32 %v12453, %v12525
    %v12527 = vpop.f32.mrf.mxu0
    %v12528 = vadd.f32 %v12455, %v12527
    %12529 = vmatmul.bf16.gmra.mxu0 %v12421
    %v12530 = vpop.f32.mrf.mxu0
    %v12531 = vadd.f32 %v12458, %v12530
    %v12532 = vpop.f32.mrf.mxu0
    %v12533 = vadd.f32 %v12460, %v12532
    %12534 = vmatmul.bf16.gmra.mxu0 %v12423
    %v12535 = vpop.f32.mrf.mxu0
    %v12536 = vadd.f32 %v12463, %v12535
    %v12537 = vpop.f32.mrf.mxu0
    %v12538 = vadd.f32 %v12465, %v12537
    %12539 = vmatmul.bf16.gmra.mxu0 %v12425
    %v12540 = vpop.f32.mrf.mxu0
    %v12541 = vadd.f32 %v12468, %v12540
    %v12542 = vpop.f32.mrf.mxu0
    %v12543 = vadd.f32 %v12470, %v12542
    %12544 = vmatmul.bf16.gmra.mxu0 %v12427
    %v12545 = vpop.f32.mrf.mxu0
    %v12546 = vadd.f32 %v12473, %v12545
    %v12547 = vpop.f32.mrf.mxu0
    %v12548 = vadd.f32 %v12475, %v12547
    %12549 = vmatmul.bf16.gmra.mxu0 %v12429
    %v12550 = vpop.f32.mrf.mxu0
    %v12551 = vadd.f32 %v12478, %v12550
    %v12552 = vpop.f32.mrf.mxu0
    %v12553 = vadd.f32 %v12480, %v12552
    %12554 = vdwg.mxu0
    %12555 = vmatpush.bf16.msra.mxu0 0
    %12556 = vmatpush.bf16.msra.mxu0 0
    %12557 = vmatpush.bf16.msra.mxu0 0
    %12558 = vmatpush.bf16.msra.mxu0 0
    %12559 = vmatpush.bf16.msra.mxu0 0
    %12560 = vmatpush.bf16.msra.mxu0 0
    %12561 = vmatpush.bf16.msra.mxu0 %v12360
    %12562 = vmatpush.bf16.msra.mxu0 %v12359
    %12563 = vmatmul.bf16.gmra.mxu0 %v12483
    %v12564 = vpop.f32.mrf.mxu0
    %v12565 = vadd.f32 %v12516, %v12564
    %v12566 = vpop.f32.mrf.mxu0
    %v12567 = vadd.f32 %v12518, %v12566
    %12568 = vmatmul.bf16.gmra.mxu0 %v12486
    %v12569 = vpop.f32.mrf.mxu0
    %v12570 = vadd.f32 %v12521, %v12569
    %v12571 = vpop.f32.mrf.mxu0
    %v12572 = vadd.f32 %v12523, %v12571
    %12573 = vmatmul.bf16.gmra.mxu0 %v12489
    %v12574 = vpop.f32.mrf.mxu0
    %v12575 = vadd.f32 %v12526, %v12574
    %v12576 = vpop.f32.mrf.mxu0
    %v12577 = vadd.f32 %v12528, %v12576
    %12578 = vmatmul.bf16.gmra.mxu0 %v12492
    %v12579 = vpop.f32.mrf.mxu0
    %v12580 = vadd.f32 %v12531, %v12579
    %v12581 = vpop.f32.mrf.mxu0
    %v12582 = vadd.f32 %v12533, %v12581
    %12583 = vmatmul.bf16.gmra.mxu0 %v12495
    %v12584 = vpop.f32.mrf.mxu0
    %v12585 = vadd.f32 %v12536, %v12584
    %v12586 = vpop.f32.mrf.mxu0
    %v12587 = vadd.f32 %v12538, %v12586
    %12588 = vmatmul.bf16.gmra.mxu0 %v12498
    %v12589 = vpop.f32.mrf.mxu0
    %v12590 = vadd.f32 %v12541, %v12589
    %v12591 = vpop.f32.mrf.mxu0
    %v12592 = vadd.f32 %v12543, %v12591
    %12593 = vmatmul.bf16.gmra.mxu0 %v12501
    %v12594 = vpop.f32.mrf.mxu0
    %v12595 = vadd.f32 %v12546, %v12594
    %v12596 = vpop.f32.mrf.mxu0
    %v12597 = vadd.f32 %v12548, %v12596
    %12598 = vmatmul.bf16.gmra.mxu0 %v12504
    %v12599 = vpop.f32.mrf.mxu0
    %v12600 = vadd.f32 %v12551, %v12599
    %v12601 = vpop.f32.mrf.mxu0
    %v12602 = vadd.f32 %v12553, %v12601
    %12603 = vdwg.mxu0
    %v12604 = vadd.f32 %v12179, %v10759
    %v12605 = vadd.f32 %v12180, %v10928
    %v12606 = vadd.f32 %v12181, %v10761
    %v12607 = vadd.f32 %v12182, %v10930
    %v12608 = vadd.f32 %v12183, %v10764
    %v12609 = vadd.f32 %v12184, %v10933
    %v12610 = vadd.f32 %v12185, %v10766
    %v12611 = vadd.f32 %v12186, %v10935
    %v12612 = vadd.f32 %v12187, %v10769
    %v12613 = vadd.f32 %v12188, %v10938
    %v12614 = vadd.f32 %v12189, %v10771
    %v12615 = vadd.f32 %v12190, %v10940
    %v12616 = vadd.f32 %v12191, %v10774
    %v12617 = vadd.f32 %v12192, %v10943
    %v12618 = vadd.f32 %v12193, %v10776
    %v12619 = vadd.f32 %v12194, %v10945
    %v12620 = vadd.f32 %v12195, %v10779
    %v12621 = vadd.f32 %v12196, %v10948
    %v12622 = vadd.f32 %v12197, %v10781
    %v12623 = vadd.f32 %v12198, %v10950
    %v12624 = vadd.f32 %v12199, %v10784
    %v12625 = vadd.f32 %v12200, %v10953
    %v12626 = vadd.f32 %v12201, %v10786
    %v12627 = vadd.f32 %v12202, %v10955
    %v12628 = vadd.f32 %v12203, %v10789
    %v12629 = vadd.f32 %v12204, %v10958
    %v12630 = vadd.f32 %v12205, %v10791
    %v12631 = vadd.f32 %v12206, %v10960
    %v12632 = vadd.f32 %v12207, %v10794
    %v12633 = vadd.f32 %v12208, %v10963
    %v12634 = vadd.f32 %v12209, %v10796
    %v12635 = vadd.f32 %v12210, %v10965
    %v12636 = vadd.f32 %v12211, %v10799
    %v12637 = vadd.f32 %v12212, %v10968
    %v12638 = vadd.f32 %v12213, %v10801
    %v12639 = vadd.f32 %v12214, %v10970
    %v12640 = vadd.f32 %v12215, %v10804
    %v12641 = vadd.f32 %v12216, %v10973
    %v12642 = vadd.f32 %v12217, %v10806
    %v12643 = vadd.f32 %v12218, %v10975
    %v12644 = vadd.f32 %v12219, %v10809
    %v12645 = vadd.f32 %v12220, %v10978
    %v12646 = vadd.f32 %v12221, %v10811
    %v12647 = vadd.f32 %v12222, %v10980
    %v12648 = vadd.f32 %v12223, %v10814
    %v12649 = vadd.f32 %v12224, %v10983
    %v12650 = vadd.f32 %v12225, %v10816
    %v12651 = vadd.f32 %v12226, %v10985
    %v12652 = vadd.f32 %v12227, %v10819
    %v12653 = vadd.f32 %v12228, %v10988
    %v12654 = vadd.f32 %v12229, %v10821
    %v12655 = vadd.f32 %v12230, %v10990
    %v12656 = vadd.f32 %v12231, %v10824
    %v12657 = vadd.f32 %v12232, %v10993
    %v12658 = vadd.f32 %v12233, %v10826
    %v12659 = vadd.f32 %v12234, %v10995
    %v12660 = vadd.f32 %v12235, %v10829
    %v12661 = vadd.f32 %v12236, %v10998
    %v12662 = vadd.f32 %v12237, %v10831
    %v12663 = vadd.f32 %v12238, %v11000
    %v12664 = vadd.f32 %v12239, %v10834
    %v12665 = vadd.f32 %v12240, %v11003
    %v12666 = vadd.f32 %v12241, %v10836
    %v12667 = vadd.f32 %v12242, %v11005
    %v12668 = vadd.f32 %v12243, %v10839
    %v12669 = vadd.f32 %v12244, %v11008
    %v12670 = vadd.f32 %v12245, %v10841
    %v12671 = vadd.f32 %v12246, %v11010
    %v12672 = vadd.f32 %v12247, %v10844
    %v12673 = vadd.f32 %v12248, %v11013
    %v12674 = vadd.f32 %v12249, %v10846
    %v12675 = vadd.f32 %v12250, %v11015
    %v12676 = vadd.f32 %v12251, %v10849
    %v12677 = vadd.f32 %v12252, %v11018
    %v12678 = vadd.f32 %v12253, %v10851
    %v12679 = vadd.f32 %v12254, %v11020
    %v12680 = vadd.f32 %v12255, %v10854
    %v12681 = vadd.f32 %v12256, %v11023
    %v12682 = vadd.f32 %v12257, %v10856
    %v12683 = vadd.f32 %v12258, %v11025
    %v12684 = vadd.f32 %v12259, %v10859
    %v12685 = vadd.f32 %v12260, %v11028
    %v12686 = vadd.f32 %v12261, %v10861
    %v12687 = vadd.f32 %v12262, %v11030
    %v12688 = vadd.f32 %v12263, %v10864
    %v12689 = vadd.f32 %v12264, %v11033
    %v12690 = vadd.f32 %v12265, %v10866
    %v12691 = vadd.f32 %v12266, %v11035
    %v12692 = vadd.f32 %v12267, %v10869
    %v12693 = vadd.f32 %v12268, %v11038
    %v12694 = vadd.f32 %v12269, %v10871
    %v12695 = vadd.f32 %v12270, %v11040
    %v12696 = vadd.f32 %v12271, %v10874
    %v12697 = vadd.f32 %v12272, %v11043
    %v12698 = vadd.f32 %v12273, %v10876
    %v12699 = vadd.f32 %v12274, %v11045
    %v12700 = vadd.f32 %v12275, %v10879
    %v12701 = vadd.f32 %v12276, %v11048
    %v12702 = vadd.f32 %v12277, %v10881
    %v12703 = vadd.f32 %v12278, %v11050
    %v12704 = vadd.f32 %v12279, %v10884
    %v12705 = vadd.f32 %v12280, %v11053
    %v12706 = vadd.f32 %v12281, %v10886
    %v12707 = vadd.f32 %v12282, %v11055
    %v12708 = vadd.f32 %v12283, %v10889
    %v12709 = vadd.f32 %v12284, %v11058
    %v12710 = vadd.f32 %v12285, %v10891
    %v12711 = vadd.f32 %v12286, %v11060
    %v12712 = vadd.f32 %v12287, %v10894
    %v12713 = vadd.f32 %v12288, %v11063
    %v12714 = vadd.f32 %v12289, %v10896
    %v12715 = vadd.f32 %v12290, %v11065
    %v12716 = vadd.f32 %v12291, %v10899
    %v12717 = vadd.f32 %v12292, %v11068
    %v12718 = vadd.f32 %v12293, %v10901
    %v12719 = vadd.f32 %v12294, %v11070
    %v12720 = vadd.f32 %v12295, %v10904
    %v12721 = vadd.f32 %v12296, %v11073
    %v12722 = vadd.f32 %v12297, %v10906
    %v12723 = vadd.f32 %v12298, %v11075
    %v12724 = vadd.f32 %v12299, %v10909
    %v12725 = vadd.f32 %v12300, %v11078
    %v12726 = vadd.f32 %v12301, %v10911
    %v12727 = vadd.f32 %v12302, %v11080
    %v12728 = vadd.f32 %v12303, %v10914
    %v12729 = vadd.f32 %v12304, %v11083
    %v12730 = vadd.f32 %v12305, %v10916
    %v12731 = vadd.f32 %v12306, %v11085
    %v12732 = vpack.c.bf16 %v12606, %v12604
    %v12733 = vpack.c.bf16 %v12607, %v12605
    %v12734 = vpack.c.bf16 %v12610, %v12608
    %v12735 = vpack.c.bf16 %v12611, %v12609
    %v12736 = vpack.c.bf16 %v12614, %v12612
    %v12737 = vpack.c.bf16 %v12615, %v12613
    %v12738 = vpack.c.bf16 %v12618, %v12616
    %v12739 = vpack.c.bf16 %v12619, %v12617
    %v12740 = vpack.c.bf16 %v12622, %v12620
    %v12741 = vpack.c.bf16 %v12623, %v12621
    %v12742 = vpack.c.bf16 %v12626, %v12624
    %v12743 = vpack.c.bf16 %v12627, %v12625
    %v12744 = vpack.c.bf16 %v12630, %v12628
    %v12745 = vpack.c.bf16 %v12631, %v12629
    %v12746 = vpack.c.bf16 %v12634, %v12632
    %v12747 = vpack.c.bf16 %v12635, %v12633
    %v12748 = vpack.c.bf16 %v12638, %v12636
    %v12749 = vpack.c.bf16 %v12639, %v12637
    %v12750 = vpack.c.bf16 %v12642, %v12640
    %v12751 = vpack.c.bf16 %v12643, %v12641
    %v12752 = vpack.c.bf16 %v12646, %v12644
    %v12753 = vpack.c.bf16 %v12647, %v12645
    %v12754 = vpack.c.bf16 %v12650, %v12648
    %v12755 = vpack.c.bf16 %v12651, %v12649
    %v12756 = vpack.c.bf16 %v12654, %v12652
    %v12757 = vpack.c.bf16 %v12655, %v12653
    %v12758 = vpack.c.bf16 %v12658, %v12656
    %v12759 = vpack.c.bf16 %v12659, %v12657
    %v12760 = vpack.c.bf16 %v12662, %v12660
    %v12761 = vpack.c.bf16 %v12663, %v12661
    %v12762 = vpack.c.bf16 %v12666, %v12664
    %v12763 = vpack.c.bf16 %v12667, %v12665
    %v12764 = vpack.c.bf16 %v12670, %v12668
    %v12765 = vpack.c.bf16 %v12671, %v12669
    %v12766 = vpack.c.bf16 %v12674, %v12672
    %v12767 = vpack.c.bf16 %v12675, %v12673
    %v12768 = vpack.c.bf16 %v12678, %v12676
    %v12769 = vpack.c.bf16 %v12679, %v12677
    %v12770 = vpack.c.bf16 %v12682, %v12680
    %v12771 = vpack.c.bf16 %v12683, %v12681
    %v12772 = vpack.c.bf16 %v12686, %v12684
    %v12773 = vpack.c.bf16 %v12687, %v12685
    %v12774 = vpack.c.bf16 %v12690, %v12688
    %v12775 = vpack.c.bf16 %v12691, %v12689
    %v12776 = vpack.c.bf16 %v12694, %v12692
    %v12777 = vpack.c.bf16 %v12695, %v12693
    %v12778 = vpack.c.bf16 %v12698, %v12696
    %v12779 = vpack.c.bf16 %v12699, %v12697
    %v12780 = vpack.c.bf16 %v12702, %v12700
    %v12781 = vpack.c.bf16 %v12703, %v12701
    %v12782 = vpack.c.bf16 %v12706, %v12704
    %v12783 = vpack.c.bf16 %v12707, %v12705
    %v12784 = vpack.c.bf16 %v12710, %v12708
    %v12785 = vpack.c.bf16 %v12711, %v12709
    %v12786 = vpack.c.bf16 %v12714, %v12712
    %v12787 = vpack.c.bf16 %v12715, %v12713
    %v12788 = vpack.c.bf16 %v12718, %v12716
    %v12789 = vpack.c.bf16 %v12719, %v12717
    %v12790 = vpack.c.bf16 %v12722, %v12720
    %v12791 = vpack.c.bf16 %v12723, %v12721
    %v12792 = vpack.c.bf16 %v12726, %v12724
    %v12793 = vpack.c.bf16 %v12727, %v12725
    %v12794 = vpack.c.bf16 %v12730, %v12728
    %v12795 = vpack.c.bf16 %v12731, %v12729
    %v12796 = vpack.c.bf16 %v12567, %v12565
    %v12797 = vpack.c.bf16 %v12572, %v12570
    %v12798 = vpack.c.bf16 %v12577, %v12575
    %v12799 = vpack.c.bf16 %v12582, %v12580
    %v12800 = vpack.c.bf16 %v12587, %v12585
    %v12801 = vpack.c.bf16 %v12592, %v12590
    %v12802 = vpack.c.bf16 %v12597, %v12595
    %v12803 = vpack.c.bf16 %v12602, %v12600
    %12804 = vmatpush.bf16.msra.mxu0 %v12803
    %12805 = vmatpush.bf16.msra.mxu0 %v12802
    %12806 = vmatpush.bf16.msra.mxu0 %v12801
    %12807 = vmatpush.bf16.msra.mxu0 %v12800
    %12808 = vmatpush.bf16.msra.mxu0 %v12799
    %12809 = vmatpush.bf16.msra.mxu0 %v12798
    %12810 = vmatpush.bf16.msra.mxu0 %v12797
    %12811 = vmatpush.bf16.msra.mxu0 %v12796
    %12812 = vmatmul.bf16.gmra.mxu0 %v10685
    %v12813 = vpop.f32.mrf.mxu0
    %v12814 = vadd.f32 0.0, %v12813
    %v12815 = vpop.f32.mrf.mxu0
    %v12816 = vadd.f32 0.0, %v12815
    %12817 = vmatmul.bf16.gmra.mxu0 %v10686
    %v12818 = vpop.f32.mrf.mxu0
    %v12819 = vadd.f32 0.0, %v12818
    %v12820 = vpop.f32.mrf.mxu0
    %v12821 = vadd.f32 0.0, %v12820
    %12822 = vmatmul.bf16.gmra.mxu0 %v10687
    %v12823 = vpop.f32.mrf.mxu0
    %v12824 = vadd.f32 0.0, %v12823
    %v12825 = vpop.f32.mrf.mxu0
    %v12826 = vadd.f32 0.0, %v12825
    %12827 = vmatmul.bf16.gmra.mxu0 %v10688
    %v12828 = vpop.f32.mrf.mxu0
    %v12829 = vadd.f32 0.0, %v12828
    %v12830 = vpop.f32.mrf.mxu0
    %v12831 = vadd.f32 0.0, %v12830
    %12832 = vmatmul.bf16.gmra.mxu0 %v10689
    %v12833 = vpop.f32.mrf.mxu0
    %v12834 = vadd.f32 0.0, %v12833
    %v12835 = vpop.f32.mrf.mxu0
    %v12836 = vadd.f32 0.0, %v12835
    %12837 = vmatmul.bf16.gmra.mxu0 %v10690
    %v12838 = vpop.f32.mrf.mxu0
    %v12839 = vadd.f32 0.0, %v12838
    %v12840 = vpop.f32.mrf.mxu0
    %v12841 = vadd.f32 0.0, %v12840
    %12842 = vmatmul.bf16.gmra.mxu0 %v10691
    %v12843 = vpop.f32.mrf.mxu0
    %v12844 = vadd.f32 0.0, %v12843
    %v12845 = vpop.f32.mrf.mxu0
    %v12846 = vadd.f32 0.0, %v12845
    %12847 = vmatmul.bf16.gmra.mxu0 %v10692
    %v12848 = vpop.f32.mrf.mxu0
    %v12849 = vadd.f32 0.0, %v12848
    %v12850 = vpop.f32.mrf.mxu0
    %v12851 = vadd.f32 0.0, %v12850
    %12852 = vmatmul.bf16.gmra.mxu0 %v10693
    %v12853 = vpop.f32.mrf.mxu0
    %v12854 = vadd.f32 0.0, %v12853
    %v12855 = vpop.f32.mrf.mxu0
    %v12856 = vadd.f32 0.0, %v12855
    %12857 = vmatmul.bf16.gmra.mxu0 %v10694
    %v12858 = vpop.f32.mrf.mxu0
    %v12859 = vadd.f32 0.0, %v12858
    %v12860 = vpop.f32.mrf.mxu0
    %v12861 = vadd.f32 0.0, %v12860
    %12862 = vmatmul.bf16.gmra.mxu0 %v10695
    %v12863 = vpop.f32.mrf.mxu0
    %v12864 = vadd.f32 0.0, %v12863
    %v12865 = vpop.f32.mrf.mxu0
    %v12866 = vadd.f32 0.0, %v12865
    %12867 = vmatmul.bf16.gmra.mxu0 %v10696
    %v12868 = vpop.f32.mrf.mxu0
    %v12869 = vadd.f32 0.0, %v12868
    %v12870 = vpop.f32.mrf.mxu0
    %v12871 = vadd.f32 0.0, %v12870
    %12872 = vmatmul.bf16.gmra.mxu0 %v10697
    %v12873 = vpop.f32.mrf.mxu0
    %v12874 = vadd.f32 0.0, %v12873
    %v12875 = vpop.f32.mrf.mxu0
    %v12876 = vadd.f32 0.0, %v12875
    %12877 = vmatmul.bf16.gmra.mxu0 %v10698
    %v12878 = vpop.f32.mrf.mxu0
    %v12879 = vadd.f32 0.0, %v12878
    %v12880 = vpop.f32.mrf.mxu0
    %v12881 = vadd.f32 0.0, %v12880
    %12882 = vmatmul.bf16.gmra.mxu0 %v10699
    %v12883 = vpop.f32.mrf.mxu0
    %v12884 = vadd.f32 0.0, %v12883
    %v12885 = vpop.f32.mrf.mxu0
    %v12886 = vadd.f32 0.0, %v12885
    %12887 = vmatmul.bf16.gmra.mxu0 %v10700
    %v12888 = vpop.f32.mrf.mxu0
    %v12889 = vadd.f32 0.0, %v12888
    %v12890 = vpop.f32.mrf.mxu0
    %v12891 = vadd.f32 0.0, %v12890
    %12892 = vmatmul.bf16.gmra.mxu0 %v10701
    %v12893 = vpop.f32.mrf.mxu0
    %v12894 = vadd.f32 0.0, %v12893
    %v12895 = vpop.f32.mrf.mxu0
    %v12896 = vadd.f32 0.0, %v12895
    %12897 = vmatmul.bf16.gmra.mxu0 %v10702
    %v12898 = vpop.f32.mrf.mxu0
    %v12899 = vadd.f32 0.0, %v12898
    %v12900 = vpop.f32.mrf.mxu0
    %v12901 = vadd.f32 0.0, %v12900
    %12902 = vmatmul.bf16.gmra.mxu0 %v10703
    %v12903 = vpop.f32.mrf.mxu0
    %v12904 = vadd.f32 0.0, %v12903
    %v12905 = vpop.f32.mrf.mxu0
    %v12906 = vadd.f32 0.0, %v12905
    %12907 = vmatmul.bf16.gmra.mxu0 %v10704
    %v12908 = vpop.f32.mrf.mxu0
    %v12909 = vadd.f32 0.0, %v12908
    %v12910 = vpop.f32.mrf.mxu0
    %v12911 = vadd.f32 0.0, %v12910
    %12912 = vmatmul.bf16.gmra.mxu0 %v10705
    %v12913 = vpop.f32.mrf.mxu0
    %v12914 = vadd.f32 0.0, %v12913
    %v12915 = vpop.f32.mrf.mxu0
    %v12916 = vadd.f32 0.0, %v12915
    %12917 = vmatmul.bf16.gmra.mxu0 %v10706
    %v12918 = vpop.f32.mrf.mxu0
    %v12919 = vadd.f32 0.0, %v12918
    %v12920 = vpop.f32.mrf.mxu0
    %v12921 = vadd.f32 0.0, %v12920
    %12922 = vmatmul.bf16.gmra.mxu0 %v10707
    %v12923 = vpop.f32.mrf.mxu0
    %v12924 = vadd.f32 0.0, %v12923
    %v12925 = vpop.f32.mrf.mxu0
    %v12926 = vadd.f32 0.0, %v12925
    %12927 = vmatmul.bf16.gmra.mxu0 %v10708
    %v12928 = vpop.f32.mrf.mxu0
    %v12929 = vadd.f32 0.0, %v12928
    %v12930 = vpop.f32.mrf.mxu0
    %v12931 = vadd.f32 0.0, %v12930
    %12932 = vmatmul.bf16.gmra.mxu0 %v10709
    %v12933 = vpop.f32.mrf.mxu0
    %v12934 = vadd.f32 0.0, %v12933
    %v12935 = vpop.f32.mrf.mxu0
    %v12936 = vadd.f32 0.0, %v12935
    %12937 = vmatmul.bf16.gmra.mxu0 %v10710
    %v12938 = vpop.f32.mrf.mxu0
    %v12939 = vadd.f32 0.0, %v12938
    %v12940 = vpop.f32.mrf.mxu0
    %v12941 = vadd.f32 0.0, %v12940
    %12942 = vmatmul.bf16.gmra.mxu0 %v10711
    %v12943 = vpop.f32.mrf.mxu0
    %v12944 = vadd.f32 0.0, %v12943
    %v12945 = vpop.f32.mrf.mxu0
    %v12946 = vadd.f32 0.0, %v12945
    %12947 = vmatmul.bf16.gmra.mxu0 %v10712
    %v12948 = vpop.f32.mrf.mxu0
    %v12949 = vadd.f32 0.0, %v12948
    %v12950 = vpop.f32.mrf.mxu0
    %v12951 = vadd.f32 0.0, %v12950
    %12952 = vmatmul.bf16.gmra.mxu0 %v10713
    %v12953 = vpop.f32.mrf.mxu0
    %v12954 = vadd.f32 0.0, %v12953
    %v12955 = vpop.f32.mrf.mxu0
    %v12956 = vadd.f32 0.0, %v12955
    %12957 = vmatmul.bf16.gmra.mxu0 %v10714
    %v12958 = vpop.f32.mrf.mxu0
    %v12959 = vadd.f32 0.0, %v12958
    %v12960 = vpop.f32.mrf.mxu0
    %v12961 = vadd.f32 0.0, %v12960
    %12962 = vmatmul.bf16.gmra.mxu0 %v10715
    %v12963 = vpop.f32.mrf.mxu0
    %v12964 = vadd.f32 0.0, %v12963
    %v12965 = vpop.f32.mrf.mxu0
    %v12966 = vadd.f32 0.0, %v12965
    %12967 = vmatmul.bf16.gmra.mxu0 %v10716
    %v12968 = vpop.f32.mrf.mxu0
    %v12969 = vadd.f32 0.0, %v12968
    %v12970 = vpop.f32.mrf.mxu0
    %v12971 = vadd.f32 0.0, %v12970
    %12972 = vdwg.mxu0
    %v12974 = vsel %vm8624, %v12733, 0
    %v12977 = vsel %vm8624, %v12735, 0
    %v12980 = vsel %vm8624, %v12737, 0
    %v12983 = vsel %vm8624, %v12739, 0
    %v12986 = vsel %vm8624, %v12741, 0
    %v12989 = vsel %vm8624, %v12743, 0
    %v12992 = vsel %vm8624, %v12745, 0
    %v12995 = vsel %vm8624, %v12747, 0
    %v12998 = vsel %vm8624, %v12749, 0
    %v13001 = vsel %vm8624, %v12751, 0
    %v13004 = vsel %vm8624, %v12753, 0
    %v13007 = vsel %vm8624, %v12755, 0
    %v13010 = vsel %vm8624, %v12757, 0
    %v13013 = vsel %vm8624, %v12759, 0
    %v13016 = vsel %vm8624, %v12761, 0
    %v13019 = vsel %vm8624, %v12763, 0
    %v13022 = vsel %vm8624, %v12765, 0
    %v13025 = vsel %vm8624, %v12767, 0
    %v13028 = vsel %vm8624, %v12769, 0
    %v13031 = vsel %vm8624, %v12771, 0
    %v13034 = vsel %vm8624, %v12773, 0
    %v13037 = vsel %vm8624, %v12775, 0
    %v13040 = vsel %vm8624, %v12777, 0
    %v13043 = vsel %vm8624, %v12779, 0
    %v13046 = vsel %vm8624, %v12781, 0
    %v13049 = vsel %vm8624, %v12783, 0
    %v13052 = vsel %vm8624, %v12785, 0
    %v13055 = vsel %vm8624, %v12787, 0
    %v13058 = vsel %vm8624, %v12789, 0
    %v13061 = vsel %vm8624, %v12791, 0
    %v13064 = vsel %vm8624, %v12793, 0
    %v13067 = vsel %vm8624, %v12795, 0
    %13069 = vmatpush.bf16.msra.mxu0 %v12358
    %13070 = vmatpush.bf16.msra.mxu0 %v12357
    %13071 = vmatpush.bf16.msra.mxu0 %v12356
    %13072 = vmatpush.bf16.msra.mxu0 %v12355
    %13073 = vmatpush.bf16.msra.mxu0 %v12354
    %13074 = vmatpush.bf16.msra.mxu0 %v12353
    %13075 = vmatpush.bf16.msra.mxu0 %v12352
    %13076 = vmatpush.bf16.msra.mxu0 %v12351
    %13077 = vmatmul.bf16.gmra.mxu0 %v12732
    %v13078 = vpop.f32.mrf.mxu0
    %v13079 = vadd.f32 %v12814, %v13078
    %v13080 = vpop.f32.mrf.mxu0
    %v13081 = vadd.f32 %v12816, %v13080
    %13082 = vmatmul.bf16.gmra.mxu0 %v12734
    %v13083 = vpop.f32.mrf.mxu0
    %v13084 = vadd.f32 %v12819, %v13083
    %v13085 = vpop.f32.mrf.mxu0
    %v13086 = vadd.f32 %v12821, %v13085
    %13087 = vmatmul.bf16.gmra.mxu0 %v12736
    %v13088 = vpop.f32.mrf.mxu0
    %v13089 = vadd.f32 %v12824, %v13088
    %v13090 = vpop.f32.mrf.mxu0
    %v13091 = vadd.f32 %v12826, %v13090
    %13092 = vmatmul.bf16.gmra.mxu0 %v12738
    %v13093 = vpop.f32.mrf.mxu0
    %v13094 = vadd.f32 %v12829, %v13093
    %v13095 = vpop.f32.mrf.mxu0
    %v13096 = vadd.f32 %v12831, %v13095
    %13097 = vmatmul.bf16.gmra.mxu0 %v12740
    %v13098 = vpop.f32.mrf.mxu0
    %v13099 = vadd.f32 %v12834, %v13098
    %v13100 = vpop.f32.mrf.mxu0
    %v13101 = vadd.f32 %v12836, %v13100
    %13102 = vmatmul.bf16.gmra.mxu0 %v12742
    %v13103 = vpop.f32.mrf.mxu0
    %v13104 = vadd.f32 %v12839, %v13103
    %v13105 = vpop.f32.mrf.mxu0
    %v13106 = vadd.f32 %v12841, %v13105
    %13107 = vmatmul.bf16.gmra.mxu0 %v12744
    %v13108 = vpop.f32.mrf.mxu0
    %v13109 = vadd.f32 %v12844, %v13108
    %v13110 = vpop.f32.mrf.mxu0
    %v13111 = vadd.f32 %v12846, %v13110
    %13112 = vmatmul.bf16.gmra.mxu0 %v12746
    %v13113 = vpop.f32.mrf.mxu0
    %v13114 = vadd.f32 %v12849, %v13113
    %v13115 = vpop.f32.mrf.mxu0
    %v13116 = vadd.f32 %v12851, %v13115
    %13117 = vmatmul.bf16.gmra.mxu0 %v12748
    %v13118 = vpop.f32.mrf.mxu0
    %v13119 = vadd.f32 %v12854, %v13118
    %v13120 = vpop.f32.mrf.mxu0
    %v13121 = vadd.f32 %v12856, %v13120
    %13122 = vmatmul.bf16.gmra.mxu0 %v12750
    %v13123 = vpop.f32.mrf.mxu0
    %v13124 = vadd.f32 %v12859, %v13123
    %v13125 = vpop.f32.mrf.mxu0
    %v13126 = vadd.f32 %v12861, %v13125
    %13127 = vmatmul.bf16.gmra.mxu0 %v12752
    %v13128 = vpop.f32.mrf.mxu0
    %v13129 = vadd.f32 %v12864, %v13128
    %v13130 = vpop.f32.mrf.mxu0
    %v13131 = vadd.f32 %v12866, %v13130
    %13132 = vmatmul.bf16.gmra.mxu0 %v12754
    %v13133 = vpop.f32.mrf.mxu0
    %v13134 = vadd.f32 %v12869, %v13133
    %v13135 = vpop.f32.mrf.mxu0
    %v13136 = vadd.f32 %v12871, %v13135
    %13137 = vmatmul.bf16.gmra.mxu0 %v12756
    %v13138 = vpop.f32.mrf.mxu0
    %v13139 = vadd.f32 %v12874, %v13138
    %v13140 = vpop.f32.mrf.mxu0
    %v13141 = vadd.f32 %v12876, %v13140
    %13142 = vmatmul.bf16.gmra.mxu0 %v12758
    %v13143 = vpop.f32.mrf.mxu0
    %v13144 = vadd.f32 %v12879, %v13143
    %v13145 = vpop.f32.mrf.mxu0
    %v13146 = vadd.f32 %v12881, %v13145
    %13147 = vmatmul.bf16.gmra.mxu0 %v12760
    %v13148 = vpop.f32.mrf.mxu0
    %v13149 = vadd.f32 %v12884, %v13148
    %v13150 = vpop.f32.mrf.mxu0
    %v13151 = vadd.f32 %v12886, %v13150
    %13152 = vmatmul.bf16.gmra.mxu0 %v12762
    %v13153 = vpop.f32.mrf.mxu0
    %v13154 = vadd.f32 %v12889, %v13153
    %v13155 = vpop.f32.mrf.mxu0
    %v13156 = vadd.f32 %v12891, %v13155
    %13157 = vmatmul.bf16.gmra.mxu0 %v12764
    %v13158 = vpop.f32.mrf.mxu0
    %v13159 = vadd.f32 %v12894, %v13158
    %v13160 = vpop.f32.mrf.mxu0
    %v13161 = vadd.f32 %v12896, %v13160
    %13162 = vmatmul.bf16.gmra.mxu0 %v12766
    %v13163 = vpop.f32.mrf.mxu0
    %v13164 = vadd.f32 %v12899, %v13163
    %v13165 = vpop.f32.mrf.mxu0
    %v13166 = vadd.f32 %v12901, %v13165
    %13167 = vmatmul.bf16.gmra.mxu0 %v12768
    %v13168 = vpop.f32.mrf.mxu0
    %v13169 = vadd.f32 %v12904, %v13168
    %v13170 = vpop.f32.mrf.mxu0
    %v13171 = vadd.f32 %v12906, %v13170
    %13172 = vmatmul.bf16.gmra.mxu0 %v12770
    %v13173 = vpop.f32.mrf.mxu0
    %v13174 = vadd.f32 %v12909, %v13173
    %v13175 = vpop.f32.mrf.mxu0
    %v13176 = vadd.f32 %v12911, %v13175
    %13177 = vmatmul.bf16.gmra.mxu0 %v12772
    %v13178 = vpop.f32.mrf.mxu0
    %v13179 = vadd.f32 %v12914, %v13178
    %v13180 = vpop.f32.mrf.mxu0
    %v13181 = vadd.f32 %v12916, %v13180
    %13182 = vmatmul.bf16.gmra.mxu0 %v12774
    %v13183 = vpop.f32.mrf.mxu0
    %v13184 = vadd.f32 %v12919, %v13183
    %v13185 = vpop.f32.mrf.mxu0
    %v13186 = vadd.f32 %v12921, %v13185
    %13187 = vmatmul.bf16.gmra.mxu0 %v12776
    %v13188 = vpop.f32.mrf.mxu0
    %v13189 = vadd.f32 %v12924, %v13188
    %v13190 = vpop.f32.mrf.mxu0
    %v13191 = vadd.f32 %v12926, %v13190
    %13192 = vmatmul.bf16.gmra.mxu0 %v12778
    %v13193 = vpop.f32.mrf.mxu0
    %v13194 = vadd.f32 %v12929, %v13193
    %v13195 = vpop.f32.mrf.mxu0
    %v13196 = vadd.f32 %v12931, %v13195
    %13197 = vmatmul.bf16.gmra.mxu0 %v12780
    %v13198 = vpop.f32.mrf.mxu0
    %v13199 = vadd.f32 %v12934, %v13198
    %v13200 = vpop.f32.mrf.mxu0
    %v13201 = vadd.f32 %v12936, %v13200
    %13202 = vmatmul.bf16.gmra.mxu0 %v12782
    %v13203 = vpop.f32.mrf.mxu0
    %v13204 = vadd.f32 %v12939, %v13203
    %v13205 = vpop.f32.mrf.mxu0
    %v13206 = vadd.f32 %v12941, %v13205
    %13207 = vmatmul.bf16.gmra.mxu0 %v12784
    %v13208 = vpop.f32.mrf.mxu0
    %v13209 = vadd.f32 %v12944, %v13208
    %v13210 = vpop.f32.mrf.mxu0
    %v13211 = vadd.f32 %v12946, %v13210
    %13212 = vmatmul.bf16.gmra.mxu0 %v12786
    %v13213 = vpop.f32.mrf.mxu0
    %v13214 = vadd.f32 %v12949, %v13213
    %v13215 = vpop.f32.mrf.mxu0
    %v13216 = vadd.f32 %v12951, %v13215
    %13217 = vmatmul.bf16.gmra.mxu0 %v12788
    %v13218 = vpop.f32.mrf.mxu0
    %v13219 = vadd.f32 %v12954, %v13218
    %v13220 = vpop.f32.mrf.mxu0
    %v13221 = vadd.f32 %v12956, %v13220
    %13222 = vmatmul.bf16.gmra.mxu0 %v12790
    %v13223 = vpop.f32.mrf.mxu0
    %v13224 = vadd.f32 %v12959, %v13223
    %v13225 = vpop.f32.mrf.mxu0
    %v13226 = vadd.f32 %v12961, %v13225
    %13227 = vmatmul.bf16.gmra.mxu0 %v12792
    %v13228 = vpop.f32.mrf.mxu0
    %v13229 = vadd.f32 %v12964, %v13228
    %v13230 = vpop.f32.mrf.mxu0
    %v13231 = vadd.f32 %v12966, %v13230
    %13232 = vmatmul.bf16.gmra.mxu0 %v12794
    %v13233 = vpop.f32.mrf.mxu0
    %v13234 = vadd.f32 %v12969, %v13233
    %v13235 = vpop.f32.mrf.mxu0
    %v13236 = vadd.f32 %v12971, %v13235
    %13237 = vdwg.mxu0
    %13238 = vmatpush.bf16.msra.mxu0 0
    %13239 = vmatpush.bf16.msra.mxu0 0
    %13240 = vmatpush.bf16.msra.mxu0 0
    %13241 = vmatpush.bf16.msra.mxu0 0
    %13242 = vmatpush.bf16.msra.mxu0 0
    %13243 = vmatpush.bf16.msra.mxu0 0
    %13244 = vmatpush.bf16.msra.mxu0 %v12360
    %13245 = vmatpush.bf16.msra.mxu0 %v12359
    %13246 = vmatmul.bf16.gmra.mxu0 %v12974
    %v13247 = vpop.f32.mrf.mxu0
    %v13248 = vadd.f32 %v13079, %v13247
    %v13249 = vpop.f32.mrf.mxu0
    %v13250 = vadd.f32 %v13081, %v13249
    %13251 = vmatmul.bf16.gmra.mxu0 %v12977
    %v13252 = vpop.f32.mrf.mxu0
    %v13253 = vadd.f32 %v13084, %v13252
    %v13254 = vpop.f32.mrf.mxu0
    %v13255 = vadd.f32 %v13086, %v13254
    %13256 = vmatmul.bf16.gmra.mxu0 %v12980
    %v13257 = vpop.f32.mrf.mxu0
    %v13258 = vadd.f32 %v13089, %v13257
    %v13259 = vpop.f32.mrf.mxu0
    %v13260 = vadd.f32 %v13091, %v13259
    %13261 = vmatmul.bf16.gmra.mxu0 %v12983
    %v13262 = vpop.f32.mrf.mxu0
    %v13263 = vadd.f32 %v13094, %v13262
    %v13264 = vpop.f32.mrf.mxu0
    %v13265 = vadd.f32 %v13096, %v13264
    %13266 = vmatmul.bf16.gmra.mxu0 %v12986
    %v13267 = vpop.f32.mrf.mxu0
    %v13268 = vadd.f32 %v13099, %v13267
    %v13269 = vpop.f32.mrf.mxu0
    %v13270 = vadd.f32 %v13101, %v13269
    %13271 = vmatmul.bf16.gmra.mxu0 %v12989
    %v13272 = vpop.f32.mrf.mxu0
    %v13273 = vadd.f32 %v13104, %v13272
    %v13274 = vpop.f32.mrf.mxu0
    %v13275 = vadd.f32 %v13106, %v13274
    %13276 = vmatmul.bf16.gmra.mxu0 %v12992
    %v13277 = vpop.f32.mrf.mxu0
    %v13278 = vadd.f32 %v13109, %v13277
    %v13279 = vpop.f32.mrf.mxu0
    %v13280 = vadd.f32 %v13111, %v13279
    %13281 = vmatmul.bf16.gmra.mxu0 %v12995
    %v13282 = vpop.f32.mrf.mxu0
    %v13283 = vadd.f32 %v13114, %v13282
    %v13284 = vpop.f32.mrf.mxu0
    %v13285 = vadd.f32 %v13116, %v13284
    %13286 = vmatmul.bf16.gmra.mxu0 %v12998
    %v13287 = vpop.f32.mrf.mxu0
    %v13288 = vadd.f32 %v13119, %v13287
    %v13289 = vpop.f32.mrf.mxu0
    %v13290 = vadd.f32 %v13121, %v13289
    %13291 = vmatmul.bf16.gmra.mxu0 %v13001
    %v13292 = vpop.f32.mrf.mxu0
    %v13293 = vadd.f32 %v13124, %v13292
    %v13294 = vpop.f32.mrf.mxu0
    %v13295 = vadd.f32 %v13126, %v13294
    %13296 = vmatmul.bf16.gmra.mxu0 %v13004
    %v13297 = vpop.f32.mrf.mxu0
    %v13298 = vadd.f32 %v13129, %v13297
    %v13299 = vpop.f32.mrf.mxu0
    %v13300 = vadd.f32 %v13131, %v13299
    %13301 = vmatmul.bf16.gmra.mxu0 %v13007
    %v13302 = vpop.f32.mrf.mxu0
    %v13303 = vadd.f32 %v13134, %v13302
    %v13304 = vpop.f32.mrf.mxu0
    %v13305 = vadd.f32 %v13136, %v13304
    %13306 = vmatmul.bf16.gmra.mxu0 %v13010
    %v13307 = vpop.f32.mrf.mxu0
    %v13308 = vadd.f32 %v13139, %v13307
    %v13309 = vpop.f32.mrf.mxu0
    %v13310 = vadd.f32 %v13141, %v13309
    %13311 = vmatmul.bf16.gmra.mxu0 %v13013
    %v13312 = vpop.f32.mrf.mxu0
    %v13313 = vadd.f32 %v13144, %v13312
    %v13314 = vpop.f32.mrf.mxu0
    %v13315 = vadd.f32 %v13146, %v13314
    %13316 = vmatmul.bf16.gmra.mxu0 %v13016
    %v13317 = vpop.f32.mrf.mxu0
    %v13318 = vadd.f32 %v13149, %v13317
    %v13319 = vpop.f32.mrf.mxu0
    %v13320 = vadd.f32 %v13151, %v13319
    %13321 = vmatmul.bf16.gmra.mxu0 %v13019
    %v13322 = vpop.f32.mrf.mxu0
    %v13323 = vadd.f32 %v13154, %v13322
    %v13324 = vpop.f32.mrf.mxu0
    %v13325 = vadd.f32 %v13156, %v13324
    %13326 = vmatmul.bf16.gmra.mxu0 %v13022
    %v13327 = vpop.f32.mrf.mxu0
    %v13328 = vadd.f32 %v13159, %v13327
    %v13329 = vpop.f32.mrf.mxu0
    %v13330 = vadd.f32 %v13161, %v13329
    %13331 = vmatmul.bf16.gmra.mxu0 %v13025
    %v13332 = vpop.f32.mrf.mxu0
    %v13333 = vadd.f32 %v13164, %v13332
    %v13334 = vpop.f32.mrf.mxu0
    %v13335 = vadd.f32 %v13166, %v13334
    %13336 = vmatmul.bf16.gmra.mxu0 %v13028
    %v13337 = vpop.f32.mrf.mxu0
    %v13338 = vadd.f32 %v13169, %v13337
    %v13339 = vpop.f32.mrf.mxu0
    %v13340 = vadd.f32 %v13171, %v13339
    %13341 = vmatmul.bf16.gmra.mxu0 %v13031
    %v13342 = vpop.f32.mrf.mxu0
    %v13343 = vadd.f32 %v13174, %v13342
    %v13344 = vpop.f32.mrf.mxu0
    %v13345 = vadd.f32 %v13176, %v13344
    %13346 = vmatmul.bf16.gmra.mxu0 %v13034
    %v13347 = vpop.f32.mrf.mxu0
    %v13348 = vadd.f32 %v13179, %v13347
    %v13349 = vpop.f32.mrf.mxu0
    %v13350 = vadd.f32 %v13181, %v13349
    %13351 = vmatmul.bf16.gmra.mxu0 %v13037
    %v13352 = vpop.f32.mrf.mxu0
    %v13353 = vadd.f32 %v13184, %v13352
    %v13354 = vpop.f32.mrf.mxu0
    %v13355 = vadd.f32 %v13186, %v13354
    %13356 = vmatmul.bf16.gmra.mxu0 %v13040
    %v13357 = vpop.f32.mrf.mxu0
    %v13358 = vadd.f32 %v13189, %v13357
    %v13359 = vpop.f32.mrf.mxu0
    %v13360 = vadd.f32 %v13191, %v13359
    %13361 = vmatmul.bf16.gmra.mxu0 %v13043
    %v13362 = vpop.f32.mrf.mxu0
    %v13363 = vadd.f32 %v13194, %v13362
    %v13364 = vpop.f32.mrf.mxu0
    %v13365 = vadd.f32 %v13196, %v13364
    %13366 = vmatmul.bf16.gmra.mxu0 %v13046
    %v13367 = vpop.f32.mrf.mxu0
    %v13368 = vadd.f32 %v13199, %v13367
    %v13369 = vpop.f32.mrf.mxu0
    %v13370 = vadd.f32 %v13201, %v13369
    %13371 = vmatmul.bf16.gmra.mxu0 %v13049
    %v13372 = vpop.f32.mrf.mxu0
    %v13373 = vadd.f32 %v13204, %v13372
    %v13374 = vpop.f32.mrf.mxu0
    %v13375 = vadd.f32 %v13206, %v13374
    %13376 = vmatmul.bf16.gmra.mxu0 %v13052
    %v13377 = vpop.f32.mrf.mxu0
    %v13378 = vadd.f32 %v13209, %v13377
    %v13379 = vpop.f32.mrf.mxu0
    %v13380 = vadd.f32 %v13211, %v13379
    %13381 = vmatmul.bf16.gmra.mxu0 %v13055
    %v13382 = vpop.f32.mrf.mxu0
    %v13383 = vadd.f32 %v13214, %v13382
    %v13384 = vpop.f32.mrf.mxu0
    %v13385 = vadd.f32 %v13216, %v13384
    %13386 = vmatmul.bf16.gmra.mxu0 %v13058
    %v13387 = vpop.f32.mrf.mxu0
    %v13388 = vadd.f32 %v13219, %v13387
    %v13389 = vpop.f32.mrf.mxu0
    %v13390 = vadd.f32 %v13221, %v13389
    %13391 = vmatmul.bf16.gmra.mxu0 %v13061
    %v13392 = vpop.f32.mrf.mxu0
    %v13393 = vadd.f32 %v13224, %v13392
    %v13394 = vpop.f32.mrf.mxu0
    %v13395 = vadd.f32 %v13226, %v13394
    %13396 = vmatmul.bf16.gmra.mxu0 %v13064
    %v13397 = vpop.f32.mrf.mxu0
    %v13398 = vadd.f32 %v13229, %v13397
    %v13399 = vpop.f32.mrf.mxu0
    %v13400 = vadd.f32 %v13231, %v13399
    %13401 = vmatmul.bf16.gmra.mxu0 %v13067
    %v13402 = vpop.f32.mrf.mxu0
    %v13403 = vadd.f32 %v13234, %v13402
    %v13404 = vpop.f32.mrf.mxu0
    %v13405 = vadd.f32 %v13236, %v13404
    %13406 = vdwg.mxu0
    %v13407 = vld [vmem:[#allocation10 + $0x13] ss:$0 sm:$0xff]
    %v13408 = vadd.f32 %v13248, %v13407
    %v13409 = vadd.f32 %v13250, %v13407
    %v13410 = vadd.f32 %v13253, %v13407
    %v13411 = vadd.f32 %v13255, %v13407
    %v13412 = vadd.f32 %v13258, %v13407
    %v13413 = vadd.f32 %v13260, %v13407
    %v13414 = vadd.f32 %v13263, %v13407
    %v13415 = vadd.f32 %v13265, %v13407
    %v13416 = vadd.f32 %v13268, %v13407
    %v13417 = vadd.f32 %v13270, %v13407
    %v13418 = vadd.f32 %v13273, %v13407
    %v13419 = vadd.f32 %v13275, %v13407
    %v13420 = vadd.f32 %v13278, %v13407
    %v13421 = vadd.f32 %v13280, %v13407
    %v13422 = vadd.f32 %v13283, %v13407
    %v13423 = vadd.f32 %v13285, %v13407
    %v13424 = vadd.f32 %v13288, %v13407
    %v13425 = vadd.f32 %v13290, %v13407
    %v13426 = vadd.f32 %v13293, %v13407
    %v13427 = vadd.f32 %v13295, %v13407
    %v13428 = vadd.f32 %v13298, %v13407
    %v13429 = vadd.f32 %v13300, %v13407
    %v13430 = vadd.f32 %v13303, %v13407
    %v13431 = vadd.f32 %v13305, %v13407
    %v13432 = vadd.f32 %v13308, %v13407
    %v13433 = vadd.f32 %v13310, %v13407
    %v13434 = vadd.f32 %v13313, %v13407
    %v13435 = vadd.f32 %v13315, %v13407
    %v13436 = vadd.f32 %v13318, %v13407
    %v13437 = vadd.f32 %v13320, %v13407
    %v13438 = vadd.f32 %v13323, %v13407
    %v13439 = vadd.f32 %v13325, %v13407
    %v13440 = vadd.f32 %v13328, %v13407
    %v13441 = vadd.f32 %v13330, %v13407
    %v13442 = vadd.f32 %v13333, %v13407
    %v13443 = vadd.f32 %v13335, %v13407
    %v13444 = vadd.f32 %v13338, %v13407
    %v13445 = vadd.f32 %v13340, %v13407
    %v13446 = vadd.f32 %v13343, %v13407
    %v13447 = vadd.f32 %v13345, %v13407
    %v13448 = vadd.f32 %v13348, %v13407
    %v13449 = vadd.f32 %v13350, %v13407
    %v13450 = vadd.f32 %v13353, %v13407
    %v13451 = vadd.f32 %v13355, %v13407
    %v13452 = vadd.f32 %v13358, %v13407
    %v13453 = vadd.f32 %v13360, %v13407
    %v13454 = vadd.f32 %v13363, %v13407
    %v13455 = vadd.f32 %v13365, %v13407
    %v13456 = vadd.f32 %v13368, %v13407
    %v13457 = vadd.f32 %v13370, %v13407
    %v13458 = vadd.f32 %v13373, %v13407
    %v13459 = vadd.f32 %v13375, %v13407
    %v13460 = vadd.f32 %v13378, %v13407
    %v13461 = vadd.f32 %v13380, %v13407
    %v13462 = vadd.f32 %v13383, %v13407
    %v13463 = vadd.f32 %v13385, %v13407
    %v13464 = vadd.f32 %v13388, %v13407
    %v13465 = vadd.f32 %v13390, %v13407
    %v13466 = vadd.f32 %v13393, %v13407
    %v13467 = vadd.f32 %v13395, %v13407
    %v13468 = vadd.f32 %v13398, %v13407
    %v13469 = vadd.f32 %v13400, %v13407
    %v13470 = vadd.f32 %v13403, %v13407
    %v13471 = vadd.f32 %v13405, %v13407
    %13472 = vst.msk [vmem:[%s16] sm:$0xff] %vm607, %v13408
    %13473 = vst.msk [vmem:[%s16 + $0x8] sm:$0xff] %vm607, %v13409
    %13474 = vst.msk [vmem:[%s16 + $0x10] sm:$0xff] %vm607, %v13410
    %13475 = vst.msk [vmem:[%s16 + $0x18] sm:$0xff] %vm607, %v13411
    %13476 = vst.msk [vmem:[%s16 + $0x20] sm:$0xff] %vm607, %v13412
    %13477 = vst.msk [vmem:[%s16 + $0x28] sm:$0xff] %vm607, %v13413
    %13478 = vst.msk [vmem:[%s16 + $0x30] sm:$0xff] %vm607, %v13414
    %13479 = vst.msk [vmem:[%s16 + $0x38] sm:$0xff] %vm607, %v13415
    %13480 = vst.msk [vmem:[%s16 + $0x40] sm:$0xff] %vm607, %v13416
    %13481 = vst.msk [vmem:[%s16 + $0x48] sm:$0xff] %vm607, %v13417
    %13482 = vst.msk [vmem:[%s16 + $0x50] sm:$0xff] %vm607, %v13418
    %13483 = vst.msk [vmem:[%s16 + $0x58] sm:$0xff] %vm607, %v13419
    %13484 = vst.msk [vmem:[%s16 + $0x60] sm:$0xff] %vm607, %v13420
    %13485 = vst.msk [vmem:[%s16 + $0x68] sm:$0xff] %vm607, %v13421
    %13486 = vst.msk [vmem:[%s16 + $0x70] sm:$0xff] %vm607, %v13422
    %13487 = vst.msk [vmem:[%s16 + $0x78] sm:$0xff] %vm607, %v13423
    %13488 = vst.msk [vmem:[%s16 + $0x80] sm:$0xff] %vm607, %v13424
    %13489 = vst.msk [vmem:[%s16 + $0x88] sm:$0xff] %vm607, %v13425
    %13490 = vst.msk [vmem:[%s16 + $0x90] sm:$0xff] %vm607, %v13426
    %13491 = vst.msk [vmem:[%s16 + $0x98] sm:$0xff] %vm607, %v13427
    %13492 = vst.msk [vmem:[%s16 + $0xa0] sm:$0xff] %vm607, %v13428
    %13493 = vst.msk [vmem:[%s16 + $0xa8] sm:$0xff] %vm607, %v13429
    %13494 = vst.msk [vmem:[%s16 + $0xb0] sm:$0xff] %vm607, %v13430
    %13495 = vst.msk [vmem:[%s16 + $0xb8] sm:$0xff] %vm607, %v13431
    %13496 = vst.msk [vmem:[%s16 + $0xc0] sm:$0xff] %vm607, %v13432
    %13497 = vst.msk [vmem:[%s16 + $0xc8] sm:$0xff] %vm607, %v13433
    %13498 = vst.msk [vmem:[%s16 + $0xd0] sm:$0xff] %vm607, %v13434
    %13499 = vst.msk [vmem:[%s16 + $0xd8] sm:$0xff] %vm607, %v13435
    %13500 = vst.msk [vmem:[%s16 + $0xe0] sm:$0xff] %vm607, %v13436
    %13501 = vst.msk [vmem:[%s16 + $0xe8] sm:$0xff] %vm607, %v13437
    %13502 = vst.msk [vmem:[%s16 + $0xf0] sm:$0xff] %vm607, %v13438
    %13503 = vst.msk [vmem:[%s16 + $0xf8] sm:$0xff] %vm607, %v13439
    %13504 = vst.msk [vmem:[%s16 + $0x100] sm:$0xff] %vm607, %v13440
    %13505 = vst.msk [vmem:[%s16 + $0x108] sm:$0xff] %vm607, %v13441
    %13506 = vst.msk [vmem:[%s16 + $0x110] sm:$0xff] %vm607, %v13442
    %13507 = vst.msk [vmem:[%s16 + $0x118] sm:$0xff] %vm607, %v13443
    %13508 = vst.msk [vmem:[%s16 + $0x120] sm:$0xff] %vm607, %v13444
    %13509 = vst.msk [vmem:[%s16 + $0x128] sm:$0xff] %vm607, %v13445
    %13510 = vst.msk [vmem:[%s16 + $0x130] sm:$0xff] %vm607, %v13446
    %13511 = vst.msk [vmem:[%s16 + $0x138] sm:$0xff] %vm607, %v13447
    %13512 = vst.msk [vmem:[%s16 + $0x140] sm:$0xff] %vm607, %v13448
    %13513 = vst.msk [vmem:[%s16 + $0x148] sm:$0xff] %vm607, %v13449
    %13514 = vst.msk [vmem:[%s16 + $0x150] sm:$0xff] %vm607, %v13450
    %13515 = vst.msk [vmem:[%s16 + $0x158] sm:$0xff] %vm607, %v13451
    %13516 = vst.msk [vmem:[%s16 + $0x160] sm:$0xff] %vm607, %v13452
    %13517 = vst.msk [vmem:[%s16 + $0x168] sm:$0xff] %vm607, %v13453
    %13518 = vst.msk [vmem:[%s16 + $0x170] sm:$0xff] %vm607, %v13454
    %13519 = vst.msk [vmem:[%s16 + $0x178] sm:$0xff] %vm607, %v13455
    %13520 = vst.msk [vmem:[%s16 + $0x180] sm:$0xff] %vm607, %v13456
    %13521 = vst.msk [vmem:[%s16 + $0x188] sm:$0xff] %vm607, %v13457
    %13522 = vst.msk [vmem:[%s16 + $0x190] sm:$0xff] %vm607, %v13458
    %13523 = vst.msk [vmem:[%s16 + $0x198] sm:$0xff] %vm607, %v13459
    %13524 = vst.msk [vmem:[%s16 + $0x1a0] sm:$0xff] %vm607, %v13460
    %13525 = vst.msk [vmem:[%s16 + $0x1a8] sm:$0xff] %vm607, %v13461
    %13526 = vst.msk [vmem:[%s16 + $0x1b0] sm:$0xff] %vm607, %v13462
    %13527 = vst.msk [vmem:[%s16 + $0x1b8] sm:$0xff] %vm607, %v13463
    %13528 = vst.msk [vmem:[%s16 + $0x1c0] sm:$0xff] %vm607, %v13464
    %13529 = vst.msk [vmem:[%s16 + $0x1c8] sm:$0xff] %vm607, %v13465
    %13530 = vst.msk [vmem:[%s16 + $0x1d0] sm:$0xff] %vm607, %v13466
    %13531 = vst.msk [vmem:[%s16 + $0x1d8] sm:$0xff] %vm607, %v13467
    %13532 = vst.msk [vmem:[%s16 + $0x1e0] sm:$0xff] %vm607, %v13468
    %13533 = vst.msk [vmem:[%s16 + $0x1e8] sm:$0xff] %vm607, %v13469
    %13534 = vst.msk [vmem:[%s16 + $0x1f0] sm:$0xff] %vm607, %v13470
    %13535 = vst.msk [vmem:[%s16 + $0x1f8] sm:$0xff] %vm607, %v13471
    // Predicated region
    $region110: #{hydranet_forward.1} parent=1 // pred_check
      _
    $region111: #{hydranet_forward.1} parent=1 // pred_check_branch
      %13537 = sbr.rel (0) target = $region113
    $region112: #{hydranet_forward.1} parent=1 // pred_region
      _
    $region113: #{hydranet_forward.1} parent=1 // pred_fallthru
      _
    // Predicated region
    $region114: #{hydranet_forward.1} parent=1 // pred_check
      _
    $region115: #{hydranet_forward.1} parent=1 // pred_check_branch
      %13539 = sbr.rel (0) target = $region117
    $region116: #{hydranet_forward.1} parent=1 // pred_region
      _
    $region117: #{hydranet_forward.1} parent=1 // pred_fallthru
      _
    %13540 = vsyncpa [#allocation3], 1
    %13541 = vsyncpa [#allocation5], 1
    %13542 = vsyncpa [#allocation8], 1
    %13543 = vsyncpa [#allocation11], 1
    %13544 = vsyncpa [#allocation14], 1
    %13545 = vsyncpa [#allocation17], 1

</llo_original>
